<compile_context>
chip_gen: v7x
topology: tpu7x:2x2x1
jax: 0.10.0
libtpu: 0.0.40
codegen_flags: <defaults>
</compile_context>

<pallas_src>
import functools
import math

import jax
import jax.numpy as jnp
from jax.experimental import pallas as pl
from jax.experimental.pallas import tpu as pltpu


# bf16 MXU operands (v5e/v6e/v7x all support bf16 matmul), f32 accumulation everywhere.
# Weights are cast to this dtype once at init; all elementwise math stays f32.
MATMUL_DTYPE = jnp.bfloat16


# ----------------------------- fused Pallas kernel ------------------------------


def _perceiver_stack_kernel(*refs, B, Nq, D, heads, n_self):
    """Cross-attention block + n_self self-attention blocks, fully VMEM/vreg resident."""
    (st_ref, x_ref, pe_ref,
     c_wq, c_bq, c_wkvt, c_bkv, c_wo, c_bo,
     c_g1, c_be1, c_w1, c_bm1, c_w2, c_bm2, c_g2, c_be2,
     s_wqkv, s_bqkv, s_wo, s_bo,
     s_g1, s_be1, s_w1, s_bm1, s_w2, s_bm2, s_g2, s_be2,
     o_ref) = refs

    f32 = jnp.float32
    Dh = D // heads
    scale = 1.0 / math.sqrt(Dh)
    gc = math.sqrt(2.0 / math.pi)

    def mm(a, b, dims):
        return jax.lax.dot_general(a.astype(MATMUL_DTYPE), b.astype(MATMUL_DTYPE),
                                   dimension_numbers=(dims, ((), ())),
                                   preferred_element_type=f32)

    def ln(z, g, b):
        mu = jnp.mean(z, axis=-1, keepdims=True)
        var = jnp.mean(jnp.square(z - mu), axis=-1, keepdims=True)
        return (z - mu) * jax.lax.rsqrt(var + 1e-5) * g + b

    def gelu(z):  # TODO(synk): tanh approximation; reference nn.GELU is exact erf.
        return 0.5 * z * (1.0 + jnp.tanh(gc * (z + 0.044715 * z * z * z)))

    def mha(X, wo, bo, qkvt_fn):
        """Multi-head attention; q/k/v kept transposed so heads are sublane slices."""
        rows = []
        for b in range(B):
            xb = X[b * Nq:(b + 1) * Nq, :]                      # (Nq, D) sublane slice
            qT, kT, vT = qkvt_fn(b, xb)                         # (D, Nq), (D, Nk), (D, Nk)
            head_outs = []
            for h in range(heads):
                lo, hi = h * Dh, (h + 1) * Dh                   # sublane slices only
                s = mm(qT[lo:hi, :], kT[lo:hi, :], ((0,), (0,))) * scale   # (Nq, Nk)
                s = s - jnp.max(s, axis=-1, keepdims=True)
                e = jnp.exp(s)
                p = e * pl.reciprocal(jnp.sum(e, axis=-1, keepdims=True), approx=False)
                head_outs.append(mm(vT[lo:hi, :], p, ((1,), (1,))))        # (Dh, Nq)
            attnT = jnp.concatenate(head_outs, axis=0)           # (D, Nq) sublane concat
            # single output projection matmul for all heads
            rows.append(mm(attnT, wo, ((0,), (0,))) + bo)        # (Nq, D)
        return jnp.concatenate(rows, axis=0)                     # (B*Nq, D)

    def ffn_block(X, attn, g1, be1, w1, bm1, w2, bm2, g2, be2):
        y = ln(attn, g1, be1) + X
        h1 = gelu(mm(y, w1, ((1,), (0,))) + bm1)
        h2 = mm(h1, w2, ((1,), (0,))) + bm2
        return ln(h2, g2, be2) + y

    # initial token state, rows stacked across batch -> (B*Nq, D)
    X = jnp.concatenate([st_ref[b].astype(f32) for b in range(B)], axis=0)

    # ---- cross-attention block: context stays channels-first (C, S); K/V computed transposed ----
    pe = pe_ref[...].astype(f32)                                 # (C, S), hoisted
    cwq, cbq = c_wq[...], c_bq[...]
    cwkvt, cbkv = c_wkvt[...], c_bkv[...]

    def cross_qkvt(b, xb):
        qT = mm(cwq, xb, ((0,), (1,))) + cbq                     # (D, Nq)
        ctx_b = x_ref[b].astype(f32) + pe                        # (C, S), PE fused in-kernel
        kvT = mm(cwkvt, ctx_b, ((1,), (0,))) + cbkv              # (2D, S) lane-dense
        return qT, kvT[:D, :], kvT[D:, :]

    attn = mha(X, c_wo[...], c_bo[...], cross_qkvt)
    X = ffn_block(X, attn, c_g1[...], c_be1[...], c_w1[...], c_bm1[...],
                  c_w2[...], c_bm2[...], c_g2[...], c_be2[...])

    # ---- self-attention blocks (depth - 1), weights stacked on a leading axis ----
    for i in range(n_self):
        wqkv_i, bqkv_i = s_wqkv[i], s_bqkv[i]

        def self_qkvt(b, xb, _w=wqkv_i, _b=bqkv_i):
            qkvT = mm(_w, xb, ((0,), (1,))) + _b                 # (3D, Nq), fused QKV matmul
            return qkvT[:D, :], qkvT[D:2 * D, :], qkvT[2 * D:, :]

        attn = mha(X, s_wo[i], s_bo[i], self_qkvt)
        X = ffn_block(X, attn, s_g1[i], s_be1[i], s_w1[i], s_bm1[i],
                      s_w2[i], s_bm2[i], s_g2[i], s_be2[i])

    # ---- store final token state ----
    for b in range(B):
        o_ref[b] = X[b * Nq:(b + 1) * Nq, :].astype(o_ref.dtype)


def _full_spec(a):
    idx = (0,) * a.ndim
    return pl.BlockSpec(a.shape, lambda i, _idx=idx: _idx)


_CROSS_KEYS = ("wq", "bq", "wkvT", "bkv", "wo", "bo",
               "g1", "be1", "w1", "bm1", "w2", "bm2", "g2", "be2")
_SELF_KEYS = ("wqkv", "bqkv", "wo", "bo",
              "g1", "be1", "w1", "bm1", "w2", "bm2", "g2", "be2")


def _perceiver_segment(state, ctx, pos_enc, seg, heads):
    """One (cross + self*) segment as a single pallas_call. state: (B, Nq, D), ctx: (B, C, S)."""
    B, Nq, D = state.shape
    args = ([state, ctx, pos_enc]
            + [seg["cross"][k] for k in _CROSS_KEYS]
            + [seg["selfs"][k] for k in _SELF_KEYS])
    kernel = functools.partial(_perceiver_stack_kernel, B=B, Nq=Nq, D=D,
                               heads=heads, n_self=seg["n_self"])
    return pl.pallas_call(
        kernel,
        out_shape=jax.ShapeDtypeStruct((B, Nq, D), jnp.float32),
        grid=(1,),
        in_specs=[_full_spec(a) for a in args],
        out_specs=pl.BlockSpec((B, Nq, D), lambda i: (0, 0, 0)),
        compiler_params=pltpu.CompilerParams(dimension_semantics=("arbitrary",)),
    )(*args)


# ----------------------------- parameter init ------------------------------


def _init_linear(key, in_dim, out_dim):
    kw, kb = jax.random.split(key)
    bound = 1.0 / math.sqrt(in_dim)
    w = jax.random.uniform(kw, (in_dim, out_dim), jnp.float32, -bound, bound)
    b = jax.random.uniform(kb, (out_dim,), jnp.float32, -bound, bound)
    return w, b


def _init_block(key, dim, context_dim=None):
    """One AttentionBlock's parameters, pre-packed into kernel-friendly layouts."""
    cross = context_dim is not None
    ctx_dim = context_dim if cross else dim
    ks = jax.random.split(key, 6)
    wq, bq = _init_linear(ks[0], dim, dim)
    wk, bk = _init_linear(ks[1], ctx_dim, dim)
    wv, bv = _init_linear(ks[2], ctx_dim, dim)
    wo, bo = _init_linear(ks[3], dim, dim)
    w1, b1 = _init_linear(ks[4], dim, dim)
    w2, b2 = _init_linear(ks[5], dim, dim)
    p = dict(
        wo=wo.astype(MATMUL_DTYPE), bo=bo[None, :],
        g1=jnp.ones((1, dim), jnp.float32), be1=jnp.zeros((1, dim), jnp.float32),
        w1=w1.astype(MATMUL_DTYPE), bm1=b1[None, :],
        w2=w2.astype(MATMUL_DTYPE), bm2=b2[None, :],
        g2=jnp.ones((1, dim), jnp.float32), be2=jnp.zeros((1, dim), jnp.float32),
    )
    if cross:
        p["wq"] = wq.astype(MATMUL_DTYPE)                                        # (D, D)
        p["bq"] = bq[:, None]                                                    # (D, 1)
        p["wkvT"] = jnp.concatenate([wk, wv], axis=1).T.astype(MATMUL_DTYPE)     # (2D, Dc)
        p["bkv"] = jnp.concatenate([bk, bv])[:, None]                            # (2D, 1)
    else:
        p["wqkv"] = jnp.concatenate([wq, wk, wv], axis=1).astype(MATMUL_DTYPE)   # (D, 3D)
        p["bqkv"] = jnp.concatenate([bq, bk, bv])[:, None]                       # (3D, 1)
    return p


def _stack_self_blocks(blocks, dim):
    if not blocks:   # depth == 1: pass a (never-read) dummy stack, n_self = 0
        blocks, n = [_init_block(jax.random.PRNGKey(0), dim)], 0
    else:
        n = len(blocks)
    return {k: jnp.stack([b[k] for b in blocks]) for k in blocks[0]}, n


def positional_encodings_cf(channels, seq_len):
    """Sinusoidal encodings, channels-first (C, S). Precomputed once at init."""
    pos = jnp.arange(seq_len, dtype=jnp.float32)[None, :]
    ch = jnp.arange(channels, dtype=jnp.float32)[:, None]
    angle = pos / jnp.power(10000.0, (2.0 * jnp.floor(ch / 2.0)) / channels)
    return jnp.where((jnp.arange(channels)[:, None] % 2) == 0, jnp.sin(angle), jnp.cos(angle))


def init_perceiver(key, input_shape, num_tokens, token_dim, heads,
                   depths=(3,), recursions=(1,)):
    assert len(depths) == len(recursions)
    C = input_shape[0]
    S = math.prod(input_shape[1:]) if len(input_shape) > 1 else 1
    keys = jax.random.split(key, 1 + sum(depths))
    # tokens ~ kaiming_uniform_(a=sqrt(5)) on a (1, token_dim, num_tokens) parameter
    fan_in = token_dim * num_tokens
    bound = math.sqrt(6.0 / ((1.0 + 5.0) * fan_in))
    tokens = jax.random.uniform(keys[0], (token_dim, num_tokens), jnp.float32, -bound, bound)
    segments, ki = [], 1
    for depth, recurs in zip(depths, recursions):
        cross = _init_block(keys[ki], token_dim, context_dim=C); ki += 1
        selfs = [_init_block(keys[ki + j], token_dim) for j in range(depth - 1)]
        ki += depth - 1
        stacked, n_self = _stack_self_blocks(selfs, token_dim)
        seg = dict(cross=cross, selfs=stacked, n_self=n_self)
        for _ in range(recurs):             # recursion reuses the same weights
            segments.append(seg)
    return dict(heads=heads, tokens=tokens,
                pos_enc=positional_encodings_cf(C, S), segments=segments)


# ------------------------------- forward -----------------------------------


def perceiver_forward(x, params):
    """Channels-first input (B, C, *spatial) -> channels-first output (B, token_dim, num_tokens)."""
    heads = params["heads"]
    if x.ndim < 3:
        x = x[:, None, :]                                        # unsqueeze channel dim
    B, C = x.shape[0], x.shape[1]
    S = math.prod(x.shape[2:])
    ctx = x.reshape(B, C, S)                                     # stays channels-first, no transpose
    tokens_t = params["tokens"].T                                # (num_tokens, token_dim)
    Nq, D = tokens_t.shape
    state = jnp.broadcast_to(tokens_t[None], (B, Nq, D))
    for seg in params["segments"]:
        state = _perceiver_segment(state, ctx, params["pos_enc"], seg, heads)
    return state.transpose(0, 2, 1)                              # (B, token_dim, num_tokens)


# --------------------------------- main -------------------------------------


if __name__ == "__main__":
    key = jax.random.PRNGKey(0)
    kx, kp = jax.random.split(key)

    # input_shape=(4, 16, 16), channels_first, num_tokens=8, token_dim=32, heads=4,
    # depths=[3], recursions=[1].
    B, C, H_sp, W_sp = 2, 4, 16, 16
    num_tokens, token_dim, heads = 8, 32, 4

    x = jax.random.normal(kx, (B, C, H_sp, W_sp), jnp.float32)
    params = init_perceiver(kp, input_shape=(C, H_sp, W_sp), num_tokens=num_tokens,
                            token_dim=token_dim, heads=heads,
                            depths=(3,), recursions=(1,))

    fwd = jax.jit(lambda inp: perceiver_forward(inp, params))
    out = jax.block_until_ready(fwd(x))
    assert out.shape == (B, token_dim, num_tokens), out.shape
    assert bool(jnp.all(jnp.isfinite(out)))
    print("KERNEL_OK")
</pallas_src>

<mosaic_0001>
module attributes {stable_mosaic.version = 11 : i64} {
  func.func @_perceiver_stack_kernel(%arg0: i32, %arg1: memref<2x8x32xf32, #tpu.memory_space<vmem>>, %arg2: memref<2x4x256xf32, #tpu.memory_space<vmem>>, %arg3: memref<4x256xf32, #tpu.memory_space<vmem>>, %arg4: memref<32x32xbf16, #tpu.memory_space<vmem>>, %arg5: memref<32x1xf32, #tpu.memory_space<vmem>>, %arg6: memref<64x4xbf16, #tpu.memory_space<vmem>>, %arg7: memref<64x1xf32, #tpu.memory_space<vmem>>, %arg8: memref<32x32xbf16, #tpu.memory_space<vmem>>, %arg9: memref<1x32xf32, #tpu.memory_space<vmem>>, %arg10: memref<1x32xf32, #tpu.memory_space<vmem>>, %arg11: memref<1x32xf32, #tpu.memory_space<vmem>>, %arg12: memref<32x32xbf16, #tpu.memory_space<vmem>>, %arg13: memref<1x32xf32, #tpu.memory_space<vmem>>, %arg14: memref<32x32xbf16, #tpu.memory_space<vmem>>, %arg15: memref<1x32xf32, #tpu.memory_space<vmem>>, %arg16: memref<1x32xf32, #tpu.memory_space<vmem>>, %arg17: memref<1x32xf32, #tpu.memory_space<vmem>>, %arg18: memref<2x32x96xbf16, #tpu.memory_space<vmem>>, %arg19: memref<2x96x1xf32, #tpu.memory_space<vmem>>, %arg20: memref<2x32x32xbf16, #tpu.memory_space<vmem>>, %arg21: memref<2x1x32xf32, #tpu.memory_space<vmem>>, %arg22: memref<2x1x32xf32, #tpu.memory_space<vmem>>, %arg23: memref<2x1x32xf32, #tpu.memory_space<vmem>>, %arg24: memref<2x32x32xbf16, #tpu.memory_space<vmem>>, %arg25: memref<2x1x32xf32, #tpu.memory_space<vmem>>, %arg26: memref<2x32x32xbf16, #tpu.memory_space<vmem>>, %arg27: memref<2x1x32xf32, #tpu.memory_space<vmem>>, %arg28: memref<2x1x32xf32, #tpu.memory_space<vmem>>, %arg29: memref<2x1x32xf32, #tpu.memory_space<vmem>>, %arg30: memref<2x8x32xf32, #tpu.memory_space<vmem>>) attributes {dimension_semantics = [#tpu.dimension_semantics<arbitrary>], iteration_bounds = array<i64: 1>, scalar_prefetch = 0 : i64, scratch_operands = 0 : i64, tpu.core_type = #tpu.core_type<tc>, window_params = [{pipeline_mode = #tpu.pipeline_mode<synchronous>, transform_indices = @transform_0, window_bounds = array<i64: 2, 8, 32>}, {pipeline_mode = #tpu.pipeline_mode<synchronous>, transform_indices = @transform_1, window_bounds = array<i64: 2, 4, 256>}, {pipeline_mode = #tpu.pipeline_mode<synchronous>, transform_indices = @transform_2, window_bounds = array<i64: 4, 256>}, {pipeline_mode = #tpu.pipeline_mode<synchronous>, transform_indices = @transform_3, window_bounds = array<i64: 32, 32>}, {pipeline_mode = #tpu.pipeline_mode<synchronous>, transform_indices = @transform_4, window_bounds = array<i64: 32, 1>}, {pipeline_mode = #tpu.pipeline_mode<synchronous>, transform_indices = @transform_5, window_bounds = array<i64: 64, 4>}, {pipeline_mode = #tpu.pipeline_mode<synchronous>, transform_indices = @transform_6, window_bounds = array<i64: 64, 1>}, {pipeline_mode = #tpu.pipeline_mode<synchronous>, transform_indices = @transform_7, window_bounds = array<i64: 32, 32>}, {pipeline_mode = #tpu.pipeline_mode<synchronous>, transform_indices = @transform_8, window_bounds = array<i64: 1, 32>}, {pipeline_mode = #tpu.pipeline_mode<synchronous>, transform_indices = @transform_9, window_bounds = array<i64: 1, 32>}, {pipeline_mode = #tpu.pipeline_mode<synchronous>, transform_indices = @transform_10, window_bounds = array<i64: 1, 32>}, {pipeline_mode = #tpu.pipeline_mode<synchronous>, transform_indices = @transform_11, window_bounds = array<i64: 32, 32>}, {pipeline_mode = #tpu.pipeline_mode<synchronous>, transform_indices = @transform_12, window_bounds = array<i64: 1, 32>}, {pipeline_mode = #tpu.pipeline_mode<synchronous>, transform_indices = @transform_13, window_bounds = array<i64: 32, 32>}, {pipeline_mode = #tpu.pipeline_mode<synchronous>, transform_indices = @transform_14, window_bounds = array<i64: 1, 32>}, {pipeline_mode = #tpu.pipeline_mode<synchronous>, transform_indices = @transform_15, window_bounds = array<i64: 1, 32>}, {pipeline_mode = #tpu.pipeline_mode<synchronous>, transform_indices = @transform_16, window_bounds = array<i64: 1, 32>}, {pipeline_mode = #tpu.pipeline_mode<synchronous>, transform_indices = @transform_17, window_bounds = array<i64: 2, 32, 96>}, {pipeline_mode = #tpu.pipeline_mode<synchronous>, transform_indices = @transform_18, window_bounds = array<i64: 2, 96, 1>}, {pipeline_mode = #tpu.pipeline_mode<synchronous>, transform_indices = @transform_19, window_bounds = array<i64: 2, 32, 32>}, {pipeline_mode = #tpu.pipeline_mode<synchronous>, transform_indices = @transform_20, window_bounds = array<i64: 2, 1, 32>}, {pipeline_mode = #tpu.pipeline_mode<synchronous>, transform_indices = @transform_21, window_bounds = array<i64: 2, 1, 32>}, {pipeline_mode = #tpu.pipeline_mode<synchronous>, transform_indices = @transform_22, window_bounds = array<i64: 2, 1, 32>}, {pipeline_mode = #tpu.pipeline_mode<synchronous>, transform_indices = @transform_23, window_bounds = array<i64: 2, 32, 32>}, {pipeline_mode = #tpu.pipeline_mode<synchronous>, transform_indices = @transform_24, window_bounds = array<i64: 2, 1, 32>}, {pipeline_mode = #tpu.pipeline_mode<synchronous>, transform_indices = @transform_25, window_bounds = array<i64: 2, 32, 32>}, {pipeline_mode = #tpu.pipeline_mode<synchronous>, transform_indices = @transform_26, window_bounds = array<i64: 2, 1, 32>}, {pipeline_mode = #tpu.pipeline_mode<synchronous>, transform_indices = @transform_27, window_bounds = array<i64: 2, 1, 32>}, {pipeline_mode = #tpu.pipeline_mode<synchronous>, transform_indices = @transform_28, window_bounds = array<i64: 2, 1, 32>}, {pipeline_mode = #tpu.pipeline_mode<synchronous>, transform_indices = @transform_29, window_bounds = array<i64: 2, 8, 32>}]} {
    %c0 = arith.constant 0 : index
    %c0_0 = arith.constant 0 : index
    %c0_1 = arith.constant 0 : index
    %0 = vector.load %arg1[%c0, %c0_0, %c0_1] : memref<2x8x32xf32, #tpu.memory_space<vmem>>, vector<1x8x32xf32>
    %1 = vector.shape_cast %0 : vector<1x8x32xf32> to vector<8x32xf32>
    %c1 = arith.constant 1 : index
    %c0_2 = arith.constant 0 : index
    %c0_3 = arith.constant 0 : index
    %2 = vector.load %arg1[%c1, %c0_2, %c0_3] : memref<2x8x32xf32, #tpu.memory_space<vmem>>, vector<1x8x32xf32>
    %3 = vector.shape_cast %2 : vector<1x8x32xf32> to vector<8x32xf32>
    %4 = tpu.concatenate %1, %3 in 0 : vector<8x32xf32>, vector<8x32xf32> -> vector<16x32xf32>
    %c0_4 = arith.constant 0 : index
    %c0_5 = arith.constant 0 : index
    %5 = vector.load %arg3[%c0_4, %c0_5] : memref<4x256xf32, #tpu.memory_space<vmem>>, vector<4x256xf32>
    %c0_6 = arith.constant 0 : index
    %c0_7 = arith.constant 0 : index
    %6 = vector.load %arg4[%c0_6, %c0_7] : memref<32x32xbf16, #tpu.memory_space<vmem>>, vector<32x32xbf16>
    %c0_8 = arith.constant 0 : index
    %c0_9 = arith.constant 0 : index
    %7 = vector.load %arg5[%c0_8, %c0_9] : memref<32x1xf32, #tpu.memory_space<vmem>>, vector<32x1xf32>
    %c0_10 = arith.constant 0 : index
    %c0_11 = arith.constant 0 : index
    %8 = vector.load %arg6[%c0_10, %c0_11] : memref<64x4xbf16, #tpu.memory_space<vmem>>, vector<64x4xbf16>
    %c0_12 = arith.constant 0 : index
    %c0_13 = arith.constant 0 : index
    %9 = vector.load %arg7[%c0_12, %c0_13] : memref<64x1xf32, #tpu.memory_space<vmem>>, vector<64x1xf32>
    %c0_14 = arith.constant 0 : index
    %c0_15 = arith.constant 0 : index
    %10 = vector.load %arg8[%c0_14, %c0_15] : memref<32x32xbf16, #tpu.memory_space<vmem>>, vector<32x32xbf16>
    %c0_16 = arith.constant 0 : index
    %c0_17 = arith.constant 0 : index
    %11 = vector.load %arg9[%c0_16, %c0_17] : memref<1x32xf32, #tpu.memory_space<vmem>>, vector<1x32xf32>
    %12 = vector.extract_strided_slice %4 {offsets = [0, 0], sizes = [8, 32], strides = [1, 1]} : vector<16x32xf32> to vector<8x32xf32>
    %13 = arith.truncf %12 : vector<8x32xf32> to vector<8x32xbf16>
    %cst = arith.constant dense<0.000000e+00> : vector<32x8xf32>
    %14 = tpu.matmul %6, %13, %cst {dimension_numbers = #tpu.dot_dimension_numbers<[0], [1], [1], [0], [0, 1, 1, 0], [], []>} : vector<32x32xbf16>, vector<8x32xbf16>, vector<32x8xf32> -> vector<32x8xf32>
    %15 = vector.broadcast %7 : vector<32x1xf32> to vector<32x8xf32>
    %16 = arith.addf %14, %15 : vector<32x8xf32>
    %c0_18 = arith.constant 0 : index
    %c0_19 = arith.constant 0 : index
    %c0_20 = arith.constant 0 : index
    %17 = vector.load %arg2[%c0_18, %c0_19, %c0_20] : memref<2x4x256xf32, #tpu.memory_space<vmem>>, vector<1x4x256xf32>
    %18 = vector.shape_cast %17 : vector<1x4x256xf32> to vector<4x256xf32>
    %19 = arith.addf %18, %5 : vector<4x256xf32>
    %20 = arith.truncf %19 : vector<4x256xf32> to vector<4x256xbf16>
    %cst_21 = arith.constant dense<0.000000e+00> : vector<64x256xf32>
    %21 = tpu.matmul %8, %20, %cst_21 {dimension_numbers = #tpu.dot_dimension_numbers<[1], [0], [0], [1], [0, 0, 1, 1], [], []>} : vector<64x4xbf16>, vector<4x256xbf16>, vector<64x256xf32> -> vector<64x256xf32>
    %22 = vector.broadcast %9 : vector<64x1xf32> to vector<64x256xf32>
    %23 = arith.addf %21, %22 : vector<64x256xf32>
    %24 = vector.extract_strided_slice %23 {offsets = [0, 0], sizes = [32, 256], strides = [1, 1]} : vector<64x256xf32> to vector<32x256xf32>
    %25 = vector.extract_strided_slice %23 {offsets = [32, 0], sizes = [32, 256], strides = [1, 1]} : vector<64x256xf32> to vector<32x256xf32>
    %26 = vector.extract_strided_slice %16 {offsets = [0, 0], sizes = [8, 8], strides = [1, 1]} : vector<32x8xf32> to vector<8x8xf32>
    %27 = vector.extract_strided_slice %24 {offsets = [0, 0], sizes = [8, 256], strides = [1, 1]} : vector<32x256xf32> to vector<8x256xf32>
    %28 = arith.truncf %26 : vector<8x8xf32> to vector<8x8xbf16>
    %29 = arith.truncf %27 : vector<8x256xf32> to vector<8x256xbf16>
    %cst_22 = arith.constant dense<0.000000e+00> : vector<8x256xf32>
    %30 = tpu.matmul %28, %29, %cst_22 {dimension_numbers = #tpu.dot_dimension_numbers<[0], [0], [1], [1], [0, 1, 1, 1], [], []>} : vector<8x8xbf16>, vector<8x256xbf16>, vector<8x256xf32> -> vector<8x256xf32>
    %cst_23 = arith.constant 0.353553385 : f32
    %31 = vector.broadcast %cst_23 : f32 to vector<8x256xf32>
    %32 = arith.mulf %30, %31 : vector<8x256xf32>
    %cst_24 = arith.constant dense<0xFF800000> : vector<8xf32>
    %33 = vector.multi_reduction <maximumf>, %32, %cst_24 [1] : vector<8x256xf32> to vector<8xf32>
    %34 = vector.shape_cast %33 : vector<8xf32> to vector<8x1xf32>
    %35 = vector.broadcast %34 : vector<8x1xf32> to vector<8x256xf32>
    %36 = arith.subf %32, %35 : vector<8x256xf32>
    %37 = math.exp %36 : vector<8x256xf32>
    %cst_25 = arith.constant dense<0.000000e+00> : vector<8xf32>
    %38 = vector.multi_reduction <add>, %37, %cst_25 [1] : vector<8x256xf32> to vector<8xf32>
    %39 = vector.shape_cast %38 : vector<8xf32> to vector<8x1xf32>
    %40 = tpu.reciprocal %39 : vector<8x1xf32> -> vector<8x1xf32>
    %41 = vector.broadcast %40 : vector<8x1xf32> to vector<8x256xf32>
    %42 = arith.mulf %37, %41 : vector<8x256xf32>
    %43 = vector.extract_strided_slice %25 {offsets = [0, 0], sizes = [8, 256], strides = [1, 1]} : vector<32x256xf32> to vector<8x256xf32>
    %44 = arith.truncf %43 : vector<8x256xf32> to vector<8x256xbf16>
    %45 = arith.truncf %42 : vector<8x256xf32> to vector<8x256xbf16>
    %cst_26 = arith.constant dense<0.000000e+00> : vector<8x8xf32>
    %46 = tpu.matmul %44, %45, %cst_26 {dimension_numbers = #tpu.dot_dimension_numbers<[1], [1], [0], [0], [0, 0, 1, 0], [], []>} : vector<8x256xbf16>, vector<8x256xbf16>, vector<8x8xf32> -> vector<8x8xf32>
    %47 = vector.extract_strided_slice %16 {offsets = [8, 0], sizes = [8, 8], strides = [1, 1]} : vector<32x8xf32> to vector<8x8xf32>
    %48 = vector.extract_strided_slice %24 {offsets = [8, 0], sizes = [8, 256], strides = [1, 1]} : vector<32x256xf32> to vector<8x256xf32>
    %49 = arith.truncf %47 : vector<8x8xf32> to vector<8x8xbf16>
    %50 = arith.truncf %48 : vector<8x256xf32> to vector<8x256xbf16>
    %cst_27 = arith.constant dense<0.000000e+00> : vector<8x256xf32>
    %51 = tpu.matmul %49, %50, %cst_27 {dimension_numbers = #tpu.dot_dimension_numbers<[0], [0], [1], [1], [0, 1, 1, 1], [], []>} : vector<8x8xbf16>, vector<8x256xbf16>, vector<8x256xf32> -> vector<8x256xf32>
    %cst_28 = arith.constant 0.353553385 : f32
    %52 = vector.broadcast %cst_28 : f32 to vector<8x256xf32>
    %53 = arith.mulf %51, %52 : vector<8x256xf32>
    %cst_29 = arith.constant dense<0xFF800000> : vector<8xf32>
    %54 = vector.multi_reduction <maximumf>, %53, %cst_29 [1] : vector<8x256xf32> to vector<8xf32>
    %55 = vector.shape_cast %54 : vector<8xf32> to vector<8x1xf32>
    %56 = vector.broadcast %55 : vector<8x1xf32> to vector<8x256xf32>
    %57 = arith.subf %53, %56 : vector<8x256xf32>
    %58 = math.exp %57 : vector<8x256xf32>
    %cst_30 = arith.constant dense<0.000000e+00> : vector<8xf32>
    %59 = vector.multi_reduction <add>, %58, %cst_30 [1] : vector<8x256xf32> to vector<8xf32>
    %60 = vector.shape_cast %59 : vector<8xf32> to vector<8x1xf32>
    %61 = tpu.reciprocal %60 : vector<8x1xf32> -> vector<8x1xf32>
    %62 = vector.broadcast %61 : vector<8x1xf32> to vector<8x256xf32>
    %63 = arith.mulf %58, %62 : vector<8x256xf32>
    %64 = vector.extract_strided_slice %25 {offsets = [8, 0], sizes = [8, 256], strides = [1, 1]} : vector<32x256xf32> to vector<8x256xf32>
    %65 = arith.truncf %64 : vector<8x256xf32> to vector<8x256xbf16>
    %66 = arith.truncf %63 : vector<8x256xf32> to vector<8x256xbf16>
    %cst_31 = arith.constant dense<0.000000e+00> : vector<8x8xf32>
    %67 = tpu.matmul %65, %66, %cst_31 {dimension_numbers = #tpu.dot_dimension_numbers<[1], [1], [0], [0], [0, 0, 1, 0], [], []>} : vector<8x256xbf16>, vector<8x256xbf16>, vector<8x8xf32> -> vector<8x8xf32>
    %68 = vector.extract_strided_slice %16 {offsets = [16, 0], sizes = [8, 8], strides = [1, 1]} : vector<32x8xf32> to vector<8x8xf32>
    %69 = vector.extract_strided_slice %24 {offsets = [16, 0], sizes = [8, 256], strides = [1, 1]} : vector<32x256xf32> to vector<8x256xf32>
    %70 = arith.truncf %68 : vector<8x8xf32> to vector<8x8xbf16>
    %71 = arith.truncf %69 : vector<8x256xf32> to vector<8x256xbf16>
    %cst_32 = arith.constant dense<0.000000e+00> : vector<8x256xf32>
    %72 = tpu.matmul %70, %71, %cst_32 {dimension_numbers = #tpu.dot_dimension_numbers<[0], [0], [1], [1], [0, 1, 1, 1], [], []>} : vector<8x8xbf16>, vector<8x256xbf16>, vector<8x256xf32> -> vector<8x256xf32>
    %cst_33 = arith.constant 0.353553385 : f32
    %73 = vector.broadcast %cst_33 : f32 to vector<8x256xf32>
    %74 = arith.mulf %72, %73 : vector<8x256xf32>
    %cst_34 = arith.constant dense<0xFF800000> : vector<8xf32>
    %75 = vector.multi_reduction <maximumf>, %74, %cst_34 [1] : vector<8x256xf32> to vector<8xf32>
    %76 = vector.shape_cast %75 : vector<8xf32> to vector<8x1xf32>
    %77 = vector.broadcast %76 : vector<8x1xf32> to vector<8x256xf32>
    %78 = arith.subf %74, %77 : vector<8x256xf32>
    %79 = math.exp %78 : vector<8x256xf32>
    %cst_35 = arith.constant dense<0.000000e+00> : vector<8xf32>
    %80 = vector.multi_reduction <add>, %79, %cst_35 [1] : vector<8x256xf32> to vector<8xf32>
    %81 = vector.shape_cast %80 : vector<8xf32> to vector<8x1xf32>
    %82 = tpu.reciprocal %81 : vector<8x1xf32> -> vector<8x1xf32>
    %83 = vector.broadcast %82 : vector<8x1xf32> to vector<8x256xf32>
    %84 = arith.mulf %79, %83 : vector<8x256xf32>
    %85 = vector.extract_strided_slice %25 {offsets = [16, 0], sizes = [8, 256], strides = [1, 1]} : vector<32x256xf32> to vector<8x256xf32>
    %86 = arith.truncf %85 : vector<8x256xf32> to vector<8x256xbf16>
    %87 = arith.truncf %84 : vector<8x256xf32> to vector<8x256xbf16>
    %cst_36 = arith.constant dense<0.000000e+00> : vector<8x8xf32>
    %88 = tpu.matmul %86, %87, %cst_36 {dimension_numbers = #tpu.dot_dimension_numbers<[1], [1], [0], [0], [0, 0, 1, 0], [], []>} : vector<8x256xbf16>, vector<8x256xbf16>, vector<8x8xf32> -> vector<8x8xf32>
    %89 = vector.extract_strided_slice %16 {offsets = [24, 0], sizes = [8, 8], strides = [1, 1]} : vector<32x8xf32> to vector<8x8xf32>
    %90 = vector.extract_strided_slice %24 {offsets = [24, 0], sizes = [8, 256], strides = [1, 1]} : vector<32x256xf32> to vector<8x256xf32>
    %91 = arith.truncf %89 : vector<8x8xf32> to vector<8x8xbf16>
    %92 = arith.truncf %90 : vector<8x256xf32> to vector<8x256xbf16>
    %cst_37 = arith.constant dense<0.000000e+00> : vector<8x256xf32>
    %93 = tpu.matmul %91, %92, %cst_37 {dimension_numbers = #tpu.dot_dimension_numbers<[0], [0], [1], [1], [0, 1, 1, 1], [], []>} : vector<8x8xbf16>, vector<8x256xbf16>, vector<8x256xf32> -> vector<8x256xf32>
    %cst_38 = arith.constant 0.353553385 : f32
    %94 = vector.broadcast %cst_38 : f32 to vector<8x256xf32>
    %95 = arith.mulf %93, %94 : vector<8x256xf32>
    %cst_39 = arith.constant dense<0xFF800000> : vector<8xf32>
    %96 = vector.multi_reduction <maximumf>, %95, %cst_39 [1] : vector<8x256xf32> to vector<8xf32>
    %97 = vector.shape_cast %96 : vector<8xf32> to vector<8x1xf32>
    %98 = vector.broadcast %97 : vector<8x1xf32> to vector<8x256xf32>
    %99 = arith.subf %95, %98 : vector<8x256xf32>
    %100 = math.exp %99 : vector<8x256xf32>
    %cst_40 = arith.constant dense<0.000000e+00> : vector<8xf32>
    %101 = vector.multi_reduction <add>, %100, %cst_40 [1] : vector<8x256xf32> to vector<8xf32>
    %102 = vector.shape_cast %101 : vector<8xf32> to vector<8x1xf32>
    %103 = tpu.reciprocal %102 : vector<8x1xf32> -> vector<8x1xf32>
    %104 = vector.broadcast %103 : vector<8x1xf32> to vector<8x256xf32>
    %105 = arith.mulf %100, %104 : vector<8x256xf32>
    %106 = vector.extract_strided_slice %25 {offsets = [24, 0], sizes = [8, 256], strides = [1, 1]} : vector<32x256xf32> to vector<8x256xf32>
    %107 = arith.truncf %106 : vector<8x256xf32> to vector<8x256xbf16>
    %108 = arith.truncf %105 : vector<8x256xf32> to vector<8x256xbf16>
    %cst_41 = arith.constant dense<0.000000e+00> : vector<8x8xf32>
    %109 = tpu.matmul %107, %108, %cst_41 {dimension_numbers = #tpu.dot_dimension_numbers<[1], [1], [0], [0], [0, 0, 1, 0], [], []>} : vector<8x256xbf16>, vector<8x256xbf16>, vector<8x8xf32> -> vector<8x8xf32>
    %110 = tpu.concatenate %46, %67, %88, %109 in 0 : vector<8x8xf32>, vector<8x8xf32>, vector<8x8xf32>, vector<8x8xf32> -> vector<32x8xf32>
    %111 = arith.truncf %110 : vector<32x8xf32> to vector<32x8xbf16>
    %cst_42 = arith.constant dense<0.000000e+00> : vector<8x32xf32>
    %112 = tpu.matmul %111, %10, %cst_42 {dimension_numbers = #tpu.dot_dimension_numbers<[0], [0], [1], [1], [0, 1, 1, 1], [], []>} : vector<32x8xbf16>, vector<32x32xbf16>, vector<8x32xf32> -> vector<8x32xf32>
    %113 = vector.broadcast %11 : vector<1x32xf32> to vector<8x32xf32>
    %114 = arith.addf %112, %113 : vector<8x32xf32>
    %115 = vector.extract_strided_slice %4 {offsets = [8, 0], sizes = [8, 32], strides = [1, 1]} : vector<16x32xf32> to vector<8x32xf32>
    %116 = arith.truncf %115 : vector<8x32xf32> to vector<8x32xbf16>
    %cst_43 = arith.constant dense<0.000000e+00> : vector<32x8xf32>
    %117 = tpu.matmul %6, %116, %cst_43 {dimension_numbers = #tpu.dot_dimension_numbers<[0], [1], [1], [0], [0, 1, 1, 0], [], []>} : vector<32x32xbf16>, vector<8x32xbf16>, vector<32x8xf32> -> vector<32x8xf32>
    %118 = vector.broadcast %7 : vector<32x1xf32> to vector<32x8xf32>
    %119 = arith.addf %117, %118 : vector<32x8xf32>
    %c1_44 = arith.constant 1 : index
    %c0_45 = arith.constant 0 : index
    %c0_46 = arith.constant 0 : index
    %120 = vector.load %arg2[%c1_44, %c0_45, %c0_46] : memref<2x4x256xf32, #tpu.memory_space<vmem>>, vector<1x4x256xf32>
    %121 = vector.shape_cast %120 : vector<1x4x256xf32> to vector<4x256xf32>
    %122 = arith.addf %121, %5 : vector<4x256xf32>
    %123 = arith.truncf %122 : vector<4x256xf32> to vector<4x256xbf16>
    %cst_47 = arith.constant dense<0.000000e+00> : vector<64x256xf32>
    %124 = tpu.matmul %8, %123, %cst_47 {dimension_numbers = #tpu.dot_dimension_numbers<[1], [0], [0], [1], [0, 0, 1, 1], [], []>} : vector<64x4xbf16>, vector<4x256xbf16>, vector<64x256xf32> -> vector<64x256xf32>
    %125 = vector.broadcast %9 : vector<64x1xf32> to vector<64x256xf32>
    %126 = arith.addf %124, %125 : vector<64x256xf32>
    %127 = vector.extract_strided_slice %126 {offsets = [0, 0], sizes = [32, 256], strides = [1, 1]} : vector<64x256xf32> to vector<32x256xf32>
    %128 = vector.extract_strided_slice %126 {offsets = [32, 0], sizes = [32, 256], strides = [1, 1]} : vector<64x256xf32> to vector<32x256xf32>
    %129 = vector.extract_strided_slice %119 {offsets = [0, 0], sizes = [8, 8], strides = [1, 1]} : vector<32x8xf32> to vector<8x8xf32>
    %130 = vector.extract_strided_slice %127 {offsets = [0, 0], sizes = [8, 256], strides = [1, 1]} : vector<32x256xf32> to vector<8x256xf32>
    %131 = arith.truncf %129 : vector<8x8xf32> to vector<8x8xbf16>
    %132 = arith.truncf %130 : vector<8x256xf32> to vector<8x256xbf16>
    %cst_48 = arith.constant dense<0.000000e+00> : vector<8x256xf32>
    %133 = tpu.matmul %131, %132, %cst_48 {dimension_numbers = #tpu.dot_dimension_numbers<[0], [0], [1], [1], [0, 1, 1, 1], [], []>} : vector<8x8xbf16>, vector<8x256xbf16>, vector<8x256xf32> -> vector<8x256xf32>
    %cst_49 = arith.constant 0.353553385 : f32
    %134 = vector.broadcast %cst_49 : f32 to vector<8x256xf32>
    %135 = arith.mulf %133, %134 : vector<8x256xf32>
    %cst_50 = arith.constant dense<0xFF800000> : vector<8xf32>
    %136 = vector.multi_reduction <maximumf>, %135, %cst_50 [1] : vector<8x256xf32> to vector<8xf32>
    %137 = vector.shape_cast %136 : vector<8xf32> to vector<8x1xf32>
    %138 = vector.broadcast %137 : vector<8x1xf32> to vector<8x256xf32>
    %139 = arith.subf %135, %138 : vector<8x256xf32>
    %140 = math.exp %139 : vector<8x256xf32>
    %cst_51 = arith.constant dense<0.000000e+00> : vector<8xf32>
    %141 = vector.multi_reduction <add>, %140, %cst_51 [1] : vector<8x256xf32> to vector<8xf32>
    %142 = vector.shape_cast %141 : vector<8xf32> to vector<8x1xf32>
    %143 = tpu.reciprocal %142 : vector<8x1xf32> -> vector<8x1xf32>
    %144 = vector.broadcast %143 : vector<8x1xf32> to vector<8x256xf32>
    %145 = arith.mulf %140, %144 : vector<8x256xf32>
    %146 = vector.extract_strided_slice %128 {offsets = [0, 0], sizes = [8, 256], strides = [1, 1]} : vector<32x256xf32> to vector<8x256xf32>
    %147 = arith.truncf %146 : vector<8x256xf32> to vector<8x256xbf16>
    %148 = arith.truncf %145 : vector<8x256xf32> to vector<8x256xbf16>
    %cst_52 = arith.constant dense<0.000000e+00> : vector<8x8xf32>
    %149 = tpu.matmul %147, %148, %cst_52 {dimension_numbers = #tpu.dot_dimension_numbers<[1], [1], [0], [0], [0, 0, 1, 0], [], []>} : vector<8x256xbf16>, vector<8x256xbf16>, vector<8x8xf32> -> vector<8x8xf32>
    %150 = vector.extract_strided_slice %119 {offsets = [8, 0], sizes = [8, 8], strides = [1, 1]} : vector<32x8xf32> to vector<8x8xf32>
    %151 = vector.extract_strided_slice %127 {offsets = [8, 0], sizes = [8, 256], strides = [1, 1]} : vector<32x256xf32> to vector<8x256xf32>
    %152 = arith.truncf %150 : vector<8x8xf32> to vector<8x8xbf16>
    %153 = arith.truncf %151 : vector<8x256xf32> to vector<8x256xbf16>
    %cst_53 = arith.constant dense<0.000000e+00> : vector<8x256xf32>
    %154 = tpu.matmul %152, %153, %cst_53 {dimension_numbers = #tpu.dot_dimension_numbers<[0], [0], [1], [1], [0, 1, 1, 1], [], []>} : vector<8x8xbf16>, vector<8x256xbf16>, vector<8x256xf32> -> vector<8x256xf32>
    %cst_54 = arith.constant 0.353553385 : f32
    %155 = vector.broadcast %cst_54 : f32 to vector<8x256xf32>
    %156 = arith.mulf %154, %155 : vector<8x256xf32>
    %cst_55 = arith.constant dense<0xFF800000> : vector<8xf32>
    %157 = vector.multi_reduction <maximumf>, %156, %cst_55 [1] : vector<8x256xf32> to vector<8xf32>
    %158 = vector.shape_cast %157 : vector<8xf32> to vector<8x1xf32>
    %159 = vector.broadcast %158 : vector<8x1xf32> to vector<8x256xf32>
    %160 = arith.subf %156, %159 : vector<8x256xf32>
    %161 = math.exp %160 : vector<8x256xf32>
    %cst_56 = arith.constant dense<0.000000e+00> : vector<8xf32>
    %162 = vector.multi_reduction <add>, %161, %cst_56 [1] : vector<8x256xf32> to vector<8xf32>
    %163 = vector.shape_cast %162 : vector<8xf32> to vector<8x1xf32>
    %164 = tpu.reciprocal %163 : vector<8x1xf32> -> vector<8x1xf32>
    %165 = vector.broadcast %164 : vector<8x1xf32> to vector<8x256xf32>
    %166 = arith.mulf %161, %165 : vector<8x256xf32>
    %167 = vector.extract_strided_slice %128 {offsets = [8, 0], sizes = [8, 256], strides = [1, 1]} : vector<32x256xf32> to vector<8x256xf32>
    %168 = arith.truncf %167 : vector<8x256xf32> to vector<8x256xbf16>
    %169 = arith.truncf %166 : vector<8x256xf32> to vector<8x256xbf16>
    %cst_57 = arith.constant dense<0.000000e+00> : vector<8x8xf32>
    %170 = tpu.matmul %168, %169, %cst_57 {dimension_numbers = #tpu.dot_dimension_numbers<[1], [1], [0], [0], [0, 0, 1, 0], [], []>} : vector<8x256xbf16>, vector<8x256xbf16>, vector<8x8xf32> -> vector<8x8xf32>
    %171 = vector.extract_strided_slice %119 {offsets = [16, 0], sizes = [8, 8], strides = [1, 1]} : vector<32x8xf32> to vector<8x8xf32>
    %172 = vector.extract_strided_slice %127 {offsets = [16, 0], sizes = [8, 256], strides = [1, 1]} : vector<32x256xf32> to vector<8x256xf32>
    %173 = arith.truncf %171 : vector<8x8xf32> to vector<8x8xbf16>
    %174 = arith.truncf %172 : vector<8x256xf32> to vector<8x256xbf16>
    %cst_58 = arith.constant dense<0.000000e+00> : vector<8x256xf32>
    %175 = tpu.matmul %173, %174, %cst_58 {dimension_numbers = #tpu.dot_dimension_numbers<[0], [0], [1], [1], [0, 1, 1, 1], [], []>} : vector<8x8xbf16>, vector<8x256xbf16>, vector<8x256xf32> -> vector<8x256xf32>
    %cst_59 = arith.constant 0.353553385 : f32
    %176 = vector.broadcast %cst_59 : f32 to vector<8x256xf32>
    %177 = arith.mulf %175, %176 : vector<8x256xf32>
    %cst_60 = arith.constant dense<0xFF800000> : vector<8xf32>
    %178 = vector.multi_reduction <maximumf>, %177, %cst_60 [1] : vector<8x256xf32> to vector<8xf32>
    %179 = vector.shape_cast %178 : vector<8xf32> to vector<8x1xf32>
    %180 = vector.broadcast %179 : vector<8x1xf32> to vector<8x256xf32>
    %181 = arith.subf %177, %180 : vector<8x256xf32>
    %182 = math.exp %181 : vector<8x256xf32>
    %cst_61 = arith.constant dense<0.000000e+00> : vector<8xf32>
    %183 = vector.multi_reduction <add>, %182, %cst_61 [1] : vector<8x256xf32> to vector<8xf32>
    %184 = vector.shape_cast %183 : vector<8xf32> to vector<8x1xf32>
    %185 = tpu.reciprocal %184 : vector<8x1xf32> -> vector<8x1xf32>
    %186 = vector.broadcast %185 : vector<8x1xf32> to vector<8x256xf32>
    %187 = arith.mulf %182, %186 : vector<8x256xf32>
    %188 = vector.extract_strided_slice %128 {offsets = [16, 0], sizes = [8, 256], strides = [1, 1]} : vector<32x256xf32> to vector<8x256xf32>
    %189 = arith.truncf %188 : vector<8x256xf32> to vector<8x256xbf16>
    %190 = arith.truncf %187 : vector<8x256xf32> to vector<8x256xbf16>
    %cst_62 = arith.constant dense<0.000000e+00> : vector<8x8xf32>
    %191 = tpu.matmul %189, %190, %cst_62 {dimension_numbers = #tpu.dot_dimension_numbers<[1], [1], [0], [0], [0, 0, 1, 0], [], []>} : vector<8x256xbf16>, vector<8x256xbf16>, vector<8x8xf32> -> vector<8x8xf32>
    %192 = vector.extract_strided_slice %119 {offsets = [24, 0], sizes = [8, 8], strides = [1, 1]} : vector<32x8xf32> to vector<8x8xf32>
    %193 = vector.extract_strided_slice %127 {offsets = [24, 0], sizes = [8, 256], strides = [1, 1]} : vector<32x256xf32> to vector<8x256xf32>
    %194 = arith.truncf %192 : vector<8x8xf32> to vector<8x8xbf16>
    %195 = arith.truncf %193 : vector<8x256xf32> to vector<8x256xbf16>
    %cst_63 = arith.constant dense<0.000000e+00> : vector<8x256xf32>
    %196 = tpu.matmul %194, %195, %cst_63 {dimension_numbers = #tpu.dot_dimension_numbers<[0], [0], [1], [1], [0, 1, 1, 1], [], []>} : vector<8x8xbf16>, vector<8x256xbf16>, vector<8x256xf32> -> vector<8x256xf32>
    %cst_64 = arith.constant 0.353553385 : f32
    %197 = vector.broadcast %cst_64 : f32 to vector<8x256xf32>
    %198 = arith.mulf %196, %197 : vector<8x256xf32>
    %cst_65 = arith.constant dense<0xFF800000> : vector<8xf32>
    %199 = vector.multi_reduction <maximumf>, %198, %cst_65 [1] : vector<8x256xf32> to vector<8xf32>
    %200 = vector.shape_cast %199 : vector<8xf32> to vector<8x1xf32>
    %201 = vector.broadcast %200 : vector<8x1xf32> to vector<8x256xf32>
    %202 = arith.subf %198, %201 : vector<8x256xf32>
    %203 = math.exp %202 : vector<8x256xf32>
    %cst_66 = arith.constant dense<0.000000e+00> : vector<8xf32>
    %204 = vector.multi_reduction <add>, %203, %cst_66 [1] : vector<8x256xf32> to vector<8xf32>
    %205 = vector.shape_cast %204 : vector<8xf32> to vector<8x1xf32>
    %206 = tpu.reciprocal %205 : vector<8x1xf32> -> vector<8x1xf32>
    %207 = vector.broadcast %206 : vector<8x1xf32> to vector<8x256xf32>
    %208 = arith.mulf %203, %207 : vector<8x256xf32>
    %209 = vector.extract_strided_slice %128 {offsets = [24, 0], sizes = [8, 256], strides = [1, 1]} : vector<32x256xf32> to vector<8x256xf32>
    %210 = arith.truncf %209 : vector<8x256xf32> to vector<8x256xbf16>
    %211 = arith.truncf %208 : vector<8x256xf32> to vector<8x256xbf16>
    %cst_67 = arith.constant dense<0.000000e+00> : vector<8x8xf32>
    %212 = tpu.matmul %210, %211, %cst_67 {dimension_numbers = #tpu.dot_dimension_numbers<[1], [1], [0], [0], [0, 0, 1, 0], [], []>} : vector<8x256xbf16>, vector<8x256xbf16>, vector<8x8xf32> -> vector<8x8xf32>
    %213 = tpu.concatenate %149, %170, %191, %212 in 0 : vector<8x8xf32>, vector<8x8xf32>, vector<8x8xf32>, vector<8x8xf32> -> vector<32x8xf32>
    %214 = arith.truncf %213 : vector<32x8xf32> to vector<32x8xbf16>
    %cst_68 = arith.constant dense<0.000000e+00> : vector<8x32xf32>
    %215 = tpu.matmul %214, %10, %cst_68 {dimension_numbers = #tpu.dot_dimension_numbers<[0], [0], [1], [1], [0, 1, 1, 1], [], []>} : vector<32x8xbf16>, vector<32x32xbf16>, vector<8x32xf32> -> vector<8x32xf32>
    %216 = vector.broadcast %11 : vector<1x32xf32> to vector<8x32xf32>
    %217 = arith.addf %215, %216 : vector<8x32xf32>
    %218 = tpu.concatenate %114, %217 in 0 : vector<8x32xf32>, vector<8x32xf32> -> vector<16x32xf32>
    %c0_69 = arith.constant 0 : index
    %c0_70 = arith.constant 0 : index
    %219 = vector.load %arg10[%c0_69, %c0_70] : memref<1x32xf32, #tpu.memory_space<vmem>>, vector<1x32xf32>
    %c0_71 = arith.constant 0 : index
    %c0_72 = arith.constant 0 : index
    %220 = vector.load %arg11[%c0_71, %c0_72] : memref<1x32xf32, #tpu.memory_space<vmem>>, vector<1x32xf32>
    %c0_73 = arith.constant 0 : index
    %c0_74 = arith.constant 0 : index
    %221 = vector.load %arg12[%c0_73, %c0_74] : memref<32x32xbf16, #tpu.memory_space<vmem>>, vector<32x32xbf16>
    %c0_75 = arith.constant 0 : index
    %c0_76 = arith.constant 0 : index
    %222 = vector.load %arg13[%c0_75, %c0_76] : memref<1x32xf32, #tpu.memory_space<vmem>>, vector<1x32xf32>
    %c0_77 = arith.constant 0 : index
    %c0_78 = arith.constant 0 : index
    %223 = vector.load %arg14[%c0_77, %c0_78] : memref<32x32xbf16, #tpu.memory_space<vmem>>, vector<32x32xbf16>
    %c0_79 = arith.constant 0 : index
    %c0_80 = arith.constant 0 : index
    %224 = vector.load %arg15[%c0_79, %c0_80] : memref<1x32xf32, #tpu.memory_space<vmem>>, vector<1x32xf32>
    %c0_81 = arith.constant 0 : index
    %c0_82 = arith.constant 0 : index
    %225 = vector.load %arg16[%c0_81, %c0_82] : memref<1x32xf32, #tpu.memory_space<vmem>>, vector<1x32xf32>
    %c0_83 = arith.constant 0 : index
    %c0_84 = arith.constant 0 : index
    %226 = vector.load %arg17[%c0_83, %c0_84] : memref<1x32xf32, #tpu.memory_space<vmem>>, vector<1x32xf32>
    %cst_85 = arith.constant dense<0.000000e+00> : vector<16xf32>
    %227 = vector.multi_reduction <add>, %218, %cst_85 [1] : vector<16x32xf32> to vector<16xf32>
    %228 = vector.shape_cast %227 : vector<16xf32> to vector<16x1xf32>
    %cst_86 = arith.constant 3.200000e+01 : f32
    %229 = vector.broadcast %cst_86 : f32 to vector<16x1xf32>
    %230 = arith.divf %228, %229 : vector<16x1xf32>
    %231 = vector.broadcast %230 : vector<16x1xf32> to vector<16x32xf32>
    %232 = arith.subf %218, %231 : vector<16x32xf32>
    %233 = arith.mulf %232, %232 : vector<16x32xf32>
    %cst_87 = arith.constant dense<0.000000e+00> : vector<16xf32>
    %234 = vector.multi_reduction <add>, %233, %cst_87 [1] : vector<16x32xf32> to vector<16xf32>
    %235 = vector.shape_cast %234 : vector<16xf32> to vector<16x1xf32>
    %cst_88 = arith.constant 3.200000e+01 : f32
    %236 = vector.broadcast %cst_88 : f32 to vector<16x1xf32>
    %237 = arith.divf %235, %236 : vector<16x1xf32>
    %238 = vector.broadcast %230 : vector<16x1xf32> to vector<16x32xf32>
    %239 = arith.subf %218, %238 : vector<16x32xf32>
    %cst_89 = arith.constant 9.99999974E-6 : f32
    %240 = vector.broadcast %cst_89 : f32 to vector<16x1xf32>
    %241 = arith.addf %237, %240 : vector<16x1xf32>
    %242 = math.rsqrt %241 : vector<16x1xf32>
    %243 = vector.broadcast %242 : vector<16x1xf32> to vector<16x32xf32>
    %244 = arith.mulf %239, %243 : vector<16x32xf32>
    %245 = vector.broadcast %219 : vector<1x32xf32> to vector<16x32xf32>
    %246 = arith.mulf %244, %245 : vector<16x32xf32>
    %247 = vector.broadcast %220 : vector<1x32xf32> to vector<16x32xf32>
    %248 = arith.addf %246, %247 : vector<16x32xf32>
    %249 = arith.addf %248, %4 : vector<16x32xf32>
    %250 = arith.truncf %249 : vector<16x32xf32> to vector<16x32xbf16>
    %cst_90 = arith.constant dense<0.000000e+00> : vector<16x32xf32>
    %251 = tpu.matmul %250, %221, %cst_90 {dimension_numbers = #tpu.dot_dimension_numbers<[1], [0], [0], [1], [0, 0, 1, 1], [], []>} : vector<16x32xbf16>, vector<32x32xbf16>, vector<16x32xf32> -> vector<16x32xf32>
    %252 = vector.broadcast %222 : vector<1x32xf32> to vector<16x32xf32>
    %253 = arith.addf %251, %252 : vector<16x32xf32>
    %cst_91 = arith.constant 5.000000e-01 : f32
    %254 = vector.broadcast %cst_91 : f32 to vector<16x32xf32>
    %255 = arith.mulf %254, %253 : vector<16x32xf32>
    %cst_92 = arith.constant 4.471500e-02 : f32
    %256 = vector.broadcast %cst_92 : f32 to vector<16x32xf32>
    %257 = arith.mulf %256, %253 : vector<16x32xf32>
    %258 = arith.mulf %257, %253 : vector<16x32xf32>
    %259 = arith.mulf %258, %253 : vector<16x32xf32>
    %260 = arith.addf %253, %259 : vector<16x32xf32>
    %cst_93 = arith.constant 0.797884583 : f32
    %261 = vector.broadcast %cst_93 : f32 to vector<16x32xf32>
    %262 = arith.mulf %261, %260 : vector<16x32xf32>
    %263 = math.tanh %262 : vector<16x32xf32>
    %cst_94 = arith.constant 1.000000e+00 : f32
    %264 = vector.broadcast %cst_94 : f32 to vector<16x32xf32>
    %265 = arith.addf %264, %263 : vector<16x32xf32>
    %266 = arith.mulf %255, %265 : vector<16x32xf32>
    %267 = arith.truncf %266 : vector<16x32xf32> to vector<16x32xbf16>
    %cst_95 = arith.constant dense<0.000000e+00> : vector<16x32xf32>
    %268 = tpu.matmul %267, %223, %cst_95 {dimension_numbers = #tpu.dot_dimension_numbers<[1], [0], [0], [1], [0, 0, 1, 1], [], []>} : vector<16x32xbf16>, vector<32x32xbf16>, vector<16x32xf32> -> vector<16x32xf32>
    %269 = vector.broadcast %224 : vector<1x32xf32> to vector<16x32xf32>
    %270 = arith.addf %268, %269 : vector<16x32xf32>
    %cst_96 = arith.constant dense<0.000000e+00> : vector<16xf32>
    %271 = vector.multi_reduction <add>, %270, %cst_96 [1] : vector<16x32xf32> to vector<16xf32>
    %272 = vector.shape_cast %271 : vector<16xf32> to vector<16x1xf32>
    %cst_97 = arith.constant 3.200000e+01 : f32
    %273 = vector.broadcast %cst_97 : f32 to vector<16x1xf32>
    %274 = arith.divf %272, %273 : vector<16x1xf32>
    %275 = vector.broadcast %274 : vector<16x1xf32> to vector<16x32xf32>
    %276 = arith.subf %270, %275 : vector<16x32xf32>
    %277 = arith.mulf %276, %276 : vector<16x32xf32>
    %cst_98 = arith.constant dense<0.000000e+00> : vector<16xf32>
    %278 = vector.multi_reduction <add>, %277, %cst_98 [1] : vector<16x32xf32> to vector<16xf32>
    %279 = vector.shape_cast %278 : vector<16xf32> to vector<16x1xf32>
    %cst_99 = arith.constant 3.200000e+01 : f32
    %280 = vector.broadcast %cst_99 : f32 to vector<16x1xf32>
    %281 = arith.divf %279, %280 : vector<16x1xf32>
    %282 = vector.broadcast %274 : vector<16x1xf32> to vector<16x32xf32>
    %283 = arith.subf %270, %282 : vector<16x32xf32>
    %cst_100 = arith.constant 9.99999974E-6 : f32
    %284 = vector.broadcast %cst_100 : f32 to vector<16x1xf32>
    %285 = arith.addf %281, %284 : vector<16x1xf32>
    %286 = math.rsqrt %285 : vector<16x1xf32>
    %287 = vector.broadcast %286 : vector<16x1xf32> to vector<16x32xf32>
    %288 = arith.mulf %283, %287 : vector<16x32xf32>
    %289 = vector.broadcast %225 : vector<1x32xf32> to vector<16x32xf32>
    %290 = arith.mulf %288, %289 : vector<16x32xf32>
    %291 = vector.broadcast %226 : vector<1x32xf32> to vector<16x32xf32>
    %292 = arith.addf %290, %291 : vector<16x32xf32>
    %293 = arith.addf %292, %249 : vector<16x32xf32>
    %c0_101 = arith.constant 0 : index
    %c0_102 = arith.constant 0 : index
    %c0_103 = arith.constant 0 : index
    %294 = vector.load %arg18[%c0_101, %c0_102, %c0_103] : memref<2x32x96xbf16, #tpu.memory_space<vmem>>, vector<1x32x96xbf16>
    %295 = vector.shape_cast %294 : vector<1x32x96xbf16> to vector<32x96xbf16>
    %c0_104 = arith.constant 0 : index
    %c0_105 = arith.constant 0 : index
    %c0_106 = arith.constant 0 : index
    %296 = vector.load %arg19[%c0_104, %c0_105, %c0_106] : memref<2x96x1xf32, #tpu.memory_space<vmem>>, vector<1x96x1xf32>
    %297 = vector.shape_cast %296 : vector<1x96x1xf32> to vector<96x1xf32>
    %c0_107 = arith.constant 0 : index
    %c0_108 = arith.constant 0 : index
    %c0_109 = arith.constant 0 : index
    %298 = vector.load %arg20[%c0_107, %c0_108, %c0_109] : memref<2x32x32xbf16, #tpu.memory_space<vmem>>, vector<1x32x32xbf16>
    %299 = vector.shape_cast %298 : vector<1x32x32xbf16> to vector<32x32xbf16>
    %c0_110 = arith.constant 0 : index
    %c0_111 = arith.constant 0 : index
    %c0_112 = arith.constant 0 : index
    %300 = vector.load %arg21[%c0_110, %c0_111, %c0_112] : memref<2x1x32xf32, #tpu.memory_space<vmem>>, vector<1x1x32xf32>
    %301 = vector.shape_cast %300 : vector<1x1x32xf32> to vector<1x32xf32>
    %302 = vector.extract_strided_slice %293 {offsets = [0, 0], sizes = [8, 32], strides = [1, 1]} : vector<16x32xf32> to vector<8x32xf32>
    %303 = arith.truncf %302 : vector<8x32xf32> to vector<8x32xbf16>
    %cst_113 = arith.constant dense<0.000000e+00> : vector<96x8xf32>
    %304 = tpu.matmul %295, %303, %cst_113 {dimension_numbers = #tpu.dot_dimension_numbers<[0], [1], [1], [0], [0, 1, 1, 0], [], []>} : vector<32x96xbf16>, vector<8x32xbf16>, vector<96x8xf32> -> vector<96x8xf32>
    %305 = vector.broadcast %297 : vector<96x1xf32> to vector<96x8xf32>
    %306 = arith.addf %304, %305 : vector<96x8xf32>
    %307 = vector.extract_strided_slice %306 {offsets = [0, 0], sizes = [32, 8], strides = [1, 1]} : vector<96x8xf32> to vector<32x8xf32>
    %308 = vector.extract_strided_slice %306 {offsets = [32, 0], sizes = [32, 8], strides = [1, 1]} : vector<96x8xf32> to vector<32x8xf32>
    %309 = vector.extract_strided_slice %306 {offsets = [64, 0], sizes = [32, 8], strides = [1, 1]} : vector<96x8xf32> to vector<32x8xf32>
    %310 = vector.extract_strided_slice %307 {offsets = [0, 0], sizes = [8, 8], strides = [1, 1]} : vector<32x8xf32> to vector<8x8xf32>
    %311 = vector.extract_strided_slice %308 {offsets = [0, 0], sizes = [8, 8], strides = [1, 1]} : vector<32x8xf32> to vector<8x8xf32>
    %312 = arith.truncf %310 : vector<8x8xf32> to vector<8x8xbf16>
    %313 = arith.truncf %311 : vector<8x8xf32> to vector<8x8xbf16>
    %cst_114 = arith.constant dense<0.000000e+00> : vector<8x8xf32>
    %314 = tpu.matmul %312, %313, %cst_114 {dimension_numbers = #tpu.dot_dimension_numbers<[0], [0], [1], [1], [0, 1, 1, 1], [], []>} : vector<8x8xbf16>, vector<8x8xbf16>, vector<8x8xf32> -> vector<8x8xf32>
    %cst_115 = arith.constant 0.353553385 : f32
    %315 = vector.broadcast %cst_115 : f32 to vector<8x8xf32>
    %316 = arith.mulf %314, %315 : vector<8x8xf32>
    %cst_116 = arith.constant dense<0xFF800000> : vector<8xf32>
    %317 = vector.multi_reduction <maximumf>, %316, %cst_116 [1] : vector<8x8xf32> to vector<8xf32>
    %318 = vector.shape_cast %317 : vector<8xf32> to vector<8x1xf32>
    %319 = vector.broadcast %318 : vector<8x1xf32> to vector<8x8xf32>
    %320 = arith.subf %316, %319 : vector<8x8xf32>
    %321 = math.exp %320 : vector<8x8xf32>
    %cst_117 = arith.constant dense<0.000000e+00> : vector<8xf32>
    %322 = vector.multi_reduction <add>, %321, %cst_117 [1] : vector<8x8xf32> to vector<8xf32>
    %323 = vector.shape_cast %322 : vector<8xf32> to vector<8x1xf32>
    %324 = tpu.reciprocal %323 : vector<8x1xf32> -> vector<8x1xf32>
    %325 = vector.broadcast %324 : vector<8x1xf32> to vector<8x8xf32>
    %326 = arith.mulf %321, %325 : vector<8x8xf32>
    %327 = vector.extract_strided_slice %309 {offsets = [0, 0], sizes = [8, 8], strides = [1, 1]} : vector<32x8xf32> to vector<8x8xf32>
    %328 = arith.truncf %327 : vector<8x8xf32> to vector<8x8xbf16>
    %329 = arith.truncf %326 : vector<8x8xf32> to vector<8x8xbf16>
    %cst_118 = arith.constant dense<0.000000e+00> : vector<8x8xf32>
    %330 = tpu.matmul %328, %329, %cst_118 {dimension_numbers = #tpu.dot_dimension_numbers<[1], [1], [0], [0], [0, 0, 1, 0], [], []>} : vector<8x8xbf16>, vector<8x8xbf16>, vector<8x8xf32> -> vector<8x8xf32>
    %331 = vector.extract_strided_slice %307 {offsets = [8, 0], sizes = [8, 8], strides = [1, 1]} : vector<32x8xf32> to vector<8x8xf32>
    %332 = vector.extract_strided_slice %308 {offsets = [8, 0], sizes = [8, 8], strides = [1, 1]} : vector<32x8xf32> to vector<8x8xf32>
    %333 = arith.truncf %331 : vector<8x8xf32> to vector<8x8xbf16>
    %334 = arith.truncf %332 : vector<8x8xf32> to vector<8x8xbf16>
    %cst_119 = arith.constant dense<0.000000e+00> : vector<8x8xf32>
    %335 = tpu.matmul %333, %334, %cst_119 {dimension_numbers = #tpu.dot_dimension_numbers<[0], [0], [1], [1], [0, 1, 1, 1], [], []>} : vector<8x8xbf16>, vector<8x8xbf16>, vector<8x8xf32> -> vector<8x8xf32>
    %cst_120 = arith.constant 0.353553385 : f32
    %336 = vector.broadcast %cst_120 : f32 to vector<8x8xf32>
    %337 = arith.mulf %335, %336 : vector<8x8xf32>
    %cst_121 = arith.constant dense<0xFF800000> : vector<8xf32>
    %338 = vector.multi_reduction <maximumf>, %337, %cst_121 [1] : vector<8x8xf32> to vector<8xf32>
    %339 = vector.shape_cast %338 : vector<8xf32> to vector<8x1xf32>
    %340 = vector.broadcast %339 : vector<8x1xf32> to vector<8x8xf32>
    %341 = arith.subf %337, %340 : vector<8x8xf32>
    %342 = math.exp %341 : vector<8x8xf32>
    %cst_122 = arith.constant dense<0.000000e+00> : vector<8xf32>
    %343 = vector.multi_reduction <add>, %342, %cst_122 [1] : vector<8x8xf32> to vector<8xf32>
    %344 = vector.shape_cast %343 : vector<8xf32> to vector<8x1xf32>
    %345 = tpu.reciprocal %344 : vector<8x1xf32> -> vector<8x1xf32>
    %346 = vector.broadcast %345 : vector<8x1xf32> to vector<8x8xf32>
    %347 = arith.mulf %342, %346 : vector<8x8xf32>
    %348 = vector.extract_strided_slice %309 {offsets = [8, 0], sizes = [8, 8], strides = [1, 1]} : vector<32x8xf32> to vector<8x8xf32>
    %349 = arith.truncf %348 : vector<8x8xf32> to vector<8x8xbf16>
    %350 = arith.truncf %347 : vector<8x8xf32> to vector<8x8xbf16>
    %cst_123 = arith.constant dense<0.000000e+00> : vector<8x8xf32>
    %351 = tpu.matmul %349, %350, %cst_123 {dimension_numbers = #tpu.dot_dimension_numbers<[1], [1], [0], [0], [0, 0, 1, 0], [], []>} : vector<8x8xbf16>, vector<8x8xbf16>, vector<8x8xf32> -> vector<8x8xf32>
    %352 = vector.extract_strided_slice %307 {offsets = [16, 0], sizes = [8, 8], strides = [1, 1]} : vector<32x8xf32> to vector<8x8xf32>
    %353 = vector.extract_strided_slice %308 {offsets = [16, 0], sizes = [8, 8], strides = [1, 1]} : vector<32x8xf32> to vector<8x8xf32>
    %354 = arith.truncf %352 : vector<8x8xf32> to vector<8x8xbf16>
    %355 = arith.truncf %353 : vector<8x8xf32> to vector<8x8xbf16>
    %cst_124 = arith.constant dense<0.000000e+00> : vector<8x8xf32>
    %356 = tpu.matmul %354, %355, %cst_124 {dimension_numbers = #tpu.dot_dimension_numbers<[0], [0], [1], [1], [0, 1, 1, 1], [], []>} : vector<8x8xbf16>, vector<8x8xbf16>, vector<8x8xf32> -> vector<8x8xf32>
    %cst_125 = arith.constant 0.353553385 : f32
    %357 = vector.broadcast %cst_125 : f32 to vector<8x8xf32>
    %358 = arith.mulf %356, %357 : vector<8x8xf32>
    %cst_126 = arith.constant dense<0xFF800000> : vector<8xf32>
    %359 = vector.multi_reduction <maximumf>, %358, %cst_126 [1] : vector<8x8xf32> to vector<8xf32>
    %360 = vector.shape_cast %359 : vector<8xf32> to vector<8x1xf32>
    %361 = vector.broadcast %360 : vector<8x1xf32> to vector<8x8xf32>
    %362 = arith.subf %358, %361 : vector<8x8xf32>
    %363 = math.exp %362 : vector<8x8xf32>
    %cst_127 = arith.constant dense<0.000000e+00> : vector<8xf32>
    %364 = vector.multi_reduction <add>, %363, %cst_127 [1] : vector<8x8xf32> to vector<8xf32>
    %365 = vector.shape_cast %364 : vector<8xf32> to vector<8x1xf32>
    %366 = tpu.reciprocal %365 : vector<8x1xf32> -> vector<8x1xf32>
    %367 = vector.broadcast %366 : vector<8x1xf32> to vector<8x8xf32>
    %368 = arith.mulf %363, %367 : vector<8x8xf32>
    %369 = vector.extract_strided_slice %309 {offsets = [16, 0], sizes = [8, 8], strides = [1, 1]} : vector<32x8xf32> to vector<8x8xf32>
    %370 = arith.truncf %369 : vector<8x8xf32> to vector<8x8xbf16>
    %371 = arith.truncf %368 : vector<8x8xf32> to vector<8x8xbf16>
    %cst_128 = arith.constant dense<0.000000e+00> : vector<8x8xf32>
    %372 = tpu.matmul %370, %371, %cst_128 {dimension_numbers = #tpu.dot_dimension_numbers<[1], [1], [0], [0], [0, 0, 1, 0], [], []>} : vector<8x8xbf16>, vector<8x8xbf16>, vector<8x8xf32> -> vector<8x8xf32>
    %373 = vector.extract_strided_slice %307 {offsets = [24, 0], sizes = [8, 8], strides = [1, 1]} : vector<32x8xf32> to vector<8x8xf32>
    %374 = vector.extract_strided_slice %308 {offsets = [24, 0], sizes = [8, 8], strides = [1, 1]} : vector<32x8xf32> to vector<8x8xf32>
    %375 = arith.truncf %373 : vector<8x8xf32> to vector<8x8xbf16>
    %376 = arith.truncf %374 : vector<8x8xf32> to vector<8x8xbf16>
    %cst_129 = arith.constant dense<0.000000e+00> : vector<8x8xf32>
    %377 = tpu.matmul %375, %376, %cst_129 {dimension_numbers = #tpu.dot_dimension_numbers<[0], [0], [1], [1], [0, 1, 1, 1], [], []>} : vector<8x8xbf16>, vector<8x8xbf16>, vector<8x8xf32> -> vector<8x8xf32>
    %cst_130 = arith.constant 0.353553385 : f32
    %378 = vector.broadcast %cst_130 : f32 to vector<8x8xf32>
    %379 = arith.mulf %377, %378 : vector<8x8xf32>
    %cst_131 = arith.constant dense<0xFF800000> : vector<8xf32>
    %380 = vector.multi_reduction <maximumf>, %379, %cst_131 [1] : vector<8x8xf32> to vector<8xf32>
    %381 = vector.shape_cast %380 : vector<8xf32> to vector<8x1xf32>
    %382 = vector.broadcast %381 : vector<8x1xf32> to vector<8x8xf32>
    %383 = arith.subf %379, %382 : vector<8x8xf32>
    %384 = math.exp %383 : vector<8x8xf32>
    %cst_132 = arith.constant dense<0.000000e+00> : vector<8xf32>
    %385 = vector.multi_reduction <add>, %384, %cst_132 [1] : vector<8x8xf32> to vector<8xf32>
    %386 = vector.shape_cast %385 : vector<8xf32> to vector<8x1xf32>
    %387 = tpu.reciprocal %386 : vector<8x1xf32> -> vector<8x1xf32>
    %388 = vector.broadcast %387 : vector<8x1xf32> to vector<8x8xf32>
    %389 = arith.mulf %384, %388 : vector<8x8xf32>
    %390 = vector.extract_strided_slice %309 {offsets = [24, 0], sizes = [8, 8], strides = [1, 1]} : vector<32x8xf32> to vector<8x8xf32>
    %391 = arith.truncf %390 : vector<8x8xf32> to vector<8x8xbf16>
    %392 = arith.truncf %389 : vector<8x8xf32> to vector<8x8xbf16>
    %cst_133 = arith.constant dense<0.000000e+00> : vector<8x8xf32>
    %393 = tpu.matmul %391, %392, %cst_133 {dimension_numbers = #tpu.dot_dimension_numbers<[1], [1], [0], [0], [0, 0, 1, 0], [], []>} : vector<8x8xbf16>, vector<8x8xbf16>, vector<8x8xf32> -> vector<8x8xf32>
    %394 = tpu.concatenate %330, %351, %372, %393 in 0 : vector<8x8xf32>, vector<8x8xf32>, vector<8x8xf32>, vector<8x8xf32> -> vector<32x8xf32>
    %395 = arith.truncf %394 : vector<32x8xf32> to vector<32x8xbf16>
    %cst_134 = arith.constant dense<0.000000e+00> : vector<8x32xf32>
    %396 = tpu.matmul %395, %299, %cst_134 {dimension_numbers = #tpu.dot_dimension_numbers<[0], [0], [1], [1], [0, 1, 1, 1], [], []>} : vector<32x8xbf16>, vector<32x32xbf16>, vector<8x32xf32> -> vector<8x32xf32>
    %397 = vector.broadcast %301 : vector<1x32xf32> to vector<8x32xf32>
    %398 = arith.addf %396, %397 : vector<8x32xf32>
    %399 = vector.extract_strided_slice %293 {offsets = [8, 0], sizes = [8, 32], strides = [1, 1]} : vector<16x32xf32> to vector<8x32xf32>
    %400 = arith.truncf %399 : vector<8x32xf32> to vector<8x32xbf16>
    %cst_135 = arith.constant dense<0.000000e+00> : vector<96x8xf32>
    %401 = tpu.matmul %295, %400, %cst_135 {dimension_numbers = #tpu.dot_dimension_numbers<[0], [1], [1], [0], [0, 1, 1, 0], [], []>} : vector<32x96xbf16>, vector<8x32xbf16>, vector<96x8xf32> -> vector<96x8xf32>
    %402 = vector.broadcast %297 : vector<96x1xf32> to vector<96x8xf32>
    %403 = arith.addf %401, %402 : vector<96x8xf32>
    %404 = vector.extract_strided_slice %403 {offsets = [0, 0], sizes = [32, 8], strides = [1, 1]} : vector<96x8xf32> to vector<32x8xf32>
    %405 = vector.extract_strided_slice %403 {offsets = [32, 0], sizes = [32, 8], strides = [1, 1]} : vector<96x8xf32> to vector<32x8xf32>
    %406 = vector.extract_strided_slice %403 {offsets = [64, 0], sizes = [32, 8], strides = [1, 1]} : vector<96x8xf32> to vector<32x8xf32>
    %407 = vector.extract_strided_slice %404 {offsets = [0, 0], sizes = [8, 8], strides = [1, 1]} : vector<32x8xf32> to vector<8x8xf32>
    %408 = vector.extract_strided_slice %405 {offsets = [0, 0], sizes = [8, 8], strides = [1, 1]} : vector<32x8xf32> to vector<8x8xf32>
    %409 = arith.truncf %407 : vector<8x8xf32> to vector<8x8xbf16>
    %410 = arith.truncf %408 : vector<8x8xf32> to vector<8x8xbf16>
    %cst_136 = arith.constant dense<0.000000e+00> : vector<8x8xf32>
    %411 = tpu.matmul %409, %410, %cst_136 {dimension_numbers = #tpu.dot_dimension_numbers<[0], [0], [1], [1], [0, 1, 1, 1], [], []>} : vector<8x8xbf16>, vector<8x8xbf16>, vector<8x8xf32> -> vector<8x8xf32>
    %cst_137 = arith.constant 0.353553385 : f32
    %412 = vector.broadcast %cst_137 : f32 to vector<8x8xf32>
    %413 = arith.mulf %411, %412 : vector<8x8xf32>
    %cst_138 = arith.constant dense<0xFF800000> : vector<8xf32>
    %414 = vector.multi_reduction <maximumf>, %413, %cst_138 [1] : vector<8x8xf32> to vector<8xf32>
    %415 = vector.shape_cast %414 : vector<8xf32> to vector<8x1xf32>
    %416 = vector.broadcast %415 : vector<8x1xf32> to vector<8x8xf32>
    %417 = arith.subf %413, %416 : vector<8x8xf32>
    %418 = math.exp %417 : vector<8x8xf32>
    %cst_139 = arith.constant dense<0.000000e+00> : vector<8xf32>
    %419 = vector.multi_reduction <add>, %418, %cst_139 [1] : vector<8x8xf32> to vector<8xf32>
    %420 = vector.shape_cast %419 : vector<8xf32> to vector<8x1xf32>
    %421 = tpu.reciprocal %420 : vector<8x1xf32> -> vector<8x1xf32>
    %422 = vector.broadcast %421 : vector<8x1xf32> to vector<8x8xf32>
    %423 = arith.mulf %418, %422 : vector<8x8xf32>
    %424 = vector.extract_strided_slice %406 {offsets = [0, 0], sizes = [8, 8], strides = [1, 1]} : vector<32x8xf32> to vector<8x8xf32>
    %425 = arith.truncf %424 : vector<8x8xf32> to vector<8x8xbf16>
    %426 = arith.truncf %423 : vector<8x8xf32> to vector<8x8xbf16>
    %cst_140 = arith.constant dense<0.000000e+00> : vector<8x8xf32>
    %427 = tpu.matmul %425, %426, %cst_140 {dimension_numbers = #tpu.dot_dimension_numbers<[1], [1], [0], [0], [0, 0, 1, 0], [], []>} : vector<8x8xbf16>, vector<8x8xbf16>, vector<8x8xf32> -> vector<8x8xf32>
    %428 = vector.extract_strided_slice %404 {offsets = [8, 0], sizes = [8, 8], strides = [1, 1]} : vector<32x8xf32> to vector<8x8xf32>
    %429 = vector.extract_strided_slice %405 {offsets = [8, 0], sizes = [8, 8], strides = [1, 1]} : vector<32x8xf32> to vector<8x8xf32>
    %430 = arith.truncf %428 : vector<8x8xf32> to vector<8x8xbf16>
    %431 = arith.truncf %429 : vector<8x8xf32> to vector<8x8xbf16>
    %cst_141 = arith.constant dense<0.000000e+00> : vector<8x8xf32>
    %432 = tpu.matmul %430, %431, %cst_141 {dimension_numbers = #tpu.dot_dimension_numbers<[0], [0], [1], [1], [0, 1, 1, 1], [], []>} : vector<8x8xbf16>, vector<8x8xbf16>, vector<8x8xf32> -> vector<8x8xf32>
    %cst_142 = arith.constant 0.353553385 : f32
    %433 = vector.broadcast %cst_142 : f32 to vector<8x8xf32>
    %434 = arith.mulf %432, %433 : vector<8x8xf32>
    %cst_143 = arith.constant dense<0xFF800000> : vector<8xf32>
    %435 = vector.multi_reduction <maximumf>, %434, %cst_143 [1] : vector<8x8xf32> to vector<8xf32>
    %436 = vector.shape_cast %435 : vector<8xf32> to vector<8x1xf32>
    %437 = vector.broadcast %436 : vector<8x1xf32> to vector<8x8xf32>
    %438 = arith.subf %434, %437 : vector<8x8xf32>
    %439 = math.exp %438 : vector<8x8xf32>
    %cst_144 = arith.constant dense<0.000000e+00> : vector<8xf32>
    %440 = vector.multi_reduction <add>, %439, %cst_144 [1] : vector<8x8xf32> to vector<8xf32>
    %441 = vector.shape_cast %440 : vector<8xf32> to vector<8x1xf32>
    %442 = tpu.reciprocal %441 : vector<8x1xf32> -> vector<8x1xf32>
    %443 = vector.broadcast %442 : vector<8x1xf32> to vector<8x8xf32>
    %444 = arith.mulf %439, %443 : vector<8x8xf32>
    %445 = vector.extract_strided_slice %406 {offsets = [8, 0], sizes = [8, 8], strides = [1, 1]} : vector<32x8xf32> to vector<8x8xf32>
    %446 = arith.truncf %445 : vector<8x8xf32> to vector<8x8xbf16>
    %447 = arith.truncf %444 : vector<8x8xf32> to vector<8x8xbf16>
    %cst_145 = arith.constant dense<0.000000e+00> : vector<8x8xf32>
    %448 = tpu.matmul %446, %447, %cst_145 {dimension_numbers = #tpu.dot_dimension_numbers<[1], [1], [0], [0], [0, 0, 1, 0], [], []>} : vector<8x8xbf16>, vector<8x8xbf16>, vector<8x8xf32> -> vector<8x8xf32>
    %449 = vector.extract_strided_slice %404 {offsets = [16, 0], sizes = [8, 8], strides = [1, 1]} : vector<32x8xf32> to vector<8x8xf32>
    %450 = vector.extract_strided_slice %405 {offsets = [16, 0], sizes = [8, 8], strides = [1, 1]} : vector<32x8xf32> to vector<8x8xf32>
    %451 = arith.truncf %449 : vector<8x8xf32> to vector<8x8xbf16>
    %452 = arith.truncf %450 : vector<8x8xf32> to vector<8x8xbf16>
    %cst_146 = arith.constant dense<0.000000e+00> : vector<8x8xf32>
    %453 = tpu.matmul %451, %452, %cst_146 {dimension_numbers = #tpu.dot_dimension_numbers<[0], [0], [1], [1], [0, 1, 1, 1], [], []>} : vector<8x8xbf16>, vector<8x8xbf16>, vector<8x8xf32> -> vector<8x8xf32>
    %cst_147 = arith.constant 0.353553385 : f32
    %454 = vector.broadcast %cst_147 : f32 to vector<8x8xf32>
    %455 = arith.mulf %453, %454 : vector<8x8xf32>
    %cst_148 = arith.constant dense<0xFF800000> : vector<8xf32>
    %456 = vector.multi_reduction <maximumf>, %455, %cst_148 [1] : vector<8x8xf32> to vector<8xf32>
    %457 = vector.shape_cast %456 : vector<8xf32> to vector<8x1xf32>
    %458 = vector.broadcast %457 : vector<8x1xf32> to vector<8x8xf32>
    %459 = arith.subf %455, %458 : vector<8x8xf32>
    %460 = math.exp %459 : vector<8x8xf32>
    %cst_149 = arith.constant dense<0.000000e+00> : vector<8xf32>
    %461 = vector.multi_reduction <add>, %460, %cst_149 [1] : vector<8x8xf32> to vector<8xf32>
    %462 = vector.shape_cast %461 : vector<8xf32> to vector<8x1xf32>
    %463 = tpu.reciprocal %462 : vector<8x1xf32> -> vector<8x1xf32>
    %464 = vector.broadcast %463 : vector<8x1xf32> to vector<8x8xf32>
    %465 = arith.mulf %460, %464 : vector<8x8xf32>
    %466 = vector.extract_strided_slice %406 {offsets = [16, 0], sizes = [8, 8], strides = [1, 1]} : vector<32x8xf32> to vector<8x8xf32>
    %467 = arith.truncf %466 : vector<8x8xf32> to vector<8x8xbf16>
    %468 = arith.truncf %465 : vector<8x8xf32> to vector<8x8xbf16>
    %cst_150 = arith.constant dense<0.000000e+00> : vector<8x8xf32>
    %469 = tpu.matmul %467, %468, %cst_150 {dimension_numbers = #tpu.dot_dimension_numbers<[1], [1], [0], [0], [0, 0, 1, 0], [], []>} : vector<8x8xbf16>, vector<8x8xbf16>, vector<8x8xf32> -> vector<8x8xf32>
    %470 = vector.extract_strided_slice %404 {offsets = [24, 0], sizes = [8, 8], strides = [1, 1]} : vector<32x8xf32> to vector<8x8xf32>
    %471 = vector.extract_strided_slice %405 {offsets = [24, 0], sizes = [8, 8], strides = [1, 1]} : vector<32x8xf32> to vector<8x8xf32>
    %472 = arith.truncf %470 : vector<8x8xf32> to vector<8x8xbf16>
    %473 = arith.truncf %471 : vector<8x8xf32> to vector<8x8xbf16>
    %cst_151 = arith.constant dense<0.000000e+00> : vector<8x8xf32>
    %474 = tpu.matmul %472, %473, %cst_151 {dimension_numbers = #tpu.dot_dimension_numbers<[0], [0], [1], [1], [0, 1, 1, 1], [], []>} : vector<8x8xbf16>, vector<8x8xbf16>, vector<8x8xf32> -> vector<8x8xf32>
    %cst_152 = arith.constant 0.353553385 : f32
    %475 = vector.broadcast %cst_152 : f32 to vector<8x8xf32>
    %476 = arith.mulf %474, %475 : vector<8x8xf32>
    %cst_153 = arith.constant dense<0xFF800000> : vector<8xf32>
    %477 = vector.multi_reduction <maximumf>, %476, %cst_153 [1] : vector<8x8xf32> to vector<8xf32>
    %478 = vector.shape_cast %477 : vector<8xf32> to vector<8x1xf32>
    %479 = vector.broadcast %478 : vector<8x1xf32> to vector<8x8xf32>
    %480 = arith.subf %476, %479 : vector<8x8xf32>
    %481 = math.exp %480 : vector<8x8xf32>
    %cst_154 = arith.constant dense<0.000000e+00> : vector<8xf32>
    %482 = vector.multi_reduction <add>, %481, %cst_154 [1] : vector<8x8xf32> to vector<8xf32>
    %483 = vector.shape_cast %482 : vector<8xf32> to vector<8x1xf32>
    %484 = tpu.reciprocal %483 : vector<8x1xf32> -> vector<8x1xf32>
    %485 = vector.broadcast %484 : vector<8x1xf32> to vector<8x8xf32>
    %486 = arith.mulf %481, %485 : vector<8x8xf32>
    %487 = vector.extract_strided_slice %406 {offsets = [24, 0], sizes = [8, 8], strides = [1, 1]} : vector<32x8xf32> to vector<8x8xf32>
    %488 = arith.truncf %487 : vector<8x8xf32> to vector<8x8xbf16>
    %489 = arith.truncf %486 : vector<8x8xf32> to vector<8x8xbf16>
    %cst_155 = arith.constant dense<0.000000e+00> : vector<8x8xf32>
    %490 = tpu.matmul %488, %489, %cst_155 {dimension_numbers = #tpu.dot_dimension_numbers<[1], [1], [0], [0], [0, 0, 1, 0], [], []>} : vector<8x8xbf16>, vector<8x8xbf16>, vector<8x8xf32> -> vector<8x8xf32>
    %491 = tpu.concatenate %427, %448, %469, %490 in 0 : vector<8x8xf32>, vector<8x8xf32>, vector<8x8xf32>, vector<8x8xf32> -> vector<32x8xf32>
    %492 = arith.truncf %491 : vector<32x8xf32> to vector<32x8xbf16>
    %cst_156 = arith.constant dense<0.000000e+00> : vector<8x32xf32>
    %493 = tpu.matmul %492, %299, %cst_156 {dimension_numbers = #tpu.dot_dimension_numbers<[0], [0], [1], [1], [0, 1, 1, 1], [], []>} : vector<32x8xbf16>, vector<32x32xbf16>, vector<8x32xf32> -> vector<8x32xf32>
    %494 = vector.broadcast %301 : vector<1x32xf32> to vector<8x32xf32>
    %495 = arith.addf %493, %494 : vector<8x32xf32>
    %496 = tpu.concatenate %398, %495 in 0 : vector<8x32xf32>, vector<8x32xf32> -> vector<16x32xf32>
    %c0_157 = arith.constant 0 : index
    %c0_158 = arith.constant 0 : index
    %c0_159 = arith.constant 0 : index
    %497 = vector.load %arg22[%c0_157, %c0_158, %c0_159] : memref<2x1x32xf32, #tpu.memory_space<vmem>>, vector<1x1x32xf32>
    %498 = vector.shape_cast %497 : vector<1x1x32xf32> to vector<1x32xf32>
    %c0_160 = arith.constant 0 : index
    %c0_161 = arith.constant 0 : index
    %c0_162 = arith.constant 0 : index
    %499 = vector.load %arg23[%c0_160, %c0_161, %c0_162] : memref<2x1x32xf32, #tpu.memory_space<vmem>>, vector<1x1x32xf32>
    %500 = vector.shape_cast %499 : vector<1x1x32xf32> to vector<1x32xf32>
    %c0_163 = arith.constant 0 : index
    %c0_164 = arith.constant 0 : index
    %c0_165 = arith.constant 0 : index
    %501 = vector.load %arg24[%c0_163, %c0_164, %c0_165] : memref<2x32x32xbf16, #tpu.memory_space<vmem>>, vector<1x32x32xbf16>
    %502 = vector.shape_cast %501 : vector<1x32x32xbf16> to vector<32x32xbf16>
    %c0_166 = arith.constant 0 : index
    %c0_167 = arith.constant 0 : index
    %c0_168 = arith.constant 0 : index
    %503 = vector.load %arg25[%c0_166, %c0_167, %c0_168] : memref<2x1x32xf32, #tpu.memory_space<vmem>>, vector<1x1x32xf32>
    %504 = vector.shape_cast %503 : vector<1x1x32xf32> to vector<1x32xf32>
    %c0_169 = arith.constant 0 : index
    %c0_170 = arith.constant 0 : index
    %c0_171 = arith.constant 0 : index
    %505 = vector.load %arg26[%c0_169, %c0_170, %c0_171] : memref<2x32x32xbf16, #tpu.memory_space<vmem>>, vector<1x32x32xbf16>
    %506 = vector.shape_cast %505 : vector<1x32x32xbf16> to vector<32x32xbf16>
    %c0_172 = arith.constant 0 : index
    %c0_173 = arith.constant 0 : index
    %c0_174 = arith.constant 0 : index
    %507 = vector.load %arg27[%c0_172, %c0_173, %c0_174] : memref<2x1x32xf32, #tpu.memory_space<vmem>>, vector<1x1x32xf32>
    %508 = vector.shape_cast %507 : vector<1x1x32xf32> to vector<1x32xf32>
    %c0_175 = arith.constant 0 : index
    %c0_176 = arith.constant 0 : index
    %c0_177 = arith.constant 0 : index
    %509 = vector.load %arg28[%c0_175, %c0_176, %c0_177] : memref<2x1x32xf32, #tpu.memory_space<vmem>>, vector<1x1x32xf32>
    %510 = vector.shape_cast %509 : vector<1x1x32xf32> to vector<1x32xf32>
    %c0_178 = arith.constant 0 : index
    %c0_179 = arith.constant 0 : index
    %c0_180 = arith.constant 0 : index
    %511 = vector.load %arg29[%c0_178, %c0_179, %c0_180] : memref<2x1x32xf32, #tpu.memory_space<vmem>>, vector<1x1x32xf32>
    %512 = vector.shape_cast %511 : vector<1x1x32xf32> to vector<1x32xf32>
    %cst_181 = arith.constant dense<0.000000e+00> : vector<16xf32>
    %513 = vector.multi_reduction <add>, %496, %cst_181 [1] : vector<16x32xf32> to vector<16xf32>
    %514 = vector.shape_cast %513 : vector<16xf32> to vector<16x1xf32>
    %cst_182 = arith.constant 3.200000e+01 : f32
    %515 = vector.broadcast %cst_182 : f32 to vector<16x1xf32>
    %516 = arith.divf %514, %515 : vector<16x1xf32>
    %517 = vector.broadcast %516 : vector<16x1xf32> to vector<16x32xf32>
    %518 = arith.subf %496, %517 : vector<16x32xf32>
    %519 = arith.mulf %518, %518 : vector<16x32xf32>
    %cst_183 = arith.constant dense<0.000000e+00> : vector<16xf32>
    %520 = vector.multi_reduction <add>, %519, %cst_183 [1] : vector<16x32xf32> to vector<16xf32>
    %521 = vector.shape_cast %520 : vector<16xf32> to vector<16x1xf32>
    %cst_184 = arith.constant 3.200000e+01 : f32
    %522 = vector.broadcast %cst_184 : f32 to vector<16x1xf32>
    %523 = arith.divf %521, %522 : vector<16x1xf32>
    %524 = vector.broadcast %516 : vector<16x1xf32> to vector<16x32xf32>
    %525 = arith.subf %496, %524 : vector<16x32xf32>
    %cst_185 = arith.constant 9.99999974E-6 : f32
    %526 = vector.broadcast %cst_185 : f32 to vector<16x1xf32>
    %527 = arith.addf %523, %526 : vector<16x1xf32>
    %528 = math.rsqrt %527 : vector<16x1xf32>
    %529 = vector.broadcast %528 : vector<16x1xf32> to vector<16x32xf32>
    %530 = arith.mulf %525, %529 : vector<16x32xf32>
    %531 = vector.broadcast %498 : vector<1x32xf32> to vector<16x32xf32>
    %532 = arith.mulf %530, %531 : vector<16x32xf32>
    %533 = vector.broadcast %500 : vector<1x32xf32> to vector<16x32xf32>
    %534 = arith.addf %532, %533 : vector<16x32xf32>
    %535 = arith.addf %534, %293 : vector<16x32xf32>
    %536 = arith.truncf %535 : vector<16x32xf32> to vector<16x32xbf16>
    %cst_186 = arith.constant dense<0.000000e+00> : vector<16x32xf32>
    %537 = tpu.matmul %536, %502, %cst_186 {dimension_numbers = #tpu.dot_dimension_numbers<[1], [0], [0], [1], [0, 0, 1, 1], [], []>} : vector<16x32xbf16>, vector<32x32xbf16>, vector<16x32xf32> -> vector<16x32xf32>
    %538 = vector.broadcast %504 : vector<1x32xf32> to vector<16x32xf32>
    %539 = arith.addf %537, %538 : vector<16x32xf32>
    %cst_187 = arith.constant 5.000000e-01 : f32
    %540 = vector.broadcast %cst_187 : f32 to vector<16x32xf32>
    %541 = arith.mulf %540, %539 : vector<16x32xf32>
    %cst_188 = arith.constant 4.471500e-02 : f32
    %542 = vector.broadcast %cst_188 : f32 to vector<16x32xf32>
    %543 = arith.mulf %542, %539 : vector<16x32xf32>
    %544 = arith.mulf %543, %539 : vector<16x32xf32>
    %545 = arith.mulf %544, %539 : vector<16x32xf32>
    %546 = arith.addf %539, %545 : vector<16x32xf32>
    %cst_189 = arith.constant 0.797884583 : f32
    %547 = vector.broadcast %cst_189 : f32 to vector<16x32xf32>
    %548 = arith.mulf %547, %546 : vector<16x32xf32>
    %549 = math.tanh %548 : vector<16x32xf32>
    %cst_190 = arith.constant 1.000000e+00 : f32
    %550 = vector.broadcast %cst_190 : f32 to vector<16x32xf32>
    %551 = arith.addf %550, %549 : vector<16x32xf32>
    %552 = arith.mulf %541, %551 : vector<16x32xf32>
    %553 = arith.truncf %552 : vector<16x32xf32> to vector<16x32xbf16>
    %cst_191 = arith.constant dense<0.000000e+00> : vector<16x32xf32>
    %554 = tpu.matmul %553, %506, %cst_191 {dimension_numbers = #tpu.dot_dimension_numbers<[1], [0], [0], [1], [0, 0, 1, 1], [], []>} : vector<16x32xbf16>, vector<32x32xbf16>, vector<16x32xf32> -> vector<16x32xf32>
    %555 = vector.broadcast %508 : vector<1x32xf32> to vector<16x32xf32>
    %556 = arith.addf %554, %555 : vector<16x32xf32>
    %cst_192 = arith.constant dense<0.000000e+00> : vector<16xf32>
    %557 = vector.multi_reduction <add>, %556, %cst_192 [1] : vector<16x32xf32> to vector<16xf32>
    %558 = vector.shape_cast %557 : vector<16xf32> to vector<16x1xf32>
    %cst_193 = arith.constant 3.200000e+01 : f32
    %559 = vector.broadcast %cst_193 : f32 to vector<16x1xf32>
    %560 = arith.divf %558, %559 : vector<16x1xf32>
    %561 = vector.broadcast %560 : vector<16x1xf32> to vector<16x32xf32>
    %562 = arith.subf %556, %561 : vector<16x32xf32>
    %563 = arith.mulf %562, %562 : vector<16x32xf32>
    %cst_194 = arith.constant dense<0.000000e+00> : vector<16xf32>
    %564 = vector.multi_reduction <add>, %563, %cst_194 [1] : vector<16x32xf32> to vector<16xf32>
    %565 = vector.shape_cast %564 : vector<16xf32> to vector<16x1xf32>
    %cst_195 = arith.constant 3.200000e+01 : f32
    %566 = vector.broadcast %cst_195 : f32 to vector<16x1xf32>
    %567 = arith.divf %565, %566 : vector<16x1xf32>
    %568 = vector.broadcast %560 : vector<16x1xf32> to vector<16x32xf32>
    %569 = arith.subf %556, %568 : vector<16x32xf32>
    %cst_196 = arith.constant 9.99999974E-6 : f32
    %570 = vector.broadcast %cst_196 : f32 to vector<16x1xf32>
    %571 = arith.addf %567, %570 : vector<16x1xf32>
    %572 = math.rsqrt %571 : vector<16x1xf32>
    %573 = vector.broadcast %572 : vector<16x1xf32> to vector<16x32xf32>
    %574 = arith.mulf %569, %573 : vector<16x32xf32>
    %575 = vector.broadcast %510 : vector<1x32xf32> to vector<16x32xf32>
    %576 = arith.mulf %574, %575 : vector<16x32xf32>
    %577 = vector.broadcast %512 : vector<1x32xf32> to vector<16x32xf32>
    %578 = arith.addf %576, %577 : vector<16x32xf32>
    %579 = arith.addf %578, %535 : vector<16x32xf32>
    %c1_197 = arith.constant 1 : index
    %c0_198 = arith.constant 0 : index
    %c0_199 = arith.constant 0 : index
    %580 = vector.load %arg18[%c1_197, %c0_198, %c0_199] : memref<2x32x96xbf16, #tpu.memory_space<vmem>>, vector<1x32x96xbf16>
    %581 = vector.shape_cast %580 : vector<1x32x96xbf16> to vector<32x96xbf16>
    %c1_200 = arith.constant 1 : index
    %c0_201 = arith.constant 0 : index
    %c0_202 = arith.constant 0 : index
    %582 = vector.load %arg19[%c1_200, %c0_201, %c0_202] : memref<2x96x1xf32, #tpu.memory_space<vmem>>, vector<1x96x1xf32>
    %583 = vector.shape_cast %582 : vector<1x96x1xf32> to vector<96x1xf32>
    %c1_203 = arith.constant 1 : index
    %c0_204 = arith.constant 0 : index
    %c0_205 = arith.constant 0 : index
    %584 = vector.load %arg20[%c1_203, %c0_204, %c0_205] : memref<2x32x32xbf16, #tpu.memory_space<vmem>>, vector<1x32x32xbf16>
    %585 = vector.shape_cast %584 : vector<1x32x32xbf16> to vector<32x32xbf16>
    %c1_206 = arith.constant 1 : index
    %c0_207 = arith.constant 0 : index
    %c0_208 = arith.constant 0 : index
    %586 = vector.load %arg21[%c1_206, %c0_207, %c0_208] : memref<2x1x32xf32, #tpu.memory_space<vmem>>, vector<1x1x32xf32>
    %587 = vector.shape_cast %586 : vector<1x1x32xf32> to vector<1x32xf32>
    %588 = vector.extract_strided_slice %579 {offsets = [0, 0], sizes = [8, 32], strides = [1, 1]} : vector<16x32xf32> to vector<8x32xf32>
    %589 = arith.truncf %588 : vector<8x32xf32> to vector<8x32xbf16>
    %cst_209 = arith.constant dense<0.000000e+00> : vector<96x8xf32>
    %590 = tpu.matmul %581, %589, %cst_209 {dimension_numbers = #tpu.dot_dimension_numbers<[0], [1], [1], [0], [0, 1, 1, 0], [], []>} : vector<32x96xbf16>, vector<8x32xbf16>, vector<96x8xf32> -> vector<96x8xf32>
    %591 = vector.broadcast %583 : vector<96x1xf32> to vector<96x8xf32>
    %592 = arith.addf %590, %591 : vector<96x8xf32>
    %593 = vector.extract_strided_slice %592 {offsets = [0, 0], sizes = [32, 8], strides = [1, 1]} : vector<96x8xf32> to vector<32x8xf32>
    %594 = vector.extract_strided_slice %592 {offsets = [32, 0], sizes = [32, 8], strides = [1, 1]} : vector<96x8xf32> to vector<32x8xf32>
    %595 = vector.extract_strided_slice %592 {offsets = [64, 0], sizes = [32, 8], strides = [1, 1]} : vector<96x8xf32> to vector<32x8xf32>
    %596 = vector.extract_strided_slice %593 {offsets = [0, 0], sizes = [8, 8], strides = [1, 1]} : vector<32x8xf32> to vector<8x8xf32>
    %597 = vector.extract_strided_slice %594 {offsets = [0, 0], sizes = [8, 8], strides = [1, 1]} : vector<32x8xf32> to vector<8x8xf32>
    %598 = arith.truncf %596 : vector<8x8xf32> to vector<8x8xbf16>
    %599 = arith.truncf %597 : vector<8x8xf32> to vector<8x8xbf16>
    %cst_210 = arith.constant dense<0.000000e+00> : vector<8x8xf32>
    %600 = tpu.matmul %598, %599, %cst_210 {dimension_numbers = #tpu.dot_dimension_numbers<[0], [0], [1], [1], [0, 1, 1, 1], [], []>} : vector<8x8xbf16>, vector<8x8xbf16>, vector<8x8xf32> -> vector<8x8xf32>
    %cst_211 = arith.constant 0.353553385 : f32
    %601 = vector.broadcast %cst_211 : f32 to vector<8x8xf32>
    %602 = arith.mulf %600, %601 : vector<8x8xf32>
    %cst_212 = arith.constant dense<0xFF800000> : vector<8xf32>
    %603 = vector.multi_reduction <maximumf>, %602, %cst_212 [1] : vector<8x8xf32> to vector<8xf32>
    %604 = vector.shape_cast %603 : vector<8xf32> to vector<8x1xf32>
    %605 = vector.broadcast %604 : vector<8x1xf32> to vector<8x8xf32>
    %606 = arith.subf %602, %605 : vector<8x8xf32>
    %607 = math.exp %606 : vector<8x8xf32>
    %cst_213 = arith.constant dense<0.000000e+00> : vector<8xf32>
    %608 = vector.multi_reduction <add>, %607, %cst_213 [1] : vector<8x8xf32> to vector<8xf32>
    %609 = vector.shape_cast %608 : vector<8xf32> to vector<8x1xf32>
    %610 = tpu.reciprocal %609 : vector<8x1xf32> -> vector<8x1xf32>
    %611 = vector.broadcast %610 : vector<8x1xf32> to vector<8x8xf32>
    %612 = arith.mulf %607, %611 : vector<8x8xf32>
    %613 = vector.extract_strided_slice %595 {offsets = [0, 0], sizes = [8, 8], strides = [1, 1]} : vector<32x8xf32> to vector<8x8xf32>
    %614 = arith.truncf %613 : vector<8x8xf32> to vector<8x8xbf16>
    %615 = arith.truncf %612 : vector<8x8xf32> to vector<8x8xbf16>
    %cst_214 = arith.constant dense<0.000000e+00> : vector<8x8xf32>
    %616 = tpu.matmul %614, %615, %cst_214 {dimension_numbers = #tpu.dot_dimension_numbers<[1], [1], [0], [0], [0, 0, 1, 0], [], []>} : vector<8x8xbf16>, vector<8x8xbf16>, vector<8x8xf32> -> vector<8x8xf32>
    %617 = vector.extract_strided_slice %593 {offsets = [8, 0], sizes = [8, 8], strides = [1, 1]} : vector<32x8xf32> to vector<8x8xf32>
    %618 = vector.extract_strided_slice %594 {offsets = [8, 0], sizes = [8, 8], strides = [1, 1]} : vector<32x8xf32> to vector<8x8xf32>
    %619 = arith.truncf %617 : vector<8x8xf32> to vector<8x8xbf16>
    %620 = arith.truncf %618 : vector<8x8xf32> to vector<8x8xbf16>
    %cst_215 = arith.constant dense<0.000000e+00> : vector<8x8xf32>
    %621 = tpu.matmul %619, %620, %cst_215 {dimension_numbers = #tpu.dot_dimension_numbers<[0], [0], [1], [1], [0, 1, 1, 1], [], []>} : vector<8x8xbf16>, vector<8x8xbf16>, vector<8x8xf32> -> vector<8x8xf32>
    %cst_216 = arith.constant 0.353553385 : f32
    %622 = vector.broadcast %cst_216 : f32 to vector<8x8xf32>
    %623 = arith.mulf %621, %622 : vector<8x8xf32>
    %cst_217 = arith.constant dense<0xFF800000> : vector<8xf32>
    %624 = vector.multi_reduction <maximumf>, %623, %cst_217 [1] : vector<8x8xf32> to vector<8xf32>
    %625 = vector.shape_cast %624 : vector<8xf32> to vector<8x1xf32>
    %626 = vector.broadcast %625 : vector<8x1xf32> to vector<8x8xf32>
    %627 = arith.subf %623, %626 : vector<8x8xf32>
    %628 = math.exp %627 : vector<8x8xf32>
    %cst_218 = arith.constant dense<0.000000e+00> : vector<8xf32>
    %629 = vector.multi_reduction <add>, %628, %cst_218 [1] : vector<8x8xf32> to vector<8xf32>
    %630 = vector.shape_cast %629 : vector<8xf32> to vector<8x1xf32>
    %631 = tpu.reciprocal %630 : vector<8x1xf32> -> vector<8x1xf32>
    %632 = vector.broadcast %631 : vector<8x1xf32> to vector<8x8xf32>
    %633 = arith.mulf %628, %632 : vector<8x8xf32>
    %634 = vector.extract_strided_slice %595 {offsets = [8, 0], sizes = [8, 8], strides = [1, 1]} : vector<32x8xf32> to vector<8x8xf32>
    %635 = arith.truncf %634 : vector<8x8xf32> to vector<8x8xbf16>
    %636 = arith.truncf %633 : vector<8x8xf32> to vector<8x8xbf16>
    %cst_219 = arith.constant dense<0.000000e+00> : vector<8x8xf32>
    %637 = tpu.matmul %635, %636, %cst_219 {dimension_numbers = #tpu.dot_dimension_numbers<[1], [1], [0], [0], [0, 0, 1, 0], [], []>} : vector<8x8xbf16>, vector<8x8xbf16>, vector<8x8xf32> -> vector<8x8xf32>
    %638 = vector.extract_strided_slice %593 {offsets = [16, 0], sizes = [8, 8], strides = [1, 1]} : vector<32x8xf32> to vector<8x8xf32>
    %639 = vector.extract_strided_slice %594 {offsets = [16, 0], sizes = [8, 8], strides = [1, 1]} : vector<32x8xf32> to vector<8x8xf32>
    %640 = arith.truncf %638 : vector<8x8xf32> to vector<8x8xbf16>
    %641 = arith.truncf %639 : vector<8x8xf32> to vector<8x8xbf16>
    %cst_220 = arith.constant dense<0.000000e+00> : vector<8x8xf32>
    %642 = tpu.matmul %640, %641, %cst_220 {dimension_numbers = #tpu.dot_dimension_numbers<[0], [0], [1], [1], [0, 1, 1, 1], [], []>} : vector<8x8xbf16>, vector<8x8xbf16>, vector<8x8xf32> -> vector<8x8xf32>
    %cst_221 = arith.constant 0.353553385 : f32
    %643 = vector.broadcast %cst_221 : f32 to vector<8x8xf32>
    %644 = arith.mulf %642, %643 : vector<8x8xf32>
    %cst_222 = arith.constant dense<0xFF800000> : vector<8xf32>
    %645 = vector.multi_reduction <maximumf>, %644, %cst_222 [1] : vector<8x8xf32> to vector<8xf32>
    %646 = vector.shape_cast %645 : vector<8xf32> to vector<8x1xf32>
    %647 = vector.broadcast %646 : vector<8x1xf32> to vector<8x8xf32>
    %648 = arith.subf %644, %647 : vector<8x8xf32>
    %649 = math.exp %648 : vector<8x8xf32>
    %cst_223 = arith.constant dense<0.000000e+00> : vector<8xf32>
    %650 = vector.multi_reduction <add>, %649, %cst_223 [1] : vector<8x8xf32> to vector<8xf32>
    %651 = vector.shape_cast %650 : vector<8xf32> to vector<8x1xf32>
    %652 = tpu.reciprocal %651 : vector<8x1xf32> -> vector<8x1xf32>
    %653 = vector.broadcast %652 : vector<8x1xf32> to vector<8x8xf32>
    %654 = arith.mulf %649, %653 : vector<8x8xf32>
    %655 = vector.extract_strided_slice %595 {offsets = [16, 0], sizes = [8, 8], strides = [1, 1]} : vector<32x8xf32> to vector<8x8xf32>
    %656 = arith.truncf %655 : vector<8x8xf32> to vector<8x8xbf16>
    %657 = arith.truncf %654 : vector<8x8xf32> to vector<8x8xbf16>
    %cst_224 = arith.constant dense<0.000000e+00> : vector<8x8xf32>
    %658 = tpu.matmul %656, %657, %cst_224 {dimension_numbers = #tpu.dot_dimension_numbers<[1], [1], [0], [0], [0, 0, 1, 0], [], []>} : vector<8x8xbf16>, vector<8x8xbf16>, vector<8x8xf32> -> vector<8x8xf32>
    %659 = vector.extract_strided_slice %593 {offsets = [24, 0], sizes = [8, 8], strides = [1, 1]} : vector<32x8xf32> to vector<8x8xf32>
    %660 = vector.extract_strided_slice %594 {offsets = [24, 0], sizes = [8, 8], strides = [1, 1]} : vector<32x8xf32> to vector<8x8xf32>
    %661 = arith.truncf %659 : vector<8x8xf32> to vector<8x8xbf16>
    %662 = arith.truncf %660 : vector<8x8xf32> to vector<8x8xbf16>
    %cst_225 = arith.constant dense<0.000000e+00> : vector<8x8xf32>
    %663 = tpu.matmul %661, %662, %cst_225 {dimension_numbers = #tpu.dot_dimension_numbers<[0], [0], [1], [1], [0, 1, 1, 1], [], []>} : vector<8x8xbf16>, vector<8x8xbf16>, vector<8x8xf32> -> vector<8x8xf32>
    %cst_226 = arith.constant 0.353553385 : f32
    %664 = vector.broadcast %cst_226 : f32 to vector<8x8xf32>
    %665 = arith.mulf %663, %664 : vector<8x8xf32>
    %cst_227 = arith.constant dense<0xFF800000> : vector<8xf32>
    %666 = vector.multi_reduction <maximumf>, %665, %cst_227 [1] : vector<8x8xf32> to vector<8xf32>
    %667 = vector.shape_cast %666 : vector<8xf32> to vector<8x1xf32>
    %668 = vector.broadcast %667 : vector<8x1xf32> to vector<8x8xf32>
    %669 = arith.subf %665, %668 : vector<8x8xf32>
    %670 = math.exp %669 : vector<8x8xf32>
    %cst_228 = arith.constant dense<0.000000e+00> : vector<8xf32>
    %671 = vector.multi_reduction <add>, %670, %cst_228 [1] : vector<8x8xf32> to vector<8xf32>
    %672 = vector.shape_cast %671 : vector<8xf32> to vector<8x1xf32>
    %673 = tpu.reciprocal %672 : vector<8x1xf32> -> vector<8x1xf32>
    %674 = vector.broadcast %673 : vector<8x1xf32> to vector<8x8xf32>
    %675 = arith.mulf %670, %674 : vector<8x8xf32>
    %676 = vector.extract_strided_slice %595 {offsets = [24, 0], sizes = [8, 8], strides = [1, 1]} : vector<32x8xf32> to vector<8x8xf32>
    %677 = arith.truncf %676 : vector<8x8xf32> to vector<8x8xbf16>
    %678 = arith.truncf %675 : vector<8x8xf32> to vector<8x8xbf16>
    %cst_229 = arith.constant dense<0.000000e+00> : vector<8x8xf32>
    %679 = tpu.matmul %677, %678, %cst_229 {dimension_numbers = #tpu.dot_dimension_numbers<[1], [1], [0], [0], [0, 0, 1, 0], [], []>} : vector<8x8xbf16>, vector<8x8xbf16>, vector<8x8xf32> -> vector<8x8xf32>
    %680 = tpu.concatenate %616, %637, %658, %679 in 0 : vector<8x8xf32>, vector<8x8xf32>, vector<8x8xf32>, vector<8x8xf32> -> vector<32x8xf32>
    %681 = arith.truncf %680 : vector<32x8xf32> to vector<32x8xbf16>
    %cst_230 = arith.constant dense<0.000000e+00> : vector<8x32xf32>
    %682 = tpu.matmul %681, %585, %cst_230 {dimension_numbers = #tpu.dot_dimension_numbers<[0], [0], [1], [1], [0, 1, 1, 1], [], []>} : vector<32x8xbf16>, vector<32x32xbf16>, vector<8x32xf32> -> vector<8x32xf32>
    %683 = vector.broadcast %587 : vector<1x32xf32> to vector<8x32xf32>
    %684 = arith.addf %682, %683 : vector<8x32xf32>
    %685 = vector.extract_strided_slice %579 {offsets = [8, 0], sizes = [8, 32], strides = [1, 1]} : vector<16x32xf32> to vector<8x32xf32>
    %686 = arith.truncf %685 : vector<8x32xf32> to vector<8x32xbf16>
    %cst_231 = arith.constant dense<0.000000e+00> : vector<96x8xf32>
    %687 = tpu.matmul %581, %686, %cst_231 {dimension_numbers = #tpu.dot_dimension_numbers<[0], [1], [1], [0], [0, 1, 1, 0], [], []>} : vector<32x96xbf16>, vector<8x32xbf16>, vector<96x8xf32> -> vector<96x8xf32>
    %688 = vector.broadcast %583 : vector<96x1xf32> to vector<96x8xf32>
    %689 = arith.addf %687, %688 : vector<96x8xf32>
    %690 = vector.extract_strided_slice %689 {offsets = [0, 0], sizes = [32, 8], strides = [1, 1]} : vector<96x8xf32> to vector<32x8xf32>
    %691 = vector.extract_strided_slice %689 {offsets = [32, 0], sizes = [32, 8], strides = [1, 1]} : vector<96x8xf32> to vector<32x8xf32>
    %692 = vector.extract_strided_slice %689 {offsets = [64, 0], sizes = [32, 8], strides = [1, 1]} : vector<96x8xf32> to vector<32x8xf32>
    %693 = vector.extract_strided_slice %690 {offsets = [0, 0], sizes = [8, 8], strides = [1, 1]} : vector<32x8xf32> to vector<8x8xf32>
    %694 = vector.extract_strided_slice %691 {offsets = [0, 0], sizes = [8, 8], strides = [1, 1]} : vector<32x8xf32> to vector<8x8xf32>
    %695 = arith.truncf %693 : vector<8x8xf32> to vector<8x8xbf16>
    %696 = arith.truncf %694 : vector<8x8xf32> to vector<8x8xbf16>
    %cst_232 = arith.constant dense<0.000000e+00> : vector<8x8xf32>
    %697 = tpu.matmul %695, %696, %cst_232 {dimension_numbers = #tpu.dot_dimension_numbers<[0], [0], [1], [1], [0, 1, 1, 1], [], []>} : vector<8x8xbf16>, vector<8x8xbf16>, vector<8x8xf32> -> vector<8x8xf32>
    %cst_233 = arith.constant 0.353553385 : f32
    %698 = vector.broadcast %cst_233 : f32 to vector<8x8xf32>
    %699 = arith.mulf %697, %698 : vector<8x8xf32>
    %cst_234 = arith.constant dense<0xFF800000> : vector<8xf32>
    %700 = vector.multi_reduction <maximumf>, %699, %cst_234 [1] : vector<8x8xf32> to vector<8xf32>
    %701 = vector.shape_cast %700 : vector<8xf32> to vector<8x1xf32>
    %702 = vector.broadcast %701 : vector<8x1xf32> to vector<8x8xf32>
    %703 = arith.subf %699, %702 : vector<8x8xf32>
    %704 = math.exp %703 : vector<8x8xf32>
    %cst_235 = arith.constant dense<0.000000e+00> : vector<8xf32>
    %705 = vector.multi_reduction <add>, %704, %cst_235 [1] : vector<8x8xf32> to vector<8xf32>
    %706 = vector.shape_cast %705 : vector<8xf32> to vector<8x1xf32>
    %707 = tpu.reciprocal %706 : vector<8x1xf32> -> vector<8x1xf32>
    %708 = vector.broadcast %707 : vector<8x1xf32> to vector<8x8xf32>
    %709 = arith.mulf %704, %708 : vector<8x8xf32>
    %710 = vector.extract_strided_slice %692 {offsets = [0, 0], sizes = [8, 8], strides = [1, 1]} : vector<32x8xf32> to vector<8x8xf32>
    %711 = arith.truncf %710 : vector<8x8xf32> to vector<8x8xbf16>
    %712 = arith.truncf %709 : vector<8x8xf32> to vector<8x8xbf16>
    %cst_236 = arith.constant dense<0.000000e+00> : vector<8x8xf32>
    %713 = tpu.matmul %711, %712, %cst_236 {dimension_numbers = #tpu.dot_dimension_numbers<[1], [1], [0], [0], [0, 0, 1, 0], [], []>} : vector<8x8xbf16>, vector<8x8xbf16>, vector<8x8xf32> -> vector<8x8xf32>
    %714 = vector.extract_strided_slice %690 {offsets = [8, 0], sizes = [8, 8], strides = [1, 1]} : vector<32x8xf32> to vector<8x8xf32>
    %715 = vector.extract_strided_slice %691 {offsets = [8, 0], sizes = [8, 8], strides = [1, 1]} : vector<32x8xf32> to vector<8x8xf32>
    %716 = arith.truncf %714 : vector<8x8xf32> to vector<8x8xbf16>
    %717 = arith.truncf %715 : vector<8x8xf32> to vector<8x8xbf16>
    %cst_237 = arith.constant dense<0.000000e+00> : vector<8x8xf32>
    %718 = tpu.matmul %716, %717, %cst_237 {dimension_numbers = #tpu.dot_dimension_numbers<[0], [0], [1], [1], [0, 1, 1, 1], [], []>} : vector<8x8xbf16>, vector<8x8xbf16>, vector<8x8xf32> -> vector<8x8xf32>
    %cst_238 = arith.constant 0.353553385 : f32
    %719 = vector.broadcast %cst_238 : f32 to vector<8x8xf32>
    %720 = arith.mulf %718, %719 : vector<8x8xf32>
    %cst_239 = arith.constant dense<0xFF800000> : vector<8xf32>
    %721 = vector.multi_reduction <maximumf>, %720, %cst_239 [1] : vector<8x8xf32> to vector<8xf32>
    %722 = vector.shape_cast %721 : vector<8xf32> to vector<8x1xf32>
    %723 = vector.broadcast %722 : vector<8x1xf32> to vector<8x8xf32>
    %724 = arith.subf %720, %723 : vector<8x8xf32>
    %725 = math.exp %724 : vector<8x8xf32>
    %cst_240 = arith.constant dense<0.000000e+00> : vector<8xf32>
    %726 = vector.multi_reduction <add>, %725, %cst_240 [1] : vector<8x8xf32> to vector<8xf32>
    %727 = vector.shape_cast %726 : vector<8xf32> to vector<8x1xf32>
    %728 = tpu.reciprocal %727 : vector<8x1xf32> -> vector<8x1xf32>
    %729 = vector.broadcast %728 : vector<8x1xf32> to vector<8x8xf32>
    %730 = arith.mulf %725, %729 : vector<8x8xf32>
    %731 = vector.extract_strided_slice %692 {offsets = [8, 0], sizes = [8, 8], strides = [1, 1]} : vector<32x8xf32> to vector<8x8xf32>
    %732 = arith.truncf %731 : vector<8x8xf32> to vector<8x8xbf16>
    %733 = arith.truncf %730 : vector<8x8xf32> to vector<8x8xbf16>
    %cst_241 = arith.constant dense<0.000000e+00> : vector<8x8xf32>
    %734 = tpu.matmul %732, %733, %cst_241 {dimension_numbers = #tpu.dot_dimension_numbers<[1], [1], [0], [0], [0, 0, 1, 0], [], []>} : vector<8x8xbf16>, vector<8x8xbf16>, vector<8x8xf32> -> vector<8x8xf32>
    %735 = vector.extract_strided_slice %690 {offsets = [16, 0], sizes = [8, 8], strides = [1, 1]} : vector<32x8xf32> to vector<8x8xf32>
    %736 = vector.extract_strided_slice %691 {offsets = [16, 0], sizes = [8, 8], strides = [1, 1]} : vector<32x8xf32> to vector<8x8xf32>
    %737 = arith.truncf %735 : vector<8x8xf32> to vector<8x8xbf16>
    %738 = arith.truncf %736 : vector<8x8xf32> to vector<8x8xbf16>
    %cst_242 = arith.constant dense<0.000000e+00> : vector<8x8xf32>
    %739 = tpu.matmul %737, %738, %cst_242 {dimension_numbers = #tpu.dot_dimension_numbers<[0], [0], [1], [1], [0, 1, 1, 1], [], []>} : vector<8x8xbf16>, vector<8x8xbf16>, vector<8x8xf32> -> vector<8x8xf32>
    %cst_243 = arith.constant 0.353553385 : f32
    %740 = vector.broadcast %cst_243 : f32 to vector<8x8xf32>
    %741 = arith.mulf %739, %740 : vector<8x8xf32>
    %cst_244 = arith.constant dense<0xFF800000> : vector<8xf32>
    %742 = vector.multi_reduction <maximumf>, %741, %cst_244 [1] : vector<8x8xf32> to vector<8xf32>
    %743 = vector.shape_cast %742 : vector<8xf32> to vector<8x1xf32>
    %744 = vector.broadcast %743 : vector<8x1xf32> to vector<8x8xf32>
    %745 = arith.subf %741, %744 : vector<8x8xf32>
    %746 = math.exp %745 : vector<8x8xf32>
    %cst_245 = arith.constant dense<0.000000e+00> : vector<8xf32>
    %747 = vector.multi_reduction <add>, %746, %cst_245 [1] : vector<8x8xf32> to vector<8xf32>
    %748 = vector.shape_cast %747 : vector<8xf32> to vector<8x1xf32>
    %749 = tpu.reciprocal %748 : vector<8x1xf32> -> vector<8x1xf32>
    %750 = vector.broadcast %749 : vector<8x1xf32> to vector<8x8xf32>
    %751 = arith.mulf %746, %750 : vector<8x8xf32>
    %752 = vector.extract_strided_slice %692 {offsets = [16, 0], sizes = [8, 8], strides = [1, 1]} : vector<32x8xf32> to vector<8x8xf32>
    %753 = arith.truncf %752 : vector<8x8xf32> to vector<8x8xbf16>
    %754 = arith.truncf %751 : vector<8x8xf32> to vector<8x8xbf16>
    %cst_246 = arith.constant dense<0.000000e+00> : vector<8x8xf32>
    %755 = tpu.matmul %753, %754, %cst_246 {dimension_numbers = #tpu.dot_dimension_numbers<[1], [1], [0], [0], [0, 0, 1, 0], [], []>} : vector<8x8xbf16>, vector<8x8xbf16>, vector<8x8xf32> -> vector<8x8xf32>
    %756 = vector.extract_strided_slice %690 {offsets = [24, 0], sizes = [8, 8], strides = [1, 1]} : vector<32x8xf32> to vector<8x8xf32>
    %757 = vector.extract_strided_slice %691 {offsets = [24, 0], sizes = [8, 8], strides = [1, 1]} : vector<32x8xf32> to vector<8x8xf32>
    %758 = arith.truncf %756 : vector<8x8xf32> to vector<8x8xbf16>
    %759 = arith.truncf %757 : vector<8x8xf32> to vector<8x8xbf16>
    %cst_247 = arith.constant dense<0.000000e+00> : vector<8x8xf32>
    %760 = tpu.matmul %758, %759, %cst_247 {dimension_numbers = #tpu.dot_dimension_numbers<[0], [0], [1], [1], [0, 1, 1, 1], [], []>} : vector<8x8xbf16>, vector<8x8xbf16>, vector<8x8xf32> -> vector<8x8xf32>
    %cst_248 = arith.constant 0.353553385 : f32
    %761 = vector.broadcast %cst_248 : f32 to vector<8x8xf32>
    %762 = arith.mulf %760, %761 : vector<8x8xf32>
    %cst_249 = arith.constant dense<0xFF800000> : vector<8xf32>
    %763 = vector.multi_reduction <maximumf>, %762, %cst_249 [1] : vector<8x8xf32> to vector<8xf32>
    %764 = vector.shape_cast %763 : vector<8xf32> to vector<8x1xf32>
    %765 = vector.broadcast %764 : vector<8x1xf32> to vector<8x8xf32>
    %766 = arith.subf %762, %765 : vector<8x8xf32>
    %767 = math.exp %766 : vector<8x8xf32>
    %cst_250 = arith.constant dense<0.000000e+00> : vector<8xf32>
    %768 = vector.multi_reduction <add>, %767, %cst_250 [1] : vector<8x8xf32> to vector<8xf32>
    %769 = vector.shape_cast %768 : vector<8xf32> to vector<8x1xf32>
    %770 = tpu.reciprocal %769 : vector<8x1xf32> -> vector<8x1xf32>
    %771 = vector.broadcast %770 : vector<8x1xf32> to vector<8x8xf32>
    %772 = arith.mulf %767, %771 : vector<8x8xf32>
    %773 = vector.extract_strided_slice %692 {offsets = [24, 0], sizes = [8, 8], strides = [1, 1]} : vector<32x8xf32> to vector<8x8xf32>
    %774 = arith.truncf %773 : vector<8x8xf32> to vector<8x8xbf16>
    %775 = arith.truncf %772 : vector<8x8xf32> to vector<8x8xbf16>
    %cst_251 = arith.constant dense<0.000000e+00> : vector<8x8xf32>
    %776 = tpu.matmul %774, %775, %cst_251 {dimension_numbers = #tpu.dot_dimension_numbers<[1], [1], [0], [0], [0, 0, 1, 0], [], []>} : vector<8x8xbf16>, vector<8x8xbf16>, vector<8x8xf32> -> vector<8x8xf32>
    %777 = tpu.concatenate %713, %734, %755, %776 in 0 : vector<8x8xf32>, vector<8x8xf32>, vector<8x8xf32>, vector<8x8xf32> -> vector<32x8xf32>
    %778 = arith.truncf %777 : vector<32x8xf32> to vector<32x8xbf16>
    %cst_252 = arith.constant dense<0.000000e+00> : vector<8x32xf32>
    %779 = tpu.matmul %778, %585, %cst_252 {dimension_numbers = #tpu.dot_dimension_numbers<[0], [0], [1], [1], [0, 1, 1, 1], [], []>} : vector<32x8xbf16>, vector<32x32xbf16>, vector<8x32xf32> -> vector<8x32xf32>
    %780 = vector.broadcast %587 : vector<1x32xf32> to vector<8x32xf32>
    %781 = arith.addf %779, %780 : vector<8x32xf32>
    %782 = tpu.concatenate %684, %781 in 0 : vector<8x32xf32>, vector<8x32xf32> -> vector<16x32xf32>
    %c1_253 = arith.constant 1 : index
    %c0_254 = arith.constant 0 : index
    %c0_255 = arith.constant 0 : index
    %783 = vector.load %arg22[%c1_253, %c0_254, %c0_255] : memref<2x1x32xf32, #tpu.memory_space<vmem>>, vector<1x1x32xf32>
    %784 = vector.shape_cast %783 : vector<1x1x32xf32> to vector<1x32xf32>
    %c1_256 = arith.constant 1 : index
    %c0_257 = arith.constant 0 : index
    %c0_258 = arith.constant 0 : index
    %785 = vector.load %arg23[%c1_256, %c0_257, %c0_258] : memref<2x1x32xf32, #tpu.memory_space<vmem>>, vector<1x1x32xf32>
    %786 = vector.shape_cast %785 : vector<1x1x32xf32> to vector<1x32xf32>
    %c1_259 = arith.constant 1 : index
    %c0_260 = arith.constant 0 : index
    %c0_261 = arith.constant 0 : index
    %787 = vector.load %arg24[%c1_259, %c0_260, %c0_261] : memref<2x32x32xbf16, #tpu.memory_space<vmem>>, vector<1x32x32xbf16>
    %788 = vector.shape_cast %787 : vector<1x32x32xbf16> to vector<32x32xbf16>
    %c1_262 = arith.constant 1 : index
    %c0_263 = arith.constant 0 : index
    %c0_264 = arith.constant 0 : index
    %789 = vector.load %arg25[%c1_262, %c0_263, %c0_264] : memref<2x1x32xf32, #tpu.memory_space<vmem>>, vector<1x1x32xf32>
    %790 = vector.shape_cast %789 : vector<1x1x32xf32> to vector<1x32xf32>
    %c1_265 = arith.constant 1 : index
    %c0_266 = arith.constant 0 : index
    %c0_267 = arith.constant 0 : index
    %791 = vector.load %arg26[%c1_265, %c0_266, %c0_267] : memref<2x32x32xbf16, #tpu.memory_space<vmem>>, vector<1x32x32xbf16>
    %792 = vector.shape_cast %791 : vector<1x32x32xbf16> to vector<32x32xbf16>
    %c1_268 = arith.constant 1 : index
    %c0_269 = arith.constant 0 : index
    %c0_270 = arith.constant 0 : index
    %793 = vector.load %arg27[%c1_268, %c0_269, %c0_270] : memref<2x1x32xf32, #tpu.memory_space<vmem>>, vector<1x1x32xf32>
    %794 = vector.shape_cast %793 : vector<1x1x32xf32> to vector<1x32xf32>
    %c1_271 = arith.constant 1 : index
    %c0_272 = arith.constant 0 : index
    %c0_273 = arith.constant 0 : index
    %795 = vector.load %arg28[%c1_271, %c0_272, %c0_273] : memref<2x1x32xf32, #tpu.memory_space<vmem>>, vector<1x1x32xf32>
    %796 = vector.shape_cast %795 : vector<1x1x32xf32> to vector<1x32xf32>
    %c1_274 = arith.constant 1 : index
    %c0_275 = arith.constant 0 : index
    %c0_276 = arith.constant 0 : index
    %797 = vector.load %arg29[%c1_274, %c0_275, %c0_276] : memref<2x1x32xf32, #tpu.memory_space<vmem>>, vector<1x1x32xf32>
    %798 = vector.shape_cast %797 : vector<1x1x32xf32> to vector<1x32xf32>
    %cst_277 = arith.constant dense<0.000000e+00> : vector<16xf32>
    %799 = vector.multi_reduction <add>, %782, %cst_277 [1] : vector<16x32xf32> to vector<16xf32>
    %800 = vector.shape_cast %799 : vector<16xf32> to vector<16x1xf32>
    %cst_278 = arith.constant 3.200000e+01 : f32
    %801 = vector.broadcast %cst_278 : f32 to vector<16x1xf32>
    %802 = arith.divf %800, %801 : vector<16x1xf32>
    %803 = vector.broadcast %802 : vector<16x1xf32> to vector<16x32xf32>
    %804 = arith.subf %782, %803 : vector<16x32xf32>
    %805 = arith.mulf %804, %804 : vector<16x32xf32>
    %cst_279 = arith.constant dense<0.000000e+00> : vector<16xf32>
    %806 = vector.multi_reduction <add>, %805, %cst_279 [1] : vector<16x32xf32> to vector<16xf32>
    %807 = vector.shape_cast %806 : vector<16xf32> to vector<16x1xf32>
    %cst_280 = arith.constant 3.200000e+01 : f32
    %808 = vector.broadcast %cst_280 : f32 to vector<16x1xf32>
    %809 = arith.divf %807, %808 : vector<16x1xf32>
    %810 = vector.broadcast %802 : vector<16x1xf32> to vector<16x32xf32>
    %811 = arith.subf %782, %810 : vector<16x32xf32>
    %cst_281 = arith.constant 9.99999974E-6 : f32
    %812 = vector.broadcast %cst_281 : f32 to vector<16x1xf32>
    %813 = arith.addf %809, %812 : vector<16x1xf32>
    %814 = math.rsqrt %813 : vector<16x1xf32>
    %815 = vector.broadcast %814 : vector<16x1xf32> to vector<16x32xf32>
    %816 = arith.mulf %811, %815 : vector<16x32xf32>
    %817 = vector.broadcast %784 : vector<1x32xf32> to vector<16x32xf32>
    %818 = arith.mulf %816, %817 : vector<16x32xf32>
    %819 = vector.broadcast %786 : vector<1x32xf32> to vector<16x32xf32>
    %820 = arith.addf %818, %819 : vector<16x32xf32>
    %821 = arith.addf %820, %579 : vector<16x32xf32>
    %822 = arith.truncf %821 : vector<16x32xf32> to vector<16x32xbf16>
    %cst_282 = arith.constant dense<0.000000e+00> : vector<16x32xf32>
    %823 = tpu.matmul %822, %788, %cst_282 {dimension_numbers = #tpu.dot_dimension_numbers<[1], [0], [0], [1], [0, 0, 1, 1], [], []>} : vector<16x32xbf16>, vector<32x32xbf16>, vector<16x32xf32> -> vector<16x32xf32>
    %824 = vector.broadcast %790 : vector<1x32xf32> to vector<16x32xf32>
    %825 = arith.addf %823, %824 : vector<16x32xf32>
    %cst_283 = arith.constant 5.000000e-01 : f32
    %826 = vector.broadcast %cst_283 : f32 to vector<16x32xf32>
    %827 = arith.mulf %826, %825 : vector<16x32xf32>
    %cst_284 = arith.constant 4.471500e-02 : f32
    %828 = vector.broadcast %cst_284 : f32 to vector<16x32xf32>
    %829 = arith.mulf %828, %825 : vector<16x32xf32>
    %830 = arith.mulf %829, %825 : vector<16x32xf32>
    %831 = arith.mulf %830, %825 : vector<16x32xf32>
    %832 = arith.addf %825, %831 : vector<16x32xf32>
    %cst_285 = arith.constant 0.797884583 : f32
    %833 = vector.broadcast %cst_285 : f32 to vector<16x32xf32>
    %834 = arith.mulf %833, %832 : vector<16x32xf32>
    %835 = math.tanh %834 : vector<16x32xf32>
    %cst_286 = arith.constant 1.000000e+00 : f32
    %836 = vector.broadcast %cst_286 : f32 to vector<16x32xf32>
    %837 = arith.addf %836, %835 : vector<16x32xf32>
    %838 = arith.mulf %827, %837 : vector<16x32xf32>
    %839 = arith.truncf %838 : vector<16x32xf32> to vector<16x32xbf16>
    %cst_287 = arith.constant dense<0.000000e+00> : vector<16x32xf32>
    %840 = tpu.matmul %839, %792, %cst_287 {dimension_numbers = #tpu.dot_dimension_numbers<[1], [0], [0], [1], [0, 0, 1, 1], [], []>} : vector<16x32xbf16>, vector<32x32xbf16>, vector<16x32xf32> -> vector<16x32xf32>
    %841 = vector.broadcast %794 : vector<1x32xf32> to vector<16x32xf32>
    %842 = arith.addf %840, %841 : vector<16x32xf32>
    %cst_288 = arith.constant dense<0.000000e+00> : vector<16xf32>
    %843 = vector.multi_reduction <add>, %842, %cst_288 [1] : vector<16x32xf32> to vector<16xf32>
    %844 = vector.shape_cast %843 : vector<16xf32> to vector<16x1xf32>
    %cst_289 = arith.constant 3.200000e+01 : f32
    %845 = vector.broadcast %cst_289 : f32 to vector<16x1xf32>
    %846 = arith.divf %844, %845 : vector<16x1xf32>
    %847 = vector.broadcast %846 : vector<16x1xf32> to vector<16x32xf32>
    %848 = arith.subf %842, %847 : vector<16x32xf32>
    %849 = arith.mulf %848, %848 : vector<16x32xf32>
    %cst_290 = arith.constant dense<0.000000e+00> : vector<16xf32>
    %850 = vector.multi_reduction <add>, %849, %cst_290 [1] : vector<16x32xf32> to vector<16xf32>
    %851 = vector.shape_cast %850 : vector<16xf32> to vector<16x1xf32>
    %cst_291 = arith.constant 3.200000e+01 : f32
    %852 = vector.broadcast %cst_291 : f32 to vector<16x1xf32>
    %853 = arith.divf %851, %852 : vector<16x1xf32>
    %854 = vector.broadcast %846 : vector<16x1xf32> to vector<16x32xf32>
    %855 = arith.subf %842, %854 : vector<16x32xf32>
    %cst_292 = arith.constant 9.99999974E-6 : f32
    %856 = vector.broadcast %cst_292 : f32 to vector<16x1xf32>
    %857 = arith.addf %853, %856 : vector<16x1xf32>
    %858 = math.rsqrt %857 : vector<16x1xf32>
    %859 = vector.broadcast %858 : vector<16x1xf32> to vector<16x32xf32>
    %860 = arith.mulf %855, %859 : vector<16x32xf32>
    %861 = vector.broadcast %796 : vector<1x32xf32> to vector<16x32xf32>
    %862 = arith.mulf %860, %861 : vector<16x32xf32>
    %863 = vector.broadcast %798 : vector<1x32xf32> to vector<16x32xf32>
    %864 = arith.addf %862, %863 : vector<16x32xf32>
    %865 = arith.addf %864, %821 : vector<16x32xf32>
    %866 = vector.extract_strided_slice %865 {offsets = [0, 0], sizes = [8, 32], strides = [1, 1]} : vector<16x32xf32> to vector<8x32xf32>
    %c0_293 = arith.constant 0 : index
    %c0_294 = arith.constant 0 : index
    %c0_295 = arith.constant 0 : index
    %867 = vector.load %arg30[%c0_293, %c0_294, %c0_295] : memref<2x8x32xf32, #tpu.memory_space<vmem>>, vector<1x8x32xf32>
    %868 = vector.shape_cast %867 : vector<1x8x32xf32> to vector<8x32xf32>
    %869 = vector.shape_cast %866 : vector<8x32xf32> to vector<1x8x32xf32>
    tpu.vector_store %arg30[%c0_293, %c0_294, %c0_295], %869 {strides = array<i32>} : memref<2x8x32xf32, #tpu.memory_space<vmem>>, vector<1x8x32xf32>,
    %870 = vector.extract_strided_slice %865 {offsets = [8, 0], sizes = [8, 32], strides = [1, 1]} : vector<16x32xf32> to vector<8x32xf32>
    %c1_296 = arith.constant 1 : index
    %c0_297 = arith.constant 0 : index
    %c0_298 = arith.constant 0 : index
    %871 = vector.load %arg30[%c1_296, %c0_297, %c0_298] : memref<2x8x32xf32, #tpu.memory_space<vmem>>, vector<1x8x32xf32>
    %872 = vector.shape_cast %871 : vector<1x8x32xf32> to vector<8x32xf32>
    %873 = vector.shape_cast %870 : vector<8x32xf32> to vector<1x8x32xf32>
    tpu.vector_store %arg30[%c1_296, %c0_297, %c0_298], %873 {strides = array<i32>} : memref<2x8x32xf32, #tpu.memory_space<vmem>>, vector<1x8x32xf32>,
    return
  }
  func.func @transform_0(%arg0: i32) -> (i32, i32, i32) {
    %c0_i32 = arith.constant 0 : i32
    %c0_i32_0 = arith.constant 0 : i32
    %c0_i32_1 = arith.constant 0 : i32
    %c0_i32_2 = arith.constant 0 : i32
    return %c0_i32, %c0_i32_0, %c0_i32_1 : i32, i32, i32
  }
  func.func @transform_1(%arg0: i32) -> (i32, i32, i32) {
    %c0_i32 = arith.constant 0 : i32
    %c0_i32_0 = arith.constant 0 : i32
    %c0_i32_1 = arith.constant 0 : i32
    %c0_i32_2 = arith.constant 0 : i32
    return %c0_i32, %c0_i32_0, %c0_i32_1 : i32, i32, i32
  }
  func.func @transform_2(%arg0: i32) -> (i32, i32) {
    %c0_i32 = arith.constant 0 : i32
    %c0_i32_0 = arith.constant 0 : i32
    %c0_i32_1 = arith.constant 0 : i32
    return %c0_i32, %c0_i32_0 : i32, i32
  }
  func.func @transform_3(%arg0: i32) -> (i32, i32) {
    %c0_i32 = arith.constant 0 : i32
    %c0_i32_0 = arith.constant 0 : i32
    %c0_i32_1 = arith.constant 0 : i32
    return %c0_i32, %c0_i32_0 : i32, i32
  }
  func.func @transform_4(%arg0: i32) -> (i32, i32) {
    %c0_i32 = arith.constant 0 : i32
    %c0_i32_0 = arith.constant 0 : i32
    %c0_i32_1 = arith.constant 0 : i32
    return %c0_i32, %c0_i32_0 : i32, i32
  }
  func.func @transform_5(%arg0: i32) -> (i32, i32) {
    %c0_i32 = arith.constant 0 : i32
    %c0_i32_0 = arith.constant 0 : i32
    %c0_i32_1 = arith.constant 0 : i32
    return %c0_i32, %c0_i32_0 : i32, i32
  }
  func.func @transform_6(%arg0: i32) -> (i32, i32) {
    %c0_i32 = arith.constant 0 : i32
    %c0_i32_0 = arith.constant 0 : i32
    %c0_i32_1 = arith.constant 0 : i32
    return %c0_i32, %c0_i32_0 : i32, i32
  }
  func.func @transform_7(%arg0: i32) -> (i32, i32) {
    %c0_i32 = arith.constant 0 : i32
    %c0_i32_0 = arith.constant 0 : i32
    %c0_i32_1 = arith.constant 0 : i32
    return %c0_i32, %c0_i32_0 : i32, i32
  }
  func.func @transform_8(%arg0: i32) -> (i32, i32) {
    %c0_i32 = arith.constant 0 : i32
    %c0_i32_0 = arith.constant 0 : i32
    %c0_i32_1 = arith.constant 0 : i32
    return %c0_i32, %c0_i32_0 : i32, i32
  }
  func.func @transform_9(%arg0: i32) -> (i32, i32) {
    %c0_i32 = arith.constant 0 : i32
    %c0_i32_0 = arith.constant 0 : i32
    %c0_i32_1 = arith.constant 0 : i32
    return %c0_i32, %c0_i32_0 : i32, i32
  }
  func.func @transform_10(%arg0: i32) -> (i32, i32) {
    %c0_i32 = arith.constant 0 : i32
    %c0_i32_0 = arith.constant 0 : i32
    %c0_i32_1 = arith.constant 0 : i32
    return %c0_i32, %c0_i32_0 : i32, i32
  }
  func.func @transform_11(%arg0: i32) -> (i32, i32) {
    %c0_i32 = arith.constant 0 : i32
    %c0_i32_0 = arith.constant 0 : i32
    %c0_i32_1 = arith.constant 0 : i32
    return %c0_i32, %c0_i32_0 : i32, i32
  }
  func.func @transform_12(%arg0: i32) -> (i32, i32) {
    %c0_i32 = arith.constant 0 : i32
    %c0_i32_0 = arith.constant 0 : i32
    %c0_i32_1 = arith.constant 0 : i32
    return %c0_i32, %c0_i32_0 : i32, i32
  }
  func.func @transform_13(%arg0: i32) -> (i32, i32) {
    %c0_i32 = arith.constant 0 : i32
    %c0_i32_0 = arith.constant 0 : i32
    %c0_i32_1 = arith.constant 0 : i32
    return %c0_i32, %c0_i32_0 : i32, i32
  }
  func.func @transform_14(%arg0: i32) -> (i32, i32) {
    %c0_i32 = arith.constant 0 : i32
    %c0_i32_0 = arith.constant 0 : i32
    %c0_i32_1 = arith.constant 0 : i32
    return %c0_i32, %c0_i32_0 : i32, i32
  }
  func.func @transform_15(%arg0: i32) -> (i32, i32) {
    %c0_i32 = arith.constant 0 : i32
    %c0_i32_0 = arith.constant 0 : i32
    %c0_i32_1 = arith.constant 0 : i32
    return %c0_i32, %c0_i32_0 : i32, i32
  }
  func.func @transform_16(%arg0: i32) -> (i32, i32) {
    %c0_i32 = arith.constant 0 : i32
    %c0_i32_0 = arith.constant 0 : i32
    %c0_i32_1 = arith.constant 0 : i32
    return %c0_i32, %c0_i32_0 : i32, i32
  }
  func.func @transform_17(%arg0: i32) -> (i32, i32, i32) {
    %c0_i32 = arith.constant 0 : i32
    %c0_i32_0 = arith.constant 0 : i32
    %c0_i32_1 = arith.constant 0 : i32
    %c0_i32_2 = arith.constant 0 : i32
    return %c0_i32, %c0_i32_0, %c0_i32_1 : i32, i32, i32
  }
  func.func @transform_18(%arg0: i32) -> (i32, i32, i32) {
    %c0_i32 = arith.constant 0 : i32
    %c0_i32_0 = arith.constant 0 : i32
    %c0_i32_1 = arith.constant 0 : i32
    %c0_i32_2 = arith.constant 0 : i32
    return %c0_i32, %c0_i32_0, %c0_i32_1 : i32, i32, i32
  }
  func.func @transform_19(%arg0: i32) -> (i32, i32, i32) {
    %c0_i32 = arith.constant 0 : i32
    %c0_i32_0 = arith.constant 0 : i32
    %c0_i32_1 = arith.constant 0 : i32
    %c0_i32_2 = arith.constant 0 : i32
    return %c0_i32, %c0_i32_0, %c0_i32_1 : i32, i32, i32
  }
  func.func @transform_20(%arg0: i32) -> (i32, i32, i32) {
    %c0_i32 = arith.constant 0 : i32
    %c0_i32_0 = arith.constant 0 : i32
    %c0_i32_1 = arith.constant 0 : i32
    %c0_i32_2 = arith.constant 0 : i32
    return %c0_i32, %c0_i32_0, %c0_i32_1 : i32, i32, i32
  }
  func.func @transform_21(%arg0: i32) -> (i32, i32, i32) {
    %c0_i32 = arith.constant 0 : i32
    %c0_i32_0 = arith.constant 0 : i32
    %c0_i32_1 = arith.constant 0 : i32
    %c0_i32_2 = arith.constant 0 : i32
    return %c0_i32, %c0_i32_0, %c0_i32_1 : i32, i32, i32
  }
  func.func @transform_22(%arg0: i32) -> (i32, i32, i32) {
    %c0_i32 = arith.constant 0 : i32
    %c0_i32_0 = arith.constant 0 : i32
    %c0_i32_1 = arith.constant 0 : i32
    %c0_i32_2 = arith.constant 0 : i32
    return %c0_i32, %c0_i32_0, %c0_i32_1 : i32, i32, i32
  }
  func.func @transform_23(%arg0: i32) -> (i32, i32, i32) {
    %c0_i32 = arith.constant 0 : i32
    %c0_i32_0 = arith.constant 0 : i32
    %c0_i32_1 = arith.constant 0 : i32
    %c0_i32_2 = arith.constant 0 : i32
    return %c0_i32, %c0_i32_0, %c0_i32_1 : i32, i32, i32
  }
  func.func @transform_24(%arg0: i32) -> (i32, i32, i32) {
    %c0_i32 = arith.constant 0 : i32
    %c0_i32_0 = arith.constant 0 : i32
    %c0_i32_1 = arith.constant 0 : i32
    %c0_i32_2 = arith.constant 0 : i32
    return %c0_i32, %c0_i32_0, %c0_i32_1 : i32, i32, i32
  }
  func.func @transform_25(%arg0: i32) -> (i32, i32, i32) {
    %c0_i32 = arith.constant 0 : i32
    %c0_i32_0 = arith.constant 0 : i32
    %c0_i32_1 = arith.constant 0 : i32
    %c0_i32_2 = arith.constant 0 : i32
    return %c0_i32, %c0_i32_0, %c0_i32_1 : i32, i32, i32
  }
  func.func @transform_26(%arg0: i32) -> (i32, i32, i32) {
    %c0_i32 = arith.constant 0 : i32
    %c0_i32_0 = arith.constant 0 : i32
    %c0_i32_1 = arith.constant 0 : i32
    %c0_i32_2 = arith.constant 0 : i32
    return %c0_i32, %c0_i32_0, %c0_i32_1 : i32, i32, i32
  }
  func.func @transform_27(%arg0: i32) -> (i32, i32, i32) {
    %c0_i32 = arith.constant 0 : i32
    %c0_i32_0 = arith.constant 0 : i32
    %c0_i32_1 = arith.constant 0 : i32
    %c0_i32_2 = arith.constant 0 : i32
    return %c0_i32, %c0_i32_0, %c0_i32_1 : i32, i32, i32
  }
  func.func @transform_28(%arg0: i32) -> (i32, i32, i32) {
    %c0_i32 = arith.constant 0 : i32
    %c0_i32_0 = arith.constant 0 : i32
    %c0_i32_1 = arith.constant 0 : i32
    %c0_i32_2 = arith.constant 0 : i32
    return %c0_i32, %c0_i32_0, %c0_i32_1 : i32, i32, i32
  }
  func.func @transform_29(%arg0: i32) -> (i32, i32, i32) {
    %c0_i32 = arith.constant 0 : i32
    %c0_i32_0 = arith.constant 0 : i32
    %c0_i32_1 = arith.constant 0 : i32
    %c0_i32_2 = arith.constant 0 : i32
    return %c0_i32, %c0_i32_0, %c0_i32_1 : i32, i32, i32
  }
}

</mosaic_0001>

<llo_original>
// kernel: _lambda_.1
$region0: #{_lambda_.1}
  #allocation0 [shape = 'u32[]', space=smem, size = 0x4, offset = 0x4, fixed_abs, tag = 'smem constant byte address 0x4 - core index']
  #allocation1 [shape = 'u32[144,128]{1,0:T(1,128)}', space=vmem, size = 0x12000, scoped, tag = 'internal scratch']
  %s0 = inlined_call_operand.smem [shape: u32[30], index: -1, kind: input, shape index: {}]
  %s1 = sld [smem:[%s0]]
  %s2 = scalar_lea.smem %s0, 1
  %s3 = sld [smem:[%s2]]
  %s4 = scalar_lea.smem %s0, 2
  %s5 = sld [smem:[%s4]]
  %s6 = scalar_lea.smem %s0, 3
  %s7 = sld [smem:[%s6]]
  %s8 = scalar_lea.smem %s0, 4
  %s9 = sld [smem:[%s8]]
  %s10 = scalar_lea.smem %s0, 5
  %s11 = sld [smem:[%s10]]
  %s12 = scalar_lea.smem %s0, 6
  %s13 = sld [smem:[%s12]]
  %s14 = scalar_lea.smem %s0, 7
  %s15 = sld [smem:[%s14]]
  %s16 = scalar_lea.smem %s0, 8
  %s17 = sld [smem:[%s16]]
  %s18 = scalar_lea.smem %s0, 9
  %s19 = sld [smem:[%s18]]
  %s20 = scalar_lea.smem %s0, 10
  %s21 = sld [smem:[%s20]]
  %s22 = scalar_lea.smem %s0, 11
  %s23 = sld [smem:[%s22]]
  %s24 = scalar_lea.smem %s0, 12
  %s25 = sld [smem:[%s24]]
  %s26 = scalar_lea.smem %s0, 13
  %s27 = sld [smem:[%s26]]
  %s28 = scalar_lea.smem %s0, 14
  %s29 = sld [smem:[%s28]]
  %s30 = scalar_lea.smem %s0, 15
  %s31 = sld [smem:[%s30]]
  %s32 = scalar_lea.smem %s0, 16
  %s33 = sld [smem:[%s32]]
  %s34 = scalar_lea.smem %s0, 17
  %s35 = sld [smem:[%s34]]
  %s36 = scalar_lea.smem %s0, 18
  %s37 = sld [smem:[%s36]]
  %s38 = scalar_lea.smem %s0, 19
  %s39 = sld [smem:[%s38]]
  %s40 = scalar_lea.smem %s0, 20
  %s41 = sld [smem:[%s40]]
  %s42 = scalar_lea.smem %s0, 21
  %s43 = sld [smem:[%s42]]
  %s44 = scalar_lea.smem %s0, 22
  %s45 = sld [smem:[%s44]]
  %s46 = scalar_lea.smem %s0, 23
  %s47 = sld [smem:[%s46]]
  %s48 = scalar_lea.smem %s0, 24
  %s49 = sld [smem:[%s48]]
  %s50 = scalar_lea.smem %s0, 25
  %s51 = sld [smem:[%s50]]
  %s52 = scalar_lea.smem %s0, 26
  %s53 = sld [smem:[%s52]]
  %s54 = scalar_lea.smem %s0, 27
  %s55 = sld [smem:[%s54]]
  %s56 = scalar_lea.smem %s0, 28
  %s57 = sld [smem:[%s56]]
  %s58 = scalar_lea.smem %s0, 29
  %s59 = sld [smem:[%s58]]
  %s60 = sld [smem:[#allocation0]]
  $region182: #{_lambda_.1} parent=0
    _
  %s62 = ssub.s32 1, %s60
  %s63 = scalar_select 0, %s62, %s60
  $region1: #{_lambda_.1} parent=0
    #allocation2 [shape = 'u8[4096]{0}', space=vmem, size = 0x1000, scoped, tag = 'input window, operand 2, single buffered']
    #allocation3 [shape = 's32[1]{0}', space=sflag, size = 0x4, scoped, tag = 'scoped memory for _lambda_.1']
    #allocation4 [shape = 's32[1]{0}', space=sflag, size = 0x4, scoped, tag = 'scoped memory for _lambda_.1']
    #allocation5 [shape = 'u8[8192]{0}', space=vmem, size = 0x2000, scoped, tag = 'input window, operand 3, single buffered']
    #allocation6 [shape = 's32[1]{0}', space=sflag, size = 0x4, scoped, tag = 'scoped memory for _lambda_.1']
    #allocation7 [shape = 'u8[16384]{0}', space=vmem, size = 0x4000, scoped, tag = 'input window, operand 4, single buffered']
    #allocation8 [shape = 'u8[16384]{0}', space=vmem, size = 0x4000, scoped, tag = 'input window, operand 5, single buffered']
    #allocation9 [shape = 's32[1]{0}', space=sflag, size = 0x4, scoped, tag = 'scoped memory for _lambda_.1']
    #allocation10 [shape = 'u8[32768]{0}', space=vmem, size = 0x8000, scoped, tag = 'input window, operand 6, single buffered']
    #allocation11 [shape = 'u8[8192]{0}', space=vmem, size = 0x2000, scoped, tag = 'input window, operand 7, single buffered']
    #allocation12 [shape = 's32[1]{0}', space=sflag, size = 0x4, scoped, tag = 'scoped memory for _lambda_.1']
    #allocation13 [shape = 'u8[512]{0}', space=vmem, size = 0x400, scoped, tag = 'input window, operand 8, single buffered']
    #allocation14 [shape = 'u8[8192]{0}', space=vmem, size = 0x2000, scoped, tag = 'input window, operand 11, single buffered']
    #allocation15 [shape = 's32[1]{0}', space=sflag, size = 0x4, scoped, tag = 'scoped memory for _lambda_.1']
    #allocation16 [shape = 'u8[512]{0}', space=vmem, size = 0x400, scoped, tag = 'input window, operand 12, single buffered']
    #allocation17 [shape = 'u8[8192]{0}', space=vmem, size = 0x2000, scoped, tag = 'input window, operand 13, single buffered']
    #allocation18 [shape = 's32[1]{0}', space=sflag, size = 0x4, scoped, tag = 'scoped memory for _lambda_.1']
    #allocation19 [shape = 'u8[16384]{0}', space=vmem, size = 0x4000, scoped, tag = 'input window, operand 17, single buffered']
    #allocation20 [shape = 'u8[1024]{0}', space=vmem, size = 0x400, scoped, tag = 'input window, operand 20, single buffered']
    #allocation21 [shape = 's32[1]{0}', space=sflag, size = 0x4, scoped, tag = 'scoped memory for _lambda_.1']
    #allocation22 [shape = 'u8[1024]{0}', space=vmem, size = 0x400, scoped, tag = 'input window, operand 24, single buffered']
    #allocation23 [shape = 'u8[1024]{0}', space=vmem, size = 0x400, scoped, tag = 'input window, operand 26, single buffered']
    #allocation24 [shape = 's32[1]{0}', space=sflag, size = 0x4, scoped, tag = 'scoped memory for _lambda_.1']
    #allocation25 [shape = 'u8[8192]{0}', space=vmem, size = 0x2000, scoped, tag = 'output window, operand 0, single buffered']
    %64 = vsyncpa [#allocation3], 0
    %65 = vsyncpa [#allocation6], 0
    %66 = vsyncpa [#allocation9], 0
    %67 = vsyncpa [#allocation12], 0
    %68 = vsyncpa [#allocation15], 0
    %69 = vsyncpa [#allocation18], 0
    %70 = vsyncpa [#allocation21], 0
    %71 = vsyncpa [#allocation24], 0
    %72 = vsyncpa [#allocation4], 0
    // Predicated region
    $region2: #{_lambda_.1} parent=1 // pred_check
      _
    $region3: #{_lambda_.1} parent=1 // pred_check_branch
      %74 = sbr.rel (0) target = $region5
    $region4: #{_lambda_.1} parent=1 // pred_region
      _
    $region5: #{_lambda_.1} parent=1 // pred_fallthru
      _
    // Predicated region
    $region6: #{_lambda_.1} parent=1 // pred_check
      _
    $region7: #{_lambda_.1} parent=1 // pred_check_branch
      %76 = sbr.rel (0) target = $region9
    $region8: #{_lambda_.1} parent=1 // pred_region
      _
    $region9: #{_lambda_.1} parent=1 // pred_fallthru
      _
    // Predicated region
    $region10: #{_lambda_.1} parent=1 // pred_check
      _
    $region11: #{_lambda_.1} parent=1 // pred_check_branch
      %78 = sbr.rel (0) target = $region13
    $region12: #{_lambda_.1} parent=1 // pred_region
      %s80 = ssub.s32 128, 128
      %81 = vsyncadd [#allocation3], %s80
      %s83 = sshll.u32 [#allocation2], 4
      %s84 = int_to_ptr.vmem [resolvable:$true] %s83
      %86 = dma.hbm_to_vmem [thread:$0]  %s5, 128, %s84, [#allocation3]
    $region13: #{_lambda_.1} parent=1 // pred_fallthru
      _
    // Predicated region
    $region14: #{_lambda_.1} parent=1 // pred_check
      _
    $region15: #{_lambda_.1} parent=1 // pred_check_branch
      %88 = sbr.rel (0) target = $region17
    $region16: #{_lambda_.1} parent=1 // pred_region
      %s90 = ssub.s32 256, 256
      %91 = vsyncadd [#allocation6], %s90
      %s92 = sshll.u32 [#allocation5], 4
      %s93 = int_to_ptr.vmem [resolvable:$true] %s92
      %98 = dma.hbm_to_vmem [thread:$0]  %s7, 256, %s93, [#allocation6], 64, 64, 4
    $region17: #{_lambda_.1} parent=1 // pred_fallthru
      _
    // Predicated region
    $region18: #{_lambda_.1} parent=1 // pred_check
      _
    $region19: #{_lambda_.1} parent=1 // pred_check_branch
      %100 = sbr.rel (0) target = $region21
    $region20: #{_lambda_.1} parent=1 // pred_region
      %s102 = ssub.s32 512, 512
      %103 = vsyncadd [#allocation6], %s102
      %s104 = sshll.u32 [#allocation7], 4
      %s105 = int_to_ptr.vmem [resolvable:$true] %s104
      %110 = dma.hbm_to_vmem [thread:$0]  %s9, 512, %s105, [#allocation6], 128, 128, 8
    $region21: #{_lambda_.1} parent=1 // pred_fallthru
      _
    // Predicated region
    $region22: #{_lambda_.1} parent=1 // pred_check
      _
    $region23: #{_lambda_.1} parent=1 // pred_check_branch
      %112 = sbr.rel (0) target = $region25
    $region24: #{_lambda_.1} parent=1 // pred_region
      %s114 = ssub.s32 512, 512
      %115 = vsyncadd [#allocation9], %s114
      %s116 = sshll.u32 [#allocation8], 4
      %s117 = int_to_ptr.vmem [resolvable:$true] %s116
      %122 = dma.hbm_to_vmem [thread:$0]  %s11, 512, %s117, [#allocation9], 64, 64, 4
    $region25: #{_lambda_.1} parent=1 // pred_fallthru
      _
    // Predicated region
    $region26: #{_lambda_.1} parent=1 // pred_check
      _
    $region27: #{_lambda_.1} parent=1 // pred_check_branch
      %124 = sbr.rel (0) target = $region29
    $region28: #{_lambda_.1} parent=1 // pred_region
      %s126 = ssub.s32 1024, 1024
      %127 = vsyncadd [#allocation9], %s126
      %s128 = sshll.u32 [#allocation10], 4
      %s129 = int_to_ptr.vmem [resolvable:$true] %s128
      %134 = dma.hbm_to_vmem [thread:$0]  %s13, 1024, %s129, [#allocation9], 128, 128, 8
    $region29: #{_lambda_.1} parent=1 // pred_fallthru
      _
    // Predicated region
    $region30: #{_lambda_.1} parent=1 // pred_check
      _
    $region31: #{_lambda_.1} parent=1 // pred_check_branch
      %136 = sbr.rel (0) target = $region33
    $region32: #{_lambda_.1} parent=1 // pred_region
      %s138 = ssub.s32 256, 256
      %139 = vsyncadd [#allocation12], %s138
      %s140 = sshll.u32 [#allocation11], 4
      %s141 = int_to_ptr.vmem [resolvable:$true] %s140
      %146 = dma.hbm_to_vmem [thread:$0]  %s15, 256, %s141, [#allocation12], 64, 64, 4
    $region33: #{_lambda_.1} parent=1 // pred_fallthru
      _
    // Predicated region
    $region34: #{_lambda_.1} parent=1 // pred_check
      _
    $region35: #{_lambda_.1} parent=1 // pred_check_branch
      %148 = sbr.rel (0) target = $region37
    $region36: #{_lambda_.1} parent=1 // pred_region
      %s150 = ssub.s32 16, 16
      %151 = vsyncadd [#allocation12], %s150
      %s153 = sshll.u32 [#allocation13], 4
      %s154 = int_to_ptr.vmem [resolvable:$true] %s153
      %156 = dma.hbm_to_vmem [thread:$0]  %s17, 16, %s154, [#allocation12]
    $region37: #{_lambda_.1} parent=1 // pred_fallthru
      _
    // Predicated region
    $region38: #{_lambda_.1} parent=1 // pred_check
      _
    $region39: #{_lambda_.1} parent=1 // pred_check_branch
      %158 = sbr.rel (0) target = $region41
    $region40: #{_lambda_.1} parent=1 // pred_region
      _
    $region41: #{_lambda_.1} parent=1 // pred_fallthru
      _
    // Predicated region
    $region42: #{_lambda_.1} parent=1 // pred_check
      _
    $region43: #{_lambda_.1} parent=1 // pred_check_branch
      %160 = sbr.rel (0) target = $region45
    $region44: #{_lambda_.1} parent=1 // pred_region
      _
    $region45: #{_lambda_.1} parent=1 // pred_fallthru
      _
    // Predicated region
    $region46: #{_lambda_.1} parent=1 // pred_check
      _
    $region47: #{_lambda_.1} parent=1 // pred_check_branch
      %162 = sbr.rel (0) target = $region49
    $region48: #{_lambda_.1} parent=1 // pred_region
      %s164 = ssub.s32 256, 256
      %165 = vsyncadd [#allocation15], %s164
      %s166 = sshll.u32 [#allocation14], 4
      %s167 = int_to_ptr.vmem [resolvable:$true] %s166
      %172 = dma.hbm_to_vmem [thread:$0]  %s23, 256, %s167, [#allocation15], 64, 64, 4
    $region49: #{_lambda_.1} parent=1 // pred_fallthru
      _
    // Predicated region
    $region50: #{_lambda_.1} parent=1 // pred_check
      _
    $region51: #{_lambda_.1} parent=1 // pred_check_branch
      %174 = sbr.rel (0) target = $region53
    $region52: #{_lambda_.1} parent=1 // pred_region
      %s176 = ssub.s32 16, 16
      %177 = vsyncadd [#allocation15], %s176
      %s179 = sshll.u32 [#allocation16], 4
      %s180 = int_to_ptr.vmem [resolvable:$true] %s179
      %182 = dma.hbm_to_vmem [thread:$0]  %s25, 16, %s180, [#allocation15]
    $region53: #{_lambda_.1} parent=1 // pred_fallthru
      _
    // Predicated region
    $region54: #{_lambda_.1} parent=1 // pred_check
      _
    $region55: #{_lambda_.1} parent=1 // pred_check_branch
      %184 = sbr.rel (0) target = $region57
    $region56: #{_lambda_.1} parent=1 // pred_region
      %s186 = ssub.s32 256, 256
      %187 = vsyncadd [#allocation18], %s186
      %s188 = sshll.u32 [#allocation17], 4
      %s189 = int_to_ptr.vmem [resolvable:$true] %s188
      %194 = dma.hbm_to_vmem [thread:$0]  %s27, 256, %s189, [#allocation18], 64, 64, 4
    $region57: #{_lambda_.1} parent=1 // pred_fallthru
      _
    // Predicated region
    $region58: #{_lambda_.1} parent=1 // pred_check
      _
    $region59: #{_lambda_.1} parent=1 // pred_check_branch
      %196 = sbr.rel (0) target = $region61
    $region60: #{_lambda_.1} parent=1 // pred_region
      _
    $region61: #{_lambda_.1} parent=1 // pred_fallthru
      _
    // Predicated region
    $region62: #{_lambda_.1} parent=1 // pred_check
      _
    $region63: #{_lambda_.1} parent=1 // pred_check_branch
      %198 = sbr.rel (0) target = $region65
    $region64: #{_lambda_.1} parent=1 // pred_region
      _
    $region65: #{_lambda_.1} parent=1 // pred_fallthru
      _
    // Predicated region
    $region66: #{_lambda_.1} parent=1 // pred_check
      _
    $region67: #{_lambda_.1} parent=1 // pred_check_branch
      %200 = sbr.rel (0) target = $region69
    $region68: #{_lambda_.1} parent=1 // pred_region
      _
    $region69: #{_lambda_.1} parent=1 // pred_fallthru
      _
    // Predicated region
    $region70: #{_lambda_.1} parent=1 // pred_check
      _
    $region71: #{_lambda_.1} parent=1 // pred_check_branch
      %202 = sbr.rel (0) target = $region73
    $region72: #{_lambda_.1} parent=1 // pred_region
      %s204 = ssub.s32 512, 512
      %205 = vsyncadd [#allocation18], %s204
      %s206 = sshll.u32 [#allocation19], 4
      %s207 = int_to_ptr.vmem [resolvable:$true] %s206
      %212 = dma.hbm_to_vmem [thread:$0]  %s35, 512, %s207, [#allocation18], 64, 64, 4
    $region73: #{_lambda_.1} parent=1 // pred_fallthru
      _
    // Predicated region
    $region74: #{_lambda_.1} parent=1 // pred_check
      _
    $region75: #{_lambda_.1} parent=1 // pred_check_branch
      %214 = sbr.rel (0) target = $region77
    $region76: #{_lambda_.1} parent=1 // pred_region
      _
    $region77: #{_lambda_.1} parent=1 // pred_fallthru
      _
    // Predicated region
    $region78: #{_lambda_.1} parent=1 // pred_check
      _
    $region79: #{_lambda_.1} parent=1 // pred_check_branch
      %216 = sbr.rel (0) target = $region81
    $region80: #{_lambda_.1} parent=1 // pred_region
      _
    $region81: #{_lambda_.1} parent=1 // pred_fallthru
      _
    // Predicated region
    $region82: #{_lambda_.1} parent=1 // pred_check
      _
    $region83: #{_lambda_.1} parent=1 // pred_check_branch
      %218 = sbr.rel (0) target = $region85
    $region84: #{_lambda_.1} parent=1 // pred_region
      %s220 = ssub.s32 32, 32
      %221 = vsyncadd [#allocation21], %s220
      %s222 = sshll.u32 [#allocation20], 4
      %s223 = int_to_ptr.vmem [resolvable:$true] %s222
      %228 = dma.hbm_to_vmem [thread:$0]  %s41, 32, %s223, [#allocation21], 16, 16, 1
    $region85: #{_lambda_.1} parent=1 // pred_fallthru
      _
    // Predicated region
    $region86: #{_lambda_.1} parent=1 // pred_check
      _
    $region87: #{_lambda_.1} parent=1 // pred_check_branch
      %230 = sbr.rel (0) target = $region89
    $region88: #{_lambda_.1} parent=1 // pred_region
      _
    $region89: #{_lambda_.1} parent=1 // pred_fallthru
      _
    // Predicated region
    $region90: #{_lambda_.1} parent=1 // pred_check
      _
    $region91: #{_lambda_.1} parent=1 // pred_check_branch
      %232 = sbr.rel (0) target = $region93
    $region92: #{_lambda_.1} parent=1 // pred_region
      _
    $region93: #{_lambda_.1} parent=1 // pred_fallthru
      _
    // Predicated region
    $region94: #{_lambda_.1} parent=1 // pred_check
      _
    $region95: #{_lambda_.1} parent=1 // pred_check_branch
      %234 = sbr.rel (0) target = $region97
    $region96: #{_lambda_.1} parent=1 // pred_region
      _
    $region97: #{_lambda_.1} parent=1 // pred_fallthru
      _
    // Predicated region
    $region98: #{_lambda_.1} parent=1 // pred_check
      _
    $region99: #{_lambda_.1} parent=1 // pred_check_branch
      %236 = sbr.rel (0) target = $region101
    $region100: #{_lambda_.1} parent=1 // pred_region
      %s238 = ssub.s32 32, 32
      %239 = vsyncadd [#allocation21], %s238
      %s240 = sshll.u32 [#allocation22], 4
      %s241 = int_to_ptr.vmem [resolvable:$true] %s240
      %246 = dma.hbm_to_vmem [thread:$0]  %s49, 32, %s241, [#allocation21], 16, 16, 1
    $region101: #{_lambda_.1} parent=1 // pred_fallthru
      _
    // Predicated region
    $region102: #{_lambda_.1} parent=1 // pred_check
      _
    $region103: #{_lambda_.1} parent=1 // pred_check_branch
      %248 = sbr.rel (0) target = $region105
    $region104: #{_lambda_.1} parent=1 // pred_region
      _
    $region105: #{_lambda_.1} parent=1 // pred_fallthru
      _
    // Predicated region
    $region106: #{_lambda_.1} parent=1 // pred_check
      _
    $region107: #{_lambda_.1} parent=1 // pred_check_branch
      %250 = sbr.rel (0) target = $region109
    $region108: #{_lambda_.1} parent=1 // pred_region
      %s252 = ssub.s32 32, 32
      %253 = vsyncadd [#allocation24], %s252
      %s254 = sshll.u32 [#allocation23], 4
      %s255 = int_to_ptr.vmem [resolvable:$true] %s254
      %260 = dma.hbm_to_vmem [thread:$0]  %s53, 32, %s255, [#allocation24], 16, 16, 1
    $region109: #{_lambda_.1} parent=1 // pred_fallthru
      _
    // Predicated region
    $region110: #{_lambda_.1} parent=1 // pred_check
      _
    $region111: #{_lambda_.1} parent=1 // pred_check_branch
      %262 = sbr.rel (0) target = $region113
    $region112: #{_lambda_.1} parent=1 // pred_region
      _
    $region113: #{_lambda_.1} parent=1 // pred_fallthru
      _
    // Predicated region
    $region114: #{_lambda_.1} parent=1 // pred_check
      _
    $region115: #{_lambda_.1} parent=1 // pred_check_branch
      %264 = sbr.rel (0) target = $region117
    $region116: #{_lambda_.1} parent=1 // pred_region
      _
    $region117: #{_lambda_.1} parent=1 // pred_fallthru
      _
    // Predicated region
    $region118: #{_lambda_.1} parent=1 // pred_check
      _
    $region119: #{_lambda_.1} parent=1 // pred_check_branch
      %266 = sbr.rel (0) target = $region121
    $region120: #{_lambda_.1} parent=1 // pred_region
      %267 = dma.done [#allocation3], 128
    $region121: #{_lambda_.1} parent=1 // pred_fallthru
      _
    // Predicated region
    $region122: #{_lambda_.1} parent=1 // pred_check
      _
    $region123: #{_lambda_.1} parent=1 // pred_check_branch
      %269 = sbr.rel (0) target = $region125
    $region124: #{_lambda_.1} parent=1 // pred_region
      %270 = dma.done [#allocation6], 256
    $region125: #{_lambda_.1} parent=1 // pred_fallthru
      _
    // Predicated region
    $region126: #{_lambda_.1} parent=1 // pred_check
      _
    $region127: #{_lambda_.1} parent=1 // pred_check_branch
      %272 = sbr.rel (0) target = $region129
    $region128: #{_lambda_.1} parent=1 // pred_region
      %273 = dma.done [#allocation6], 512
    $region129: #{_lambda_.1} parent=1 // pred_fallthru
      _
    // Predicated region
    $region130: #{_lambda_.1} parent=1 // pred_check
      _
    $region131: #{_lambda_.1} parent=1 // pred_check_branch
      %275 = sbr.rel (0) target = $region133
    $region132: #{_lambda_.1} parent=1 // pred_region
      %276 = dma.done [#allocation9], 512
    $region133: #{_lambda_.1} parent=1 // pred_fallthru
      _
    // Predicated region
    $region134: #{_lambda_.1} parent=1 // pred_check
      _
    $region135: #{_lambda_.1} parent=1 // pred_check_branch
      %278 = sbr.rel (0) target = $region137
    $region136: #{_lambda_.1} parent=1 // pred_region
      %279 = dma.done [#allocation9], 1024
    $region137: #{_lambda_.1} parent=1 // pred_fallthru
      _
    // Predicated region
    $region138: #{_lambda_.1} parent=1 // pred_check
      _
    $region139: #{_lambda_.1} parent=1 // pred_check_branch
      %281 = sbr.rel (0) target = $region141
    $region140: #{_lambda_.1} parent=1 // pred_region
      %282 = dma.done [#allocation12], 256
    $region141: #{_lambda_.1} parent=1 // pred_fallthru
      _
    // Predicated region
    $region142: #{_lambda_.1} parent=1 // pred_check
      _
    $region143: #{_lambda_.1} parent=1 // pred_check_branch
      %284 = sbr.rel (0) target = $region145
    $region144: #{_lambda_.1} parent=1 // pred_region
      %285 = dma.done [#allocation12], 16
    $region145: #{_lambda_.1} parent=1 // pred_fallthru
      _
    // Predicated region
    $region146: #{_lambda_.1} parent=1 // pred_check
      _
    $region147: #{_lambda_.1} parent=1 // pred_check_branch
      %287 = sbr.rel (0) target = $region149
    $region148: #{_lambda_.1} parent=1 // pred_region
      %288 = dma.done [#allocation15], 256
    $region149: #{_lambda_.1} parent=1 // pred_fallthru
      _
    // Predicated region
    $region150: #{_lambda_.1} parent=1 // pred_check
      _
    $region151: #{_lambda_.1} parent=1 // pred_check_branch
      %290 = sbr.rel (0) target = $region153
    $region152: #{_lambda_.1} parent=1 // pred_region
      %291 = dma.done [#allocation15], 16
    $region153: #{_lambda_.1} parent=1 // pred_fallthru
      _
    // Predicated region
    $region154: #{_lambda_.1} parent=1 // pred_check
      _
    $region155: #{_lambda_.1} parent=1 // pred_check_branch
      %293 = sbr.rel (0) target = $region157
    $region156: #{_lambda_.1} parent=1 // pred_region
      %294 = dma.done [#allocation18], 256
    $region157: #{_lambda_.1} parent=1 // pred_fallthru
      _
    // Predicated region
    $region158: #{_lambda_.1} parent=1 // pred_check
      _
    $region159: #{_lambda_.1} parent=1 // pred_check_branch
      %296 = sbr.rel (0) target = $region161
    $region160: #{_lambda_.1} parent=1 // pred_region
      %297 = dma.done [#allocation18], 512
    $region161: #{_lambda_.1} parent=1 // pred_fallthru
      _
    // Predicated region
    $region162: #{_lambda_.1} parent=1 // pred_check
      _
    $region163: #{_lambda_.1} parent=1 // pred_check_branch
      %299 = sbr.rel (0) target = $region165
    $region164: #{_lambda_.1} parent=1 // pred_region
      %300 = dma.done [#allocation21], 32
    $region165: #{_lambda_.1} parent=1 // pred_fallthru
      _
    // Predicated region
    $region166: #{_lambda_.1} parent=1 // pred_check
      _
    $region167: #{_lambda_.1} parent=1 // pred_check_branch
      %302 = sbr.rel (0) target = $region169
    $region168: #{_lambda_.1} parent=1 // pred_region
      %303 = dma.done [#allocation21], 32
    $region169: #{_lambda_.1} parent=1 // pred_fallthru
      _
    // Predicated region
    $region170: #{_lambda_.1} parent=1 // pred_check
      _
    $region171: #{_lambda_.1} parent=1 // pred_check_branch
      %305 = sbr.rel (0) target = $region173
    $region172: #{_lambda_.1} parent=1 // pred_region
      %306 = dma.done [#allocation24], 32
    $region173: #{_lambda_.1} parent=1 // pred_fallthru
      _
    %v308 = vld [vmem:[%s1] sm:$0xff]
    %s309 = scalar_lea.vmem %s1, 8
    %v310 = vld [vmem:[%s309] sm:$0xff]
    %v311 = vld [vmem:[#allocation2] sm:$0xff]
    %v312 = vld [vmem:[#allocation5] sm:$0xf]
    %v313 = vld [vmem:[#allocation5 + $0x4] sm:$0xf]
    %v314 = vld [vmem:[#allocation5 + $0x8] sm:$0xf]
    %v315 = vld [vmem:[#allocation5 + $0xc] sm:$0xf]
    %v316 = vld [vmem:[#allocation7] sm:$0xff]
    %v317 = vld [vmem:[#allocation7 + $0x8] sm:$0xff]
    %v318 = vld [vmem:[#allocation7 + $0x10] sm:$0xff]
    %v319 = vld [vmem:[#allocation7 + $0x18] sm:$0xff]
    %v320 = vld [vmem:[#allocation8] sm:$0xf]
    %v321 = vld [vmem:[#allocation8 + $0x4] sm:$0xf]
    %v322 = vld [vmem:[#allocation8 + $0x8] sm:$0xf]
    %v323 = vld [vmem:[#allocation8 + $0xc] sm:$0xf]
    %v324 = vld [vmem:[#allocation8 + $0x10] sm:$0xf]
    %v325 = vld [vmem:[#allocation8 + $0x14] sm:$0xf]
    %v326 = vld [vmem:[#allocation8 + $0x18] sm:$0xf]
    %v327 = vld [vmem:[#allocation8 + $0x1c] sm:$0xf]
    %v328 = vld [vmem:[#allocation10] sm:$0xff]
    %v329 = vld [vmem:[#allocation10 + $0x8] sm:$0xff]
    %v330 = vld [vmem:[#allocation10 + $0x10] sm:$0xff]
    %v331 = vld [vmem:[#allocation10 + $0x18] sm:$0xff]
    %v332 = vld [vmem:[#allocation10 + $0x20] sm:$0xff]
    %v333 = vld [vmem:[#allocation10 + $0x28] sm:$0xff]
    %v334 = vld [vmem:[#allocation10 + $0x30] sm:$0xff]
    %v335 = vld [vmem:[#allocation10 + $0x38] sm:$0xff]
    %v336 = vld [vmem:[#allocation11] sm:$0xf]
    %v337 = vld [vmem:[#allocation11 + $0x4] sm:$0xf]
    %v338 = vld [vmem:[#allocation11 + $0x8] sm:$0xf]
    %v339 = vld [vmem:[#allocation11 + $0xc] sm:$0xf]
    %v340 = vld [vmem:[#allocation13] sm:$0x1]
    %v341 = vpack.c.bf16 %v308, %v308
    %343 = vset.pattern.permute.xlu0 0
    %344 = vperm.xlu0 %343, %v316
    %v345 = vpop.permute.xlu0 %344
    %348 = vset.pattern.permute.xlu0 0
    %349 = vperm.xlu0 %348, %v317
    %v350 = vpop.permute.xlu0 %349
    %353 = vset.pattern.permute.xlu0 0
    %354 = vperm.xlu0 %353, %v318
    %v355 = vpop.permute.xlu0 %354
    %358 = vset.pattern.permute.xlu0 0
    %359 = vperm.xlu0 %358, %v319
    %v360 = vpop.permute.xlu0 %359
    %v366 = vunpack.c.l.b16 %v312
    %v367 = vunpack.c.l.b16 %v313
    %v368 = vunpack.c.l.b16 %v314
    %v369 = vunpack.c.l.b16 %v315
    %v370 = vpack.c.b16 %v367, %v366
    %v371 = vpack.c.b16 %v369, %v368
    %374 = vxpose.xlu0.c.b16.start [1/8] %v370, 128
    %375 = vxpose.xlu0.c.b16.cont [2/8] %v371, 128
    %376 = vxpose.xlu0.c.b16.cont [3/8] 0, 128
    %377 = vxpose.xlu0.c.b16.cont [4/8] 0, 128
    %378 = vxpose.xlu0.c.b16.cont [5/8] 0, 128
    %379 = vxpose.xlu0.c.b16.cont [6/8] 0, 128
    %380 = vxpose.xlu0.c.b16.cont [7/8] 0, 128
    %381 = vxpose.xlu0.c.b16.end [8/8] 0, 128
    %v382 = vpop.trf.xlu0
    %v383 = vpop.trf.xlu0
    %v384 = vpop.trf.xlu0
    %v385 = vpop.trf.xlu0
    %v386 = vpop.trf.xlu0
    %v387 = vpop.trf.xlu0
    %v388 = vpop.trf.xlu0
    %v389 = vpop.trf.xlu0
    %vm390 = vcmask 261120
    %v392 = vsel %vm390, %v382, 0
    %v395 = vsel %vm390, %v383, 0
    %v398 = vsel %vm390, %v341, 0
    %400 = vmatprep.subr.bf16.mxu0 0
    %401 = vmatpush1.bf16.xpose.msra.mxu0 %v398
    %402 = vmatprep.subr.bf16.mxu0 0
    %403 = vmatpush1.bf16.xpose.msra.mxu0 0
    %404 = vmatprep.subr.bf16.mxu0 0
    %405 = vmatpush1.bf16.xpose.msra.mxu0 0
    %406 = vmatprep.subr.bf16.mxu0 0
    %407 = vmatpush1.bf16.xpose.msra.mxu0 0
    %408 = vmatprep.subr.bf16.mxu0 0
    %409 = vmatpush1.bf16.xpose.msra.mxu0 0
    %410 = vmatprep.subr.bf16.mxu0 0
    %411 = vmatpush1.bf16.xpose.msra.mxu0 0
    %412 = vmatprep.subr.bf16.mxu0 0
    %413 = vmatpush1.bf16.xpose.msra.mxu0 0
    %414 = vmatprep.subr.bf16.mxu0 0
    %415 = vmatpush1.bf16.xpose.msra.mxu0 0
    %416 = vmatprep.subr.bf16.mxu0 0
    %417 = vmatpush1.bf16.xpose.msra.mxu0 0
    %418 = vmatprep.subr.bf16.mxu0 0
    %419 = vmatpush1.bf16.xpose.msra.mxu0 0
    %420 = vmatprep.subr.bf16.mxu0 0
    %421 = vmatpush1.bf16.xpose.msra.mxu0 0
    %422 = vmatprep.subr.bf16.mxu0 0
    %423 = vmatpush1.bf16.xpose.msra.mxu0 0
    %424 = vmatprep.subr.bf16.mxu0 0
    %425 = vmatpush1.bf16.xpose.msra.mxu0 0
    %426 = vmatprep.subr.bf16.mxu0 0
    %427 = vmatpush1.bf16.xpose.msra.mxu0 0
    %428 = vmatprep.subr.bf16.mxu0 0
    %429 = vmatpush1.bf16.xpose.msra.mxu0 0
    %430 = vmatprep.subr.bf16.mxu0 0
    %431 = vmatpush1.bf16.xpose.msra.mxu0 0
    %432 = vmatprep.mubr.bf16.mxu0 0
    %433 = vmatmul.mubr.bf16.gmra.mrb[0].mxu0 %v392
    %v434 = vpop.f32.mrb[0].mxu0
    %v435 = vadd.f32 %v345, %v434
    %v436 = vpop.f32.mrb[0].mxu0
    %v437 = vpop.f32.mrb[0].mxu0
    %v438 = vadd.f32 %v350, %v437
    %v439 = vpop.f32.mrb[0].mxu0
    %440 = vmatprep.mubr.bf16.mxu0 0
    %441 = vmatmul.mubr.bf16.gmra.mrb[0].mxu0 %v395
    %v442 = vpop.f32.mrb[0].mxu0
    %v443 = vadd.f32 %v355, %v442
    %v444 = vpop.f32.mrb[0].mxu0
    %v445 = vpop.f32.mrb[0].mxu0
    %v446 = vadd.f32 %v360, %v445
    %v447 = vpop.f32.mrb[0].mxu0
    %448 = vdwg.mxu0
    %v449 = vld [vmem:[%s3] sm:$0xff]
    %v450 = vadd.f32 %v449, %v311
    %v452 = vcombine.high %v450, %v450
    %v454 = vpack.c.bf16 %v450, %v450
    %v455 = vpack.c.bf16 %v452, %v452
    %457 = vset.pattern.permute.xlu0 0
    %458 = vperm.xlu0 %457, %v328
    %v459 = vpop.permute.xlu0 %458
    %462 = vset.pattern.permute.xlu0 0
    %463 = vperm.xlu0 %462, %v329
    %v464 = vpop.permute.xlu0 %463
    %467 = vset.pattern.permute.xlu0 0
    %468 = vperm.xlu0 %467, %v330
    %v469 = vpop.permute.xlu0 %468
    %472 = vset.pattern.permute.xlu0 0
    %473 = vperm.xlu0 %472, %v331
    %v474 = vpop.permute.xlu0 %473
    %477 = vset.pattern.permute.xlu0 0
    %478 = vperm.xlu0 %477, %v332
    %v479 = vpop.permute.xlu0 %478
    %482 = vset.pattern.permute.xlu0 0
    %483 = vperm.xlu0 %482, %v333
    %v484 = vpop.permute.xlu0 %483
    %487 = vset.pattern.permute.xlu0 0
    %488 = vperm.xlu0 %487, %v334
    %v489 = vpop.permute.xlu0 %488
    %492 = vset.pattern.permute.xlu0 0
    %493 = vperm.xlu0 %492, %v335
    %v494 = vpop.permute.xlu0 %493
    %v504 = vunpack.c.l.b16 %v320
    %v505 = vunpack.c.l.b16 %v321
    %v506 = vunpack.c.l.b16 %v322
    %v507 = vunpack.c.l.b16 %v323
    %v508 = vunpack.c.l.b16 %v324
    %v509 = vunpack.c.l.b16 %v325
    %v510 = vunpack.c.l.b16 %v326
    %v511 = vunpack.c.l.b16 %v327
    %v512 = vpack.c.b16 %v505, %v504
    %v513 = vpack.c.b16 %v507, %v506
    %v514 = vpack.c.b16 %v509, %v508
    %v515 = vpack.c.b16 %v511, %v510
    %vm516 = vcmask 31744
    %v518 = vsel %vm516, %v512, 0
    %v521 = vsel %vm516, %v513, 0
    %v524 = vsel %vm516, %v514, 0
    %v527 = vsel %vm516, %v515, 0
    %vm529 = vcmask 1041408
    %v531 = vsel %vm529, %v454, 0
    %v534 = vsel %vm529, %v455, 0
    %536 = vmatprep.subr.bf16.mxu0 %v534
    %537 = vmatpush1.bf16.msra.mxu0 %v531
    %538 = vmatprep.subr.bf16.mxu0 0
    %539 = vmatpush1.bf16.msra.mxu0 0
    %540 = vmatprep.subr.bf16.mxu0 0
    %541 = vmatpush1.bf16.msra.mxu0 0
    %542 = vmatprep.subr.bf16.mxu0 0
    %543 = vmatpush1.bf16.msra.mxu0 0
    %544 = vmatprep.subr.bf16.mxu0 0
    %545 = vmatpush1.bf16.msra.mxu0 0
    %546 = vmatprep.subr.bf16.mxu0 0
    %547 = vmatpush1.bf16.msra.mxu0 0
    %548 = vmatprep.subr.bf16.mxu0 0
    %549 = vmatpush1.bf16.msra.mxu0 0
    %550 = vmatprep.subr.bf16.mxu0 0
    %551 = vmatpush1.bf16.msra.mxu0 0
    %552 = vmatprep.subr.bf16.mxu0 0
    %553 = vmatpush1.bf16.msra.mxu0 0
    %554 = vmatprep.subr.bf16.mxu0 0
    %555 = vmatpush1.bf16.msra.mxu0 0
    %556 = vmatprep.subr.bf16.mxu0 0
    %557 = vmatpush1.bf16.msra.mxu0 0
    %558 = vmatprep.subr.bf16.mxu0 0
    %559 = vmatpush1.bf16.msra.mxu0 0
    %560 = vmatprep.subr.bf16.mxu0 0
    %561 = vmatpush1.bf16.msra.mxu0 0
    %562 = vmatprep.subr.bf16.mxu0 0
    %563 = vmatpush1.bf16.msra.mxu0 0
    %564 = vmatprep.subr.bf16.mxu0 0
    %565 = vmatpush1.bf16.msra.mxu0 0
    %566 = vmatprep.subr.bf16.mxu0 0
    %567 = vmatpush1.bf16.msra.mxu0 0
    %568 = vmatprep.mubr.bf16.mxu0 0
    %569 = vmatmul.mubr.bf16.gmra.mrb[0].mxu0 %v518
    %v570 = vpop.f32.mrb[0].mxu0
    %v571 = vadd.f32 %v459, %v570
    %v572 = vpop.f32.mrb[0].mxu0
    %v573 = vadd.f32 %v459, %v572
    %v574 = vpop.f32.mrb[0].mxu0
    %v575 = vadd.f32 %v464, %v574
    %v576 = vpop.f32.mrb[0].mxu0
    %v577 = vadd.f32 %v464, %v576
    %578 = vmatprep.mubr.bf16.mxu0 0
    %579 = vmatmul.mubr.bf16.gmra.mrb[0].mxu0 %v521
    %v580 = vpop.f32.mrb[0].mxu0
    %v581 = vadd.f32 %v469, %v580
    %v582 = vpop.f32.mrb[0].mxu0
    %v583 = vadd.f32 %v469, %v582
    %v584 = vpop.f32.mrb[0].mxu0
    %v585 = vadd.f32 %v474, %v584
    %v586 = vpop.f32.mrb[0].mxu0
    %v587 = vadd.f32 %v474, %v586
    %588 = vmatprep.mubr.bf16.mxu0 0
    %589 = vmatmul.mubr.bf16.gmra.mrb[0].mxu0 %v524
    %v590 = vpop.f32.mrb[0].mxu0
    %v591 = vadd.f32 %v479, %v590
    %v592 = vpop.f32.mrb[0].mxu0
    %v593 = vadd.f32 %v479, %v592
    %v594 = vpop.f32.mrb[0].mxu0
    %v595 = vadd.f32 %v484, %v594
    %v596 = vpop.f32.mrb[0].mxu0
    %v597 = vadd.f32 %v484, %v596
    %598 = vmatprep.mubr.bf16.mxu0 0
    %599 = vmatmul.mubr.bf16.gmra.mrb[0].mxu0 %v527
    %v600 = vpop.f32.mrb[0].mxu0
    %v601 = vadd.f32 %v489, %v600
    %v602 = vpop.f32.mrb[0].mxu0
    %v603 = vadd.f32 %v489, %v602
    %v604 = vpop.f32.mrb[0].mxu0
    %v605 = vadd.f32 %v494, %v604
    %v606 = vpop.f32.mrb[0].mxu0
    %v607 = vadd.f32 %v494, %v606
    %608 = vdwg.mxu0
    %v609 = vpack.c.bf16 %v435, %v435
    %v610 = vpack.c.bf16 %v571, %v571
    %v611 = vpack.c.bf16 %v573, %v573
    %612 = vxpose.xlu0.c.b16.start [1/8] %v609, 128
    %613 = vxpose.xlu0.c.b16.cont [2/8] 0, 128
    %614 = vxpose.xlu0.c.b16.cont [3/8] 0, 128
    %615 = vxpose.xlu0.c.b16.cont [4/8] 0, 128
    %616 = vxpose.xlu0.c.b16.cont [5/8] 0, 128
    %617 = vxpose.xlu0.c.b16.cont [6/8] 0, 128
    %618 = vxpose.xlu0.c.b16.cont [7/8] 0, 128
    %619 = vxpose.xlu0.c.b16.end [8/8] 0, 128
    %v620 = vpop.trf.xlu0
    %v621 = vpop.trf.xlu0
    %v622 = vpop.trf.xlu0
    %v623 = vpop.trf.xlu0
    %v624 = vpop.trf.xlu0
    %v625 = vpop.trf.xlu0
    %v626 = vpop.trf.xlu0
    %v627 = vpop.trf.xlu0
    %vm628 = vcmask 64512
    %v630 = vsel %vm628, %v620, 0
    %vm632 = vcmask 1043456
    %v634 = vsel %vm632, %v610, 0
    %v637 = vsel %vm632, %v611, 0
    %639 = vmatprep.subr.bf16.mxu0 %v637
    %640 = vmatpush1.bf16.msra.mxu0 %v634
    %641 = vmatprep.subr.bf16.mxu0 0
    %642 = vmatpush1.bf16.msra.mxu0 0
    %643 = vmatprep.subr.bf16.mxu0 0
    %644 = vmatpush1.bf16.msra.mxu0 0
    %645 = vmatprep.subr.bf16.mxu0 0
    %646 = vmatpush1.bf16.msra.mxu0 0
    %647 = vmatprep.subr.bf16.mxu0 0
    %648 = vmatpush1.bf16.msra.mxu0 0
    %649 = vmatprep.subr.bf16.mxu0 0
    %650 = vmatpush1.bf16.msra.mxu0 0
    %651 = vmatprep.subr.bf16.mxu0 0
    %652 = vmatpush1.bf16.msra.mxu0 0
    %653 = vmatprep.subr.bf16.mxu0 0
    %654 = vmatpush1.bf16.msra.mxu0 0
    %655 = vmatprep.subr.bf16.mxu0 0
    %656 = vmatpush1.bf16.msra.mxu0 0
    %657 = vmatprep.subr.bf16.mxu0 0
    %658 = vmatpush1.bf16.msra.mxu0 0
    %659 = vmatprep.subr.bf16.mxu0 0
    %660 = vmatpush1.bf16.msra.mxu0 0
    %661 = vmatprep.subr.bf16.mxu0 0
    %662 = vmatpush1.bf16.msra.mxu0 0
    %663 = vmatprep.subr.bf16.mxu0 0
    %664 = vmatpush1.bf16.msra.mxu0 0
    %665 = vmatprep.subr.bf16.mxu0 0
    %666 = vmatpush1.bf16.msra.mxu0 0
    %667 = vmatprep.subr.bf16.mxu0 0
    %668 = vmatpush1.bf16.msra.mxu0 0
    %669 = vmatprep.subr.bf16.mxu0 0
    %670 = vmatpush1.bf16.msra.mxu0 0
    %671 = vmatprep.mubr.bf16.mxu0 0
    %672 = vmatmul.mubr.bf16.gmra.mrb[0].mxu0 %v630
    %v673 = vpop.f32.mrb[0].mxu0
    %v674 = vadd.f32 0.0, %v673
    %v675 = vpop.f32.mrb[0].mxu0
    %v676 = vadd.f32 0.0, %v675
    %v677 = vpop.f32.mrb[0].mxu0
    %v678 = vpop.f32.mrb[0].mxu0
    %679 = vdwg.mxu0
    %v680 = vmul.f32 %v674, 0.35355338
    %v681 = vmul.f32 %v676, 0.35355338
    %v682 = vmax.f32 %v680, %v681
    %683 = vmax.xlane.f32.xlu0 %v682
    %v684 = vpop.xlane.xlu0 %683
    %v685 = vsub.f32 %v680, %v684
    %v686 = vsub.f32 %v681, %v684
    %v687 = vmul.f32 %v685, 1.442695
    %v688 = vpow.pop %v687
    %v689 = vmul.f32 %v686, 1.442695
    %v690 = vpow.pop %v689
    %v691 = vadd.f32 %v688, %v690
    %692 = vadd.xlane.f32.xlu0 %v691
    %v693 = vpop.xlane.xlu0 %692
    %v694 = vrcp.pop %v693
    %v695 = vmul.f32 %v688, %v694
    %v696 = vmul.f32 %v690, %v694
    %v697 = vpack.c.bf16 %v591, %v591
    %v698 = vpack.c.bf16 %v593, %v593
    %v699 = vpack.c.bf16 %v695, %v695
    %v700 = vpack.c.bf16 %v696, %v696
    %701 = vmatprep.subr.bf16.mxu0 %v700
    %702 = vmatpush1.bf16.xpose.msra.mxu0 %v699
    %703 = vmatprep.subr.bf16.mxu0 0
    %704 = vmatpush1.bf16.xpose.msra.mxu0 0
    %705 = vmatprep.subr.bf16.mxu0 0
    %706 = vmatpush1.bf16.xpose.msra.mxu0 0
    %707 = vmatprep.subr.bf16.mxu0 0
    %708 = vmatpush1.bf16.xpose.msra.mxu0 0
    %709 = vmatprep.subr.bf16.mxu0 0
    %710 = vmatpush1.bf16.xpose.msra.mxu0 0
    %711 = vmatprep.subr.bf16.mxu0 0
    %712 = vmatpush1.bf16.xpose.msra.mxu0 0
    %713 = vmatprep.subr.bf16.mxu0 0
    %714 = vmatpush1.bf16.xpose.msra.mxu0 0
    %715 = vmatprep.subr.bf16.mxu0 0
    %716 = vmatpush1.bf16.xpose.msra.mxu0 0
    %717 = vmatprep.subr.bf16.mxu0 0
    %718 = vmatpush1.bf16.xpose.msra.mxu0 0
    %719 = vmatprep.subr.bf16.mxu0 0
    %720 = vmatpush1.bf16.xpose.msra.mxu0 0
    %721 = vmatprep.subr.bf16.mxu0 0
    %722 = vmatpush1.bf16.xpose.msra.mxu0 0
    %723 = vmatprep.subr.bf16.mxu0 0
    %724 = vmatpush1.bf16.xpose.msra.mxu0 0
    %725 = vmatprep.subr.bf16.mxu0 0
    %726 = vmatpush1.bf16.xpose.msra.mxu0 0
    %727 = vmatprep.subr.bf16.mxu0 0
    %728 = vmatpush1.bf16.xpose.msra.mxu0 0
    %729 = vmatprep.subr.bf16.mxu0 0
    %730 = vmatpush1.bf16.xpose.msra.mxu0 0
    %731 = vmatprep.subr.bf16.mxu0 0
    %732 = vmatpush1.bf16.xpose.msra.mxu0 0
    %733 = vmatprep.mubr.bf16.mxu0 %v698
    %734 = vmatmul.mubr.bf16.gmra.mrb[0].mxu0 %v697
    %v735 = vpop.f32.mrb[0].mxu0
    %v736 = vadd.f32 0.0, %v735
    %v737 = vpop.f32.mrb[0].mxu0
    %v738 = vpop.f32.mrb[0].mxu0
    %v739 = vpop.f32.mrb[0].mxu0
    %740 = vdwg.mxu0
    %v741 = vpack.c.bf16 %v438, %v438
    %v742 = vpack.c.bf16 %v575, %v575
    %v743 = vpack.c.bf16 %v577, %v577
    %744 = vxpose.xlu0.c.b16.start [1/8] %v741, 128
    %745 = vxpose.xlu0.c.b16.cont [2/8] 0, 128
    %746 = vxpose.xlu0.c.b16.cont [3/8] 0, 128
    %747 = vxpose.xlu0.c.b16.cont [4/8] 0, 128
    %748 = vxpose.xlu0.c.b16.cont [5/8] 0, 128
    %749 = vxpose.xlu0.c.b16.cont [6/8] 0, 128
    %750 = vxpose.xlu0.c.b16.cont [7/8] 0, 128
    %751 = vxpose.xlu0.c.b16.end [8/8] 0, 128
    %v752 = vpop.trf.xlu0
    %v753 = vpop.trf.xlu0
    %v754 = vpop.trf.xlu0
    %v755 = vpop.trf.xlu0
    %v756 = vpop.trf.xlu0
    %v757 = vpop.trf.xlu0
    %v758 = vpop.trf.xlu0
    %v759 = vpop.trf.xlu0
    %v761 = vsel %vm628, %v752, 0
    %v764 = vsel %vm632, %v742, 0
    %v767 = vsel %vm632, %v743, 0
    %769 = vmatprep.subr.bf16.mxu0 %v767
    %770 = vmatpush1.bf16.msra.mxu0 %v764
    %771 = vmatprep.subr.bf16.mxu0 0
    %772 = vmatpush1.bf16.msra.mxu0 0
    %773 = vmatprep.subr.bf16.mxu0 0
    %774 = vmatpush1.bf16.msra.mxu0 0
    %775 = vmatprep.subr.bf16.mxu0 0
    %776 = vmatpush1.bf16.msra.mxu0 0
    %777 = vmatprep.subr.bf16.mxu0 0
    %778 = vmatpush1.bf16.msra.mxu0 0
    %779 = vmatprep.subr.bf16.mxu0 0
    %780 = vmatpush1.bf16.msra.mxu0 0
    %781 = vmatprep.subr.bf16.mxu0 0
    %782 = vmatpush1.bf16.msra.mxu0 0
    %783 = vmatprep.subr.bf16.mxu0 0
    %784 = vmatpush1.bf16.msra.mxu0 0
    %785 = vmatprep.subr.bf16.mxu0 0
    %786 = vmatpush1.bf16.msra.mxu0 0
    %787 = vmatprep.subr.bf16.mxu0 0
    %788 = vmatpush1.bf16.msra.mxu0 0
    %789 = vmatprep.subr.bf16.mxu0 0
    %790 = vmatpush1.bf16.msra.mxu0 0
    %791 = vmatprep.subr.bf16.mxu0 0
    %792 = vmatpush1.bf16.msra.mxu0 0
    %793 = vmatprep.subr.bf16.mxu0 0
    %794 = vmatpush1.bf16.msra.mxu0 0
    %795 = vmatprep.subr.bf16.mxu0 0
    %796 = vmatpush1.bf16.msra.mxu0 0
    %797 = vmatprep.subr.bf16.mxu0 0
    %798 = vmatpush1.bf16.msra.mxu0 0
    %799 = vmatprep.subr.bf16.mxu0 0
    %800 = vmatpush1.bf16.msra.mxu0 0
    %801 = vmatprep.mubr.bf16.mxu0 0
    %802 = vmatmul.mubr.bf16.gmra.mrb[0].mxu0 %v761
    %v803 = vpop.f32.mrb[0].mxu0
    %v804 = vadd.f32 0.0, %v803
    %v805 = vpop.f32.mrb[0].mxu0
    %v806 = vadd.f32 0.0, %v805
    %v807 = vpop.f32.mrb[0].mxu0
    %v808 = vpop.f32.mrb[0].mxu0
    %809 = vdwg.mxu0
    %v810 = vmul.f32 %v804, 0.35355338
    %v811 = vmul.f32 %v806, 0.35355338
    %v812 = vmax.f32 %v810, %v811
    %813 = vmax.xlane.f32.xlu0 %v812
    %v814 = vpop.xlane.xlu0 %813
    %v815 = vsub.f32 %v810, %v814
    %v816 = vsub.f32 %v811, %v814
    %v817 = vmul.f32 %v815, 1.442695
    %v818 = vpow.pop %v817
    %v819 = vmul.f32 %v816, 1.442695
    %v820 = vpow.pop %v819
    %v821 = vadd.f32 %v818, %v820
    %822 = vadd.xlane.f32.xlu0 %v821
    %v823 = vpop.xlane.xlu0 %822
    %v824 = vrcp.pop %v823
    %v825 = vmul.f32 %v818, %v824
    %v826 = vmul.f32 %v820, %v824
    %v827 = vpack.c.bf16 %v595, %v595
    %v828 = vpack.c.bf16 %v597, %v597
    %v829 = vpack.c.bf16 %v825, %v825
    %v830 = vpack.c.bf16 %v826, %v826
    %831 = vmatprep.subr.bf16.mxu0 %v830
    %832 = vmatpush1.bf16.xpose.msra.mxu0 %v829
    %833 = vmatprep.subr.bf16.mxu0 0
    %834 = vmatpush1.bf16.xpose.msra.mxu0 0
    %835 = vmatprep.subr.bf16.mxu0 0
    %836 = vmatpush1.bf16.xpose.msra.mxu0 0
    %837 = vmatprep.subr.bf16.mxu0 0
    %838 = vmatpush1.bf16.xpose.msra.mxu0 0
    %839 = vmatprep.subr.bf16.mxu0 0
    %840 = vmatpush1.bf16.xpose.msra.mxu0 0
    %841 = vmatprep.subr.bf16.mxu0 0
    %842 = vmatpush1.bf16.xpose.msra.mxu0 0
    %843 = vmatprep.subr.bf16.mxu0 0
    %844 = vmatpush1.bf16.xpose.msra.mxu0 0
    %845 = vmatprep.subr.bf16.mxu0 0
    %846 = vmatpush1.bf16.xpose.msra.mxu0 0
    %847 = vmatprep.subr.bf16.mxu0 0
    %848 = vmatpush1.bf16.xpose.msra.mxu0 0
    %849 = vmatprep.subr.bf16.mxu0 0
    %850 = vmatpush1.bf16.xpose.msra.mxu0 0
    %851 = vmatprep.subr.bf16.mxu0 0
    %852 = vmatpush1.bf16.xpose.msra.mxu0 0
    %853 = vmatprep.subr.bf16.mxu0 0
    %854 = vmatpush1.bf16.xpose.msra.mxu0 0
    %855 = vmatprep.subr.bf16.mxu0 0
    %856 = vmatpush1.bf16.xpose.msra.mxu0 0
    %857 = vmatprep.subr.bf16.mxu0 0
    %858 = vmatpush1.bf16.xpose.msra.mxu0 0
    %859 = vmatprep.subr.bf16.mxu0 0
    %860 = vmatpush1.bf16.xpose.msra.mxu0 0
    %861 = vmatprep.subr.bf16.mxu0 0
    %862 = vmatpush1.bf16.xpose.msra.mxu0 0
    %863 = vmatprep.mubr.bf16.mxu0 %v828
    %864 = vmatmul.mubr.bf16.gmra.mrb[0].mxu0 %v827
    %v865 = vpop.f32.mrb[0].mxu0
    %v866 = vadd.f32 0.0, %v865
    %v867 = vpop.f32.mrb[0].mxu0
    %v868 = vpop.f32.mrb[0].mxu0
    %v869 = vpop.f32.mrb[0].mxu0
    %870 = vdwg.mxu0
    %v871 = vpack.c.bf16 %v443, %v443
    %v872 = vpack.c.bf16 %v581, %v581
    %v873 = vpack.c.bf16 %v583, %v583
    %874 = vxpose.xlu0.c.b16.start [1/8] %v871, 128
    %875 = vxpose.xlu0.c.b16.cont [2/8] 0, 128
    %876 = vxpose.xlu0.c.b16.cont [3/8] 0, 128
    %877 = vxpose.xlu0.c.b16.cont [4/8] 0, 128
    %878 = vxpose.xlu0.c.b16.cont [5/8] 0, 128
    %879 = vxpose.xlu0.c.b16.cont [6/8] 0, 128
    %880 = vxpose.xlu0.c.b16.cont [7/8] 0, 128
    %881 = vxpose.xlu0.c.b16.end [8/8] 0, 128
    %v882 = vpop.trf.xlu0
    %v883 = vpop.trf.xlu0
    %v884 = vpop.trf.xlu0
    %v885 = vpop.trf.xlu0
    %v886 = vpop.trf.xlu0
    %v887 = vpop.trf.xlu0
    %v888 = vpop.trf.xlu0
    %v889 = vpop.trf.xlu0
    %v891 = vsel %vm628, %v882, 0
    %v894 = vsel %vm632, %v872, 0
    %v897 = vsel %vm632, %v873, 0
    %899 = vmatprep.subr.bf16.mxu0 %v897
    %900 = vmatpush1.bf16.msra.mxu0 %v894
    %901 = vmatprep.subr.bf16.mxu0 0
    %902 = vmatpush1.bf16.msra.mxu0 0
    %903 = vmatprep.subr.bf16.mxu0 0
    %904 = vmatpush1.bf16.msra.mxu0 0
    %905 = vmatprep.subr.bf16.mxu0 0
    %906 = vmatpush1.bf16.msra.mxu0 0
    %907 = vmatprep.subr.bf16.mxu0 0
    %908 = vmatpush1.bf16.msra.mxu0 0
    %909 = vmatprep.subr.bf16.mxu0 0
    %910 = vmatpush1.bf16.msra.mxu0 0
    %911 = vmatprep.subr.bf16.mxu0 0
    %912 = vmatpush1.bf16.msra.mxu0 0
    %913 = vmatprep.subr.bf16.mxu0 0
    %914 = vmatpush1.bf16.msra.mxu0 0
    %915 = vmatprep.subr.bf16.mxu0 0
    %916 = vmatpush1.bf16.msra.mxu0 0
    %917 = vmatprep.subr.bf16.mxu0 0
    %918 = vmatpush1.bf16.msra.mxu0 0
    %919 = vmatprep.subr.bf16.mxu0 0
    %920 = vmatpush1.bf16.msra.mxu0 0
    %921 = vmatprep.subr.bf16.mxu0 0
    %922 = vmatpush1.bf16.msra.mxu0 0
    %923 = vmatprep.subr.bf16.mxu0 0
    %924 = vmatpush1.bf16.msra.mxu0 0
    %925 = vmatprep.subr.bf16.mxu0 0
    %926 = vmatpush1.bf16.msra.mxu0 0
    %927 = vmatprep.subr.bf16.mxu0 0
    %928 = vmatpush1.bf16.msra.mxu0 0
    %929 = vmatprep.subr.bf16.mxu0 0
    %930 = vmatpush1.bf16.msra.mxu0 0
    %931 = vmatprep.mubr.bf16.mxu0 0
    %932 = vmatmul.mubr.bf16.gmra.mrb[0].mxu0 %v891
    %v933 = vpop.f32.mrb[0].mxu0
    %v934 = vadd.f32 0.0, %v933
    %v935 = vpop.f32.mrb[0].mxu0
    %v936 = vadd.f32 0.0, %v935
    %v937 = vpop.f32.mrb[0].mxu0
    %v938 = vpop.f32.mrb[0].mxu0
    %939 = vdwg.mxu0
    %v940 = vmul.f32 %v934, 0.35355338
    %v941 = vmul.f32 %v936, 0.35355338
    %v942 = vmax.f32 %v940, %v941
    %943 = vmax.xlane.f32.xlu0 %v942
    %v944 = vpop.xlane.xlu0 %943
    %v945 = vsub.f32 %v940, %v944
    %v946 = vsub.f32 %v941, %v944
    %v947 = vmul.f32 %v945, 1.442695
    %v948 = vpow.pop %v947
    %v949 = vmul.f32 %v946, 1.442695
    %v950 = vpow.pop %v949
    %v951 = vadd.f32 %v948, %v950
    %952 = vadd.xlane.f32.xlu0 %v951
    %v953 = vpop.xlane.xlu0 %952
    %v954 = vrcp.pop %v953
    %v955 = vmul.f32 %v948, %v954
    %v956 = vmul.f32 %v950, %v954
    %v957 = vpack.c.bf16 %v601, %v601
    %v958 = vpack.c.bf16 %v603, %v603
    %v959 = vpack.c.bf16 %v955, %v955
    %v960 = vpack.c.bf16 %v956, %v956
    %961 = vmatprep.subr.bf16.mxu0 %v960
    %962 = vmatpush1.bf16.xpose.msra.mxu0 %v959
    %963 = vmatprep.subr.bf16.mxu0 0
    %964 = vmatpush1.bf16.xpose.msra.mxu0 0
    %965 = vmatprep.subr.bf16.mxu0 0
    %966 = vmatpush1.bf16.xpose.msra.mxu0 0
    %967 = vmatprep.subr.bf16.mxu0 0
    %968 = vmatpush1.bf16.xpose.msra.mxu0 0
    %969 = vmatprep.subr.bf16.mxu0 0
    %970 = vmatpush1.bf16.xpose.msra.mxu0 0
    %971 = vmatprep.subr.bf16.mxu0 0
    %972 = vmatpush1.bf16.xpose.msra.mxu0 0
    %973 = vmatprep.subr.bf16.mxu0 0
    %974 = vmatpush1.bf16.xpose.msra.mxu0 0
    %975 = vmatprep.subr.bf16.mxu0 0
    %976 = vmatpush1.bf16.xpose.msra.mxu0 0
    %977 = vmatprep.subr.bf16.mxu0 0
    %978 = vmatpush1.bf16.xpose.msra.mxu0 0
    %979 = vmatprep.subr.bf16.mxu0 0
    %980 = vmatpush1.bf16.xpose.msra.mxu0 0
    %981 = vmatprep.subr.bf16.mxu0 0
    %982 = vmatpush1.bf16.xpose.msra.mxu0 0
    %983 = vmatprep.subr.bf16.mxu0 0
    %984 = vmatpush1.bf16.xpose.msra.mxu0 0
    %985 = vmatprep.subr.bf16.mxu0 0
    %986 = vmatpush1.bf16.xpose.msra.mxu0 0
    %987 = vmatprep.subr.bf16.mxu0 0
    %988 = vmatpush1.bf16.xpose.msra.mxu0 0
    %989 = vmatprep.subr.bf16.mxu0 0
    %990 = vmatpush1.bf16.xpose.msra.mxu0 0
    %991 = vmatprep.subr.bf16.mxu0 0
    %992 = vmatpush1.bf16.xpose.msra.mxu0 0
    %993 = vmatprep.mubr.bf16.mxu0 %v958
    %994 = vmatmul.mubr.bf16.gmra.mrb[0].mxu0 %v957
    %v995 = vpop.f32.mrb[0].mxu0
    %v996 = vadd.f32 0.0, %v995
    %v997 = vpop.f32.mrb[0].mxu0
    %v998 = vpop.f32.mrb[0].mxu0
    %v999 = vpop.f32.mrb[0].mxu0
    %1000 = vdwg.mxu0
    %v1001 = vpack.c.bf16 %v446, %v446
    %v1002 = vpack.c.bf16 %v585, %v585
    %v1003 = vpack.c.bf16 %v587, %v587
    %1004 = vxpose.xlu0.c.b16.start [1/8] %v1001, 128
    %1005 = vxpose.xlu0.c.b16.cont [2/8] 0, 128
    %1006 = vxpose.xlu0.c.b16.cont [3/8] 0, 128
    %1007 = vxpose.xlu0.c.b16.cont [4/8] 0, 128
    %1008 = vxpose.xlu0.c.b16.cont [5/8] 0, 128
    %1009 = vxpose.xlu0.c.b16.cont [6/8] 0, 128
    %1010 = vxpose.xlu0.c.b16.cont [7/8] 0, 128
    %1011 = vxpose.xlu0.c.b16.end [8/8] 0, 128
    %v1012 = vpop.trf.xlu0
    %v1013 = vpop.trf.xlu0
    %v1014 = vpop.trf.xlu0
    %v1015 = vpop.trf.xlu0
    %v1016 = vpop.trf.xlu0
    %v1017 = vpop.trf.xlu0
    %v1018 = vpop.trf.xlu0
    %v1019 = vpop.trf.xlu0
    %v1021 = vsel %vm628, %v1012, 0
    %v1024 = vsel %vm632, %v1002, 0
    %v1027 = vsel %vm632, %v1003, 0
    %1029 = vmatprep.subr.bf16.mxu0 %v1027
    %1030 = vmatpush1.bf16.msra.mxu0 %v1024
    %1031 = vmatprep.subr.bf16.mxu0 0
    %1032 = vmatpush1.bf16.msra.mxu0 0
    %1033 = vmatprep.subr.bf16.mxu0 0
    %1034 = vmatpush1.bf16.msra.mxu0 0
    %1035 = vmatprep.subr.bf16.mxu0 0
    %1036 = vmatpush1.bf16.msra.mxu0 0
    %1037 = vmatprep.subr.bf16.mxu0 0
    %1038 = vmatpush1.bf16.msra.mxu0 0
    %1039 = vmatprep.subr.bf16.mxu0 0
    %1040 = vmatpush1.bf16.msra.mxu0 0
    %1041 = vmatprep.subr.bf16.mxu0 0
    %1042 = vmatpush1.bf16.msra.mxu0 0
    %1043 = vmatprep.subr.bf16.mxu0 0
    %1044 = vmatpush1.bf16.msra.mxu0 0
    %1045 = vmatprep.subr.bf16.mxu0 0
    %1046 = vmatpush1.bf16.msra.mxu0 0
    %1047 = vmatprep.subr.bf16.mxu0 0
    %1048 = vmatpush1.bf16.msra.mxu0 0
    %1049 = vmatprep.subr.bf16.mxu0 0
    %1050 = vmatpush1.bf16.msra.mxu0 0
    %1051 = vmatprep.subr.bf16.mxu0 0
    %1052 = vmatpush1.bf16.msra.mxu0 0
    %1053 = vmatprep.subr.bf16.mxu0 0
    %1054 = vmatpush1.bf16.msra.mxu0 0
    %1055 = vmatprep.subr.bf16.mxu0 0
    %1056 = vmatpush1.bf16.msra.mxu0 0
    %1057 = vmatprep.subr.bf16.mxu0 0
    %1058 = vmatpush1.bf16.msra.mxu0 0
    %1059 = vmatprep.subr.bf16.mxu0 0
    %1060 = vmatpush1.bf16.msra.mxu0 0
    %1061 = vmatprep.mubr.bf16.mxu0 0
    %1062 = vmatmul.mubr.bf16.gmra.mrb[0].mxu0 %v1021
    %v1063 = vpop.f32.mrb[0].mxu0
    %v1064 = vadd.f32 0.0, %v1063
    %v1065 = vpop.f32.mrb[0].mxu0
    %v1066 = vadd.f32 0.0, %v1065
    %v1067 = vpop.f32.mrb[0].mxu0
    %v1068 = vpop.f32.mrb[0].mxu0
    %1069 = vdwg.mxu0
    %v1070 = vmul.f32 %v1064, 0.35355338
    %v1071 = vmul.f32 %v1066, 0.35355338
    %v1072 = vmax.f32 %v1070, %v1071
    %1073 = vmax.xlane.f32.xlu0 %v1072
    %v1074 = vpop.xlane.xlu0 %1073
    %v1075 = vsub.f32 %v1070, %v1074
    %v1076 = vsub.f32 %v1071, %v1074
    %v1077 = vmul.f32 %v1075, 1.442695
    %v1078 = vpow.pop %v1077
    %v1079 = vmul.f32 %v1076, 1.442695
    %v1080 = vpow.pop %v1079
    %v1081 = vadd.f32 %v1078, %v1080
    %1082 = vadd.xlane.f32.xlu0 %v1081
    %v1083 = vpop.xlane.xlu0 %1082
    %v1084 = vrcp.pop %v1083
    %v1085 = vmul.f32 %v1078, %v1084
    %v1086 = vmul.f32 %v1080, %v1084
    %v1087 = vpack.c.bf16 %v605, %v605
    %v1088 = vpack.c.bf16 %v607, %v607
    %v1089 = vpack.c.bf16 %v1085, %v1085
    %v1090 = vpack.c.bf16 %v1086, %v1086
    %1091 = vmatprep.subr.bf16.mxu0 %v1090
    %1092 = vmatpush1.bf16.xpose.msra.mxu0 %v1089
    %1093 = vmatprep.subr.bf16.mxu0 0
    %1094 = vmatpush1.bf16.xpose.msra.mxu0 0
    %1095 = vmatprep.subr.bf16.mxu0 0
    %1096 = vmatpush1.bf16.xpose.msra.mxu0 0
    %1097 = vmatprep.subr.bf16.mxu0 0
    %1098 = vmatpush1.bf16.xpose.msra.mxu0 0
    %1099 = vmatprep.subr.bf16.mxu0 0
    %1100 = vmatpush1.bf16.xpose.msra.mxu0 0
    %1101 = vmatprep.subr.bf16.mxu0 0
    %1102 = vmatpush1.bf16.xpose.msra.mxu0 0
    %1103 = vmatprep.subr.bf16.mxu0 0
    %1104 = vmatpush1.bf16.xpose.msra.mxu0 0
    %1105 = vmatprep.subr.bf16.mxu0 0
    %1106 = vmatpush1.bf16.xpose.msra.mxu0 0
    %1107 = vmatprep.subr.bf16.mxu0 0
    %1108 = vmatpush1.bf16.xpose.msra.mxu0 0
    %1109 = vmatprep.subr.bf16.mxu0 0
    %1110 = vmatpush1.bf16.xpose.msra.mxu0 0
    %1111 = vmatprep.subr.bf16.mxu0 0
    %1112 = vmatpush1.bf16.xpose.msra.mxu0 0
    %1113 = vmatprep.subr.bf16.mxu0 0
    %1114 = vmatpush1.bf16.xpose.msra.mxu0 0
    %1115 = vmatprep.subr.bf16.mxu0 0
    %1116 = vmatpush1.bf16.xpose.msra.mxu0 0
    %1117 = vmatprep.subr.bf16.mxu0 0
    %1118 = vmatpush1.bf16.xpose.msra.mxu0 0
    %1119 = vmatprep.subr.bf16.mxu0 0
    %1120 = vmatpush1.bf16.xpose.msra.mxu0 0
    %1121 = vmatprep.subr.bf16.mxu0 0
    %1122 = vmatpush1.bf16.xpose.msra.mxu0 0
    %1123 = vmatprep.mubr.bf16.mxu0 %v1088
    %1124 = vmatmul.mubr.bf16.gmra.mrb[0].mxu0 %v1087
    %v1125 = vpop.f32.mrb[0].mxu0
    %v1126 = vadd.f32 0.0, %v1125
    %v1127 = vpop.f32.mrb[0].mxu0
    %v1128 = vpop.f32.mrb[0].mxu0
    %v1129 = vpop.f32.mrb[0].mxu0
    %1130 = vdwg.mxu0
    %v1131 = vpack.c.bf16 %v866, %v736
    %v1132 = vpack.c.bf16 %v1126, %v996
    %v1134 = vlaneseq
    %v1135 = vshrl.u32 %v1134, 7
    %v1136 = vsub.s32 0, %v1135
    %v1137 = vrot.slane %v340, %v1136
    %1139 = vxpose.xlu0.c.b16.start [1/8] %v1131, 128
    %1140 = vxpose.xlu0.c.b16.cont [2/8] %v1132, 128
    %1141 = vxpose.xlu0.c.b16.cont [3/8] 0, 128
    %1142 = vxpose.xlu0.c.b16.cont [4/8] 0, 128
    %1143 = vxpose.xlu0.c.b16.cont [5/8] 0, 128
    %1144 = vxpose.xlu0.c.b16.cont [6/8] 0, 128
    %1145 = vxpose.xlu0.c.b16.cont [7/8] 0, 128
    %1146 = vxpose.xlu0.c.b16.end [8/8] 0, 128
    %v1147 = vpop.trf.xlu0
    %v1148 = vpop.trf.xlu0
    %v1149 = vpop.trf.xlu0
    %v1150 = vpop.trf.xlu0
    %v1151 = vpop.trf.xlu0
    %v1152 = vpop.trf.xlu0
    %v1153 = vpop.trf.xlu0
    %v1154 = vpop.trf.xlu0
    %v1159 = vunpack.c.l.b16 %v336
    %v1160 = vunpack.c.l.b16 %v337
    %v1161 = vunpack.c.l.b16 %v338
    %v1162 = vunpack.c.l.b16 %v339
    %v1163 = vpack.c.b16 %v1160, %v1159
    %v1164 = vpack.c.b16 %v1162, %v1161
    %v1168 = vsel %vm390, %v1147, 0
    %1170 = vmatprep.subr.bf16.mxu0 0
    %1171 = vmatpush1.bf16.msra.mxu0 %v1163
    %1172 = vmatprep.subr.bf16.mxu0 0
    %1173 = vmatpush1.bf16.msra.mxu0 %v1164
    %1174 = vmatprep.subr.bf16.mxu0 0
    %1175 = vmatpush1.bf16.msra.mxu0 0
    %1176 = vmatprep.subr.bf16.mxu0 0
    %1177 = vmatpush1.bf16.msra.mxu0 0
    %1178 = vmatprep.subr.bf16.mxu0 0
    %1179 = vmatpush1.bf16.msra.mxu0 0
    %1180 = vmatprep.subr.bf16.mxu0 0
    %1181 = vmatpush1.bf16.msra.mxu0 0
    %1182 = vmatprep.subr.bf16.mxu0 0
    %1183 = vmatpush1.bf16.msra.mxu0 0
    %1184 = vmatprep.subr.bf16.mxu0 0
    %1185 = vmatpush1.bf16.msra.mxu0 0
    %1186 = vmatprep.subr.bf16.mxu0 0
    %1187 = vmatpush1.bf16.msra.mxu0 0
    %1188 = vmatprep.subr.bf16.mxu0 0
    %1189 = vmatpush1.bf16.msra.mxu0 0
    %1190 = vmatprep.subr.bf16.mxu0 0
    %1191 = vmatpush1.bf16.msra.mxu0 0
    %1192 = vmatprep.subr.bf16.mxu0 0
    %1193 = vmatpush1.bf16.msra.mxu0 0
    %1194 = vmatprep.subr.bf16.mxu0 0
    %1195 = vmatpush1.bf16.msra.mxu0 0
    %1196 = vmatprep.subr.bf16.mxu0 0
    %1197 = vmatpush1.bf16.msra.mxu0 0
    %1198 = vmatprep.subr.bf16.mxu0 0
    %1199 = vmatpush1.bf16.msra.mxu0 0
    %1200 = vmatprep.subr.bf16.mxu0 0
    %1201 = vmatpush1.bf16.msra.mxu0 0
    %1202 = vmatprep.mubr.bf16.mxu0 0
    %1203 = vmatmul.mubr.bf16.gmra.mrb[0].mxu0 %v1168
    %v1204 = vpop.f32.mrb[0].mxu0
    %v1205 = vadd.f32 %v1137, %v1204
    %v1206 = vpop.f32.mrb[0].mxu0
    %v1207 = vpop.f32.mrb[0].mxu0
    %v1208 = vpop.f32.mrb[0].mxu0
    %1209 = vdwg.mxu0
    %v1210 = vpack.c.bf16 %v310, %v310
    %v1212 = vsel %vm390, %v1210, 0
    %1214 = vmatprep.subr.bf16.mxu0 0
    %1215 = vmatpush1.bf16.xpose.msra.mxu0 %v1212
    %1216 = vmatprep.subr.bf16.mxu0 0
    %1217 = vmatpush1.bf16.xpose.msra.mxu0 0
    %1218 = vmatprep.subr.bf16.mxu0 0
    %1219 = vmatpush1.bf16.xpose.msra.mxu0 0
    %1220 = vmatprep.subr.bf16.mxu0 0
    %1221 = vmatpush1.bf16.xpose.msra.mxu0 0
    %1222 = vmatprep.subr.bf16.mxu0 0
    %1223 = vmatpush1.bf16.xpose.msra.mxu0 0
    %1224 = vmatprep.subr.bf16.mxu0 0
    %1225 = vmatpush1.bf16.xpose.msra.mxu0 0
    %1226 = vmatprep.subr.bf16.mxu0 0
    %1227 = vmatpush1.bf16.xpose.msra.mxu0 0
    %1228 = vmatprep.subr.bf16.mxu0 0
    %1229 = vmatpush1.bf16.xpose.msra.mxu0 0
    %1230 = vmatprep.subr.bf16.mxu0 0
    %1231 = vmatpush1.bf16.xpose.msra.mxu0 0
    %1232 = vmatprep.subr.bf16.mxu0 0
    %1233 = vmatpush1.bf16.xpose.msra.mxu0 0
    %1234 = vmatprep.subr.bf16.mxu0 0
    %1235 = vmatpush1.bf16.xpose.msra.mxu0 0
    %1236 = vmatprep.subr.bf16.mxu0 0
    %1237 = vmatpush1.bf16.xpose.msra.mxu0 0
    %1238 = vmatprep.subr.bf16.mxu0 0
    %1239 = vmatpush1.bf16.xpose.msra.mxu0 0
    %1240 = vmatprep.subr.bf16.mxu0 0
    %1241 = vmatpush1.bf16.xpose.msra.mxu0 0
    %1242 = vmatprep.subr.bf16.mxu0 0
    %1243 = vmatpush1.bf16.xpose.msra.mxu0 0
    %1244 = vmatprep.subr.bf16.mxu0 0
    %1245 = vmatpush1.bf16.xpose.msra.mxu0 0
    %1246 = vmatprep.mubr.bf16.mxu0 0
    %1247 = vmatmul.mubr.bf16.gmra.mrb[0].mxu0 %v392
    %v1248 = vpop.f32.mrb[0].mxu0
    %v1249 = vadd.f32 %v345, %v1248
    %v1250 = vpop.f32.mrb[0].mxu0
    %v1251 = vpop.f32.mrb[0].mxu0
    %v1252 = vadd.f32 %v350, %v1251
    %v1253 = vpop.f32.mrb[0].mxu0
    %1254 = vmatprep.mubr.bf16.mxu0 0
    %1255 = vmatmul.mubr.bf16.gmra.mrb[0].mxu0 %v395
    %v1256 = vpop.f32.mrb[0].mxu0
    %v1257 = vadd.f32 %v355, %v1256
    %v1258 = vpop.f32.mrb[0].mxu0
    %v1259 = vpop.f32.mrb[0].mxu0
    %v1260 = vadd.f32 %v360, %v1259
    %v1261 = vpop.f32.mrb[0].mxu0
    %1262 = vdwg.mxu0
    %s1263 = scalar_lea.vmem %s3, 8
    %v1264 = vld [vmem:[%s1263] sm:$0xff]
    %v1265 = vadd.f32 %v1264, %v311
    %v1267 = vcombine.high %v1265, %v1265
    %v1269 = vpack.c.bf16 %v1265, %v1265
    %v1270 = vpack.c.bf16 %v1267, %v1267
    %v1272 = vsel %vm529, %v1269, 0
    %v1275 = vsel %vm529, %v1270, 0
    %1277 = vmatprep.subr.bf16.mxu0 %v1275
    %1278 = vmatpush1.bf16.msra.mxu0 %v1272
    %1279 = vmatprep.subr.bf16.mxu0 0
    %1280 = vmatpush1.bf16.msra.mxu0 0
    %1281 = vmatprep.subr.bf16.mxu0 0
    %1282 = vmatpush1.bf16.msra.mxu0 0
    %1283 = vmatprep.subr.bf16.mxu0 0
    %1284 = vmatpush1.bf16.msra.mxu0 0
    %1285 = vmatprep.subr.bf16.mxu0 0
    %1286 = vmatpush1.bf16.msra.mxu0 0
    %1287 = vmatprep.subr.bf16.mxu0 0
    %1288 = vmatpush1.bf16.msra.mxu0 0
    %1289 = vmatprep.subr.bf16.mxu0 0
    %1290 = vmatpush1.bf16.msra.mxu0 0
    %1291 = vmatprep.subr.bf16.mxu0 0
    %1292 = vmatpush1.bf16.msra.mxu0 0
    %1293 = vmatprep.subr.bf16.mxu0 0
    %1294 = vmatpush1.bf16.msra.mxu0 0
    %1295 = vmatprep.subr.bf16.mxu0 0
    %1296 = vmatpush1.bf16.msra.mxu0 0
    %1297 = vmatprep.subr.bf16.mxu0 0
    %1298 = vmatpush1.bf16.msra.mxu0 0
    %1299 = vmatprep.subr.bf16.mxu0 0
    %1300 = vmatpush1.bf16.msra.mxu0 0
    %1301 = vmatprep.subr.bf16.mxu0 0
    %1302 = vmatpush1.bf16.msra.mxu0 0
    %1303 = vmatprep.subr.bf16.mxu0 0
    %1304 = vmatpush1.bf16.msra.mxu0 0
    %1305 = vmatprep.subr.bf16.mxu0 0
    %1306 = vmatpush1.bf16.msra.mxu0 0
    %1307 = vmatprep.subr.bf16.mxu0 0
    %1308 = vmatpush1.bf16.msra.mxu0 0
    %1309 = vmatprep.mubr.bf16.mxu0 0
    %1310 = vmatmul.mubr.bf16.gmra.mrb[0].mxu0 %v518
    %v1311 = vpop.f32.mrb[0].mxu0
    %v1312 = vadd.f32 %v459, %v1311
    %v1313 = vpop.f32.mrb[0].mxu0
    %v1314 = vadd.f32 %v459, %v1313
    %v1315 = vpop.f32.mrb[0].mxu0
    %v1316 = vadd.f32 %v464, %v1315
    %v1317 = vpop.f32.mrb[0].mxu0
    %v1318 = vadd.f32 %v464, %v1317
    %1319 = vmatprep.mubr.bf16.mxu0 0
    %1320 = vmatmul.mubr.bf16.gmra.mrb[0].mxu0 %v521
    %v1321 = vpop.f32.mrb[0].mxu0
    %v1322 = vadd.f32 %v469, %v1321
    %v1323 = vpop.f32.mrb[0].mxu0
    %v1324 = vadd.f32 %v469, %v1323
    %v1325 = vpop.f32.mrb[0].mxu0
    %v1326 = vadd.f32 %v474, %v1325
    %v1327 = vpop.f32.mrb[0].mxu0
    %v1328 = vadd.f32 %v474, %v1327
    %1329 = vmatprep.mubr.bf16.mxu0 0
    %1330 = vmatmul.mubr.bf16.gmra.mrb[0].mxu0 %v524
    %v1331 = vpop.f32.mrb[0].mxu0
    %v1332 = vadd.f32 %v479, %v1331
    %v1333 = vpop.f32.mrb[0].mxu0
    %v1334 = vadd.f32 %v479, %v1333
    %v1335 = vpop.f32.mrb[0].mxu0
    %v1336 = vadd.f32 %v484, %v1335
    %v1337 = vpop.f32.mrb[0].mxu0
    %v1338 = vadd.f32 %v484, %v1337
    %1339 = vmatprep.mubr.bf16.mxu0 0
    %1340 = vmatmul.mubr.bf16.gmra.mrb[0].mxu0 %v527
    %v1341 = vpop.f32.mrb[0].mxu0
    %v1342 = vadd.f32 %v489, %v1341
    %v1343 = vpop.f32.mrb[0].mxu0
    %v1344 = vadd.f32 %v489, %v1343
    %v1345 = vpop.f32.mrb[0].mxu0
    %v1346 = vadd.f32 %v494, %v1345
    %v1347 = vpop.f32.mrb[0].mxu0
    %v1348 = vadd.f32 %v494, %v1347
    %1349 = vdwg.mxu0
    %v1350 = vpack.c.bf16 %v1249, %v1249
    %v1351 = vpack.c.bf16 %v1312, %v1312
    %v1352 = vpack.c.bf16 %v1314, %v1314
    %1353 = vxpose.xlu0.c.b16.start [1/8] %v1350, 128
    %1354 = vxpose.xlu0.c.b16.cont [2/8] 0, 128
    %1355 = vxpose.xlu0.c.b16.cont [3/8] 0, 128
    %1356 = vxpose.xlu0.c.b16.cont [4/8] 0, 128
    %1357 = vxpose.xlu0.c.b16.cont [5/8] 0, 128
    %1358 = vxpose.xlu0.c.b16.cont [6/8] 0, 128
    %1359 = vxpose.xlu0.c.b16.cont [7/8] 0, 128
    %1360 = vxpose.xlu0.c.b16.end [8/8] 0, 128
    %v1361 = vpop.trf.xlu0
    %v1362 = vpop.trf.xlu0
    %v1363 = vpop.trf.xlu0
    %v1364 = vpop.trf.xlu0
    %v1365 = vpop.trf.xlu0
    %v1366 = vpop.trf.xlu0
    %v1367 = vpop.trf.xlu0
    %v1368 = vpop.trf.xlu0
    %v1370 = vsel %vm628, %v1361, 0
    %v1373 = vsel %vm632, %v1351, 0
    %v1376 = vsel %vm632, %v1352, 0
    %1378 = vmatprep.subr.bf16.mxu0 %v1376
    %1379 = vmatpush1.bf16.msra.mxu0 %v1373
    %1380 = vmatprep.subr.bf16.mxu0 0
    %1381 = vmatpush1.bf16.msra.mxu0 0
    %1382 = vmatprep.subr.bf16.mxu0 0
    %1383 = vmatpush1.bf16.msra.mxu0 0
    %1384 = vmatprep.subr.bf16.mxu0 0
    %1385 = vmatpush1.bf16.msra.mxu0 0
    %1386 = vmatprep.subr.bf16.mxu0 0
    %1387 = vmatpush1.bf16.msra.mxu0 0
    %1388 = vmatprep.subr.bf16.mxu0 0
    %1389 = vmatpush1.bf16.msra.mxu0 0
    %1390 = vmatprep.subr.bf16.mxu0 0
    %1391 = vmatpush1.bf16.msra.mxu0 0
    %1392 = vmatprep.subr.bf16.mxu0 0
    %1393 = vmatpush1.bf16.msra.mxu0 0
    %1394 = vmatprep.subr.bf16.mxu0 0
    %1395 = vmatpush1.bf16.msra.mxu0 0
    %1396 = vmatprep.subr.bf16.mxu0 0
    %1397 = vmatpush1.bf16.msra.mxu0 0
    %1398 = vmatprep.subr.bf16.mxu0 0
    %1399 = vmatpush1.bf16.msra.mxu0 0
    %1400 = vmatprep.subr.bf16.mxu0 0
    %1401 = vmatpush1.bf16.msra.mxu0 0
    %1402 = vmatprep.subr.bf16.mxu0 0
    %1403 = vmatpush1.bf16.msra.mxu0 0
    %1404 = vmatprep.subr.bf16.mxu0 0
    %1405 = vmatpush1.bf16.msra.mxu0 0
    %1406 = vmatprep.subr.bf16.mxu0 0
    %1407 = vmatpush1.bf16.msra.mxu0 0
    %1408 = vmatprep.subr.bf16.mxu0 0
    %1409 = vmatpush1.bf16.msra.mxu0 0
    %1410 = vmatprep.mubr.bf16.mxu0 0
    %1411 = vmatmul.mubr.bf16.gmra.mrb[0].mxu0 %v1370
    %v1412 = vpop.f32.mrb[0].mxu0
    %v1413 = vadd.f32 0.0, %v1412
    %v1414 = vpop.f32.mrb[0].mxu0
    %v1415 = vadd.f32 0.0, %v1414
    %v1416 = vpop.f32.mrb[0].mxu0
    %v1417 = vpop.f32.mrb[0].mxu0
    %1418 = vdwg.mxu0
    %v1419 = vmul.f32 %v1413, 0.35355338
    %v1420 = vmul.f32 %v1415, 0.35355338
    %v1421 = vmax.f32 %v1419, %v1420
    %1422 = vmax.xlane.f32.xlu0 %v1421
    %v1423 = vpop.xlane.xlu0 %1422
    %v1424 = vsub.f32 %v1419, %v1423
    %v1425 = vsub.f32 %v1420, %v1423
    %v1426 = vmul.f32 %v1424, 1.442695
    %v1427 = vpow.pop %v1426
    %v1428 = vmul.f32 %v1425, 1.442695
    %v1429 = vpow.pop %v1428
    %v1430 = vadd.f32 %v1427, %v1429
    %1431 = vadd.xlane.f32.xlu0 %v1430
    %v1432 = vpop.xlane.xlu0 %1431
    %v1433 = vrcp.pop %v1432
    %v1434 = vmul.f32 %v1427, %v1433
    %v1435 = vmul.f32 %v1429, %v1433
    %v1436 = vpack.c.bf16 %v1332, %v1332
    %v1437 = vpack.c.bf16 %v1334, %v1334
    %v1438 = vpack.c.bf16 %v1434, %v1434
    %v1439 = vpack.c.bf16 %v1435, %v1435
    %1440 = vmatprep.subr.bf16.mxu0 %v1439
    %1441 = vmatpush1.bf16.xpose.msra.mxu0 %v1438
    %1442 = vmatprep.subr.bf16.mxu0 0
    %1443 = vmatpush1.bf16.xpose.msra.mxu0 0
    %1444 = vmatprep.subr.bf16.mxu0 0
    %1445 = vmatpush1.bf16.xpose.msra.mxu0 0
    %1446 = vmatprep.subr.bf16.mxu0 0
    %1447 = vmatpush1.bf16.xpose.msra.mxu0 0
    %1448 = vmatprep.subr.bf16.mxu0 0
    %1449 = vmatpush1.bf16.xpose.msra.mxu0 0
    %1450 = vmatprep.subr.bf16.mxu0 0
    %1451 = vmatpush1.bf16.xpose.msra.mxu0 0
    %1452 = vmatprep.subr.bf16.mxu0 0
    %1453 = vmatpush1.bf16.xpose.msra.mxu0 0
    %1454 = vmatprep.subr.bf16.mxu0 0
    %1455 = vmatpush1.bf16.xpose.msra.mxu0 0
    %1456 = vmatprep.subr.bf16.mxu0 0
    %1457 = vmatpush1.bf16.xpose.msra.mxu0 0
    %1458 = vmatprep.subr.bf16.mxu0 0
    %1459 = vmatpush1.bf16.xpose.msra.mxu0 0
    %1460 = vmatprep.subr.bf16.mxu0 0
    %1461 = vmatpush1.bf16.xpose.msra.mxu0 0
    %1462 = vmatprep.subr.bf16.mxu0 0
    %1463 = vmatpush1.bf16.xpose.msra.mxu0 0
    %1464 = vmatprep.subr.bf16.mxu0 0
    %1465 = vmatpush1.bf16.xpose.msra.mxu0 0
    %1466 = vmatprep.subr.bf16.mxu0 0
    %1467 = vmatpush1.bf16.xpose.msra.mxu0 0
    %1468 = vmatprep.subr.bf16.mxu0 0
    %1469 = vmatpush1.bf16.xpose.msra.mxu0 0
    %1470 = vmatprep.subr.bf16.mxu0 0
    %1471 = vmatpush1.bf16.xpose.msra.mxu0 0
    %1472 = vmatprep.mubr.bf16.mxu0 %v1437
    %1473 = vmatmul.mubr.bf16.gmra.mrb[0].mxu0 %v1436
    %v1474 = vpop.f32.mrb[0].mxu0
    %v1475 = vadd.f32 0.0, %v1474
    %v1476 = vpop.f32.mrb[0].mxu0
    %v1477 = vpop.f32.mrb[0].mxu0
    %v1478 = vpop.f32.mrb[0].mxu0
    %1479 = vdwg.mxu0
    %v1480 = vpack.c.bf16 %v1252, %v1252
    %v1481 = vpack.c.bf16 %v1316, %v1316
    %v1482 = vpack.c.bf16 %v1318, %v1318
    %1483 = vxpose.xlu0.c.b16.start [1/8] %v1480, 128
    %1484 = vxpose.xlu0.c.b16.cont [2/8] 0, 128
    %1485 = vxpose.xlu0.c.b16.cont [3/8] 0, 128
    %1486 = vxpose.xlu0.c.b16.cont [4/8] 0, 128
    %1487 = vxpose.xlu0.c.b16.cont [5/8] 0, 128
    %1488 = vxpose.xlu0.c.b16.cont [6/8] 0, 128
    %1489 = vxpose.xlu0.c.b16.cont [7/8] 0, 128
    %1490 = vxpose.xlu0.c.b16.end [8/8] 0, 128
    %v1491 = vpop.trf.xlu0
    %v1492 = vpop.trf.xlu0
    %v1493 = vpop.trf.xlu0
    %v1494 = vpop.trf.xlu0
    %v1495 = vpop.trf.xlu0
    %v1496 = vpop.trf.xlu0
    %v1497 = vpop.trf.xlu0
    %v1498 = vpop.trf.xlu0
    %v1500 = vsel %vm628, %v1491, 0
    %v1503 = vsel %vm632, %v1481, 0
    %v1506 = vsel %vm632, %v1482, 0
    %1508 = vmatprep.subr.bf16.mxu0 %v1506
    %1509 = vmatpush1.bf16.msra.mxu0 %v1503
    %1510 = vmatprep.subr.bf16.mxu0 0
    %1511 = vmatpush1.bf16.msra.mxu0 0
    %1512 = vmatprep.subr.bf16.mxu0 0
    %1513 = vmatpush1.bf16.msra.mxu0 0
    %1514 = vmatprep.subr.bf16.mxu0 0
    %1515 = vmatpush1.bf16.msra.mxu0 0
    %1516 = vmatprep.subr.bf16.mxu0 0
    %1517 = vmatpush1.bf16.msra.mxu0 0
    %1518 = vmatprep.subr.bf16.mxu0 0
    %1519 = vmatpush1.bf16.msra.mxu0 0
    %1520 = vmatprep.subr.bf16.mxu0 0
    %1521 = vmatpush1.bf16.msra.mxu0 0
    %1522 = vmatprep.subr.bf16.mxu0 0
    %1523 = vmatpush1.bf16.msra.mxu0 0
    %1524 = vmatprep.subr.bf16.mxu0 0
    %1525 = vmatpush1.bf16.msra.mxu0 0
    %1526 = vmatprep.subr.bf16.mxu0 0
    %1527 = vmatpush1.bf16.msra.mxu0 0
    %1528 = vmatprep.subr.bf16.mxu0 0
    %1529 = vmatpush1.bf16.msra.mxu0 0
    %1530 = vmatprep.subr.bf16.mxu0 0
    %1531 = vmatpush1.bf16.msra.mxu0 0
    %1532 = vmatprep.subr.bf16.mxu0 0
    %1533 = vmatpush1.bf16.msra.mxu0 0
    %1534 = vmatprep.subr.bf16.mxu0 0
    %1535 = vmatpush1.bf16.msra.mxu0 0
    %1536 = vmatprep.subr.bf16.mxu0 0
    %1537 = vmatpush1.bf16.msra.mxu0 0
    %1538 = vmatprep.subr.bf16.mxu0 0
    %1539 = vmatpush1.bf16.msra.mxu0 0
    %1540 = vmatprep.mubr.bf16.mxu0 0
    %1541 = vmatmul.mubr.bf16.gmra.mrb[0].mxu0 %v1500
    %v1542 = vpop.f32.mrb[0].mxu0
    %v1543 = vadd.f32 0.0, %v1542
    %v1544 = vpop.f32.mrb[0].mxu0
    %v1545 = vadd.f32 0.0, %v1544
    %v1546 = vpop.f32.mrb[0].mxu0
    %v1547 = vpop.f32.mrb[0].mxu0
    %1548 = vdwg.mxu0
    %v1549 = vmul.f32 %v1543, 0.35355338
    %v1550 = vmul.f32 %v1545, 0.35355338
    %v1551 = vmax.f32 %v1549, %v1550
    %1552 = vmax.xlane.f32.xlu0 %v1551
    %v1553 = vpop.xlane.xlu0 %1552
    %v1554 = vsub.f32 %v1549, %v1553
    %v1555 = vsub.f32 %v1550, %v1553
    %v1556 = vmul.f32 %v1554, 1.442695
    %v1557 = vpow.pop %v1556
    %v1558 = vmul.f32 %v1555, 1.442695
    %v1559 = vpow.pop %v1558
    %v1560 = vadd.f32 %v1557, %v1559
    %1561 = vadd.xlane.f32.xlu0 %v1560
    %v1562 = vpop.xlane.xlu0 %1561
    %v1563 = vrcp.pop %v1562
    %v1564 = vmul.f32 %v1557, %v1563
    %v1565 = vmul.f32 %v1559, %v1563
    %v1566 = vpack.c.bf16 %v1336, %v1336
    %v1567 = vpack.c.bf16 %v1338, %v1338
    %v1568 = vpack.c.bf16 %v1564, %v1564
    %v1569 = vpack.c.bf16 %v1565, %v1565
    %1570 = vmatprep.subr.bf16.mxu0 %v1569
    %1571 = vmatpush1.bf16.xpose.msra.mxu0 %v1568
    %1572 = vmatprep.subr.bf16.mxu0 0
    %1573 = vmatpush1.bf16.xpose.msra.mxu0 0
    %1574 = vmatprep.subr.bf16.mxu0 0
    %1575 = vmatpush1.bf16.xpose.msra.mxu0 0
    %1576 = vmatprep.subr.bf16.mxu0 0
    %1577 = vmatpush1.bf16.xpose.msra.mxu0 0
    %1578 = vmatprep.subr.bf16.mxu0 0
    %1579 = vmatpush1.bf16.xpose.msra.mxu0 0
    %1580 = vmatprep.subr.bf16.mxu0 0
    %1581 = vmatpush1.bf16.xpose.msra.mxu0 0
    %1582 = vmatprep.subr.bf16.mxu0 0
    %1583 = vmatpush1.bf16.xpose.msra.mxu0 0
    %1584 = vmatprep.subr.bf16.mxu0 0
    %1585 = vmatpush1.bf16.xpose.msra.mxu0 0
    %1586 = vmatprep.subr.bf16.mxu0 0
    %1587 = vmatpush1.bf16.xpose.msra.mxu0 0
    %1588 = vmatprep.subr.bf16.mxu0 0
    %1589 = vmatpush1.bf16.xpose.msra.mxu0 0
    %1590 = vmatprep.subr.bf16.mxu0 0
    %1591 = vmatpush1.bf16.xpose.msra.mxu0 0
    %1592 = vmatprep.subr.bf16.mxu0 0
    %1593 = vmatpush1.bf16.xpose.msra.mxu0 0
    %1594 = vmatprep.subr.bf16.mxu0 0
    %1595 = vmatpush1.bf16.xpose.msra.mxu0 0
    %1596 = vmatprep.subr.bf16.mxu0 0
    %1597 = vmatpush1.bf16.xpose.msra.mxu0 0
    %1598 = vmatprep.subr.bf16.mxu0 0
    %1599 = vmatpush1.bf16.xpose.msra.mxu0 0
    %1600 = vmatprep.subr.bf16.mxu0 0
    %1601 = vmatpush1.bf16.xpose.msra.mxu0 0
    %1602 = vmatprep.mubr.bf16.mxu0 %v1567
    %1603 = vmatmul.mubr.bf16.gmra.mrb[0].mxu0 %v1566
    %v1604 = vpop.f32.mrb[0].mxu0
    %v1605 = vadd.f32 0.0, %v1604
    %v1606 = vpop.f32.mrb[0].mxu0
    %v1607 = vpop.f32.mrb[0].mxu0
    %v1608 = vpop.f32.mrb[0].mxu0
    %1609 = vdwg.mxu0
    %v1610 = vpack.c.bf16 %v1257, %v1257
    %v1611 = vpack.c.bf16 %v1322, %v1322
    %v1612 = vpack.c.bf16 %v1324, %v1324
    %1613 = vxpose.xlu0.c.b16.start [1/8] %v1610, 128
    %1614 = vxpose.xlu0.c.b16.cont [2/8] 0, 128
    %1615 = vxpose.xlu0.c.b16.cont [3/8] 0, 128
    %1616 = vxpose.xlu0.c.b16.cont [4/8] 0, 128
    %1617 = vxpose.xlu0.c.b16.cont [5/8] 0, 128
    %1618 = vxpose.xlu0.c.b16.cont [6/8] 0, 128
    %1619 = vxpose.xlu0.c.b16.cont [7/8] 0, 128
    %1620 = vxpose.xlu0.c.b16.end [8/8] 0, 128
    %v1621 = vpop.trf.xlu0
    %v1622 = vpop.trf.xlu0
    %v1623 = vpop.trf.xlu0
    %v1624 = vpop.trf.xlu0
    %v1625 = vpop.trf.xlu0
    %v1626 = vpop.trf.xlu0
    %v1627 = vpop.trf.xlu0
    %v1628 = vpop.trf.xlu0
    %v1630 = vsel %vm628, %v1621, 0
    %v1633 = vsel %vm632, %v1611, 0
    %v1636 = vsel %vm632, %v1612, 0
    %1638 = vmatprep.subr.bf16.mxu0 %v1636
    %1639 = vmatpush1.bf16.msra.mxu0 %v1633
    %1640 = vmatprep.subr.bf16.mxu0 0
    %1641 = vmatpush1.bf16.msra.mxu0 0
    %1642 = vmatprep.subr.bf16.mxu0 0
    %1643 = vmatpush1.bf16.msra.mxu0 0
    %1644 = vmatprep.subr.bf16.mxu0 0
    %1645 = vmatpush1.bf16.msra.mxu0 0
    %1646 = vmatprep.subr.bf16.mxu0 0
    %1647 = vmatpush1.bf16.msra.mxu0 0
    %1648 = vmatprep.subr.bf16.mxu0 0
    %1649 = vmatpush1.bf16.msra.mxu0 0
    %1650 = vmatprep.subr.bf16.mxu0 0
    %1651 = vmatpush1.bf16.msra.mxu0 0
    %1652 = vmatprep.subr.bf16.mxu0 0
    %1653 = vmatpush1.bf16.msra.mxu0 0
    %1654 = vmatprep.subr.bf16.mxu0 0
    %1655 = vmatpush1.bf16.msra.mxu0 0
    %1656 = vmatprep.subr.bf16.mxu0 0
    %1657 = vmatpush1.bf16.msra.mxu0 0
    %1658 = vmatprep.subr.bf16.mxu0 0
    %1659 = vmatpush1.bf16.msra.mxu0 0
    %1660 = vmatprep.subr.bf16.mxu0 0
    %1661 = vmatpush1.bf16.msra.mxu0 0
    %1662 = vmatprep.subr.bf16.mxu0 0
    %1663 = vmatpush1.bf16.msra.mxu0 0
    %1664 = vmatprep.subr.bf16.mxu0 0
    %1665 = vmatpush1.bf16.msra.mxu0 0
    %1666 = vmatprep.subr.bf16.mxu0 0
    %1667 = vmatpush1.bf16.msra.mxu0 0
    %1668 = vmatprep.subr.bf16.mxu0 0
    %1669 = vmatpush1.bf16.msra.mxu0 0
    %1670 = vmatprep.mubr.bf16.mxu0 0
    %1671 = vmatmul.mubr.bf16.gmra.mrb[0].mxu0 %v1630
    %v1672 = vpop.f32.mrb[0].mxu0
    %v1673 = vadd.f32 0.0, %v1672
    %v1674 = vpop.f32.mrb[0].mxu0
    %v1675 = vadd.f32 0.0, %v1674
    %v1676 = vpop.f32.mrb[0].mxu0
    %v1677 = vpop.f32.mrb[0].mxu0
    %1678 = vdwg.mxu0
    %v1679 = vmul.f32 %v1673, 0.35355338
    %v1680 = vmul.f32 %v1675, 0.35355338
    %v1681 = vmax.f32 %v1679, %v1680
    %1682 = vmax.xlane.f32.xlu0 %v1681
    %v1683 = vpop.xlane.xlu0 %1682
    %v1684 = vsub.f32 %v1679, %v1683
    %v1685 = vsub.f32 %v1680, %v1683
    %v1686 = vmul.f32 %v1684, 1.442695
    %v1687 = vpow.pop %v1686
    %v1688 = vmul.f32 %v1685, 1.442695
    %v1689 = vpow.pop %v1688
    %v1690 = vadd.f32 %v1687, %v1689
    %1691 = vadd.xlane.f32.xlu0 %v1690
    %v1692 = vpop.xlane.xlu0 %1691
    %v1693 = vrcp.pop %v1692
    %v1694 = vmul.f32 %v1687, %v1693
    %v1695 = vmul.f32 %v1689, %v1693
    %v1696 = vpack.c.bf16 %v1342, %v1342
    %v1697 = vpack.c.bf16 %v1344, %v1344
    %v1698 = vpack.c.bf16 %v1694, %v1694
    %v1699 = vpack.c.bf16 %v1695, %v1695
    %1700 = vmatprep.subr.bf16.mxu0 %v1699
    %1701 = vmatpush1.bf16.xpose.msra.mxu0 %v1698
    %1702 = vmatprep.subr.bf16.mxu0 0
    %1703 = vmatpush1.bf16.xpose.msra.mxu0 0
    %1704 = vmatprep.subr.bf16.mxu0 0
    %1705 = vmatpush1.bf16.xpose.msra.mxu0 0
    %1706 = vmatprep.subr.bf16.mxu0 0
    %1707 = vmatpush1.bf16.xpose.msra.mxu0 0
    %1708 = vmatprep.subr.bf16.mxu0 0
    %1709 = vmatpush1.bf16.xpose.msra.mxu0 0
    %1710 = vmatprep.subr.bf16.mxu0 0
    %1711 = vmatpush1.bf16.xpose.msra.mxu0 0
    %1712 = vmatprep.subr.bf16.mxu0 0
    %1713 = vmatpush1.bf16.xpose.msra.mxu0 0
    %1714 = vmatprep.subr.bf16.mxu0 0
    %1715 = vmatpush1.bf16.xpose.msra.mxu0 0
    %1716 = vmatprep.subr.bf16.mxu0 0
    %1717 = vmatpush1.bf16.xpose.msra.mxu0 0
    %1718 = vmatprep.subr.bf16.mxu0 0
    %1719 = vmatpush1.bf16.xpose.msra.mxu0 0
    %1720 = vmatprep.subr.bf16.mxu0 0
    %1721 = vmatpush1.bf16.xpose.msra.mxu0 0
    %1722 = vmatprep.subr.bf16.mxu0 0
    %1723 = vmatpush1.bf16.xpose.msra.mxu0 0
    %1724 = vmatprep.subr.bf16.mxu0 0
    %1725 = vmatpush1.bf16.xpose.msra.mxu0 0
    %1726 = vmatprep.subr.bf16.mxu0 0
    %1727 = vmatpush1.bf16.xpose.msra.mxu0 0
    %1728 = vmatprep.subr.bf16.mxu0 0
    %1729 = vmatpush1.bf16.xpose.msra.mxu0 0
    %1730 = vmatprep.subr.bf16.mxu0 0
    %1731 = vmatpush1.bf16.xpose.msra.mxu0 0
    %1732 = vmatprep.mubr.bf16.mxu0 %v1697
    %1733 = vmatmul.mubr.bf16.gmra.mrb[0].mxu0 %v1696
    %v1734 = vpop.f32.mrb[0].mxu0
    %v1735 = vadd.f32 0.0, %v1734
    %v1736 = vpop.f32.mrb[0].mxu0
    %v1737 = vpop.f32.mrb[0].mxu0
    %v1738 = vpop.f32.mrb[0].mxu0
    %1739 = vdwg.mxu0
    %v1740 = vpack.c.bf16 %v1260, %v1260
    %v1741 = vpack.c.bf16 %v1326, %v1326
    %v1742 = vpack.c.bf16 %v1328, %v1328
    %1743 = vxpose.xlu0.c.b16.start [1/8] %v1740, 128
    %1744 = vxpose.xlu0.c.b16.cont [2/8] 0, 128
    %1745 = vxpose.xlu0.c.b16.cont [3/8] 0, 128
    %1746 = vxpose.xlu0.c.b16.cont [4/8] 0, 128
    %1747 = vxpose.xlu0.c.b16.cont [5/8] 0, 128
    %1748 = vxpose.xlu0.c.b16.cont [6/8] 0, 128
    %1749 = vxpose.xlu0.c.b16.cont [7/8] 0, 128
    %1750 = vxpose.xlu0.c.b16.end [8/8] 0, 128
    %v1751 = vpop.trf.xlu0
    %v1752 = vpop.trf.xlu0
    %v1753 = vpop.trf.xlu0
    %v1754 = vpop.trf.xlu0
    %v1755 = vpop.trf.xlu0
    %v1756 = vpop.trf.xlu0
    %v1757 = vpop.trf.xlu0
    %v1758 = vpop.trf.xlu0
    %v1760 = vsel %vm628, %v1751, 0
    %v1763 = vsel %vm632, %v1741, 0
    %v1766 = vsel %vm632, %v1742, 0
    %1768 = vmatprep.subr.bf16.mxu0 %v1766
    %1769 = vmatpush1.bf16.msra.mxu0 %v1763
    %1770 = vmatprep.subr.bf16.mxu0 0
    %1771 = vmatpush1.bf16.msra.mxu0 0
    %1772 = vmatprep.subr.bf16.mxu0 0
    %1773 = vmatpush1.bf16.msra.mxu0 0
    %1774 = vmatprep.subr.bf16.mxu0 0
    %1775 = vmatpush1.bf16.msra.mxu0 0
    %1776 = vmatprep.subr.bf16.mxu0 0
    %1777 = vmatpush1.bf16.msra.mxu0 0
    %1778 = vmatprep.subr.bf16.mxu0 0
    %1779 = vmatpush1.bf16.msra.mxu0 0
    %1780 = vmatprep.subr.bf16.mxu0 0
    %1781 = vmatpush1.bf16.msra.mxu0 0
    %1782 = vmatprep.subr.bf16.mxu0 0
    %1783 = vmatpush1.bf16.msra.mxu0 0
    %1784 = vmatprep.subr.bf16.mxu0 0
    %1785 = vmatpush1.bf16.msra.mxu0 0
    %1786 = vmatprep.subr.bf16.mxu0 0
    %1787 = vmatpush1.bf16.msra.mxu0 0
    %1788 = vmatprep.subr.bf16.mxu0 0
    %1789 = vmatpush1.bf16.msra.mxu0 0
    %1790 = vmatprep.subr.bf16.mxu0 0
    %1791 = vmatpush1.bf16.msra.mxu0 0
    %1792 = vmatprep.subr.bf16.mxu0 0
    %1793 = vmatpush1.bf16.msra.mxu0 0
    %1794 = vmatprep.subr.bf16.mxu0 0
    %1795 = vmatpush1.bf16.msra.mxu0 0
    %1796 = vmatprep.subr.bf16.mxu0 0
    %1797 = vmatpush1.bf16.msra.mxu0 0
    %1798 = vmatprep.subr.bf16.mxu0 0
    %1799 = vmatpush1.bf16.msra.mxu0 0
    %1800 = vmatprep.mubr.bf16.mxu0 0
    %1801 = vmatmul.mubr.bf16.gmra.mrb[0].mxu0 %v1760
    %v1802 = vpop.f32.mrb[0].mxu0
    %v1803 = vadd.f32 0.0, %v1802
    %v1804 = vpop.f32.mrb[0].mxu0
    %v1805 = vadd.f32 0.0, %v1804
    %v1806 = vpop.f32.mrb[0].mxu0
    %v1807 = vpop.f32.mrb[0].mxu0
    %1808 = vdwg.mxu0
    %v1809 = vmul.f32 %v1803, 0.35355338
    %v1810 = vmul.f32 %v1805, 0.35355338
    %v1811 = vmax.f32 %v1809, %v1810
    %1812 = vmax.xlane.f32.xlu0 %v1811
    %v1813 = vpop.xlane.xlu0 %1812
    %v1814 = vsub.f32 %v1809, %v1813
    %v1815 = vsub.f32 %v1810, %v1813
    %v1816 = vmul.f32 %v1814, 1.442695
    %v1817 = vpow.pop %v1816
    %v1818 = vmul.f32 %v1815, 1.442695
    %v1819 = vpow.pop %v1818
    %v1820 = vadd.f32 %v1817, %v1819
    %1821 = vadd.xlane.f32.xlu0 %v1820
    %v1822 = vpop.xlane.xlu0 %1821
    %v1823 = vrcp.pop %v1822
    %v1824 = vmul.f32 %v1817, %v1823
    %v1825 = vmul.f32 %v1819, %v1823
    %v1826 = vpack.c.bf16 %v1346, %v1346
    %v1827 = vpack.c.bf16 %v1348, %v1348
    %v1828 = vpack.c.bf16 %v1824, %v1824
    %v1829 = vpack.c.bf16 %v1825, %v1825
    %1830 = vmatprep.subr.bf16.mxu0 %v1829
    %1831 = vmatpush1.bf16.xpose.msra.mxu0 %v1828
    %1832 = vmatprep.subr.bf16.mxu0 0
    %1833 = vmatpush1.bf16.xpose.msra.mxu0 0
    %1834 = vmatprep.subr.bf16.mxu0 0
    %1835 = vmatpush1.bf16.xpose.msra.mxu0 0
    %1836 = vmatprep.subr.bf16.mxu0 0
    %1837 = vmatpush1.bf16.xpose.msra.mxu0 0
    %1838 = vmatprep.subr.bf16.mxu0 0
    %1839 = vmatpush1.bf16.xpose.msra.mxu0 0
    %1840 = vmatprep.subr.bf16.mxu0 0
    %1841 = vmatpush1.bf16.xpose.msra.mxu0 0
    %1842 = vmatprep.subr.bf16.mxu0 0
    %1843 = vmatpush1.bf16.xpose.msra.mxu0 0
    %1844 = vmatprep.subr.bf16.mxu0 0
    %1845 = vmatpush1.bf16.xpose.msra.mxu0 0
    %1846 = vmatprep.subr.bf16.mxu0 0
    %1847 = vmatpush1.bf16.xpose.msra.mxu0 0
    %1848 = vmatprep.subr.bf16.mxu0 0
    %1849 = vmatpush1.bf16.xpose.msra.mxu0 0
    %1850 = vmatprep.subr.bf16.mxu0 0
    %1851 = vmatpush1.bf16.xpose.msra.mxu0 0
    %1852 = vmatprep.subr.bf16.mxu0 0
    %1853 = vmatpush1.bf16.xpose.msra.mxu0 0
    %1854 = vmatprep.subr.bf16.mxu0 0
    %1855 = vmatpush1.bf16.xpose.msra.mxu0 0
    %1856 = vmatprep.subr.bf16.mxu0 0
    %1857 = vmatpush1.bf16.xpose.msra.mxu0 0
    %1858 = vmatprep.subr.bf16.mxu0 0
    %1859 = vmatpush1.bf16.xpose.msra.mxu0 0
    %1860 = vmatprep.subr.bf16.mxu0 0
    %1861 = vmatpush1.bf16.xpose.msra.mxu0 0
    %1862 = vmatprep.mubr.bf16.mxu0 %v1827
    %1863 = vmatmul.mubr.bf16.gmra.mrb[0].mxu0 %v1826
    %v1864 = vpop.f32.mrb[0].mxu0
    %v1865 = vadd.f32 0.0, %v1864
    %v1866 = vpop.f32.mrb[0].mxu0
    %v1867 = vpop.f32.mrb[0].mxu0
    %v1868 = vpop.f32.mrb[0].mxu0
    %1869 = vdwg.mxu0
    %v1870 = vpack.c.bf16 %v1605, %v1475
    %v1871 = vpack.c.bf16 %v1865, %v1735
    %1872 = vxpose.xlu0.c.b16.start [1/8] %v1870, 128
    %1873 = vxpose.xlu0.c.b16.cont [2/8] %v1871, 128
    %1874 = vxpose.xlu0.c.b16.cont [3/8] 0, 128
    %1875 = vxpose.xlu0.c.b16.cont [4/8] 0, 128
    %1876 = vxpose.xlu0.c.b16.cont [5/8] 0, 128
    %1877 = vxpose.xlu0.c.b16.cont [6/8] 0, 128
    %1878 = vxpose.xlu0.c.b16.cont [7/8] 0, 128
    %1879 = vxpose.xlu0.c.b16.end [8/8] 0, 128
    %v1880 = vpop.trf.xlu0
    %v1881 = vpop.trf.xlu0
    %v1882 = vpop.trf.xlu0
    %v1883 = vpop.trf.xlu0
    %v1884 = vpop.trf.xlu0
    %v1885 = vpop.trf.xlu0
    %v1886 = vpop.trf.xlu0
    %v1887 = vpop.trf.xlu0
    %v1889 = vsel %vm390, %v1880, 0
    %1891 = vmatprep.subr.bf16.mxu0 0
    %1892 = vmatpush1.bf16.msra.mxu0 %v1163
    %1893 = vmatprep.subr.bf16.mxu0 0
    %1894 = vmatpush1.bf16.msra.mxu0 %v1164
    %1895 = vmatprep.subr.bf16.mxu0 0
    %1896 = vmatpush1.bf16.msra.mxu0 0
    %1897 = vmatprep.subr.bf16.mxu0 0
    %1898 = vmatpush1.bf16.msra.mxu0 0
    %1899 = vmatprep.subr.bf16.mxu0 0
    %1900 = vmatpush1.bf16.msra.mxu0 0
    %1901 = vmatprep.subr.bf16.mxu0 0
    %1902 = vmatpush1.bf16.msra.mxu0 0
    %1903 = vmatprep.subr.bf16.mxu0 0
    %1904 = vmatpush1.bf16.msra.mxu0 0
    %1905 = vmatprep.subr.bf16.mxu0 0
    %1906 = vmatpush1.bf16.msra.mxu0 0
    %1907 = vmatprep.subr.bf16.mxu0 0
    %1908 = vmatpush1.bf16.msra.mxu0 0
    %1909 = vmatprep.subr.bf16.mxu0 0
    %1910 = vmatpush1.bf16.msra.mxu0 0
    %1911 = vmatprep.subr.bf16.mxu0 0
    %1912 = vmatpush1.bf16.msra.mxu0 0
    %1913 = vmatprep.subr.bf16.mxu0 0
    %1914 = vmatpush1.bf16.msra.mxu0 0
    %1915 = vmatprep.subr.bf16.mxu0 0
    %1916 = vmatpush1.bf16.msra.mxu0 0
    %1917 = vmatprep.subr.bf16.mxu0 0
    %1918 = vmatpush1.bf16.msra.mxu0 0
    %1919 = vmatprep.subr.bf16.mxu0 0
    %1920 = vmatpush1.bf16.msra.mxu0 0
    %1921 = vmatprep.subr.bf16.mxu0 0
    %1922 = vmatpush1.bf16.msra.mxu0 0
    %1923 = vmatprep.mubr.bf16.mxu0 0
    %1924 = vmatmul.mubr.bf16.gmra.mrb[0].mxu0 %v1889
    %v1925 = vpop.f32.mrb[0].mxu0
    %v1926 = vadd.f32 %v1137, %v1925
    %v1927 = vpop.f32.mrb[0].mxu0
    %v1928 = vpop.f32.mrb[0].mxu0
    %v1929 = vpop.f32.mrb[0].mxu0
    %1930 = vdwg.mxu0
    %v1931 = vld [vmem:[%s19] sm:$0x1]
    %v1932 = vld [vmem:[%s21] sm:$0x1]
    %v1933 = vld [vmem:[#allocation14] sm:$0xf]
    %v1934 = vld [vmem:[#allocation14 + $0x4] sm:$0xf]
    %v1935 = vld [vmem:[#allocation14 + $0x8] sm:$0xf]
    %v1936 = vld [vmem:[#allocation14 + $0xc] sm:$0xf]
    %v1937 = vld [vmem:[#allocation16] sm:$0x1]
    %v1938 = vld [vmem:[#allocation17] sm:$0xf]
    %v1939 = vld [vmem:[#allocation17 + $0x4] sm:$0xf]
    %v1940 = vld [vmem:[#allocation17 + $0x8] sm:$0xf]
    %v1941 = vld [vmem:[#allocation17 + $0xc] sm:$0xf]
    %v1942 = vld [vmem:[%s29] sm:$0x1]
    %v1943 = vld [vmem:[%s31] sm:$0x1]
    %v1944 = vld [vmem:[%s33] sm:$0x1]
    %v1945 = vsel %vm390, %v1205, 0.0
    %1946 = vadd.xlane.f32.xlu0 %v1945
    %v1947 = vpop.xlane.xlu0 %1946
    %v1948 = vsel %vm390, %v1926, 0.0
    %1949 = vadd.xlane.f32.xlu0 %v1948
    %v1950 = vpop.xlane.xlu0 %1949
    %v1951 = vrcp.pop 32.0
    %v1952 = vmul.f32 %v1947, %v1951
    %v1953 = vmul.f32 %v1950, %v1951
    %v1954 = vsub.f32 %v1205, %v1952
    %v1955 = vsub.f32 %v1926, %v1953
    %v1956 = vmul.f32 %v1954, %v1954
    %v1957 = vmul.f32 %v1955, %v1955
    %v1958 = vsel %vm390, %v1956, 0.0
    %1959 = vadd.xlane.f32.xlu0 %v1958
    %v1960 = vpop.xlane.xlu0 %1959
    %v1961 = vsel %vm390, %v1957, 0.0
    %1962 = vadd.xlane.f32.xlu0 %v1961
    %v1963 = vpop.xlane.xlu0 %1962
    %v1964 = vmul.f32 %v1960, %v1951
    %v1965 = vmul.f32 %v1963, %v1951
    %v1966 = vadd.f32 %v1964, 1e-05
    %v1967 = vadd.f32 %v1965, 1e-05
    %v1968 = vrsqrt.pop %v1966
    %v1969 = vrsqrt.pop %v1967
    %v1970 = vmul.f32 %v1954, %v1968
    %v1971 = vmul.f32 %v1955, %v1969
    %v1973 = vlaneseq
    %v1974 = vshrl.u32 %v1973, 7
    %v1975 = vsub.s32 0, %v1974
    %v1976 = vrot.slane %v1931, %v1975
    %v1978 = vmul.f32 %v1970, %v1976
    %v1979 = vmul.f32 %v1971, %v1976
    %v1981 = vlaneseq
    %v1982 = vshrl.u32 %v1981, 7
    %v1983 = vsub.s32 0, %v1982
    %v1984 = vrot.slane %v1932, %v1983
    %v1986 = vadd.f32 %v1978, %v1984
    %v1987 = vadd.f32 %v1979, %v1984
    %v1988 = vadd.f32 %v1986, %v308
    %v1989 = vadd.f32 %v1987, %v310
    %v1990 = vpack.c.bf16 %v1989, %v1988
    %v1992 = vlaneseq
    %v1993 = vshrl.u32 %v1992, 7
    %v1994 = vsub.s32 0, %v1993
    %v1995 = vrot.slane %v1937, %v1994
    %v2001 = vunpack.c.l.b16 %v1933
    %v2002 = vunpack.c.l.b16 %v1934
    %v2003 = vunpack.c.l.b16 %v1935
    %v2004 = vunpack.c.l.b16 %v1936
    %v2005 = vpack.c.b16 %v2002, %v2001
    %v2006 = vpack.c.b16 %v2004, %v2003
    %v2010 = vsel %vm390, %v1990, 0
    %2012 = vmatprep.subr.bf16.mxu0 0
    %2013 = vmatpush1.bf16.msra.mxu0 %v2005
    %2014 = vmatprep.subr.bf16.mxu0 0
    %2015 = vmatpush1.bf16.msra.mxu0 %v2006
    %2016 = vmatprep.subr.bf16.mxu0 0
    %2017 = vmatpush1.bf16.msra.mxu0 0
    %2018 = vmatprep.subr.bf16.mxu0 0
    %2019 = vmatpush1.bf16.msra.mxu0 0
    %2020 = vmatprep.subr.bf16.mxu0 0
    %2021 = vmatpush1.bf16.msra.mxu0 0
    %2022 = vmatprep.subr.bf16.mxu0 0
    %2023 = vmatpush1.bf16.msra.mxu0 0
    %2024 = vmatprep.subr.bf16.mxu0 0
    %2025 = vmatpush1.bf16.msra.mxu0 0
    %2026 = vmatprep.subr.bf16.mxu0 0
    %2027 = vmatpush1.bf16.msra.mxu0 0
    %2028 = vmatprep.subr.bf16.mxu0 0
    %2029 = vmatpush1.bf16.msra.mxu0 0
    %2030 = vmatprep.subr.bf16.mxu0 0
    %2031 = vmatpush1.bf16.msra.mxu0 0
    %2032 = vmatprep.subr.bf16.mxu0 0
    %2033 = vmatpush1.bf16.msra.mxu0 0
    %2034 = vmatprep.subr.bf16.mxu0 0
    %2035 = vmatpush1.bf16.msra.mxu0 0
    %2036 = vmatprep.subr.bf16.mxu0 0
    %2037 = vmatpush1.bf16.msra.mxu0 0
    %2038 = vmatprep.subr.bf16.mxu0 0
    %2039 = vmatpush1.bf16.msra.mxu0 0
    %2040 = vmatprep.subr.bf16.mxu0 0
    %2041 = vmatpush1.bf16.msra.mxu0 0
    %2042 = vmatprep.subr.bf16.mxu0 0
    %2043 = vmatpush1.bf16.msra.mxu0 0
    %2044 = vmatprep.mubr.bf16.mxu0 0
    %2045 = vmatmul.mubr.bf16.gmra.mrb[0].mxu0 %v2010
    %v2046 = vpop.f32.mrb[0].mxu0
    %v2047 = vadd.f32 %v1995, %v2046
    %v2048 = vpop.f32.mrb[0].mxu0
    %v2049 = vpop.f32.mrb[0].mxu0
    %v2050 = vadd.f32 %v1995, %v2049
    %v2051 = vpop.f32.mrb[0].mxu0
    %2052 = vdwg.mxu0
    %v2053 = vmul.f32 %v2047, 0.5
    %v2054 = vmul.f32 %v2050, 0.5
    %v2055 = vmul.f32 %v2047, 0.044715
    %v2056 = vmul.f32 %v2050, 0.044715
    %v2057 = vmul.f32 %v2055, %v2047
    %v2058 = vmul.f32 %v2056, %v2050
    %v2059 = vmul.f32 %v2057, %v2047
    %v2060 = vmul.f32 %v2058, %v2050
    %v2061 = vadd.f32 %v2047, %v2059
    %v2062 = vadd.f32 %v2050, %v2060
    %v2063 = vmul.f32 %v2061, 0.7978846
    %v2064 = vmul.f32 %v2062, 0.7978846
    %v2065 = vtanh.pop %v2063
    %v2066 = vtanh.pop %v2064
    %v2067 = vadd.f32 %v2065, 1.0
    %v2068 = vadd.f32 %v2066, 1.0
    %v2069 = vmul.f32 %v2053, %v2067
    %v2070 = vmul.f32 %v2054, %v2068
    %v2071 = vpack.c.bf16 %v2070, %v2069
    %v2073 = vlaneseq
    %v2074 = vshrl.u32 %v2073, 7
    %v2075 = vsub.s32 0, %v2074
    %v2076 = vrot.slane %v1942, %v2075
    %v2082 = vunpack.c.l.b16 %v1938
    %v2083 = vunpack.c.l.b16 %v1939
    %v2084 = vunpack.c.l.b16 %v1940
    %v2085 = vunpack.c.l.b16 %v1941
    %v2086 = vpack.c.b16 %v2083, %v2082
    %v2087 = vpack.c.b16 %v2085, %v2084
    %v2091 = vsel %vm390, %v2071, 0
    %2093 = vmatprep.subr.bf16.mxu0 0
    %2094 = vmatpush1.bf16.msra.mxu0 %v2086
    %2095 = vmatprep.subr.bf16.mxu0 0
    %2096 = vmatpush1.bf16.msra.mxu0 %v2087
    %2097 = vmatprep.subr.bf16.mxu0 0
    %2098 = vmatpush1.bf16.msra.mxu0 0
    %2099 = vmatprep.subr.bf16.mxu0 0
    %2100 = vmatpush1.bf16.msra.mxu0 0
    %2101 = vmatprep.subr.bf16.mxu0 0
    %2102 = vmatpush1.bf16.msra.mxu0 0
    %2103 = vmatprep.subr.bf16.mxu0 0
    %2104 = vmatpush1.bf16.msra.mxu0 0
    %2105 = vmatprep.subr.bf16.mxu0 0
    %2106 = vmatpush1.bf16.msra.mxu0 0
    %2107 = vmatprep.subr.bf16.mxu0 0
    %2108 = vmatpush1.bf16.msra.mxu0 0
    %2109 = vmatprep.subr.bf16.mxu0 0
    %2110 = vmatpush1.bf16.msra.mxu0 0
    %2111 = vmatprep.subr.bf16.mxu0 0
    %2112 = vmatpush1.bf16.msra.mxu0 0
    %2113 = vmatprep.subr.bf16.mxu0 0
    %2114 = vmatpush1.bf16.msra.mxu0 0
    %2115 = vmatprep.subr.bf16.mxu0 0
    %2116 = vmatpush1.bf16.msra.mxu0 0
    %2117 = vmatprep.subr.bf16.mxu0 0
    %2118 = vmatpush1.bf16.msra.mxu0 0
    %2119 = vmatprep.subr.bf16.mxu0 0
    %2120 = vmatpush1.bf16.msra.mxu0 0
    %2121 = vmatprep.subr.bf16.mxu0 0
    %2122 = vmatpush1.bf16.msra.mxu0 0
    %2123 = vmatprep.subr.bf16.mxu0 0
    %2124 = vmatpush1.bf16.msra.mxu0 0
    %2125 = vmatprep.mubr.bf16.mxu0 0
    %2126 = vmatmul.mubr.bf16.gmra.mrb[0].mxu0 %v2091
    %v2127 = vpop.f32.mrb[0].mxu0
    %v2128 = vadd.f32 %v2076, %v2127
    %v2129 = vpop.f32.mrb[0].mxu0
    %v2130 = vpop.f32.mrb[0].mxu0
    %v2131 = vadd.f32 %v2076, %v2130
    %v2132 = vpop.f32.mrb[0].mxu0
    %2133 = vdwg.mxu0
    %v2134 = vsel %vm390, %v2128, 0.0
    %2135 = vadd.xlane.f32.xlu0 %v2134
    %v2136 = vpop.xlane.xlu0 %2135
    %v2137 = vsel %vm390, %v2131, 0.0
    %2138 = vadd.xlane.f32.xlu0 %v2137
    %v2139 = vpop.xlane.xlu0 %2138
    %v2140 = vmul.f32 %v2136, %v1951
    %v2141 = vmul.f32 %v2139, %v1951
    %v2142 = vsub.f32 %v2128, %v2140
    %v2143 = vsub.f32 %v2131, %v2141
    %v2144 = vmul.f32 %v2142, %v2142
    %v2145 = vmul.f32 %v2143, %v2143
    %v2146 = vsel %vm390, %v2144, 0.0
    %2147 = vadd.xlane.f32.xlu0 %v2146
    %v2148 = vpop.xlane.xlu0 %2147
    %v2149 = vsel %vm390, %v2145, 0.0
    %2150 = vadd.xlane.f32.xlu0 %v2149
    %v2151 = vpop.xlane.xlu0 %2150
    %v2152 = vmul.f32 %v2148, %v1951
    %v2153 = vmul.f32 %v2151, %v1951
    %v2154 = vadd.f32 %v2152, 1e-05
    %v2155 = vadd.f32 %v2153, 1e-05
    %v2156 = vrsqrt.pop %v2154
    %v2157 = vrsqrt.pop %v2155
    %v2158 = vmul.f32 %v2142, %v2156
    %v2159 = vmul.f32 %v2143, %v2157
    %v2161 = vlaneseq
    %v2162 = vshrl.u32 %v2161, 7
    %v2163 = vsub.s32 0, %v2162
    %v2164 = vrot.slane %v1943, %v2163
    %v2166 = vmul.f32 %v2158, %v2164
    %v2167 = vmul.f32 %v2159, %v2164
    %v2169 = vlaneseq
    %v2170 = vshrl.u32 %v2169, 7
    %v2171 = vsub.s32 0, %v2170
    %v2172 = vrot.slane %v1944, %v2171
    %v2174 = vadd.f32 %v2166, %v2172
    %v2175 = vadd.f32 %v2167, %v2172
    %v2176 = vadd.f32 %v2174, %v1988
    %v2177 = vadd.f32 %v2175, %v1989
    %v2178 = vld [vmem:[#allocation19] sm:$0xf]
    %v2179 = vld [vmem:[#allocation19 + $0x4] sm:$0xf]
    %v2180 = vld [vmem:[#allocation19 + $0x8] sm:$0xf]
    %v2181 = vld [vmem:[#allocation19 + $0xc] sm:$0xf]
    %v2182 = vld [vmem:[%s37] sm:$0xff]
    %v2183 = vld [vmem:[%s37 + $0x8] sm:$0xff]
    %v2184 = vld [vmem:[%s37 + $0x10] sm:$0xff]
    %v2185 = vld [vmem:[%s37 + $0x18] sm:$0xff]
    %v2186 = vld [vmem:[%s37 + $0x20] sm:$0xff]
    %v2187 = vld [vmem:[%s37 + $0x28] sm:$0xff]
    %v2188 = vld [vmem:[%s37 + $0x30] sm:$0xff]
    %v2189 = vld [vmem:[%s37 + $0x38] sm:$0xff]
    %v2190 = vld [vmem:[%s37 + $0x40] sm:$0xff]
    %v2191 = vld [vmem:[%s37 + $0x48] sm:$0xff]
    %v2192 = vld [vmem:[%s37 + $0x50] sm:$0xff]
    %v2193 = vld [vmem:[%s37 + $0x58] sm:$0xff]
    %v2194 = vld [vmem:[%s39] sm:$0xf]
    %v2195 = vld [vmem:[%s39 + $0x4] sm:$0xf]
    %v2196 = vld [vmem:[%s39 + $0x8] sm:$0xf]
    %v2197 = vld [vmem:[%s39 + $0xc] sm:$0xf]
    %v2198 = vld [vmem:[#allocation20] sm:$0x1]
    %v2199 = vpack.c.bf16 %v2176, %v2176
    %2201 = vset.pattern.permute.xlu0 0
    %2202 = vperm.xlu0 %2201, %v2182
    %v2203 = vpop.permute.xlu0 %2202
    %2206 = vset.pattern.permute.xlu0 0
    %2207 = vperm.xlu0 %2206, %v2183
    %v2208 = vpop.permute.xlu0 %2207
    %2211 = vset.pattern.permute.xlu0 0
    %2212 = vperm.xlu0 %2211, %v2184
    %v2213 = vpop.permute.xlu0 %2212
    %2216 = vset.pattern.permute.xlu0 0
    %2217 = vperm.xlu0 %2216, %v2185
    %v2218 = vpop.permute.xlu0 %2217
    %2221 = vset.pattern.permute.xlu0 0
    %2222 = vperm.xlu0 %2221, %v2186
    %v2223 = vpop.permute.xlu0 %2222
    %2226 = vset.pattern.permute.xlu0 0
    %2227 = vperm.xlu0 %2226, %v2187
    %v2228 = vpop.permute.xlu0 %2227
    %2231 = vset.pattern.permute.xlu0 0
    %2232 = vperm.xlu0 %2231, %v2188
    %v2233 = vpop.permute.xlu0 %2232
    %2236 = vset.pattern.permute.xlu0 0
    %2237 = vperm.xlu0 %2236, %v2189
    %v2238 = vpop.permute.xlu0 %2237
    %2241 = vset.pattern.permute.xlu0 0
    %2242 = vperm.xlu0 %2241, %v2190
    %v2243 = vpop.permute.xlu0 %2242
    %2246 = vset.pattern.permute.xlu0 0
    %2247 = vperm.xlu0 %2246, %v2191
    %v2248 = vpop.permute.xlu0 %2247
    %2251 = vset.pattern.permute.xlu0 0
    %2252 = vperm.xlu0 %2251, %v2192
    %v2253 = vpop.permute.xlu0 %2252
    %2256 = vset.pattern.permute.xlu0 0
    %2257 = vperm.xlu0 %2256, %v2193
    %v2258 = vpop.permute.xlu0 %2257
    %v2264 = vunpack.c.l.b16 %v2178
    %v2265 = vunpack.c.l.b16 %v2179
    %v2266 = vunpack.c.l.b16 %v2180
    %v2267 = vunpack.c.l.b16 %v2181
    %v2268 = vpack.c.b16 %v2265, %v2264
    %v2269 = vpack.c.b16 %v2267, %v2266
    %2272 = vxpose.xlu0.c.b16.start [1/8] %v2268, 128
    %2273 = vxpose.xlu0.c.b16.cont [2/8] %v2269, 128
    %2274 = vxpose.xlu0.c.b16.cont [3/8] 0, 128
    %2275 = vxpose.xlu0.c.b16.cont [4/8] 0, 128
    %2276 = vxpose.xlu0.c.b16.cont [5/8] 0, 128
    %2277 = vxpose.xlu0.c.b16.cont [6/8] 0, 128
    %2278 = vxpose.xlu0.c.b16.cont [7/8] 0, 128
    %2279 = vxpose.xlu0.c.b16.end [8/8] 0, 128
    %v2280 = vpop.trf.xlu0
    %v2281 = vpop.trf.xlu0
    %v2282 = vpop.trf.xlu0
    %v2283 = vpop.trf.xlu0
    %v2284 = vpop.trf.xlu0
    %v2285 = vpop.trf.xlu0
    %v2286 = vpop.trf.xlu0
    %v2287 = vpop.trf.xlu0
    %v2289 = vsel %vm390, %v2280, 0
    %v2292 = vsel %vm390, %v2281, 0
    %v2295 = vsel %vm390, %v2282, 0
    %v2298 = vsel %vm390, %v2283, 0
    %v2301 = vsel %vm390, %v2284, 0
    %v2304 = vsel %vm390, %v2285, 0
    %v2307 = vsel %vm390, %v2199, 0
    %2309 = vmatprep.subr.bf16.mxu0 0
    %2310 = vmatpush1.bf16.xpose.msra.mxu0 %v2307
    %2311 = vmatprep.subr.bf16.mxu0 0
    %2312 = vmatpush1.bf16.xpose.msra.mxu0 0
    %2313 = vmatprep.subr.bf16.mxu0 0
    %2314 = vmatpush1.bf16.xpose.msra.mxu0 0
    %2315 = vmatprep.subr.bf16.mxu0 0
    %2316 = vmatpush1.bf16.xpose.msra.mxu0 0
    %2317 = vmatprep.subr.bf16.mxu0 0
    %2318 = vmatpush1.bf16.xpose.msra.mxu0 0
    %2319 = vmatprep.subr.bf16.mxu0 0
    %2320 = vmatpush1.bf16.xpose.msra.mxu0 0
    %2321 = vmatprep.subr.bf16.mxu0 0
    %2322 = vmatpush1.bf16.xpose.msra.mxu0 0
    %2323 = vmatprep.subr.bf16.mxu0 0
    %2324 = vmatpush1.bf16.xpose.msra.mxu0 0
    %2325 = vmatprep.subr.bf16.mxu0 0
    %2326 = vmatpush1.bf16.xpose.msra.mxu0 0
    %2327 = vmatprep.subr.bf16.mxu0 0
    %2328 = vmatpush1.bf16.xpose.msra.mxu0 0
    %2329 = vmatprep.subr.bf16.mxu0 0
    %2330 = vmatpush1.bf16.xpose.msra.mxu0 0
    %2331 = vmatprep.subr.bf16.mxu0 0
    %2332 = vmatpush1.bf16.xpose.msra.mxu0 0
    %2333 = vmatprep.subr.bf16.mxu0 0
    %2334 = vmatpush1.bf16.xpose.msra.mxu0 0
    %2335 = vmatprep.subr.bf16.mxu0 0
    %2336 = vmatpush1.bf16.xpose.msra.mxu0 0
    %2337 = vmatprep.subr.bf16.mxu0 0
    %2338 = vmatpush1.bf16.xpose.msra.mxu0 0
    %2339 = vmatprep.subr.bf16.mxu0 0
    %2340 = vmatpush1.bf16.xpose.msra.mxu0 0
    %2341 = vmatprep.mubr.bf16.mxu0 0
    %2342 = vmatmul.mubr.bf16.gmra.mrb[0].mxu0 %v2289
    %v2343 = vpop.f32.mrb[0].mxu0
    %v2344 = vadd.f32 %v2203, %v2343
    %v2345 = vpop.f32.mrb[0].mxu0
    %v2346 = vpop.f32.mrb[0].mxu0
    %v2347 = vadd.f32 %v2208, %v2346
    %v2348 = vpop.f32.mrb[0].mxu0
    %2349 = vmatprep.mubr.bf16.mxu0 0
    %2350 = vmatmul.mubr.bf16.gmra.mrb[0].mxu0 %v2292
    %v2351 = vpop.f32.mrb[0].mxu0
    %v2352 = vadd.f32 %v2213, %v2351
    %v2353 = vpop.f32.mrb[0].mxu0
    %v2354 = vpop.f32.mrb[0].mxu0
    %v2355 = vadd.f32 %v2218, %v2354
    %v2356 = vpop.f32.mrb[0].mxu0
    %2357 = vmatprep.mubr.bf16.mxu0 0
    %2358 = vmatmul.mubr.bf16.gmra.mrb[0].mxu0 %v2295
    %v2359 = vpop.f32.mrb[0].mxu0
    %v2360 = vadd.f32 %v2223, %v2359
    %v2361 = vpop.f32.mrb[0].mxu0
    %v2362 = vpop.f32.mrb[0].mxu0
    %v2363 = vadd.f32 %v2228, %v2362
    %v2364 = vpop.f32.mrb[0].mxu0
    %2365 = vmatprep.mubr.bf16.mxu0 0
    %2366 = vmatmul.mubr.bf16.gmra.mrb[0].mxu0 %v2298
    %v2367 = vpop.f32.mrb[0].mxu0
    %v2368 = vadd.f32 %v2233, %v2367
    %v2369 = vpop.f32.mrb[0].mxu0
    %v2370 = vpop.f32.mrb[0].mxu0
    %v2371 = vadd.f32 %v2238, %v2370
    %v2372 = vpop.f32.mrb[0].mxu0
    %2373 = vmatprep.mubr.bf16.mxu0 0
    %2374 = vmatmul.mubr.bf16.gmra.mrb[0].mxu0 %v2301
    %v2375 = vpop.f32.mrb[0].mxu0
    %v2376 = vadd.f32 %v2243, %v2375
    %v2377 = vpop.f32.mrb[0].mxu0
    %v2378 = vpop.f32.mrb[0].mxu0
    %v2379 = vadd.f32 %v2248, %v2378
    %v2380 = vpop.f32.mrb[0].mxu0
    %2381 = vmatprep.mubr.bf16.mxu0 0
    %2382 = vmatmul.mubr.bf16.gmra.mrb[0].mxu0 %v2304
    %v2383 = vpop.f32.mrb[0].mxu0
    %v2384 = vadd.f32 %v2253, %v2383
    %v2385 = vpop.f32.mrb[0].mxu0
    %v2386 = vpop.f32.mrb[0].mxu0
    %v2387 = vadd.f32 %v2258, %v2386
    %v2388 = vpop.f32.mrb[0].mxu0
    %2389 = vdwg.mxu0
    %v2390 = vpack.c.bf16 %v2344, %v2344
    %v2391 = vpack.c.bf16 %v2360, %v2360
    %2392 = vxpose.xlu0.c.b16.start [1/8] %v2390, 128
    %2393 = vxpose.xlu0.c.b16.cont [2/8] 0, 128
    %2394 = vxpose.xlu0.c.b16.cont [3/8] 0, 128
    %2395 = vxpose.xlu0.c.b16.cont [4/8] 0, 128
    %2396 = vxpose.xlu0.c.b16.cont [5/8] 0, 128
    %2397 = vxpose.xlu0.c.b16.cont [6/8] 0, 128
    %2398 = vxpose.xlu0.c.b16.cont [7/8] 0, 128
    %2399 = vxpose.xlu0.c.b16.end [8/8] 0, 128
    %v2400 = vpop.trf.xlu0
    %v2401 = vpop.trf.xlu0
    %v2402 = vpop.trf.xlu0
    %v2403 = vpop.trf.xlu0
    %v2404 = vpop.trf.xlu0
    %v2405 = vpop.trf.xlu0
    %v2406 = vpop.trf.xlu0
    %v2407 = vpop.trf.xlu0
    %v2409 = vsel %vm628, %v2400, 0
    %v2412 = vsel %vm632, %v2391, 0
    %2414 = vmatprep.subr.bf16.mxu0 0
    %2415 = vmatpush1.bf16.msra.mxu0 %v2412
    %2416 = vmatprep.subr.bf16.mxu0 0
    %2417 = vmatpush1.bf16.msra.mxu0 0
    %2418 = vmatprep.subr.bf16.mxu0 0
    %2419 = vmatpush1.bf16.msra.mxu0 0
    %2420 = vmatprep.subr.bf16.mxu0 0
    %2421 = vmatpush1.bf16.msra.mxu0 0
    %2422 = vmatprep.subr.bf16.mxu0 0
    %2423 = vmatpush1.bf16.msra.mxu0 0
    %2424 = vmatprep.subr.bf16.mxu0 0
    %2425 = vmatpush1.bf16.msra.mxu0 0
    %2426 = vmatprep.subr.bf16.mxu0 0
    %2427 = vmatpush1.bf16.msra.mxu0 0
    %2428 = vmatprep.subr.bf16.mxu0 0
    %2429 = vmatpush1.bf16.msra.mxu0 0
    %2430 = vmatprep.subr.bf16.mxu0 0
    %2431 = vmatpush1.bf16.msra.mxu0 0
    %2432 = vmatprep.subr.bf16.mxu0 0
    %2433 = vmatpush1.bf16.msra.mxu0 0
    %2434 = vmatprep.subr.bf16.mxu0 0
    %2435 = vmatpush1.bf16.msra.mxu0 0
    %2436 = vmatprep.subr.bf16.mxu0 0
    %2437 = vmatpush1.bf16.msra.mxu0 0
    %2438 = vmatprep.subr.bf16.mxu0 0
    %2439 = vmatpush1.bf16.msra.mxu0 0
    %2440 = vmatprep.subr.bf16.mxu0 0
    %2441 = vmatpush1.bf16.msra.mxu0 0
    %2442 = vmatprep.subr.bf16.mxu0 0
    %2443 = vmatpush1.bf16.msra.mxu0 0
    %2444 = vmatprep.subr.bf16.mxu0 0
    %2445 = vmatpush1.bf16.msra.mxu0 0
    %2446 = vmatprep.mubr.bf16.mxu0 0
    %2447 = vmatmul.mubr.bf16.gmra.mrb[0].mxu0 %v2409
    %v2448 = vpop.f32.mrb[0].mxu0
    %v2449 = vadd.f32 0.0, %v2448
    %v2450 = vpop.f32.mrb[0].mxu0
    %v2451 = vpop.f32.mrb[0].mxu0
    %v2452 = vpop.f32.mrb[0].mxu0
    %2453 = vdwg.mxu0
    %v2454 = vmul.f32 %v2449, 0.35355338
    %v2455 = vsel %vm628, %v2454, -inf
    %2456 = vmax.xlane.f32.xlu0 %v2455
    %v2457 = vpop.xlane.xlu0 %2456
    %v2458 = vsub.f32 %v2454, %v2457
    %v2459 = vmul.f32 %v2458, 1.442695
    %v2460 = vpow.pop %v2459
    %v2461 = vsel %vm628, %v2460, 0.0
    %2462 = vadd.xlane.f32.xlu0 %v2461
    %v2463 = vpop.xlane.xlu0 %2462
    %v2464 = vrcp.pop %v2463
    %v2465 = vmul.f32 %v2460, %v2464
    %v2466 = vpack.c.bf16 %v2376, %v2376
    %v2467 = vpack.c.bf16 %v2465, %v2465
    %v2469 = vsel %vm628, %v2466, 0
    %v2472 = vsel %vm628, %v2467, 0
    %2474 = vmatprep.subr.bf16.mxu0 0
    %2475 = vmatpush1.bf16.xpose.msra.mxu0 %v2472
    %2476 = vmatprep.subr.bf16.mxu0 0
    %2477 = vmatpush1.bf16.xpose.msra.mxu0 0
    %2478 = vmatprep.subr.bf16.mxu0 0
    %2479 = vmatpush1.bf16.xpose.msra.mxu0 0
    %2480 = vmatprep.subr.bf16.mxu0 0
    %2481 = vmatpush1.bf16.xpose.msra.mxu0 0
    %2482 = vmatprep.subr.bf16.mxu0 0
    %2483 = vmatpush1.bf16.xpose.msra.mxu0 0
    %2484 = vmatprep.subr.bf16.mxu0 0
    %2485 = vmatpush1.bf16.xpose.msra.mxu0 0
    %2486 = vmatprep.subr.bf16.mxu0 0
    %2487 = vmatpush1.bf16.xpose.msra.mxu0 0
    %2488 = vmatprep.subr.bf16.mxu0 0
    %2489 = vmatpush1.bf16.xpose.msra.mxu0 0
    %2490 = vmatprep.subr.bf16.mxu0 0
    %2491 = vmatpush1.bf16.xpose.msra.mxu0 0
    %2492 = vmatprep.subr.bf16.mxu0 0
    %2493 = vmatpush1.bf16.xpose.msra.mxu0 0
    %2494 = vmatprep.subr.bf16.mxu0 0
    %2495 = vmatpush1.bf16.xpose.msra.mxu0 0
    %2496 = vmatprep.subr.bf16.mxu0 0
    %2497 = vmatpush1.bf16.xpose.msra.mxu0 0
    %2498 = vmatprep.subr.bf16.mxu0 0
    %2499 = vmatpush1.bf16.xpose.msra.mxu0 0
    %2500 = vmatprep.subr.bf16.mxu0 0
    %2501 = vmatpush1.bf16.xpose.msra.mxu0 0
    %2502 = vmatprep.subr.bf16.mxu0 0
    %2503 = vmatpush1.bf16.xpose.msra.mxu0 0
    %2504 = vmatprep.subr.bf16.mxu0 0
    %2505 = vmatpush1.bf16.xpose.msra.mxu0 0
    %2506 = vmatprep.mubr.bf16.mxu0 0
    %2507 = vmatmul.mubr.bf16.gmra.mrb[0].mxu0 %v2469
    %v2508 = vpop.f32.mrb[0].mxu0
    %v2509 = vadd.f32 0.0, %v2508
    %v2510 = vpop.f32.mrb[0].mxu0
    %v2511 = vpop.f32.mrb[0].mxu0
    %v2512 = vpop.f32.mrb[0].mxu0
    %2513 = vdwg.mxu0
    %v2514 = vpack.c.bf16 %v2347, %v2347
    %v2515 = vpack.c.bf16 %v2363, %v2363
    %2516 = vxpose.xlu0.c.b16.start [1/8] %v2514, 128
    %2517 = vxpose.xlu0.c.b16.cont [2/8] 0, 128
    %2518 = vxpose.xlu0.c.b16.cont [3/8] 0, 128
    %2519 = vxpose.xlu0.c.b16.cont [4/8] 0, 128
    %2520 = vxpose.xlu0.c.b16.cont [5/8] 0, 128
    %2521 = vxpose.xlu0.c.b16.cont [6/8] 0, 128
    %2522 = vxpose.xlu0.c.b16.cont [7/8] 0, 128
    %2523 = vxpose.xlu0.c.b16.end [8/8] 0, 128
    %v2524 = vpop.trf.xlu0
    %v2525 = vpop.trf.xlu0
    %v2526 = vpop.trf.xlu0
    %v2527 = vpop.trf.xlu0
    %v2528 = vpop.trf.xlu0
    %v2529 = vpop.trf.xlu0
    %v2530 = vpop.trf.xlu0
    %v2531 = vpop.trf.xlu0
    %v2533 = vsel %vm628, %v2524, 0
    %v2536 = vsel %vm632, %v2515, 0
    %2538 = vmatprep.subr.bf16.mxu0 0
    %2539 = vmatpush1.bf16.msra.mxu0 %v2536
    %2540 = vmatprep.subr.bf16.mxu0 0
    %2541 = vmatpush1.bf16.msra.mxu0 0
    %2542 = vmatprep.subr.bf16.mxu0 0
    %2543 = vmatpush1.bf16.msra.mxu0 0
    %2544 = vmatprep.subr.bf16.mxu0 0
    %2545 = vmatpush1.bf16.msra.mxu0 0
    %2546 = vmatprep.subr.bf16.mxu0 0
    %2547 = vmatpush1.bf16.msra.mxu0 0
    %2548 = vmatprep.subr.bf16.mxu0 0
    %2549 = vmatpush1.bf16.msra.mxu0 0
    %2550 = vmatprep.subr.bf16.mxu0 0
    %2551 = vmatpush1.bf16.msra.mxu0 0
    %2552 = vmatprep.subr.bf16.mxu0 0
    %2553 = vmatpush1.bf16.msra.mxu0 0
    %2554 = vmatprep.subr.bf16.mxu0 0
    %2555 = vmatpush1.bf16.msra.mxu0 0
    %2556 = vmatprep.subr.bf16.mxu0 0
    %2557 = vmatpush1.bf16.msra.mxu0 0
    %2558 = vmatprep.subr.bf16.mxu0 0
    %2559 = vmatpush1.bf16.msra.mxu0 0
    %2560 = vmatprep.subr.bf16.mxu0 0
    %2561 = vmatpush1.bf16.msra.mxu0 0
    %2562 = vmatprep.subr.bf16.mxu0 0
    %2563 = vmatpush1.bf16.msra.mxu0 0
    %2564 = vmatprep.subr.bf16.mxu0 0
    %2565 = vmatpush1.bf16.msra.mxu0 0
    %2566 = vmatprep.subr.bf16.mxu0 0
    %2567 = vmatpush1.bf16.msra.mxu0 0
    %2568 = vmatprep.subr.bf16.mxu0 0
    %2569 = vmatpush1.bf16.msra.mxu0 0
    %2570 = vmatprep.mubr.bf16.mxu0 0
    %2571 = vmatmul.mubr.bf16.gmra.mrb[0].mxu0 %v2533
    %v2572 = vpop.f32.mrb[0].mxu0
    %v2573 = vadd.f32 0.0, %v2572
    %v2574 = vpop.f32.mrb[0].mxu0
    %v2575 = vpop.f32.mrb[0].mxu0
    %v2576 = vpop.f32.mrb[0].mxu0
    %2577 = vdwg.mxu0
    %v2578 = vmul.f32 %v2573, 0.35355338
    %v2579 = vsel %vm628, %v2578, -inf
    %2580 = vmax.xlane.f32.xlu0 %v2579
    %v2581 = vpop.xlane.xlu0 %2580
    %v2582 = vsub.f32 %v2578, %v2581
    %v2583 = vmul.f32 %v2582, 1.442695
    %v2584 = vpow.pop %v2583
    %v2585 = vsel %vm628, %v2584, 0.0
    %2586 = vadd.xlane.f32.xlu0 %v2585
    %v2587 = vpop.xlane.xlu0 %2586
    %v2588 = vrcp.pop %v2587
    %v2589 = vmul.f32 %v2584, %v2588
    %v2590 = vpack.c.bf16 %v2379, %v2379
    %v2591 = vpack.c.bf16 %v2589, %v2589
    %v2593 = vsel %vm628, %v2590, 0
    %v2596 = vsel %vm628, %v2591, 0
    %2598 = vmatprep.subr.bf16.mxu0 0
    %2599 = vmatpush1.bf16.xpose.msra.mxu0 %v2596
    %2600 = vmatprep.subr.bf16.mxu0 0
    %2601 = vmatpush1.bf16.xpose.msra.mxu0 0
    %2602 = vmatprep.subr.bf16.mxu0 0
    %2603 = vmatpush1.bf16.xpose.msra.mxu0 0
    %2604 = vmatprep.subr.bf16.mxu0 0
    %2605 = vmatpush1.bf16.xpose.msra.mxu0 0
    %2606 = vmatprep.subr.bf16.mxu0 0
    %2607 = vmatpush1.bf16.xpose.msra.mxu0 0
    %2608 = vmatprep.subr.bf16.mxu0 0
    %2609 = vmatpush1.bf16.xpose.msra.mxu0 0
    %2610 = vmatprep.subr.bf16.mxu0 0
    %2611 = vmatpush1.bf16.xpose.msra.mxu0 0
    %2612 = vmatprep.subr.bf16.mxu0 0
    %2613 = vmatpush1.bf16.xpose.msra.mxu0 0
    %2614 = vmatprep.subr.bf16.mxu0 0
    %2615 = vmatpush1.bf16.xpose.msra.mxu0 0
    %2616 = vmatprep.subr.bf16.mxu0 0
    %2617 = vmatpush1.bf16.xpose.msra.mxu0 0
    %2618 = vmatprep.subr.bf16.mxu0 0
    %2619 = vmatpush1.bf16.xpose.msra.mxu0 0
    %2620 = vmatprep.subr.bf16.mxu0 0
    %2621 = vmatpush1.bf16.xpose.msra.mxu0 0
    %2622 = vmatprep.subr.bf16.mxu0 0
    %2623 = vmatpush1.bf16.xpose.msra.mxu0 0
    %2624 = vmatprep.subr.bf16.mxu0 0
    %2625 = vmatpush1.bf16.xpose.msra.mxu0 0
    %2626 = vmatprep.subr.bf16.mxu0 0
    %2627 = vmatpush1.bf16.xpose.msra.mxu0 0
    %2628 = vmatprep.subr.bf16.mxu0 0
    %2629 = vmatpush1.bf16.xpose.msra.mxu0 0
    %2630 = vmatprep.mubr.bf16.mxu0 0
    %2631 = vmatmul.mubr.bf16.gmra.mrb[0].mxu0 %v2593
    %v2632 = vpop.f32.mrb[0].mxu0
    %v2633 = vadd.f32 0.0, %v2632
    %v2634 = vpop.f32.mrb[0].mxu0
    %v2635 = vpop.f32.mrb[0].mxu0
    %v2636 = vpop.f32.mrb[0].mxu0
    %2637 = vdwg.mxu0
    %v2638 = vpack.c.bf16 %v2352, %v2352
    %v2639 = vpack.c.bf16 %v2368, %v2368
    %2640 = vxpose.xlu0.c.b16.start [1/8] %v2638, 128
    %2641 = vxpose.xlu0.c.b16.cont [2/8] 0, 128
    %2642 = vxpose.xlu0.c.b16.cont [3/8] 0, 128
    %2643 = vxpose.xlu0.c.b16.cont [4/8] 0, 128
    %2644 = vxpose.xlu0.c.b16.cont [5/8] 0, 128
    %2645 = vxpose.xlu0.c.b16.cont [6/8] 0, 128
    %2646 = vxpose.xlu0.c.b16.cont [7/8] 0, 128
    %2647 = vxpose.xlu0.c.b16.end [8/8] 0, 128
    %v2648 = vpop.trf.xlu0
    %v2649 = vpop.trf.xlu0
    %v2650 = vpop.trf.xlu0
    %v2651 = vpop.trf.xlu0
    %v2652 = vpop.trf.xlu0
    %v2653 = vpop.trf.xlu0
    %v2654 = vpop.trf.xlu0
    %v2655 = vpop.trf.xlu0
    %v2657 = vsel %vm628, %v2648, 0
    %v2660 = vsel %vm632, %v2639, 0
    %2662 = vmatprep.subr.bf16.mxu0 0
    %2663 = vmatpush1.bf16.msra.mxu0 %v2660
    %2664 = vmatprep.subr.bf16.mxu0 0
    %2665 = vmatpush1.bf16.msra.mxu0 0
    %2666 = vmatprep.subr.bf16.mxu0 0
    %2667 = vmatpush1.bf16.msra.mxu0 0
    %2668 = vmatprep.subr.bf16.mxu0 0
    %2669 = vmatpush1.bf16.msra.mxu0 0
    %2670 = vmatprep.subr.bf16.mxu0 0
    %2671 = vmatpush1.bf16.msra.mxu0 0
    %2672 = vmatprep.subr.bf16.mxu0 0
    %2673 = vmatpush1.bf16.msra.mxu0 0
    %2674 = vmatprep.subr.bf16.mxu0 0
    %2675 = vmatpush1.bf16.msra.mxu0 0
    %2676 = vmatprep.subr.bf16.mxu0 0
    %2677 = vmatpush1.bf16.msra.mxu0 0
    %2678 = vmatprep.subr.bf16.mxu0 0
    %2679 = vmatpush1.bf16.msra.mxu0 0
    %2680 = vmatprep.subr.bf16.mxu0 0
    %2681 = vmatpush1.bf16.msra.mxu0 0
    %2682 = vmatprep.subr.bf16.mxu0 0
    %2683 = vmatpush1.bf16.msra.mxu0 0
    %2684 = vmatprep.subr.bf16.mxu0 0
    %2685 = vmatpush1.bf16.msra.mxu0 0
    %2686 = vmatprep.subr.bf16.mxu0 0
    %2687 = vmatpush1.bf16.msra.mxu0 0
    %2688 = vmatprep.subr.bf16.mxu0 0
    %2689 = vmatpush1.bf16.msra.mxu0 0
    %2690 = vmatprep.subr.bf16.mxu0 0
    %2691 = vmatpush1.bf16.msra.mxu0 0
    %2692 = vmatprep.subr.bf16.mxu0 0
    %2693 = vmatpush1.bf16.msra.mxu0 0
    %2694 = vmatprep.mubr.bf16.mxu0 0
    %2695 = vmatmul.mubr.bf16.gmra.mrb[0].mxu0 %v2657
    %v2696 = vpop.f32.mrb[0].mxu0
    %v2697 = vadd.f32 0.0, %v2696
    %v2698 = vpop.f32.mrb[0].mxu0
    %v2699 = vpop.f32.mrb[0].mxu0
    %v2700 = vpop.f32.mrb[0].mxu0
    %2701 = vdwg.mxu0
    %v2702 = vmul.f32 %v2697, 0.35355338
    %v2703 = vsel %vm628, %v2702, -inf
    %2704 = vmax.xlane.f32.xlu0 %v2703
    %v2705 = vpop.xlane.xlu0 %2704
    %v2706 = vsub.f32 %v2702, %v2705
    %v2707 = vmul.f32 %v2706, 1.442695
    %v2708 = vpow.pop %v2707
    %v2709 = vsel %vm628, %v2708, 0.0
    %2710 = vadd.xlane.f32.xlu0 %v2709
    %v2711 = vpop.xlane.xlu0 %2710
    %v2712 = vrcp.pop %v2711
    %v2713 = vmul.f32 %v2708, %v2712
    %v2714 = vpack.c.bf16 %v2384, %v2384
    %v2715 = vpack.c.bf16 %v2713, %v2713
    %v2717 = vsel %vm628, %v2714, 0
    %v2720 = vsel %vm628, %v2715, 0
    %2722 = vmatprep.subr.bf16.mxu0 0
    %2723 = vmatpush1.bf16.xpose.msra.mxu0 %v2720
    %2724 = vmatprep.subr.bf16.mxu0 0
    %2725 = vmatpush1.bf16.xpose.msra.mxu0 0
    %2726 = vmatprep.subr.bf16.mxu0 0
    %2727 = vmatpush1.bf16.xpose.msra.mxu0 0
    %2728 = vmatprep.subr.bf16.mxu0 0
    %2729 = vmatpush1.bf16.xpose.msra.mxu0 0
    %2730 = vmatprep.subr.bf16.mxu0 0
    %2731 = vmatpush1.bf16.xpose.msra.mxu0 0
    %2732 = vmatprep.subr.bf16.mxu0 0
    %2733 = vmatpush1.bf16.xpose.msra.mxu0 0
    %2734 = vmatprep.subr.bf16.mxu0 0
    %2735 = vmatpush1.bf16.xpose.msra.mxu0 0
    %2736 = vmatprep.subr.bf16.mxu0 0
    %2737 = vmatpush1.bf16.xpose.msra.mxu0 0
    %2738 = vmatprep.subr.bf16.mxu0 0
    %2739 = vmatpush1.bf16.xpose.msra.mxu0 0
    %2740 = vmatprep.subr.bf16.mxu0 0
    %2741 = vmatpush1.bf16.xpose.msra.mxu0 0
    %2742 = vmatprep.subr.bf16.mxu0 0
    %2743 = vmatpush1.bf16.xpose.msra.mxu0 0
    %2744 = vmatprep.subr.bf16.mxu0 0
    %2745 = vmatpush1.bf16.xpose.msra.mxu0 0
    %2746 = vmatprep.subr.bf16.mxu0 0
    %2747 = vmatpush1.bf16.xpose.msra.mxu0 0
    %2748 = vmatprep.subr.bf16.mxu0 0
    %2749 = vmatpush1.bf16.xpose.msra.mxu0 0
    %2750 = vmatprep.subr.bf16.mxu0 0
    %2751 = vmatpush1.bf16.xpose.msra.mxu0 0
    %2752 = vmatprep.subr.bf16.mxu0 0
    %2753 = vmatpush1.bf16.xpose.msra.mxu0 0
    %2754 = vmatprep.mubr.bf16.mxu0 0
    %2755 = vmatmul.mubr.bf16.gmra.mrb[0].mxu0 %v2717
    %v2756 = vpop.f32.mrb[0].mxu0
    %v2757 = vadd.f32 0.0, %v2756
    %v2758 = vpop.f32.mrb[0].mxu0
    %v2759 = vpop.f32.mrb[0].mxu0
    %v2760 = vpop.f32.mrb[0].mxu0
    %2761 = vdwg.mxu0
    %v2762 = vpack.c.bf16 %v2355, %v2355
    %v2763 = vpack.c.bf16 %v2371, %v2371
    %2764 = vxpose.xlu0.c.b16.start [1/8] %v2762, 128
    %2765 = vxpose.xlu0.c.b16.cont [2/8] 0, 128
    %2766 = vxpose.xlu0.c.b16.cont [3/8] 0, 128
    %2767 = vxpose.xlu0.c.b16.cont [4/8] 0, 128
    %2768 = vxpose.xlu0.c.b16.cont [5/8] 0, 128
    %2769 = vxpose.xlu0.c.b16.cont [6/8] 0, 128
    %2770 = vxpose.xlu0.c.b16.cont [7/8] 0, 128
    %2771 = vxpose.xlu0.c.b16.end [8/8] 0, 128
    %v2772 = vpop.trf.xlu0
    %v2773 = vpop.trf.xlu0
    %v2774 = vpop.trf.xlu0
    %v2775 = vpop.trf.xlu0
    %v2776 = vpop.trf.xlu0
    %v2777 = vpop.trf.xlu0
    %v2778 = vpop.trf.xlu0
    %v2779 = vpop.trf.xlu0
    %v2781 = vsel %vm628, %v2772, 0
    %v2784 = vsel %vm632, %v2763, 0
    %2786 = vmatprep.subr.bf16.mxu0 0
    %2787 = vmatpush1.bf16.msra.mxu0 %v2784
    %2788 = vmatprep.subr.bf16.mxu0 0
    %2789 = vmatpush1.bf16.msra.mxu0 0
    %2790 = vmatprep.subr.bf16.mxu0 0
    %2791 = vmatpush1.bf16.msra.mxu0 0
    %2792 = vmatprep.subr.bf16.mxu0 0
    %2793 = vmatpush1.bf16.msra.mxu0 0
    %2794 = vmatprep.subr.bf16.mxu0 0
    %2795 = vmatpush1.bf16.msra.mxu0 0
    %2796 = vmatprep.subr.bf16.mxu0 0
    %2797 = vmatpush1.bf16.msra.mxu0 0
    %2798 = vmatprep.subr.bf16.mxu0 0
    %2799 = vmatpush1.bf16.msra.mxu0 0
    %2800 = vmatprep.subr.bf16.mxu0 0
    %2801 = vmatpush1.bf16.msra.mxu0 0
    %2802 = vmatprep.subr.bf16.mxu0 0
    %2803 = vmatpush1.bf16.msra.mxu0 0
    %2804 = vmatprep.subr.bf16.mxu0 0
    %2805 = vmatpush1.bf16.msra.mxu0 0
    %2806 = vmatprep.subr.bf16.mxu0 0
    %2807 = vmatpush1.bf16.msra.mxu0 0
    %2808 = vmatprep.subr.bf16.mxu0 0
    %2809 = vmatpush1.bf16.msra.mxu0 0
    %2810 = vmatprep.subr.bf16.mxu0 0
    %2811 = vmatpush1.bf16.msra.mxu0 0
    %2812 = vmatprep.subr.bf16.mxu0 0
    %2813 = vmatpush1.bf16.msra.mxu0 0
    %2814 = vmatprep.subr.bf16.mxu0 0
    %2815 = vmatpush1.bf16.msra.mxu0 0
    %2816 = vmatprep.subr.bf16.mxu0 0
    %2817 = vmatpush1.bf16.msra.mxu0 0
    %2818 = vmatprep.mubr.bf16.mxu0 0
    %2819 = vmatmul.mubr.bf16.gmra.mrb[0].mxu0 %v2781
    %v2820 = vpop.f32.mrb[0].mxu0
    %v2821 = vadd.f32 0.0, %v2820
    %v2822 = vpop.f32.mrb[0].mxu0
    %v2823 = vpop.f32.mrb[0].mxu0
    %v2824 = vpop.f32.mrb[0].mxu0
    %2825 = vdwg.mxu0
    %v2826 = vmul.f32 %v2821, 0.35355338
    %v2827 = vsel %vm628, %v2826, -inf
    %2828 = vmax.xlane.f32.xlu0 %v2827
    %v2829 = vpop.xlane.xlu0 %2828
    %v2830 = vsub.f32 %v2826, %v2829
    %v2831 = vmul.f32 %v2830, 1.442695
    %v2832 = vpow.pop %v2831
    %v2833 = vsel %vm628, %v2832, 0.0
    %2834 = vadd.xlane.f32.xlu0 %v2833
    %v2835 = vpop.xlane.xlu0 %2834
    %v2836 = vrcp.pop %v2835
    %v2837 = vmul.f32 %v2832, %v2836
    %v2838 = vpack.c.bf16 %v2387, %v2387
    %v2839 = vpack.c.bf16 %v2837, %v2837
    %v2841 = vsel %vm628, %v2838, 0
    %v2844 = vsel %vm628, %v2839, 0
    %2846 = vmatprep.subr.bf16.mxu0 0
    %2847 = vmatpush1.bf16.xpose.msra.mxu0 %v2844
    %2848 = vmatprep.subr.bf16.mxu0 0
    %2849 = vmatpush1.bf16.xpose.msra.mxu0 0
    %2850 = vmatprep.subr.bf16.mxu0 0
    %2851 = vmatpush1.bf16.xpose.msra.mxu0 0
    %2852 = vmatprep.subr.bf16.mxu0 0
    %2853 = vmatpush1.bf16.xpose.msra.mxu0 0
    %2854 = vmatprep.subr.bf16.mxu0 0
    %2855 = vmatpush1.bf16.xpose.msra.mxu0 0
    %2856 = vmatprep.subr.bf16.mxu0 0
    %2857 = vmatpush1.bf16.xpose.msra.mxu0 0
    %2858 = vmatprep.subr.bf16.mxu0 0
    %2859 = vmatpush1.bf16.xpose.msra.mxu0 0
    %2860 = vmatprep.subr.bf16.mxu0 0
    %2861 = vmatpush1.bf16.xpose.msra.mxu0 0
    %2862 = vmatprep.subr.bf16.mxu0 0
    %2863 = vmatpush1.bf16.xpose.msra.mxu0 0
    %2864 = vmatprep.subr.bf16.mxu0 0
    %2865 = vmatpush1.bf16.xpose.msra.mxu0 0
    %2866 = vmatprep.subr.bf16.mxu0 0
    %2867 = vmatpush1.bf16.xpose.msra.mxu0 0
    %2868 = vmatprep.subr.bf16.mxu0 0
    %2869 = vmatpush1.bf16.xpose.msra.mxu0 0
    %2870 = vmatprep.subr.bf16.mxu0 0
    %2871 = vmatpush1.bf16.xpose.msra.mxu0 0
    %2872 = vmatprep.subr.bf16.mxu0 0
    %2873 = vmatpush1.bf16.xpose.msra.mxu0 0
    %2874 = vmatprep.subr.bf16.mxu0 0
    %2875 = vmatpush1.bf16.xpose.msra.mxu0 0
    %2876 = vmatprep.subr.bf16.mxu0 0
    %2877 = vmatpush1.bf16.xpose.msra.mxu0 0
    %2878 = vmatprep.mubr.bf16.mxu0 0
    %2879 = vmatmul.mubr.bf16.gmra.mrb[0].mxu0 %v2841
    %v2880 = vpop.f32.mrb[0].mxu0
    %v2881 = vadd.f32 0.0, %v2880
    %v2882 = vpop.f32.mrb[0].mxu0
    %v2883 = vpop.f32.mrb[0].mxu0
    %v2884 = vpop.f32.mrb[0].mxu0
    %2885 = vdwg.mxu0
    %v2886 = vpack.c.bf16 %v2633, %v2509
    %v2887 = vpack.c.bf16 %v2881, %v2757
    %v2889 = vlaneseq
    %v2890 = vshrl.u32 %v2889, 7
    %v2891 = vsub.s32 0, %v2890
    %v2892 = vrot.slane %v2198, %v2891
    %2894 = vxpose.xlu0.c.b16.start [1/8] %v2886, 128
    %2895 = vxpose.xlu0.c.b16.cont [2/8] %v2887, 128
    %2896 = vxpose.xlu0.c.b16.cont [3/8] 0, 128
    %2897 = vxpose.xlu0.c.b16.cont [4/8] 0, 128
    %2898 = vxpose.xlu0.c.b16.cont [5/8] 0, 128
    %2899 = vxpose.xlu0.c.b16.cont [6/8] 0, 128
    %2900 = vxpose.xlu0.c.b16.cont [7/8] 0, 128
    %2901 = vxpose.xlu0.c.b16.end [8/8] 0, 128
    %v2902 = vpop.trf.xlu0
    %v2903 = vpop.trf.xlu0
    %v2904 = vpop.trf.xlu0
    %v2905 = vpop.trf.xlu0
    %v2906 = vpop.trf.xlu0
    %v2907 = vpop.trf.xlu0
    %v2908 = vpop.trf.xlu0
    %v2909 = vpop.trf.xlu0
    %v2914 = vunpack.c.l.b16 %v2194
    %v2915 = vunpack.c.l.b16 %v2195
    %v2916 = vunpack.c.l.b16 %v2196
    %v2917 = vunpack.c.l.b16 %v2197
    %v2918 = vpack.c.b16 %v2915, %v2914
    %v2919 = vpack.c.b16 %v2917, %v2916
    %v2923 = vsel %vm390, %v2902, 0
    %2925 = vmatprep.subr.bf16.mxu0 0
    %2926 = vmatpush1.bf16.msra.mxu0 %v2918
    %2927 = vmatprep.subr.bf16.mxu0 0
    %2928 = vmatpush1.bf16.msra.mxu0 %v2919
    %2929 = vmatprep.subr.bf16.mxu0 0
    %2930 = vmatpush1.bf16.msra.mxu0 0
    %2931 = vmatprep.subr.bf16.mxu0 0
    %2932 = vmatpush1.bf16.msra.mxu0 0
    %2933 = vmatprep.subr.bf16.mxu0 0
    %2934 = vmatpush1.bf16.msra.mxu0 0
    %2935 = vmatprep.subr.bf16.mxu0 0
    %2936 = vmatpush1.bf16.msra.mxu0 0
    %2937 = vmatprep.subr.bf16.mxu0 0
    %2938 = vmatpush1.bf16.msra.mxu0 0
    %2939 = vmatprep.subr.bf16.mxu0 0
    %2940 = vmatpush1.bf16.msra.mxu0 0
    %2941 = vmatprep.subr.bf16.mxu0 0
    %2942 = vmatpush1.bf16.msra.mxu0 0
    %2943 = vmatprep.subr.bf16.mxu0 0
    %2944 = vmatpush1.bf16.msra.mxu0 0
    %2945 = vmatprep.subr.bf16.mxu0 0
    %2946 = vmatpush1.bf16.msra.mxu0 0
    %2947 = vmatprep.subr.bf16.mxu0 0
    %2948 = vmatpush1.bf16.msra.mxu0 0
    %2949 = vmatprep.subr.bf16.mxu0 0
    %2950 = vmatpush1.bf16.msra.mxu0 0
    %2951 = vmatprep.subr.bf16.mxu0 0
    %2952 = vmatpush1.bf16.msra.mxu0 0
    %2953 = vmatprep.subr.bf16.mxu0 0
    %2954 = vmatpush1.bf16.msra.mxu0 0
    %2955 = vmatprep.subr.bf16.mxu0 0
    %2956 = vmatpush1.bf16.msra.mxu0 0
    %2957 = vmatprep.mubr.bf16.mxu0 0
    %2958 = vmatmul.mubr.bf16.gmra.mrb[0].mxu0 %v2923
    %v2959 = vpop.f32.mrb[0].mxu0
    %v2960 = vadd.f32 %v2892, %v2959
    %v2961 = vpop.f32.mrb[0].mxu0
    %v2962 = vpop.f32.mrb[0].mxu0
    %v2963 = vpop.f32.mrb[0].mxu0
    %2964 = vdwg.mxu0
    %v2965 = vpack.c.bf16 %v2177, %v2177
    %v2967 = vsel %vm390, %v2965, 0
    %2969 = vmatprep.subr.bf16.mxu0 0
    %2970 = vmatpush1.bf16.xpose.msra.mxu0 %v2967
    %2971 = vmatprep.subr.bf16.mxu0 0
    %2972 = vmatpush1.bf16.xpose.msra.mxu0 0
    %2973 = vmatprep.subr.bf16.mxu0 0
    %2974 = vmatpush1.bf16.xpose.msra.mxu0 0
    %2975 = vmatprep.subr.bf16.mxu0 0
    %2976 = vmatpush1.bf16.xpose.msra.mxu0 0
    %2977 = vmatprep.subr.bf16.mxu0 0
    %2978 = vmatpush1.bf16.xpose.msra.mxu0 0
    %2979 = vmatprep.subr.bf16.mxu0 0
    %2980 = vmatpush1.bf16.xpose.msra.mxu0 0
    %2981 = vmatprep.subr.bf16.mxu0 0
    %2982 = vmatpush1.bf16.xpose.msra.mxu0 0
    %2983 = vmatprep.subr.bf16.mxu0 0
    %2984 = vmatpush1.bf16.xpose.msra.mxu0 0
    %2985 = vmatprep.subr.bf16.mxu0 0
    %2986 = vmatpush1.bf16.xpose.msra.mxu0 0
    %2987 = vmatprep.subr.bf16.mxu0 0
    %2988 = vmatpush1.bf16.xpose.msra.mxu0 0
    %2989 = vmatprep.subr.bf16.mxu0 0
    %2990 = vmatpush1.bf16.xpose.msra.mxu0 0
    %2991 = vmatprep.subr.bf16.mxu0 0
    %2992 = vmatpush1.bf16.xpose.msra.mxu0 0
    %2993 = vmatprep.subr.bf16.mxu0 0
    %2994 = vmatpush1.bf16.xpose.msra.mxu0 0
    %2995 = vmatprep.subr.bf16.mxu0 0
    %2996 = vmatpush1.bf16.xpose.msra.mxu0 0
    %2997 = vmatprep.subr.bf16.mxu0 0
    %2998 = vmatpush1.bf16.xpose.msra.mxu0 0
    %2999 = vmatprep.subr.bf16.mxu0 0
    %3000 = vmatpush1.bf16.xpose.msra.mxu0 0
    %3001 = vmatprep.mubr.bf16.mxu0 0
    %3002 = vmatmul.mubr.bf16.gmra.mrb[0].mxu0 %v2289
    %v3003 = vpop.f32.mrb[0].mxu0
    %v3004 = vadd.f32 %v2203, %v3003
    %v3005 = vpop.f32.mrb[0].mxu0
    %v3006 = vpop.f32.mrb[0].mxu0
    %v3007 = vadd.f32 %v2208, %v3006
    %v3008 = vpop.f32.mrb[0].mxu0
    %3009 = vmatprep.mubr.bf16.mxu0 0
    %3010 = vmatmul.mubr.bf16.gmra.mrb[0].mxu0 %v2292
    %v3011 = vpop.f32.mrb[0].mxu0
    %v3012 = vadd.f32 %v2213, %v3011
    %v3013 = vpop.f32.mrb[0].mxu0
    %v3014 = vpop.f32.mrb[0].mxu0
    %v3015 = vadd.f32 %v2218, %v3014
    %v3016 = vpop.f32.mrb[0].mxu0
    %3017 = vmatprep.mubr.bf16.mxu0 0
    %3018 = vmatmul.mubr.bf16.gmra.mrb[0].mxu0 %v2295
    %v3019 = vpop.f32.mrb[0].mxu0
    %v3020 = vadd.f32 %v2223, %v3019
    %v3021 = vpop.f32.mrb[0].mxu0
    %v3022 = vpop.f32.mrb[0].mxu0
    %v3023 = vadd.f32 %v2228, %v3022
    %v3024 = vpop.f32.mrb[0].mxu0
    %3025 = vmatprep.mubr.bf16.mxu0 0
    %3026 = vmatmul.mubr.bf16.gmra.mrb[0].mxu0 %v2298
    %v3027 = vpop.f32.mrb[0].mxu0
    %v3028 = vadd.f32 %v2233, %v3027
    %v3029 = vpop.f32.mrb[0].mxu0
    %v3030 = vpop.f32.mrb[0].mxu0
    %v3031 = vadd.f32 %v2238, %v3030
    %v3032 = vpop.f32.mrb[0].mxu0
    %3033 = vmatprep.mubr.bf16.mxu0 0
    %3034 = vmatmul.mubr.bf16.gmra.mrb[0].mxu0 %v2301
    %v3035 = vpop.f32.mrb[0].mxu0
    %v3036 = vadd.f32 %v2243, %v3035
    %v3037 = vpop.f32.mrb[0].mxu0
    %v3038 = vpop.f32.mrb[0].mxu0
    %v3039 = vadd.f32 %v2248, %v3038
    %v3040 = vpop.f32.mrb[0].mxu0
    %3041 = vmatprep.mubr.bf16.mxu0 0
    %3042 = vmatmul.mubr.bf16.gmra.mrb[0].mxu0 %v2304
    %v3043 = vpop.f32.mrb[0].mxu0
    %v3044 = vadd.f32 %v2253, %v3043
    %v3045 = vpop.f32.mrb[0].mxu0
    %v3046 = vpop.f32.mrb[0].mxu0
    %v3047 = vadd.f32 %v2258, %v3046
    %v3048 = vpop.f32.mrb[0].mxu0
    %3049 = vdwg.mxu0
    %v3050 = vpack.c.bf16 %v3004, %v3004
    %v3051 = vpack.c.bf16 %v3020, %v3020
    %3052 = vxpose.xlu0.c.b16.start [1/8] %v3050, 128
    %3053 = vxpose.xlu0.c.b16.cont [2/8] 0, 128
    %3054 = vxpose.xlu0.c.b16.cont [3/8] 0, 128
    %3055 = vxpose.xlu0.c.b16.cont [4/8] 0, 128
    %3056 = vxpose.xlu0.c.b16.cont [5/8] 0, 128
    %3057 = vxpose.xlu0.c.b16.cont [6/8] 0, 128
    %3058 = vxpose.xlu0.c.b16.cont [7/8] 0, 128
    %3059 = vxpose.xlu0.c.b16.end [8/8] 0, 128
    %v3060 = vpop.trf.xlu0
    %v3061 = vpop.trf.xlu0
    %v3062 = vpop.trf.xlu0
    %v3063 = vpop.trf.xlu0
    %v3064 = vpop.trf.xlu0
    %v3065 = vpop.trf.xlu0
    %v3066 = vpop.trf.xlu0
    %v3067 = vpop.trf.xlu0
    %v3069 = vsel %vm628, %v3060, 0
    %v3072 = vsel %vm632, %v3051, 0
    %3074 = vmatprep.subr.bf16.mxu0 0
    %3075 = vmatpush1.bf16.msra.mxu0 %v3072
    %3076 = vmatprep.subr.bf16.mxu0 0
    %3077 = vmatpush1.bf16.msra.mxu0 0
    %3078 = vmatprep.subr.bf16.mxu0 0
    %3079 = vmatpush1.bf16.msra.mxu0 0
    %3080 = vmatprep.subr.bf16.mxu0 0
    %3081 = vmatpush1.bf16.msra.mxu0 0
    %3082 = vmatprep.subr.bf16.mxu0 0
    %3083 = vmatpush1.bf16.msra.mxu0 0
    %3084 = vmatprep.subr.bf16.mxu0 0
    %3085 = vmatpush1.bf16.msra.mxu0 0
    %3086 = vmatprep.subr.bf16.mxu0 0
    %3087 = vmatpush1.bf16.msra.mxu0 0
    %3088 = vmatprep.subr.bf16.mxu0 0
    %3089 = vmatpush1.bf16.msra.mxu0 0
    %3090 = vmatprep.subr.bf16.mxu0 0
    %3091 = vmatpush1.bf16.msra.mxu0 0
    %3092 = vmatprep.subr.bf16.mxu0 0
    %3093 = vmatpush1.bf16.msra.mxu0 0
    %3094 = vmatprep.subr.bf16.mxu0 0
    %3095 = vmatpush1.bf16.msra.mxu0 0
    %3096 = vmatprep.subr.bf16.mxu0 0
    %3097 = vmatpush1.bf16.msra.mxu0 0
    %3098 = vmatprep.subr.bf16.mxu0 0
    %3099 = vmatpush1.bf16.msra.mxu0 0
    %3100 = vmatprep.subr.bf16.mxu0 0
    %3101 = vmatpush1.bf16.msra.mxu0 0
    %3102 = vmatprep.subr.bf16.mxu0 0
    %3103 = vmatpush1.bf16.msra.mxu0 0
    %3104 = vmatprep.subr.bf16.mxu0 0
    %3105 = vmatpush1.bf16.msra.mxu0 0
    %3106 = vmatprep.mubr.bf16.mxu0 0
    %3107 = vmatmul.mubr.bf16.gmra.mrb[0].mxu0 %v3069
    %v3108 = vpop.f32.mrb[0].mxu0
    %v3109 = vadd.f32 0.0, %v3108
    %v3110 = vpop.f32.mrb[0].mxu0
    %v3111 = vpop.f32.mrb[0].mxu0
    %v3112 = vpop.f32.mrb[0].mxu0
    %3113 = vdwg.mxu0
    %v3114 = vmul.f32 %v3109, 0.35355338
    %v3115 = vsel %vm628, %v3114, -inf
    %3116 = vmax.xlane.f32.xlu0 %v3115
    %v3117 = vpop.xlane.xlu0 %3116
    %v3118 = vsub.f32 %v3114, %v3117
    %v3119 = vmul.f32 %v3118, 1.442695
    %v3120 = vpow.pop %v3119
    %v3121 = vsel %vm628, %v3120, 0.0
    %3122 = vadd.xlane.f32.xlu0 %v3121
    %v3123 = vpop.xlane.xlu0 %3122
    %v3124 = vrcp.pop %v3123
    %v3125 = vmul.f32 %v3120, %v3124
    %v3126 = vpack.c.bf16 %v3036, %v3036
    %v3127 = vpack.c.bf16 %v3125, %v3125
    %v3129 = vsel %vm628, %v3126, 0
    %v3132 = vsel %vm628, %v3127, 0
    %3134 = vmatprep.subr.bf16.mxu0 0
    %3135 = vmatpush1.bf16.xpose.msra.mxu0 %v3132
    %3136 = vmatprep.subr.bf16.mxu0 0
    %3137 = vmatpush1.bf16.xpose.msra.mxu0 0
    %3138 = vmatprep.subr.bf16.mxu0 0
    %3139 = vmatpush1.bf16.xpose.msra.mxu0 0
    %3140 = vmatprep.subr.bf16.mxu0 0
    %3141 = vmatpush1.bf16.xpose.msra.mxu0 0
    %3142 = vmatprep.subr.bf16.mxu0 0
    %3143 = vmatpush1.bf16.xpose.msra.mxu0 0
    %3144 = vmatprep.subr.bf16.mxu0 0
    %3145 = vmatpush1.bf16.xpose.msra.mxu0 0
    %3146 = vmatprep.subr.bf16.mxu0 0
    %3147 = vmatpush1.bf16.xpose.msra.mxu0 0
    %3148 = vmatprep.subr.bf16.mxu0 0
    %3149 = vmatpush1.bf16.xpose.msra.mxu0 0
    %3150 = vmatprep.subr.bf16.mxu0 0
    %3151 = vmatpush1.bf16.xpose.msra.mxu0 0
    %3152 = vmatprep.subr.bf16.mxu0 0
    %3153 = vmatpush1.bf16.xpose.msra.mxu0 0
    %3154 = vmatprep.subr.bf16.mxu0 0
    %3155 = vmatpush1.bf16.xpose.msra.mxu0 0
    %3156 = vmatprep.subr.bf16.mxu0 0
    %3157 = vmatpush1.bf16.xpose.msra.mxu0 0
    %3158 = vmatprep.subr.bf16.mxu0 0
    %3159 = vmatpush1.bf16.xpose.msra.mxu0 0
    %3160 = vmatprep.subr.bf16.mxu0 0
    %3161 = vmatpush1.bf16.xpose.msra.mxu0 0
    %3162 = vmatprep.subr.bf16.mxu0 0
    %3163 = vmatpush1.bf16.xpose.msra.mxu0 0
    %3164 = vmatprep.subr.bf16.mxu0 0
    %3165 = vmatpush1.bf16.xpose.msra.mxu0 0
    %3166 = vmatprep.mubr.bf16.mxu0 0
    %3167 = vmatmul.mubr.bf16.gmra.mrb[0].mxu0 %v3129
    %v3168 = vpop.f32.mrb[0].mxu0
    %v3169 = vadd.f32 0.0, %v3168
    %v3170 = vpop.f32.mrb[0].mxu0
    %v3171 = vpop.f32.mrb[0].mxu0
    %v3172 = vpop.f32.mrb[0].mxu0
    %3173 = vdwg.mxu0
    %v3174 = vpack.c.bf16 %v3007, %v3007
    %v3175 = vpack.c.bf16 %v3023, %v3023
    %3176 = vxpose.xlu0.c.b16.start [1/8] %v3174, 128
    %3177 = vxpose.xlu0.c.b16.cont [2/8] 0, 128
    %3178 = vxpose.xlu0.c.b16.cont [3/8] 0, 128
    %3179 = vxpose.xlu0.c.b16.cont [4/8] 0, 128
    %3180 = vxpose.xlu0.c.b16.cont [5/8] 0, 128
    %3181 = vxpose.xlu0.c.b16.cont [6/8] 0, 128
    %3182 = vxpose.xlu0.c.b16.cont [7/8] 0, 128
    %3183 = vxpose.xlu0.c.b16.end [8/8] 0, 128
    %v3184 = vpop.trf.xlu0
    %v3185 = vpop.trf.xlu0
    %v3186 = vpop.trf.xlu0
    %v3187 = vpop.trf.xlu0
    %v3188 = vpop.trf.xlu0
    %v3189 = vpop.trf.xlu0
    %v3190 = vpop.trf.xlu0
    %v3191 = vpop.trf.xlu0
    %v3193 = vsel %vm628, %v3184, 0
    %v3196 = vsel %vm632, %v3175, 0
    %3198 = vmatprep.subr.bf16.mxu0 0
    %3199 = vmatpush1.bf16.msra.mxu0 %v3196
    %3200 = vmatprep.subr.bf16.mxu0 0
    %3201 = vmatpush1.bf16.msra.mxu0 0
    %3202 = vmatprep.subr.bf16.mxu0 0
    %3203 = vmatpush1.bf16.msra.mxu0 0
    %3204 = vmatprep.subr.bf16.mxu0 0
    %3205 = vmatpush1.bf16.msra.mxu0 0
    %3206 = vmatprep.subr.bf16.mxu0 0
    %3207 = vmatpush1.bf16.msra.mxu0 0
    %3208 = vmatprep.subr.bf16.mxu0 0
    %3209 = vmatpush1.bf16.msra.mxu0 0
    %3210 = vmatprep.subr.bf16.mxu0 0
    %3211 = vmatpush1.bf16.msra.mxu0 0
    %3212 = vmatprep.subr.bf16.mxu0 0
    %3213 = vmatpush1.bf16.msra.mxu0 0
    %3214 = vmatprep.subr.bf16.mxu0 0
    %3215 = vmatpush1.bf16.msra.mxu0 0
    %3216 = vmatprep.subr.bf16.mxu0 0
    %3217 = vmatpush1.bf16.msra.mxu0 0
    %3218 = vmatprep.subr.bf16.mxu0 0
    %3219 = vmatpush1.bf16.msra.mxu0 0
    %3220 = vmatprep.subr.bf16.mxu0 0
    %3221 = vmatpush1.bf16.msra.mxu0 0
    %3222 = vmatprep.subr.bf16.mxu0 0
    %3223 = vmatpush1.bf16.msra.mxu0 0
    %3224 = vmatprep.subr.bf16.mxu0 0
    %3225 = vmatpush1.bf16.msra.mxu0 0
    %3226 = vmatprep.subr.bf16.mxu0 0
    %3227 = vmatpush1.bf16.msra.mxu0 0
    %3228 = vmatprep.subr.bf16.mxu0 0
    %3229 = vmatpush1.bf16.msra.mxu0 0
    %3230 = vmatprep.mubr.bf16.mxu0 0
    %3231 = vmatmul.mubr.bf16.gmra.mrb[0].mxu0 %v3193
    %v3232 = vpop.f32.mrb[0].mxu0
    %v3233 = vadd.f32 0.0, %v3232
    %v3234 = vpop.f32.mrb[0].mxu0
    %v3235 = vpop.f32.mrb[0].mxu0
    %v3236 = vpop.f32.mrb[0].mxu0
    %3237 = vdwg.mxu0
    %v3238 = vmul.f32 %v3233, 0.35355338
    %v3239 = vsel %vm628, %v3238, -inf
    %3240 = vmax.xlane.f32.xlu0 %v3239
    %v3241 = vpop.xlane.xlu0 %3240
    %v3242 = vsub.f32 %v3238, %v3241
    %v3243 = vmul.f32 %v3242, 1.442695
    %v3244 = vpow.pop %v3243
    %v3245 = vsel %vm628, %v3244, 0.0
    %3246 = vadd.xlane.f32.xlu0 %v3245
    %v3247 = vpop.xlane.xlu0 %3246
    %v3248 = vrcp.pop %v3247
    %v3249 = vmul.f32 %v3244, %v3248
    %v3250 = vpack.c.bf16 %v3039, %v3039
    %v3251 = vpack.c.bf16 %v3249, %v3249
    %v3253 = vsel %vm628, %v3250, 0
    %v3256 = vsel %vm628, %v3251, 0
    %3258 = vmatprep.subr.bf16.mxu0 0
    %3259 = vmatpush1.bf16.xpose.msra.mxu0 %v3256
    %3260 = vmatprep.subr.bf16.mxu0 0
    %3261 = vmatpush1.bf16.xpose.msra.mxu0 0
    %3262 = vmatprep.subr.bf16.mxu0 0
    %3263 = vmatpush1.bf16.xpose.msra.mxu0 0
    %3264 = vmatprep.subr.bf16.mxu0 0
    %3265 = vmatpush1.bf16.xpose.msra.mxu0 0
    %3266 = vmatprep.subr.bf16.mxu0 0
    %3267 = vmatpush1.bf16.xpose.msra.mxu0 0
    %3268 = vmatprep.subr.bf16.mxu0 0
    %3269 = vmatpush1.bf16.xpose.msra.mxu0 0
    %3270 = vmatprep.subr.bf16.mxu0 0
    %3271 = vmatpush1.bf16.xpose.msra.mxu0 0
    %3272 = vmatprep.subr.bf16.mxu0 0
    %3273 = vmatpush1.bf16.xpose.msra.mxu0 0
    %3274 = vmatprep.subr.bf16.mxu0 0
    %3275 = vmatpush1.bf16.xpose.msra.mxu0 0
    %3276 = vmatprep.subr.bf16.mxu0 0
    %3277 = vmatpush1.bf16.xpose.msra.mxu0 0
    %3278 = vmatprep.subr.bf16.mxu0 0
    %3279 = vmatpush1.bf16.xpose.msra.mxu0 0
    %3280 = vmatprep.subr.bf16.mxu0 0
    %3281 = vmatpush1.bf16.xpose.msra.mxu0 0
    %3282 = vmatprep.subr.bf16.mxu0 0
    %3283 = vmatpush1.bf16.xpose.msra.mxu0 0
    %3284 = vmatprep.subr.bf16.mxu0 0
    %3285 = vmatpush1.bf16.xpose.msra.mxu0 0
    %3286 = vmatprep.subr.bf16.mxu0 0
    %3287 = vmatpush1.bf16.xpose.msra.mxu0 0
    %3288 = vmatprep.subr.bf16.mxu0 0
    %3289 = vmatpush1.bf16.xpose.msra.mxu0 0
    %3290 = vmatprep.mubr.bf16.mxu0 0
    %3291 = vmatmul.mubr.bf16.gmra.mrb[0].mxu0 %v3253
    %v3292 = vpop.f32.mrb[0].mxu0
    %v3293 = vadd.f32 0.0, %v3292
    %v3294 = vpop.f32.mrb[0].mxu0
    %v3295 = vpop.f32.mrb[0].mxu0
    %v3296 = vpop.f32.mrb[0].mxu0
    %3297 = vdwg.mxu0
    %v3298 = vpack.c.bf16 %v3012, %v3012
    %v3299 = vpack.c.bf16 %v3028, %v3028
    %3300 = vxpose.xlu0.c.b16.start [1/8] %v3298, 128
    %3301 = vxpose.xlu0.c.b16.cont [2/8] 0, 128
    %3302 = vxpose.xlu0.c.b16.cont [3/8] 0, 128
    %3303 = vxpose.xlu0.c.b16.cont [4/8] 0, 128
    %3304 = vxpose.xlu0.c.b16.cont [5/8] 0, 128
    %3305 = vxpose.xlu0.c.b16.cont [6/8] 0, 128
    %3306 = vxpose.xlu0.c.b16.cont [7/8] 0, 128
    %3307 = vxpose.xlu0.c.b16.end [8/8] 0, 128
    %v3308 = vpop.trf.xlu0
    %v3309 = vpop.trf.xlu0
    %v3310 = vpop.trf.xlu0
    %v3311 = vpop.trf.xlu0
    %v3312 = vpop.trf.xlu0
    %v3313 = vpop.trf.xlu0
    %v3314 = vpop.trf.xlu0
    %v3315 = vpop.trf.xlu0
    %v3317 = vsel %vm628, %v3308, 0
    %v3320 = vsel %vm632, %v3299, 0
    %3322 = vmatprep.subr.bf16.mxu0 0
    %3323 = vmatpush1.bf16.msra.mxu0 %v3320
    %3324 = vmatprep.subr.bf16.mxu0 0
    %3325 = vmatpush1.bf16.msra.mxu0 0
    %3326 = vmatprep.subr.bf16.mxu0 0
    %3327 = vmatpush1.bf16.msra.mxu0 0
    %3328 = vmatprep.subr.bf16.mxu0 0
    %3329 = vmatpush1.bf16.msra.mxu0 0
    %3330 = vmatprep.subr.bf16.mxu0 0
    %3331 = vmatpush1.bf16.msra.mxu0 0
    %3332 = vmatprep.subr.bf16.mxu0 0
    %3333 = vmatpush1.bf16.msra.mxu0 0
    %3334 = vmatprep.subr.bf16.mxu0 0
    %3335 = vmatpush1.bf16.msra.mxu0 0
    %3336 = vmatprep.subr.bf16.mxu0 0
    %3337 = vmatpush1.bf16.msra.mxu0 0
    %3338 = vmatprep.subr.bf16.mxu0 0
    %3339 = vmatpush1.bf16.msra.mxu0 0
    %3340 = vmatprep.subr.bf16.mxu0 0
    %3341 = vmatpush1.bf16.msra.mxu0 0
    %3342 = vmatprep.subr.bf16.mxu0 0
    %3343 = vmatpush1.bf16.msra.mxu0 0
    %3344 = vmatprep.subr.bf16.mxu0 0
    %3345 = vmatpush1.bf16.msra.mxu0 0
    %3346 = vmatprep.subr.bf16.mxu0 0
    %3347 = vmatpush1.bf16.msra.mxu0 0
    %3348 = vmatprep.subr.bf16.mxu0 0
    %3349 = vmatpush1.bf16.msra.mxu0 0
    %3350 = vmatprep.subr.bf16.mxu0 0
    %3351 = vmatpush1.bf16.msra.mxu0 0
    %3352 = vmatprep.subr.bf16.mxu0 0
    %3353 = vmatpush1.bf16.msra.mxu0 0
    %3354 = vmatprep.mubr.bf16.mxu0 0
    %3355 = vmatmul.mubr.bf16.gmra.mrb[0].mxu0 %v3317
    %v3356 = vpop.f32.mrb[0].mxu0
    %v3357 = vadd.f32 0.0, %v3356
    %v3358 = vpop.f32.mrb[0].mxu0
    %v3359 = vpop.f32.mrb[0].mxu0
    %v3360 = vpop.f32.mrb[0].mxu0
    %3361 = vdwg.mxu0
    %v3362 = vmul.f32 %v3357, 0.35355338
    %v3363 = vsel %vm628, %v3362, -inf
    %3364 = vmax.xlane.f32.xlu0 %v3363
    %v3365 = vpop.xlane.xlu0 %3364
    %v3366 = vsub.f32 %v3362, %v3365
    %v3367 = vmul.f32 %v3366, 1.442695
    %v3368 = vpow.pop %v3367
    %v3369 = vsel %vm628, %v3368, 0.0
    %3370 = vadd.xlane.f32.xlu0 %v3369
    %v3371 = vpop.xlane.xlu0 %3370
    %v3372 = vrcp.pop %v3371
    %v3373 = vmul.f32 %v3368, %v3372
    %v3374 = vpack.c.bf16 %v3044, %v3044
    %v3375 = vpack.c.bf16 %v3373, %v3373
    %v3377 = vsel %vm628, %v3374, 0
    %v3380 = vsel %vm628, %v3375, 0
    %3382 = vmatprep.subr.bf16.mxu0 0
    %3383 = vmatpush1.bf16.xpose.msra.mxu0 %v3380
    %3384 = vmatprep.subr.bf16.mxu0 0
    %3385 = vmatpush1.bf16.xpose.msra.mxu0 0
    %3386 = vmatprep.subr.bf16.mxu0 0
    %3387 = vmatpush1.bf16.xpose.msra.mxu0 0
    %3388 = vmatprep.subr.bf16.mxu0 0
    %3389 = vmatpush1.bf16.xpose.msra.mxu0 0
    %3390 = vmatprep.subr.bf16.mxu0 0
    %3391 = vmatpush1.bf16.xpose.msra.mxu0 0
    %3392 = vmatprep.subr.bf16.mxu0 0
    %3393 = vmatpush1.bf16.xpose.msra.mxu0 0
    %3394 = vmatprep.subr.bf16.mxu0 0
    %3395 = vmatpush1.bf16.xpose.msra.mxu0 0
    %3396 = vmatprep.subr.bf16.mxu0 0
    %3397 = vmatpush1.bf16.xpose.msra.mxu0 0
    %3398 = vmatprep.subr.bf16.mxu0 0
    %3399 = vmatpush1.bf16.xpose.msra.mxu0 0
    %3400 = vmatprep.subr.bf16.mxu0 0
    %3401 = vmatpush1.bf16.xpose.msra.mxu0 0
    %3402 = vmatprep.subr.bf16.mxu0 0
    %3403 = vmatpush1.bf16.xpose.msra.mxu0 0
    %3404 = vmatprep.subr.bf16.mxu0 0
    %3405 = vmatpush1.bf16.xpose.msra.mxu0 0
    %3406 = vmatprep.subr.bf16.mxu0 0
    %3407 = vmatpush1.bf16.xpose.msra.mxu0 0
    %3408 = vmatprep.subr.bf16.mxu0 0
    %3409 = vmatpush1.bf16.xpose.msra.mxu0 0
    %3410 = vmatprep.subr.bf16.mxu0 0
    %3411 = vmatpush1.bf16.xpose.msra.mxu0 0
    %3412 = vmatprep.subr.bf16.mxu0 0
    %3413 = vmatpush1.bf16.xpose.msra.mxu0 0
    %3414 = vmatprep.mubr.bf16.mxu0 0
    %3415 = vmatmul.mubr.bf16.gmra.mrb[0].mxu0 %v3377
    %v3416 = vpop.f32.mrb[0].mxu0
    %v3417 = vadd.f32 0.0, %v3416
    %v3418 = vpop.f32.mrb[0].mxu0
    %v3419 = vpop.f32.mrb[0].mxu0
    %v3420 = vpop.f32.mrb[0].mxu0
    %3421 = vdwg.mxu0
    %v3422 = vpack.c.bf16 %v3015, %v3015
    %v3423 = vpack.c.bf16 %v3031, %v3031
    %3424 = vxpose.xlu0.c.b16.start [1/8] %v3422, 128
    %3425 = vxpose.xlu0.c.b16.cont [2/8] 0, 128
    %3426 = vxpose.xlu0.c.b16.cont [3/8] 0, 128
    %3427 = vxpose.xlu0.c.b16.cont [4/8] 0, 128
    %3428 = vxpose.xlu0.c.b16.cont [5/8] 0, 128
    %3429 = vxpose.xlu0.c.b16.cont [6/8] 0, 128
    %3430 = vxpose.xlu0.c.b16.cont [7/8] 0, 128
    %3431 = vxpose.xlu0.c.b16.end [8/8] 0, 128
    %v3432 = vpop.trf.xlu0
    %v3433 = vpop.trf.xlu0
    %v3434 = vpop.trf.xlu0
    %v3435 = vpop.trf.xlu0
    %v3436 = vpop.trf.xlu0
    %v3437 = vpop.trf.xlu0
    %v3438 = vpop.trf.xlu0
    %v3439 = vpop.trf.xlu0
    %v3441 = vsel %vm628, %v3432, 0
    %v3444 = vsel %vm632, %v3423, 0
    %3446 = vmatprep.subr.bf16.mxu0 0
    %3447 = vmatpush1.bf16.msra.mxu0 %v3444
    %3448 = vmatprep.subr.bf16.mxu0 0
    %3449 = vmatpush1.bf16.msra.mxu0 0
    %3450 = vmatprep.subr.bf16.mxu0 0
    %3451 = vmatpush1.bf16.msra.mxu0 0
    %3452 = vmatprep.subr.bf16.mxu0 0
    %3453 = vmatpush1.bf16.msra.mxu0 0
    %3454 = vmatprep.subr.bf16.mxu0 0
    %3455 = vmatpush1.bf16.msra.mxu0 0
    %3456 = vmatprep.subr.bf16.mxu0 0
    %3457 = vmatpush1.bf16.msra.mxu0 0
    %3458 = vmatprep.subr.bf16.mxu0 0
    %3459 = vmatpush1.bf16.msra.mxu0 0
    %3460 = vmatprep.subr.bf16.mxu0 0
    %3461 = vmatpush1.bf16.msra.mxu0 0
    %3462 = vmatprep.subr.bf16.mxu0 0
    %3463 = vmatpush1.bf16.msra.mxu0 0
    %3464 = vmatprep.subr.bf16.mxu0 0
    %3465 = vmatpush1.bf16.msra.mxu0 0
    %3466 = vmatprep.subr.bf16.mxu0 0
    %3467 = vmatpush1.bf16.msra.mxu0 0
    %3468 = vmatprep.subr.bf16.mxu0 0
    %3469 = vmatpush1.bf16.msra.mxu0 0
    %3470 = vmatprep.subr.bf16.mxu0 0
    %3471 = vmatpush1.bf16.msra.mxu0 0
    %3472 = vmatprep.subr.bf16.mxu0 0
    %3473 = vmatpush1.bf16.msra.mxu0 0
    %3474 = vmatprep.subr.bf16.mxu0 0
    %3475 = vmatpush1.bf16.msra.mxu0 0
    %3476 = vmatprep.subr.bf16.mxu0 0
    %3477 = vmatpush1.bf16.msra.mxu0 0
    %3478 = vmatprep.mubr.bf16.mxu0 0
    %3479 = vmatmul.mubr.bf16.gmra.mrb[0].mxu0 %v3441
    %v3480 = vpop.f32.mrb[0].mxu0
    %v3481 = vadd.f32 0.0, %v3480
    %v3482 = vpop.f32.mrb[0].mxu0
    %v3483 = vpop.f32.mrb[0].mxu0
    %v3484 = vpop.f32.mrb[0].mxu0
    %3485 = vdwg.mxu0
    %v3486 = vmul.f32 %v3481, 0.35355338
    %v3487 = vsel %vm628, %v3486, -inf
    %3488 = vmax.xlane.f32.xlu0 %v3487
    %v3489 = vpop.xlane.xlu0 %3488
    %v3490 = vsub.f32 %v3486, %v3489
    %v3491 = vmul.f32 %v3490, 1.442695
    %v3492 = vpow.pop %v3491
    %v3493 = vsel %vm628, %v3492, 0.0
    %3494 = vadd.xlane.f32.xlu0 %v3493
    %v3495 = vpop.xlane.xlu0 %3494
    %v3496 = vrcp.pop %v3495
    %v3497 = vmul.f32 %v3492, %v3496
    %v3498 = vpack.c.bf16 %v3047, %v3047
    %v3499 = vpack.c.bf16 %v3497, %v3497
    %v3501 = vsel %vm628, %v3498, 0
    %v3504 = vsel %vm628, %v3499, 0
    %3506 = vmatprep.subr.bf16.mxu0 0
    %3507 = vmatpush1.bf16.xpose.msra.mxu0 %v3504
    %3508 = vmatprep.subr.bf16.mxu0 0
    %3509 = vmatpush1.bf16.xpose.msra.mxu0 0
    %3510 = vmatprep.subr.bf16.mxu0 0
    %3511 = vmatpush1.bf16.xpose.msra.mxu0 0
    %3512 = vmatprep.subr.bf16.mxu0 0
    %3513 = vmatpush1.bf16.xpose.msra.mxu0 0
    %3514 = vmatprep.subr.bf16.mxu0 0
    %3515 = vmatpush1.bf16.xpose.msra.mxu0 0
    %3516 = vmatprep.subr.bf16.mxu0 0
    %3517 = vmatpush1.bf16.xpose.msra.mxu0 0
    %3518 = vmatprep.subr.bf16.mxu0 0
    %3519 = vmatpush1.bf16.xpose.msra.mxu0 0
    %3520 = vmatprep.subr.bf16.mxu0 0
    %3521 = vmatpush1.bf16.xpose.msra.mxu0 0
    %3522 = vmatprep.subr.bf16.mxu0 0
    %3523 = vmatpush1.bf16.xpose.msra.mxu0 0
    %3524 = vmatprep.subr.bf16.mxu0 0
    %3525 = vmatpush1.bf16.xpose.msra.mxu0 0
    %3526 = vmatprep.subr.bf16.mxu0 0
    %3527 = vmatpush1.bf16.xpose.msra.mxu0 0
    %3528 = vmatprep.subr.bf16.mxu0 0
    %3529 = vmatpush1.bf16.xpose.msra.mxu0 0
    %3530 = vmatprep.subr.bf16.mxu0 0
    %3531 = vmatpush1.bf16.xpose.msra.mxu0 0
    %3532 = vmatprep.subr.bf16.mxu0 0
    %3533 = vmatpush1.bf16.xpose.msra.mxu0 0
    %3534 = vmatprep.subr.bf16.mxu0 0
    %3535 = vmatpush1.bf16.xpose.msra.mxu0 0
    %3536 = vmatprep.subr.bf16.mxu0 0
    %3537 = vmatpush1.bf16.xpose.msra.mxu0 0
    %3538 = vmatprep.mubr.bf16.mxu0 0
    %3539 = vmatmul.mubr.bf16.gmra.mrb[0].mxu0 %v3501
    %v3540 = vpop.f32.mrb[0].mxu0
    %v3541 = vadd.f32 0.0, %v3540
    %v3542 = vpop.f32.mrb[0].mxu0
    %v3543 = vpop.f32.mrb[0].mxu0
    %v3544 = vpop.f32.mrb[0].mxu0
    %3545 = vdwg.mxu0
    %v3546 = vpack.c.bf16 %v3293, %v3169
    %v3547 = vpack.c.bf16 %v3541, %v3417
    %3548 = vxpose.xlu0.c.b16.start [1/8] %v3546, 128
    %3549 = vxpose.xlu0.c.b16.cont [2/8] %v3547, 128
    %3550 = vxpose.xlu0.c.b16.cont [3/8] 0, 128
    %3551 = vxpose.xlu0.c.b16.cont [4/8] 0, 128
    %3552 = vxpose.xlu0.c.b16.cont [5/8] 0, 128
    %3553 = vxpose.xlu0.c.b16.cont [6/8] 0, 128
    %3554 = vxpose.xlu0.c.b16.cont [7/8] 0, 128
    %3555 = vxpose.xlu0.c.b16.end [8/8] 0, 128
    %v3556 = vpop.trf.xlu0
    %v3557 = vpop.trf.xlu0
    %v3558 = vpop.trf.xlu0
    %v3559 = vpop.trf.xlu0
    %v3560 = vpop.trf.xlu0
    %v3561 = vpop.trf.xlu0
    %v3562 = vpop.trf.xlu0
    %v3563 = vpop.trf.xlu0
    %v3565 = vsel %vm390, %v3556, 0
    %3567 = vmatprep.subr.bf16.mxu0 0
    %3568 = vmatpush1.bf16.msra.mxu0 %v2918
    %3569 = vmatprep.subr.bf16.mxu0 0
    %3570 = vmatpush1.bf16.msra.mxu0 %v2919
    %3571 = vmatprep.subr.bf16.mxu0 0
    %3572 = vmatpush1.bf16.msra.mxu0 0
    %3573 = vmatprep.subr.bf16.mxu0 0
    %3574 = vmatpush1.bf16.msra.mxu0 0
    %3575 = vmatprep.subr.bf16.mxu0 0
    %3576 = vmatpush1.bf16.msra.mxu0 0
    %3577 = vmatprep.subr.bf16.mxu0 0
    %3578 = vmatpush1.bf16.msra.mxu0 0
    %3579 = vmatprep.subr.bf16.mxu0 0
    %3580 = vmatpush1.bf16.msra.mxu0 0
    %3581 = vmatprep.subr.bf16.mxu0 0
    %3582 = vmatpush1.bf16.msra.mxu0 0
    %3583 = vmatprep.subr.bf16.mxu0 0
    %3584 = vmatpush1.bf16.msra.mxu0 0
    %3585 = vmatprep.subr.bf16.mxu0 0
    %3586 = vmatpush1.bf16.msra.mxu0 0
    %3587 = vmatprep.subr.bf16.mxu0 0
    %3588 = vmatpush1.bf16.msra.mxu0 0
    %3589 = vmatprep.subr.bf16.mxu0 0
    %3590 = vmatpush1.bf16.msra.mxu0 0
    %3591 = vmatprep.subr.bf16.mxu0 0
    %3592 = vmatpush1.bf16.msra.mxu0 0
    %3593 = vmatprep.subr.bf16.mxu0 0
    %3594 = vmatpush1.bf16.msra.mxu0 0
    %3595 = vmatprep.subr.bf16.mxu0 0
    %3596 = vmatpush1.bf16.msra.mxu0 0
    %3597 = vmatprep.subr.bf16.mxu0 0
    %3598 = vmatpush1.bf16.msra.mxu0 0
    %3599 = vmatprep.mubr.bf16.mxu0 0
    %3600 = vmatmul.mubr.bf16.gmra.mrb[0].mxu0 %v3565
    %v3601 = vpop.f32.mrb[0].mxu0
    %v3602 = vadd.f32 %v2892, %v3601
    %v3603 = vpop.f32.mrb[0].mxu0
    %v3604 = vpop.f32.mrb[0].mxu0
    %v3605 = vpop.f32.mrb[0].mxu0
    %3606 = vdwg.mxu0
    %v3607 = vld [vmem:[%s43] sm:$0x1]
    %v3608 = vld [vmem:[%s45] sm:$0x1]
    %v3609 = vld [vmem:[%s47] sm:$0xf]
    %v3610 = vld [vmem:[%s47 + $0x4] sm:$0xf]
    %v3611 = vld [vmem:[%s47 + $0x8] sm:$0xf]
    %v3612 = vld [vmem:[%s47 + $0xc] sm:$0xf]
    %v3613 = vld [vmem:[#allocation22] sm:$0x1]
    %v3614 = vld [vmem:[%s51] sm:$0xf]
    %v3615 = vld [vmem:[%s51 + $0x4] sm:$0xf]
    %v3616 = vld [vmem:[%s51 + $0x8] sm:$0xf]
    %v3617 = vld [vmem:[%s51 + $0xc] sm:$0xf]
    %v3618 = vld [vmem:[#allocation23] sm:$0x1]
    %v3619 = vld [vmem:[%s55] sm:$0x1]
    %v3620 = vld [vmem:[%s57] sm:$0x1]
    %v3621 = vsel %vm390, %v2960, 0.0
    %3622 = vadd.xlane.f32.xlu0 %v3621
    %v3623 = vpop.xlane.xlu0 %3622
    %v3624 = vsel %vm390, %v3602, 0.0
    %3625 = vadd.xlane.f32.xlu0 %v3624
    %v3626 = vpop.xlane.xlu0 %3625
    %v3627 = vmul.f32 %v3623, %v1951
    %v3628 = vmul.f32 %v3626, %v1951
    %v3629 = vsub.f32 %v2960, %v3627
    %v3630 = vsub.f32 %v3602, %v3628
    %v3631 = vmul.f32 %v3629, %v3629
    %v3632 = vmul.f32 %v3630, %v3630
    %v3633 = vsel %vm390, %v3631, 0.0
    %3634 = vadd.xlane.f32.xlu0 %v3633
    %v3635 = vpop.xlane.xlu0 %3634
    %v3636 = vsel %vm390, %v3632, 0.0
    %3637 = vadd.xlane.f32.xlu0 %v3636
    %v3638 = vpop.xlane.xlu0 %3637
    %v3639 = vmul.f32 %v3635, %v1951
    %v3640 = vmul.f32 %v3638, %v1951
    %v3641 = vadd.f32 %v3639, 1e-05
    %v3642 = vadd.f32 %v3640, 1e-05
    %v3643 = vrsqrt.pop %v3641
    %v3644 = vrsqrt.pop %v3642
    %v3645 = vmul.f32 %v3629, %v3643
    %v3646 = vmul.f32 %v3630, %v3644
    %v3648 = vlaneseq
    %v3649 = vshrl.u32 %v3648, 7
    %v3650 = vsub.s32 0, %v3649
    %v3651 = vrot.slane %v3607, %v3650
    %v3653 = vmul.f32 %v3645, %v3651
    %v3654 = vmul.f32 %v3646, %v3651
    %v3656 = vlaneseq
    %v3657 = vshrl.u32 %v3656, 7
    %v3658 = vsub.s32 0, %v3657
    %v3659 = vrot.slane %v3608, %v3658
    %v3661 = vadd.f32 %v3653, %v3659
    %v3662 = vadd.f32 %v3654, %v3659
    %v3663 = vadd.f32 %v3661, %v2176
    %v3664 = vadd.f32 %v3662, %v2177
    %v3665 = vpack.c.bf16 %v3664, %v3663
    %v3667 = vlaneseq
    %v3668 = vshrl.u32 %v3667, 7
    %v3669 = vsub.s32 0, %v3668
    %v3670 = vrot.slane %v3613, %v3669
    %v3676 = vunpack.c.l.b16 %v3609
    %v3677 = vunpack.c.l.b16 %v3610
    %v3678 = vunpack.c.l.b16 %v3611
    %v3679 = vunpack.c.l.b16 %v3612
    %v3680 = vpack.c.b16 %v3677, %v3676
    %v3681 = vpack.c.b16 %v3679, %v3678
    %v3685 = vsel %vm390, %v3665, 0
    %3687 = vmatprep.subr.bf16.mxu0 0
    %3688 = vmatpush1.bf16.msra.mxu0 %v3680
    %3689 = vmatprep.subr.bf16.mxu0 0
    %3690 = vmatpush1.bf16.msra.mxu0 %v3681
    %3691 = vmatprep.subr.bf16.mxu0 0
    %3692 = vmatpush1.bf16.msra.mxu0 0
    %3693 = vmatprep.subr.bf16.mxu0 0
    %3694 = vmatpush1.bf16.msra.mxu0 0
    %3695 = vmatprep.subr.bf16.mxu0 0
    %3696 = vmatpush1.bf16.msra.mxu0 0
    %3697 = vmatprep.subr.bf16.mxu0 0
    %3698 = vmatpush1.bf16.msra.mxu0 0
    %3699 = vmatprep.subr.bf16.mxu0 0
    %3700 = vmatpush1.bf16.msra.mxu0 0
    %3701 = vmatprep.subr.bf16.mxu0 0
    %3702 = vmatpush1.bf16.msra.mxu0 0
    %3703 = vmatprep.subr.bf16.mxu0 0
    %3704 = vmatpush1.bf16.msra.mxu0 0
    %3705 = vmatprep.subr.bf16.mxu0 0
    %3706 = vmatpush1.bf16.msra.mxu0 0
    %3707 = vmatprep.subr.bf16.mxu0 0
    %3708 = vmatpush1.bf16.msra.mxu0 0
    %3709 = vmatprep.subr.bf16.mxu0 0
    %3710 = vmatpush1.bf16.msra.mxu0 0
    %3711 = vmatprep.subr.bf16.mxu0 0
    %3712 = vmatpush1.bf16.msra.mxu0 0
    %3713 = vmatprep.subr.bf16.mxu0 0
    %3714 = vmatpush1.bf16.msra.mxu0 0
    %3715 = vmatprep.subr.bf16.mxu0 0
    %3716 = vmatpush1.bf16.msra.mxu0 0
    %3717 = vmatprep.subr.bf16.mxu0 0
    %3718 = vmatpush1.bf16.msra.mxu0 0
    %3719 = vmatprep.mubr.bf16.mxu0 0
    %3720 = vmatmul.mubr.bf16.gmra.mrb[0].mxu0 %v3685
    %v3721 = vpop.f32.mrb[0].mxu0
    %v3722 = vadd.f32 %v3670, %v3721
    %v3723 = vpop.f32.mrb[0].mxu0
    %v3724 = vpop.f32.mrb[0].mxu0
    %v3725 = vadd.f32 %v3670, %v3724
    %v3726 = vpop.f32.mrb[0].mxu0
    %3727 = vdwg.mxu0
    %v3728 = vmul.f32 %v3722, 0.5
    %v3729 = vmul.f32 %v3725, 0.5
    %v3730 = vmul.f32 %v3722, 0.044715
    %v3731 = vmul.f32 %v3725, 0.044715
    %v3732 = vmul.f32 %v3730, %v3722
    %v3733 = vmul.f32 %v3731, %v3725
    %v3734 = vmul.f32 %v3732, %v3722
    %v3735 = vmul.f32 %v3733, %v3725
    %v3736 = vadd.f32 %v3722, %v3734
    %v3737 = vadd.f32 %v3725, %v3735
    %v3738 = vmul.f32 %v3736, 0.7978846
    %v3739 = vmul.f32 %v3737, 0.7978846
    %v3740 = vtanh.pop %v3738
    %v3741 = vtanh.pop %v3739
    %v3742 = vadd.f32 %v3740, 1.0
    %v3743 = vadd.f32 %v3741, 1.0
    %v3744 = vmul.f32 %v3728, %v3742
    %v3745 = vmul.f32 %v3729, %v3743
    %v3746 = vpack.c.bf16 %v3745, %v3744
    %v3748 = vlaneseq
    %v3749 = vshrl.u32 %v3748, 7
    %v3750 = vsub.s32 0, %v3749
    %v3751 = vrot.slane %v3618, %v3750
    %v3757 = vunpack.c.l.b16 %v3614
    %v3758 = vunpack.c.l.b16 %v3615
    %v3759 = vunpack.c.l.b16 %v3616
    %v3760 = vunpack.c.l.b16 %v3617
    %v3761 = vpack.c.b16 %v3758, %v3757
    %v3762 = vpack.c.b16 %v3760, %v3759
    %v3766 = vsel %vm390, %v3746, 0
    %3768 = vmatprep.subr.bf16.mxu0 0
    %3769 = vmatpush1.bf16.msra.mxu0 %v3761
    %3770 = vmatprep.subr.bf16.mxu0 0
    %3771 = vmatpush1.bf16.msra.mxu0 %v3762
    %3772 = vmatprep.subr.bf16.mxu0 0
    %3773 = vmatpush1.bf16.msra.mxu0 0
    %3774 = vmatprep.subr.bf16.mxu0 0
    %3775 = vmatpush1.bf16.msra.mxu0 0
    %3776 = vmatprep.subr.bf16.mxu0 0
    %3777 = vmatpush1.bf16.msra.mxu0 0
    %3778 = vmatprep.subr.bf16.mxu0 0
    %3779 = vmatpush1.bf16.msra.mxu0 0
    %3780 = vmatprep.subr.bf16.mxu0 0
    %3781 = vmatpush1.bf16.msra.mxu0 0
    %3782 = vmatprep.subr.bf16.mxu0 0
    %3783 = vmatpush1.bf16.msra.mxu0 0
    %3784 = vmatprep.subr.bf16.mxu0 0
    %3785 = vmatpush1.bf16.msra.mxu0 0
    %3786 = vmatprep.subr.bf16.mxu0 0
    %3787 = vmatpush1.bf16.msra.mxu0 0
    %3788 = vmatprep.subr.bf16.mxu0 0
    %3789 = vmatpush1.bf16.msra.mxu0 0
    %3790 = vmatprep.subr.bf16.mxu0 0
    %3791 = vmatpush1.bf16.msra.mxu0 0
    %3792 = vmatprep.subr.bf16.mxu0 0
    %3793 = vmatpush1.bf16.msra.mxu0 0
    %3794 = vmatprep.subr.bf16.mxu0 0
    %3795 = vmatpush1.bf16.msra.mxu0 0
    %3796 = vmatprep.subr.bf16.mxu0 0
    %3797 = vmatpush1.bf16.msra.mxu0 0
    %3798 = vmatprep.subr.bf16.mxu0 0
    %3799 = vmatpush1.bf16.msra.mxu0 0
    %3800 = vmatprep.mubr.bf16.mxu0 0
    %3801 = vmatmul.mubr.bf16.gmra.mrb[0].mxu0 %v3766
    %v3802 = vpop.f32.mrb[0].mxu0
    %v3803 = vadd.f32 %v3751, %v3802
    %v3804 = vpop.f32.mrb[0].mxu0
    %v3805 = vpop.f32.mrb[0].mxu0
    %v3806 = vadd.f32 %v3751, %v3805
    %v3807 = vpop.f32.mrb[0].mxu0
    %3808 = vdwg.mxu0
    %v3809 = vsel %vm390, %v3803, 0.0
    %3810 = vadd.xlane.f32.xlu0 %v3809
    %v3811 = vpop.xlane.xlu0 %3810
    %v3812 = vsel %vm390, %v3806, 0.0
    %3813 = vadd.xlane.f32.xlu0 %v3812
    %v3814 = vpop.xlane.xlu0 %3813
    %v3815 = vmul.f32 %v3811, %v1951
    %v3816 = vmul.f32 %v3814, %v1951
    %v3817 = vsub.f32 %v3803, %v3815
    %v3818 = vsub.f32 %v3806, %v3816
    %v3819 = vmul.f32 %v3817, %v3817
    %v3820 = vmul.f32 %v3818, %v3818
    %v3821 = vsel %vm390, %v3819, 0.0
    %3822 = vadd.xlane.f32.xlu0 %v3821
    %v3823 = vpop.xlane.xlu0 %3822
    %v3824 = vsel %vm390, %v3820, 0.0
    %3825 = vadd.xlane.f32.xlu0 %v3824
    %v3826 = vpop.xlane.xlu0 %3825
    %v3827 = vmul.f32 %v3823, %v1951
    %v3828 = vmul.f32 %v3826, %v1951
    %v3829 = vadd.f32 %v3827, 1e-05
    %v3830 = vadd.f32 %v3828, 1e-05
    %v3831 = vrsqrt.pop %v3829
    %v3832 = vrsqrt.pop %v3830
    %v3833 = vmul.f32 %v3817, %v3831
    %v3834 = vmul.f32 %v3818, %v3832
    %v3836 = vlaneseq
    %v3837 = vshrl.u32 %v3836, 7
    %v3838 = vsub.s32 0, %v3837
    %v3839 = vrot.slane %v3619, %v3838
    %v3841 = vmul.f32 %v3833, %v3839
    %v3842 = vmul.f32 %v3834, %v3839
    %v3844 = vlaneseq
    %v3845 = vshrl.u32 %v3844, 7
    %v3846 = vsub.s32 0, %v3845
    %v3847 = vrot.slane %v3620, %v3846
    %v3849 = vadd.f32 %v3841, %v3847
    %v3850 = vadd.f32 %v3842, %v3847
    %v3851 = vadd.f32 %v3849, %v3663
    %v3852 = vadd.f32 %v3850, %v3664
    %s3853 = scalar_lea.vmem [#allocation19], 16
    %v3854 = vld [vmem:[%s3853] sm:$0xf]
    %v3855 = vld [vmem:[%s3853 + $0x4] sm:$0xf]
    %v3856 = vld [vmem:[%s3853 + $0x8] sm:$0xf]
    %v3857 = vld [vmem:[%s3853 + $0xc] sm:$0xf]
    %s3858 = scalar_lea.vmem %s37, 96
    %v3859 = vld [vmem:[%s3858] sm:$0xff]
    %v3860 = vld [vmem:[%s3858 + $0x8] sm:$0xff]
    %v3861 = vld [vmem:[%s3858 + $0x10] sm:$0xff]
    %v3862 = vld [vmem:[%s3858 + $0x18] sm:$0xff]
    %v3863 = vld [vmem:[%s3858 + $0x20] sm:$0xff]
    %v3864 = vld [vmem:[%s3858 + $0x28] sm:$0xff]
    %v3865 = vld [vmem:[%s3858 + $0x30] sm:$0xff]
    %v3866 = vld [vmem:[%s3858 + $0x38] sm:$0xff]
    %v3867 = vld [vmem:[%s3858 + $0x40] sm:$0xff]
    %v3868 = vld [vmem:[%s3858 + $0x48] sm:$0xff]
    %v3869 = vld [vmem:[%s3858 + $0x50] sm:$0xff]
    %v3870 = vld [vmem:[%s3858 + $0x58] sm:$0xff]
    %s3871 = scalar_lea.vmem %s39, 16
    %v3872 = vld [vmem:[%s3871] sm:$0xf]
    %v3873 = vld [vmem:[%s3871 + $0x4] sm:$0xf]
    %v3874 = vld [vmem:[%s3871 + $0x8] sm:$0xf]
    %v3875 = vld [vmem:[%s3871 + $0xc] sm:$0xf]
    %s3876 = scalar_lea.vmem [#allocation20], 1
    %v3877 = vld [vmem:[%s3876] sm:$0x1]
    %v3878 = vpack.c.bf16 %v3851, %v3851
    %3880 = vset.pattern.permute.xlu0 0
    %3881 = vperm.xlu0 %3880, %v3859
    %v3882 = vpop.permute.xlu0 %3881
    %3885 = vset.pattern.permute.xlu0 0
    %3886 = vperm.xlu0 %3885, %v3860
    %v3887 = vpop.permute.xlu0 %3886
    %3890 = vset.pattern.permute.xlu0 0
    %3891 = vperm.xlu0 %3890, %v3861
    %v3892 = vpop.permute.xlu0 %3891
    %3895 = vset.pattern.permute.xlu0 0
    %3896 = vperm.xlu0 %3895, %v3862
    %v3897 = vpop.permute.xlu0 %3896
    %3900 = vset.pattern.permute.xlu0 0
    %3901 = vperm.xlu0 %3900, %v3863
    %v3902 = vpop.permute.xlu0 %3901
    %3905 = vset.pattern.permute.xlu0 0
    %3906 = vperm.xlu0 %3905, %v3864
    %v3907 = vpop.permute.xlu0 %3906
    %3910 = vset.pattern.permute.xlu0 0
    %3911 = vperm.xlu0 %3910, %v3865
    %v3912 = vpop.permute.xlu0 %3911
    %3915 = vset.pattern.permute.xlu0 0
    %3916 = vperm.xlu0 %3915, %v3866
    %v3917 = vpop.permute.xlu0 %3916
    %3920 = vset.pattern.permute.xlu0 0
    %3921 = vperm.xlu0 %3920, %v3867
    %v3922 = vpop.permute.xlu0 %3921
    %3925 = vset.pattern.permute.xlu0 0
    %3926 = vperm.xlu0 %3925, %v3868
    %v3927 = vpop.permute.xlu0 %3926
    %3930 = vset.pattern.permute.xlu0 0
    %3931 = vperm.xlu0 %3930, %v3869
    %v3932 = vpop.permute.xlu0 %3931
    %3935 = vset.pattern.permute.xlu0 0
    %3936 = vperm.xlu0 %3935, %v3870
    %v3937 = vpop.permute.xlu0 %3936
    %v3943 = vunpack.c.l.b16 %v3854
    %v3944 = vunpack.c.l.b16 %v3855
    %v3945 = vunpack.c.l.b16 %v3856
    %v3946 = vunpack.c.l.b16 %v3857
    %v3947 = vpack.c.b16 %v3944, %v3943
    %v3948 = vpack.c.b16 %v3946, %v3945
    %3951 = vxpose.xlu0.c.b16.start [1/8] %v3947, 128
    %3952 = vxpose.xlu0.c.b16.cont [2/8] %v3948, 128
    %3953 = vxpose.xlu0.c.b16.cont [3/8] 0, 128
    %3954 = vxpose.xlu0.c.b16.cont [4/8] 0, 128
    %3955 = vxpose.xlu0.c.b16.cont [5/8] 0, 128
    %3956 = vxpose.xlu0.c.b16.cont [6/8] 0, 128
    %3957 = vxpose.xlu0.c.b16.cont [7/8] 0, 128
    %3958 = vxpose.xlu0.c.b16.end [8/8] 0, 128
    %v3959 = vpop.trf.xlu0
    %v3960 = vpop.trf.xlu0
    %v3961 = vpop.trf.xlu0
    %v3962 = vpop.trf.xlu0
    %v3963 = vpop.trf.xlu0
    %v3964 = vpop.trf.xlu0
    %v3965 = vpop.trf.xlu0
    %v3966 = vpop.trf.xlu0
    %v3968 = vsel %vm390, %v3959, 0
    %v3971 = vsel %vm390, %v3960, 0
    %v3974 = vsel %vm390, %v3961, 0
    %v3977 = vsel %vm390, %v3962, 0
    %v3980 = vsel %vm390, %v3963, 0
    %v3983 = vsel %vm390, %v3964, 0
    %v3986 = vsel %vm390, %v3878, 0
    %3988 = vmatprep.subr.bf16.mxu0 0
    %3989 = vmatpush1.bf16.xpose.msra.mxu0 %v3986
    %3990 = vmatprep.subr.bf16.mxu0 0
    %3991 = vmatpush1.bf16.xpose.msra.mxu0 0
    %3992 = vmatprep.subr.bf16.mxu0 0
    %3993 = vmatpush1.bf16.xpose.msra.mxu0 0
    %3994 = vmatprep.subr.bf16.mxu0 0
    %3995 = vmatpush1.bf16.xpose.msra.mxu0 0
    %3996 = vmatprep.subr.bf16.mxu0 0
    %3997 = vmatpush1.bf16.xpose.msra.mxu0 0
    %3998 = vmatprep.subr.bf16.mxu0 0
    %3999 = vmatpush1.bf16.xpose.msra.mxu0 0
    %4000 = vmatprep.subr.bf16.mxu0 0
    %4001 = vmatpush1.bf16.xpose.msra.mxu0 0
    %4002 = vmatprep.subr.bf16.mxu0 0
    %4003 = vmatpush1.bf16.xpose.msra.mxu0 0
    %4004 = vmatprep.subr.bf16.mxu0 0
    %4005 = vmatpush1.bf16.xpose.msra.mxu0 0
    %4006 = vmatprep.subr.bf16.mxu0 0
    %4007 = vmatpush1.bf16.xpose.msra.mxu0 0
    %4008 = vmatprep.subr.bf16.mxu0 0
    %4009 = vmatpush1.bf16.xpose.msra.mxu0 0
    %4010 = vmatprep.subr.bf16.mxu0 0
    %4011 = vmatpush1.bf16.xpose.msra.mxu0 0
    %4012 = vmatprep.subr.bf16.mxu0 0
    %4013 = vmatpush1.bf16.xpose.msra.mxu0 0
    %4014 = vmatprep.subr.bf16.mxu0 0
    %4015 = vmatpush1.bf16.xpose.msra.mxu0 0
    %4016 = vmatprep.subr.bf16.mxu0 0
    %4017 = vmatpush1.bf16.xpose.msra.mxu0 0
    %4018 = vmatprep.subr.bf16.mxu0 0
    %4019 = vmatpush1.bf16.xpose.msra.mxu0 0
    %4020 = vmatprep.mubr.bf16.mxu0 0
    %4021 = vmatmul.mubr.bf16.gmra.mrb[0].mxu0 %v3968
    %v4022 = vpop.f32.mrb[0].mxu0
    %v4023 = vadd.f32 %v3882, %v4022
    %v4024 = vpop.f32.mrb[0].mxu0
    %v4025 = vpop.f32.mrb[0].mxu0
    %v4026 = vadd.f32 %v3887, %v4025
    %v4027 = vpop.f32.mrb[0].mxu0
    %4028 = vmatprep.mubr.bf16.mxu0 0
    %4029 = vmatmul.mubr.bf16.gmra.mrb[0].mxu0 %v3971
    %v4030 = vpop.f32.mrb[0].mxu0
    %v4031 = vadd.f32 %v3892, %v4030
    %v4032 = vpop.f32.mrb[0].mxu0
    %v4033 = vpop.f32.mrb[0].mxu0
    %v4034 = vadd.f32 %v3897, %v4033
    %v4035 = vpop.f32.mrb[0].mxu0
    %4036 = vmatprep.mubr.bf16.mxu0 0
    %4037 = vmatmul.mubr.bf16.gmra.mrb[0].mxu0 %v3974
    %v4038 = vpop.f32.mrb[0].mxu0
    %v4039 = vadd.f32 %v3902, %v4038
    %v4040 = vpop.f32.mrb[0].mxu0
    %v4041 = vpop.f32.mrb[0].mxu0
    %v4042 = vadd.f32 %v3907, %v4041
    %v4043 = vpop.f32.mrb[0].mxu0
    %4044 = vmatprep.mubr.bf16.mxu0 0
    %4045 = vmatmul.mubr.bf16.gmra.mrb[0].mxu0 %v3977
    %v4046 = vpop.f32.mrb[0].mxu0
    %v4047 = vadd.f32 %v3912, %v4046
    %v4048 = vpop.f32.mrb[0].mxu0
    %v4049 = vpop.f32.mrb[0].mxu0
    %v4050 = vadd.f32 %v3917, %v4049
    %v4051 = vpop.f32.mrb[0].mxu0
    %4052 = vmatprep.mubr.bf16.mxu0 0
    %4053 = vmatmul.mubr.bf16.gmra.mrb[0].mxu0 %v3980
    %v4054 = vpop.f32.mrb[0].mxu0
    %v4055 = vadd.f32 %v3922, %v4054
    %v4056 = vpop.f32.mrb[0].mxu0
    %v4057 = vpop.f32.mrb[0].mxu0
    %v4058 = vadd.f32 %v3927, %v4057
    %v4059 = vpop.f32.mrb[0].mxu0
    %4060 = vmatprep.mubr.bf16.mxu0 0
    %4061 = vmatmul.mubr.bf16.gmra.mrb[0].mxu0 %v3983
    %v4062 = vpop.f32.mrb[0].mxu0
    %v4063 = vadd.f32 %v3932, %v4062
    %v4064 = vpop.f32.mrb[0].mxu0
    %v4065 = vpop.f32.mrb[0].mxu0
    %v4066 = vadd.f32 %v3937, %v4065
    %v4067 = vpop.f32.mrb[0].mxu0
    %4068 = vdwg.mxu0
    %v4069 = vpack.c.bf16 %v4023, %v4023
    %v4070 = vpack.c.bf16 %v4039, %v4039
    %4071 = vxpose.xlu0.c.b16.start [1/8] %v4069, 128
    %4072 = vxpose.xlu0.c.b16.cont [2/8] 0, 128
    %4073 = vxpose.xlu0.c.b16.cont [3/8] 0, 128
    %4074 = vxpose.xlu0.c.b16.cont [4/8] 0, 128
    %4075 = vxpose.xlu0.c.b16.cont [5/8] 0, 128
    %4076 = vxpose.xlu0.c.b16.cont [6/8] 0, 128
    %4077 = vxpose.xlu0.c.b16.cont [7/8] 0, 128
    %4078 = vxpose.xlu0.c.b16.end [8/8] 0, 128
    %v4079 = vpop.trf.xlu0
    %v4080 = vpop.trf.xlu0
    %v4081 = vpop.trf.xlu0
    %v4082 = vpop.trf.xlu0
    %v4083 = vpop.trf.xlu0
    %v4084 = vpop.trf.xlu0
    %v4085 = vpop.trf.xlu0
    %v4086 = vpop.trf.xlu0
    %v4088 = vsel %vm628, %v4079, 0
    %v4091 = vsel %vm632, %v4070, 0
    %4093 = vmatprep.subr.bf16.mxu0 0
    %4094 = vmatpush1.bf16.msra.mxu0 %v4091
    %4095 = vmatprep.subr.bf16.mxu0 0
    %4096 = vmatpush1.bf16.msra.mxu0 0
    %4097 = vmatprep.subr.bf16.mxu0 0
    %4098 = vmatpush1.bf16.msra.mxu0 0
    %4099 = vmatprep.subr.bf16.mxu0 0
    %4100 = vmatpush1.bf16.msra.mxu0 0
    %4101 = vmatprep.subr.bf16.mxu0 0
    %4102 = vmatpush1.bf16.msra.mxu0 0
    %4103 = vmatprep.subr.bf16.mxu0 0
    %4104 = vmatpush1.bf16.msra.mxu0 0
    %4105 = vmatprep.subr.bf16.mxu0 0
    %4106 = vmatpush1.bf16.msra.mxu0 0
    %4107 = vmatprep.subr.bf16.mxu0 0
    %4108 = vmatpush1.bf16.msra.mxu0 0
    %4109 = vmatprep.subr.bf16.mxu0 0
    %4110 = vmatpush1.bf16.msra.mxu0 0
    %4111 = vmatprep.subr.bf16.mxu0 0
    %4112 = vmatpush1.bf16.msra.mxu0 0
    %4113 = vmatprep.subr.bf16.mxu0 0
    %4114 = vmatpush1.bf16.msra.mxu0 0
    %4115 = vmatprep.subr.bf16.mxu0 0
    %4116 = vmatpush1.bf16.msra.mxu0 0
    %4117 = vmatprep.subr.bf16.mxu0 0
    %4118 = vmatpush1.bf16.msra.mxu0 0
    %4119 = vmatprep.subr.bf16.mxu0 0
    %4120 = vmatpush1.bf16.msra.mxu0 0
    %4121 = vmatprep.subr.bf16.mxu0 0
    %4122 = vmatpush1.bf16.msra.mxu0 0
    %4123 = vmatprep.subr.bf16.mxu0 0
    %4124 = vmatpush1.bf16.msra.mxu0 0
    %4125 = vmatprep.mubr.bf16.mxu0 0
    %4126 = vmatmul.mubr.bf16.gmra.mrb[0].mxu0 %v4088
    %v4127 = vpop.f32.mrb[0].mxu0
    %v4128 = vadd.f32 0.0, %v4127
    %v4129 = vpop.f32.mrb[0].mxu0
    %v4130 = vpop.f32.mrb[0].mxu0
    %v4131 = vpop.f32.mrb[0].mxu0
    %4132 = vdwg.mxu0
    %v4133 = vmul.f32 %v4128, 0.35355338
    %v4134 = vsel %vm628, %v4133, -inf
    %4135 = vmax.xlane.f32.xlu0 %v4134
    %v4136 = vpop.xlane.xlu0 %4135
    %v4137 = vsub.f32 %v4133, %v4136
    %v4138 = vmul.f32 %v4137, 1.442695
    %v4139 = vpow.pop %v4138
    %v4140 = vsel %vm628, %v4139, 0.0
    %4141 = vadd.xlane.f32.xlu0 %v4140
    %v4142 = vpop.xlane.xlu0 %4141
    %v4143 = vrcp.pop %v4142
    %v4144 = vmul.f32 %v4139, %v4143
    %v4145 = vpack.c.bf16 %v4055, %v4055
    %v4146 = vpack.c.bf16 %v4144, %v4144
    %v4148 = vsel %vm628, %v4145, 0
    %v4151 = vsel %vm628, %v4146, 0
    %4153 = vmatprep.subr.bf16.mxu0 0
    %4154 = vmatpush1.bf16.xpose.msra.mxu0 %v4151
    %4155 = vmatprep.subr.bf16.mxu0 0
    %4156 = vmatpush1.bf16.xpose.msra.mxu0 0
    %4157 = vmatprep.subr.bf16.mxu0 0
    %4158 = vmatpush1.bf16.xpose.msra.mxu0 0
    %4159 = vmatprep.subr.bf16.mxu0 0
    %4160 = vmatpush1.bf16.xpose.msra.mxu0 0
    %4161 = vmatprep.subr.bf16.mxu0 0
    %4162 = vmatpush1.bf16.xpose.msra.mxu0 0
    %4163 = vmatprep.subr.bf16.mxu0 0
    %4164 = vmatpush1.bf16.xpose.msra.mxu0 0
    %4165 = vmatprep.subr.bf16.mxu0 0
    %4166 = vmatpush1.bf16.xpose.msra.mxu0 0
    %4167 = vmatprep.subr.bf16.mxu0 0
    %4168 = vmatpush1.bf16.xpose.msra.mxu0 0
    %4169 = vmatprep.subr.bf16.mxu0 0
    %4170 = vmatpush1.bf16.xpose.msra.mxu0 0
    %4171 = vmatprep.subr.bf16.mxu0 0
    %4172 = vmatpush1.bf16.xpose.msra.mxu0 0
    %4173 = vmatprep.subr.bf16.mxu0 0
    %4174 = vmatpush1.bf16.xpose.msra.mxu0 0
    %4175 = vmatprep.subr.bf16.mxu0 0
    %4176 = vmatpush1.bf16.xpose.msra.mxu0 0
    %4177 = vmatprep.subr.bf16.mxu0 0
    %4178 = vmatpush1.bf16.xpose.msra.mxu0 0
    %4179 = vmatprep.subr.bf16.mxu0 0
    %4180 = vmatpush1.bf16.xpose.msra.mxu0 0
    %4181 = vmatprep.subr.bf16.mxu0 0
    %4182 = vmatpush1.bf16.xpose.msra.mxu0 0
    %4183 = vmatprep.subr.bf16.mxu0 0
    %4184 = vmatpush1.bf16.xpose.msra.mxu0 0
    %4185 = vmatprep.mubr.bf16.mxu0 0
    %4186 = vmatmul.mubr.bf16.gmra.mrb[0].mxu0 %v4148
    %v4187 = vpop.f32.mrb[0].mxu0
    %v4188 = vadd.f32 0.0, %v4187
    %v4189 = vpop.f32.mrb[0].mxu0
    %v4190 = vpop.f32.mrb[0].mxu0
    %v4191 = vpop.f32.mrb[0].mxu0
    %4192 = vdwg.mxu0
    %v4193 = vpack.c.bf16 %v4026, %v4026
    %v4194 = vpack.c.bf16 %v4042, %v4042
    %4195 = vxpose.xlu0.c.b16.start [1/8] %v4193, 128
    %4196 = vxpose.xlu0.c.b16.cont [2/8] 0, 128
    %4197 = vxpose.xlu0.c.b16.cont [3/8] 0, 128
    %4198 = vxpose.xlu0.c.b16.cont [4/8] 0, 128
    %4199 = vxpose.xlu0.c.b16.cont [5/8] 0, 128
    %4200 = vxpose.xlu0.c.b16.cont [6/8] 0, 128
    %4201 = vxpose.xlu0.c.b16.cont [7/8] 0, 128
    %4202 = vxpose.xlu0.c.b16.end [8/8] 0, 128
    %v4203 = vpop.trf.xlu0
    %v4204 = vpop.trf.xlu0
    %v4205 = vpop.trf.xlu0
    %v4206 = vpop.trf.xlu0
    %v4207 = vpop.trf.xlu0
    %v4208 = vpop.trf.xlu0
    %v4209 = vpop.trf.xlu0
    %v4210 = vpop.trf.xlu0
    %v4212 = vsel %vm628, %v4203, 0
    %v4215 = vsel %vm632, %v4194, 0
    %4217 = vmatprep.subr.bf16.mxu0 0
    %4218 = vmatpush1.bf16.msra.mxu0 %v4215
    %4219 = vmatprep.subr.bf16.mxu0 0
    %4220 = vmatpush1.bf16.msra.mxu0 0
    %4221 = vmatprep.subr.bf16.mxu0 0
    %4222 = vmatpush1.bf16.msra.mxu0 0
    %4223 = vmatprep.subr.bf16.mxu0 0
    %4224 = vmatpush1.bf16.msra.mxu0 0
    %4225 = vmatprep.subr.bf16.mxu0 0
    %4226 = vmatpush1.bf16.msra.mxu0 0
    %4227 = vmatprep.subr.bf16.mxu0 0
    %4228 = vmatpush1.bf16.msra.mxu0 0
    %4229 = vmatprep.subr.bf16.mxu0 0
    %4230 = vmatpush1.bf16.msra.mxu0 0
    %4231 = vmatprep.subr.bf16.mxu0 0
    %4232 = vmatpush1.bf16.msra.mxu0 0
    %4233 = vmatprep.subr.bf16.mxu0 0
    %4234 = vmatpush1.bf16.msra.mxu0 0
    %4235 = vmatprep.subr.bf16.mxu0 0
    %4236 = vmatpush1.bf16.msra.mxu0 0
    %4237 = vmatprep.subr.bf16.mxu0 0
    %4238 = vmatpush1.bf16.msra.mxu0 0
    %4239 = vmatprep.subr.bf16.mxu0 0
    %4240 = vmatpush1.bf16.msra.mxu0 0
    %4241 = vmatprep.subr.bf16.mxu0 0
    %4242 = vmatpush1.bf16.msra.mxu0 0
    %4243 = vmatprep.subr.bf16.mxu0 0
    %4244 = vmatpush1.bf16.msra.mxu0 0
    %4245 = vmatprep.subr.bf16.mxu0 0
    %4246 = vmatpush1.bf16.msra.mxu0 0
    %4247 = vmatprep.subr.bf16.mxu0 0
    %4248 = vmatpush1.bf16.msra.mxu0 0
    %4249 = vmatprep.mubr.bf16.mxu0 0
    %4250 = vmatmul.mubr.bf16.gmra.mrb[0].mxu0 %v4212
    %v4251 = vpop.f32.mrb[0].mxu0
    %v4252 = vadd.f32 0.0, %v4251
    %v4253 = vpop.f32.mrb[0].mxu0
    %v4254 = vpop.f32.mrb[0].mxu0
    %v4255 = vpop.f32.mrb[0].mxu0
    %4256 = vdwg.mxu0
    %v4257 = vmul.f32 %v4252, 0.35355338
    %v4258 = vsel %vm628, %v4257, -inf
    %4259 = vmax.xlane.f32.xlu0 %v4258
    %v4260 = vpop.xlane.xlu0 %4259
    %v4261 = vsub.f32 %v4257, %v4260
    %v4262 = vmul.f32 %v4261, 1.442695
    %v4263 = vpow.pop %v4262
    %v4264 = vsel %vm628, %v4263, 0.0
    %4265 = vadd.xlane.f32.xlu0 %v4264
    %v4266 = vpop.xlane.xlu0 %4265
    %v4267 = vrcp.pop %v4266
    %v4268 = vmul.f32 %v4263, %v4267
    %v4269 = vpack.c.bf16 %v4058, %v4058
    %v4270 = vpack.c.bf16 %v4268, %v4268
    %v4272 = vsel %vm628, %v4269, 0
    %v4275 = vsel %vm628, %v4270, 0
    %4277 = vmatprep.subr.bf16.mxu0 0
    %4278 = vmatpush1.bf16.xpose.msra.mxu0 %v4275
    %4279 = vmatprep.subr.bf16.mxu0 0
    %4280 = vmatpush1.bf16.xpose.msra.mxu0 0
    %4281 = vmatprep.subr.bf16.mxu0 0
    %4282 = vmatpush1.bf16.xpose.msra.mxu0 0
    %4283 = vmatprep.subr.bf16.mxu0 0
    %4284 = vmatpush1.bf16.xpose.msra.mxu0 0
    %4285 = vmatprep.subr.bf16.mxu0 0
    %4286 = vmatpush1.bf16.xpose.msra.mxu0 0
    %4287 = vmatprep.subr.bf16.mxu0 0
    %4288 = vmatpush1.bf16.xpose.msra.mxu0 0
    %4289 = vmatprep.subr.bf16.mxu0 0
    %4290 = vmatpush1.bf16.xpose.msra.mxu0 0
    %4291 = vmatprep.subr.bf16.mxu0 0
    %4292 = vmatpush1.bf16.xpose.msra.mxu0 0
    %4293 = vmatprep.subr.bf16.mxu0 0
    %4294 = vmatpush1.bf16.xpose.msra.mxu0 0
    %4295 = vmatprep.subr.bf16.mxu0 0
    %4296 = vmatpush1.bf16.xpose.msra.mxu0 0
    %4297 = vmatprep.subr.bf16.mxu0 0
    %4298 = vmatpush1.bf16.xpose.msra.mxu0 0
    %4299 = vmatprep.subr.bf16.mxu0 0
    %4300 = vmatpush1.bf16.xpose.msra.mxu0 0
    %4301 = vmatprep.subr.bf16.mxu0 0
    %4302 = vmatpush1.bf16.xpose.msra.mxu0 0
    %4303 = vmatprep.subr.bf16.mxu0 0
    %4304 = vmatpush1.bf16.xpose.msra.mxu0 0
    %4305 = vmatprep.subr.bf16.mxu0 0
    %4306 = vmatpush1.bf16.xpose.msra.mxu0 0
    %4307 = vmatprep.subr.bf16.mxu0 0
    %4308 = vmatpush1.bf16.xpose.msra.mxu0 0
    %4309 = vmatprep.mubr.bf16.mxu0 0
    %4310 = vmatmul.mubr.bf16.gmra.mrb[0].mxu0 %v4272
    %v4311 = vpop.f32.mrb[0].mxu0
    %v4312 = vadd.f32 0.0, %v4311
    %v4313 = vpop.f32.mrb[0].mxu0
    %v4314 = vpop.f32.mrb[0].mxu0
    %v4315 = vpop.f32.mrb[0].mxu0
    %4316 = vdwg.mxu0
    %v4317 = vpack.c.bf16 %v4031, %v4031
    %v4318 = vpack.c.bf16 %v4047, %v4047
    %4319 = vxpose.xlu0.c.b16.start [1/8] %v4317, 128
    %4320 = vxpose.xlu0.c.b16.cont [2/8] 0, 128
    %4321 = vxpose.xlu0.c.b16.cont [3/8] 0, 128
    %4322 = vxpose.xlu0.c.b16.cont [4/8] 0, 128
    %4323 = vxpose.xlu0.c.b16.cont [5/8] 0, 128
    %4324 = vxpose.xlu0.c.b16.cont [6/8] 0, 128
    %4325 = vxpose.xlu0.c.b16.cont [7/8] 0, 128
    %4326 = vxpose.xlu0.c.b16.end [8/8] 0, 128
    %v4327 = vpop.trf.xlu0
    %v4328 = vpop.trf.xlu0
    %v4329 = vpop.trf.xlu0
    %v4330 = vpop.trf.xlu0
    %v4331 = vpop.trf.xlu0
    %v4332 = vpop.trf.xlu0
    %v4333 = vpop.trf.xlu0
    %v4334 = vpop.trf.xlu0
    %v4336 = vsel %vm628, %v4327, 0
    %v4339 = vsel %vm632, %v4318, 0
    %4341 = vmatprep.subr.bf16.mxu0 0
    %4342 = vmatpush1.bf16.msra.mxu0 %v4339
    %4343 = vmatprep.subr.bf16.mxu0 0
    %4344 = vmatpush1.bf16.msra.mxu0 0
    %4345 = vmatprep.subr.bf16.mxu0 0
    %4346 = vmatpush1.bf16.msra.mxu0 0
    %4347 = vmatprep.subr.bf16.mxu0 0
    %4348 = vmatpush1.bf16.msra.mxu0 0
    %4349 = vmatprep.subr.bf16.mxu0 0
    %4350 = vmatpush1.bf16.msra.mxu0 0
    %4351 = vmatprep.subr.bf16.mxu0 0
    %4352 = vmatpush1.bf16.msra.mxu0 0
    %4353 = vmatprep.subr.bf16.mxu0 0
    %4354 = vmatpush1.bf16.msra.mxu0 0
    %4355 = vmatprep.subr.bf16.mxu0 0
    %4356 = vmatpush1.bf16.msra.mxu0 0
    %4357 = vmatprep.subr.bf16.mxu0 0
    %4358 = vmatpush1.bf16.msra.mxu0 0
    %4359 = vmatprep.subr.bf16.mxu0 0
    %4360 = vmatpush1.bf16.msra.mxu0 0
    %4361 = vmatprep.subr.bf16.mxu0 0
    %4362 = vmatpush1.bf16.msra.mxu0 0
    %4363 = vmatprep.subr.bf16.mxu0 0
    %4364 = vmatpush1.bf16.msra.mxu0 0
    %4365 = vmatprep.subr.bf16.mxu0 0
    %4366 = vmatpush1.bf16.msra.mxu0 0
    %4367 = vmatprep.subr.bf16.mxu0 0
    %4368 = vmatpush1.bf16.msra.mxu0 0
    %4369 = vmatprep.subr.bf16.mxu0 0
    %4370 = vmatpush1.bf16.msra.mxu0 0
    %4371 = vmatprep.subr.bf16.mxu0 0
    %4372 = vmatpush1.bf16.msra.mxu0 0
    %4373 = vmatprep.mubr.bf16.mxu0 0
    %4374 = vmatmul.mubr.bf16.gmra.mrb[0].mxu0 %v4336
    %v4375 = vpop.f32.mrb[0].mxu0
    %v4376 = vadd.f32 0.0, %v4375
    %v4377 = vpop.f32.mrb[0].mxu0
    %v4378 = vpop.f32.mrb[0].mxu0
    %v4379 = vpop.f32.mrb[0].mxu0
    %4380 = vdwg.mxu0
    %v4381 = vmul.f32 %v4376, 0.35355338
    %v4382 = vsel %vm628, %v4381, -inf
    %4383 = vmax.xlane.f32.xlu0 %v4382
    %v4384 = vpop.xlane.xlu0 %4383
    %v4385 = vsub.f32 %v4381, %v4384
    %v4386 = vmul.f32 %v4385, 1.442695
    %v4387 = vpow.pop %v4386
    %v4388 = vsel %vm628, %v4387, 0.0
    %4389 = vadd.xlane.f32.xlu0 %v4388
    %v4390 = vpop.xlane.xlu0 %4389
    %v4391 = vrcp.pop %v4390
    %v4392 = vmul.f32 %v4387, %v4391
    %v4393 = vpack.c.bf16 %v4063, %v4063
    %v4394 = vpack.c.bf16 %v4392, %v4392
    %v4396 = vsel %vm628, %v4393, 0
    %v4399 = vsel %vm628, %v4394, 0
    %4401 = vmatprep.subr.bf16.mxu0 0
    %4402 = vmatpush1.bf16.xpose.msra.mxu0 %v4399
    %4403 = vmatprep.subr.bf16.mxu0 0
    %4404 = vmatpush1.bf16.xpose.msra.mxu0 0
    %4405 = vmatprep.subr.bf16.mxu0 0
    %4406 = vmatpush1.bf16.xpose.msra.mxu0 0
    %4407 = vmatprep.subr.bf16.mxu0 0
    %4408 = vmatpush1.bf16.xpose.msra.mxu0 0
    %4409 = vmatprep.subr.bf16.mxu0 0
    %4410 = vmatpush1.bf16.xpose.msra.mxu0 0
    %4411 = vmatprep.subr.bf16.mxu0 0
    %4412 = vmatpush1.bf16.xpose.msra.mxu0 0
    %4413 = vmatprep.subr.bf16.mxu0 0
    %4414 = vmatpush1.bf16.xpose.msra.mxu0 0
    %4415 = vmatprep.subr.bf16.mxu0 0
    %4416 = vmatpush1.bf16.xpose.msra.mxu0 0
    %4417 = vmatprep.subr.bf16.mxu0 0
    %4418 = vmatpush1.bf16.xpose.msra.mxu0 0
    %4419 = vmatprep.subr.bf16.mxu0 0
    %4420 = vmatpush1.bf16.xpose.msra.mxu0 0
    %4421 = vmatprep.subr.bf16.mxu0 0
    %4422 = vmatpush1.bf16.xpose.msra.mxu0 0
    %4423 = vmatprep.subr.bf16.mxu0 0
    %4424 = vmatpush1.bf16.xpose.msra.mxu0 0
    %4425 = vmatprep.subr.bf16.mxu0 0
    %4426 = vmatpush1.bf16.xpose.msra.mxu0 0
    %4427 = vmatprep.subr.bf16.mxu0 0
    %4428 = vmatpush1.bf16.xpose.msra.mxu0 0
    %4429 = vmatprep.subr.bf16.mxu0 0
    %4430 = vmatpush1.bf16.xpose.msra.mxu0 0
    %4431 = vmatprep.subr.bf16.mxu0 0
    %4432 = vmatpush1.bf16.xpose.msra.mxu0 0
    %4433 = vmatprep.mubr.bf16.mxu0 0
    %4434 = vmatmul.mubr.bf16.gmra.mrb[0].mxu0 %v4396
    %v4435 = vpop.f32.mrb[0].mxu0
    %v4436 = vadd.f32 0.0, %v4435
    %v4437 = vpop.f32.mrb[0].mxu0
    %v4438 = vpop.f32.mrb[0].mxu0
    %v4439 = vpop.f32.mrb[0].mxu0
    %4440 = vdwg.mxu0
    %v4441 = vpack.c.bf16 %v4034, %v4034
    %v4442 = vpack.c.bf16 %v4050, %v4050
    %4443 = vxpose.xlu0.c.b16.start [1/8] %v4441, 128
    %4444 = vxpose.xlu0.c.b16.cont [2/8] 0, 128
    %4445 = vxpose.xlu0.c.b16.cont [3/8] 0, 128
    %4446 = vxpose.xlu0.c.b16.cont [4/8] 0, 128
    %4447 = vxpose.xlu0.c.b16.cont [5/8] 0, 128
    %4448 = vxpose.xlu0.c.b16.cont [6/8] 0, 128
    %4449 = vxpose.xlu0.c.b16.cont [7/8] 0, 128
    %4450 = vxpose.xlu0.c.b16.end [8/8] 0, 128
    %v4451 = vpop.trf.xlu0
    %v4452 = vpop.trf.xlu0
    %v4453 = vpop.trf.xlu0
    %v4454 = vpop.trf.xlu0
    %v4455 = vpop.trf.xlu0
    %v4456 = vpop.trf.xlu0
    %v4457 = vpop.trf.xlu0
    %v4458 = vpop.trf.xlu0
    %v4460 = vsel %vm628, %v4451, 0
    %v4463 = vsel %vm632, %v4442, 0
    %4465 = vmatprep.subr.bf16.mxu0 0
    %4466 = vmatpush1.bf16.msra.mxu0 %v4463
    %4467 = vmatprep.subr.bf16.mxu0 0
    %4468 = vmatpush1.bf16.msra.mxu0 0
    %4469 = vmatprep.subr.bf16.mxu0 0
    %4470 = vmatpush1.bf16.msra.mxu0 0
    %4471 = vmatprep.subr.bf16.mxu0 0
    %4472 = vmatpush1.bf16.msra.mxu0 0
    %4473 = vmatprep.subr.bf16.mxu0 0
    %4474 = vmatpush1.bf16.msra.mxu0 0
    %4475 = vmatprep.subr.bf16.mxu0 0
    %4476 = vmatpush1.bf16.msra.mxu0 0
    %4477 = vmatprep.subr.bf16.mxu0 0
    %4478 = vmatpush1.bf16.msra.mxu0 0
    %4479 = vmatprep.subr.bf16.mxu0 0
    %4480 = vmatpush1.bf16.msra.mxu0 0
    %4481 = vmatprep.subr.bf16.mxu0 0
    %4482 = vmatpush1.bf16.msra.mxu0 0
    %4483 = vmatprep.subr.bf16.mxu0 0
    %4484 = vmatpush1.bf16.msra.mxu0 0
    %4485 = vmatprep.subr.bf16.mxu0 0
    %4486 = vmatpush1.bf16.msra.mxu0 0
    %4487 = vmatprep.subr.bf16.mxu0 0
    %4488 = vmatpush1.bf16.msra.mxu0 0
    %4489 = vmatprep.subr.bf16.mxu0 0
    %4490 = vmatpush1.bf16.msra.mxu0 0
    %4491 = vmatprep.subr.bf16.mxu0 0
    %4492 = vmatpush1.bf16.msra.mxu0 0
    %4493 = vmatprep.subr.bf16.mxu0 0
    %4494 = vmatpush1.bf16.msra.mxu0 0
    %4495 = vmatprep.subr.bf16.mxu0 0
    %4496 = vmatpush1.bf16.msra.mxu0 0
    %4497 = vmatprep.mubr.bf16.mxu0 0
    %4498 = vmatmul.mubr.bf16.gmra.mrb[0].mxu0 %v4460
    %v4499 = vpop.f32.mrb[0].mxu0
    %v4500 = vadd.f32 0.0, %v4499
    %v4501 = vpop.f32.mrb[0].mxu0
    %v4502 = vpop.f32.mrb[0].mxu0
    %v4503 = vpop.f32.mrb[0].mxu0
    %4504 = vdwg.mxu0
    %v4505 = vmul.f32 %v4500, 0.35355338
    %v4506 = vsel %vm628, %v4505, -inf
    %4507 = vmax.xlane.f32.xlu0 %v4506
    %v4508 = vpop.xlane.xlu0 %4507
    %v4509 = vsub.f32 %v4505, %v4508
    %v4510 = vmul.f32 %v4509, 1.442695
    %v4511 = vpow.pop %v4510
    %v4512 = vsel %vm628, %v4511, 0.0
    %4513 = vadd.xlane.f32.xlu0 %v4512
    %v4514 = vpop.xlane.xlu0 %4513
    %v4515 = vrcp.pop %v4514
    %v4516 = vmul.f32 %v4511, %v4515
    %v4517 = vpack.c.bf16 %v4066, %v4066
    %v4518 = vpack.c.bf16 %v4516, %v4516
    %v4520 = vsel %vm628, %v4517, 0
    %v4523 = vsel %vm628, %v4518, 0
    %4525 = vmatprep.subr.bf16.mxu0 0
    %4526 = vmatpush1.bf16.xpose.msra.mxu0 %v4523
    %4527 = vmatprep.subr.bf16.mxu0 0
    %4528 = vmatpush1.bf16.xpose.msra.mxu0 0
    %4529 = vmatprep.subr.bf16.mxu0 0
    %4530 = vmatpush1.bf16.xpose.msra.mxu0 0
    %4531 = vmatprep.subr.bf16.mxu0 0
    %4532 = vmatpush1.bf16.xpose.msra.mxu0 0
    %4533 = vmatprep.subr.bf16.mxu0 0
    %4534 = vmatpush1.bf16.xpose.msra.mxu0 0
    %4535 = vmatprep.subr.bf16.mxu0 0
    %4536 = vmatpush1.bf16.xpose.msra.mxu0 0
    %4537 = vmatprep.subr.bf16.mxu0 0
    %4538 = vmatpush1.bf16.xpose.msra.mxu0 0
    %4539 = vmatprep.subr.bf16.mxu0 0
    %4540 = vmatpush1.bf16.xpose.msra.mxu0 0
    %4541 = vmatprep.subr.bf16.mxu0 0
    %4542 = vmatpush1.bf16.xpose.msra.mxu0 0
    %4543 = vmatprep.subr.bf16.mxu0 0
    %4544 = vmatpush1.bf16.xpose.msra.mxu0 0
    %4545 = vmatprep.subr.bf16.mxu0 0
    %4546 = vmatpush1.bf16.xpose.msra.mxu0 0
    %4547 = vmatprep.subr.bf16.mxu0 0
    %4548 = vmatpush1.bf16.xpose.msra.mxu0 0
    %4549 = vmatprep.subr.bf16.mxu0 0
    %4550 = vmatpush1.bf16.xpose.msra.mxu0 0
    %4551 = vmatprep.subr.bf16.mxu0 0
    %4552 = vmatpush1.bf16.xpose.msra.mxu0 0
    %4553 = vmatprep.subr.bf16.mxu0 0
    %4554 = vmatpush1.bf16.xpose.msra.mxu0 0
    %4555 = vmatprep.subr.bf16.mxu0 0
    %4556 = vmatpush1.bf16.xpose.msra.mxu0 0
    %4557 = vmatprep.mubr.bf16.mxu0 0
    %4558 = vmatmul.mubr.bf16.gmra.mrb[0].mxu0 %v4520
    %v4559 = vpop.f32.mrb[0].mxu0
    %v4560 = vadd.f32 0.0, %v4559
    %v4561 = vpop.f32.mrb[0].mxu0
    %v4562 = vpop.f32.mrb[0].mxu0
    %v4563 = vpop.f32.mrb[0].mxu0
    %4564 = vdwg.mxu0
    %v4565 = vpack.c.bf16 %v4312, %v4188
    %v4566 = vpack.c.bf16 %v4560, %v4436
    %v4568 = vlaneseq
    %v4569 = vshrl.u32 %v4568, 7
    %v4570 = vsub.s32 0, %v4569
    %v4571 = vrot.slane %v3877, %v4570
    %4573 = vxpose.xlu0.c.b16.start [1/8] %v4565, 128
    %4574 = vxpose.xlu0.c.b16.cont [2/8] %v4566, 128
    %4575 = vxpose.xlu0.c.b16.cont [3/8] 0, 128
    %4576 = vxpose.xlu0.c.b16.cont [4/8] 0, 128
    %4577 = vxpose.xlu0.c.b16.cont [5/8] 0, 128
    %4578 = vxpose.xlu0.c.b16.cont [6/8] 0, 128
    %4579 = vxpose.xlu0.c.b16.cont [7/8] 0, 128
    %4580 = vxpose.xlu0.c.b16.end [8/8] 0, 128
    %v4581 = vpop.trf.xlu0
    %v4582 = vpop.trf.xlu0
    %v4583 = vpop.trf.xlu0
    %v4584 = vpop.trf.xlu0
    %v4585 = vpop.trf.xlu0
    %v4586 = vpop.trf.xlu0
    %v4587 = vpop.trf.xlu0
    %v4588 = vpop.trf.xlu0
    %v4593 = vunpack.c.l.b16 %v3872
    %v4594 = vunpack.c.l.b16 %v3873
    %v4595 = vunpack.c.l.b16 %v3874
    %v4596 = vunpack.c.l.b16 %v3875
    %v4597 = vpack.c.b16 %v4594, %v4593
    %v4598 = vpack.c.b16 %v4596, %v4595
    %v4602 = vsel %vm390, %v4581, 0
    %4604 = vmatprep.subr.bf16.mxu0 0
    %4605 = vmatpush1.bf16.msra.mxu0 %v4597
    %4606 = vmatprep.subr.bf16.mxu0 0
    %4607 = vmatpush1.bf16.msra.mxu0 %v4598
    %4608 = vmatprep.subr.bf16.mxu0 0
    %4609 = vmatpush1.bf16.msra.mxu0 0
    %4610 = vmatprep.subr.bf16.mxu0 0
    %4611 = vmatpush1.bf16.msra.mxu0 0
    %4612 = vmatprep.subr.bf16.mxu0 0
    %4613 = vmatpush1.bf16.msra.mxu0 0
    %4614 = vmatprep.subr.bf16.mxu0 0
    %4615 = vmatpush1.bf16.msra.mxu0 0
    %4616 = vmatprep.subr.bf16.mxu0 0
    %4617 = vmatpush1.bf16.msra.mxu0 0
    %4618 = vmatprep.subr.bf16.mxu0 0
    %4619 = vmatpush1.bf16.msra.mxu0 0
    %4620 = vmatprep.subr.bf16.mxu0 0
    %4621 = vmatpush1.bf16.msra.mxu0 0
    %4622 = vmatprep.subr.bf16.mxu0 0
    %4623 = vmatpush1.bf16.msra.mxu0 0
    %4624 = vmatprep.subr.bf16.mxu0 0
    %4625 = vmatpush1.bf16.msra.mxu0 0
    %4626 = vmatprep.subr.bf16.mxu0 0
    %4627 = vmatpush1.bf16.msra.mxu0 0
    %4628 = vmatprep.subr.bf16.mxu0 0
    %4629 = vmatpush1.bf16.msra.mxu0 0
    %4630 = vmatprep.subr.bf16.mxu0 0
    %4631 = vmatpush1.bf16.msra.mxu0 0
    %4632 = vmatprep.subr.bf16.mxu0 0
    %4633 = vmatpush1.bf16.msra.mxu0 0
    %4634 = vmatprep.subr.bf16.mxu0 0
    %4635 = vmatpush1.bf16.msra.mxu0 0
    %4636 = vmatprep.mubr.bf16.mxu0 0
    %4637 = vmatmul.mubr.bf16.gmra.mrb[0].mxu0 %v4602
    %v4638 = vpop.f32.mrb[0].mxu0
    %v4639 = vadd.f32 %v4571, %v4638
    %v4640 = vpop.f32.mrb[0].mxu0
    %v4641 = vpop.f32.mrb[0].mxu0
    %v4642 = vpop.f32.mrb[0].mxu0
    %4643 = vdwg.mxu0
    %v4644 = vpack.c.bf16 %v3852, %v3852
    %v4646 = vsel %vm390, %v4644, 0
    %4648 = vmatprep.subr.bf16.mxu0 0
    %4649 = vmatpush1.bf16.xpose.msra.mxu0 %v4646
    %4650 = vmatprep.subr.bf16.mxu0 0
    %4651 = vmatpush1.bf16.xpose.msra.mxu0 0
    %4652 = vmatprep.subr.bf16.mxu0 0
    %4653 = vmatpush1.bf16.xpose.msra.mxu0 0
    %4654 = vmatprep.subr.bf16.mxu0 0
    %4655 = vmatpush1.bf16.xpose.msra.mxu0 0
    %4656 = vmatprep.subr.bf16.mxu0 0
    %4657 = vmatpush1.bf16.xpose.msra.mxu0 0
    %4658 = vmatprep.subr.bf16.mxu0 0
    %4659 = vmatpush1.bf16.xpose.msra.mxu0 0
    %4660 = vmatprep.subr.bf16.mxu0 0
    %4661 = vmatpush1.bf16.xpose.msra.mxu0 0
    %4662 = vmatprep.subr.bf16.mxu0 0
    %4663 = vmatpush1.bf16.xpose.msra.mxu0 0
    %4664 = vmatprep.subr.bf16.mxu0 0
    %4665 = vmatpush1.bf16.xpose.msra.mxu0 0
    %4666 = vmatprep.subr.bf16.mxu0 0
    %4667 = vmatpush1.bf16.xpose.msra.mxu0 0
    %4668 = vmatprep.subr.bf16.mxu0 0
    %4669 = vmatpush1.bf16.xpose.msra.mxu0 0
    %4670 = vmatprep.subr.bf16.mxu0 0
    %4671 = vmatpush1.bf16.xpose.msra.mxu0 0
    %4672 = vmatprep.subr.bf16.mxu0 0
    %4673 = vmatpush1.bf16.xpose.msra.mxu0 0
    %4674 = vmatprep.subr.bf16.mxu0 0
    %4675 = vmatpush1.bf16.xpose.msra.mxu0 0
    %4676 = vmatprep.subr.bf16.mxu0 0
    %4677 = vmatpush1.bf16.xpose.msra.mxu0 0
    %4678 = vmatprep.subr.bf16.mxu0 0
    %4679 = vmatpush1.bf16.xpose.msra.mxu0 0
    %4680 = vmatprep.mubr.bf16.mxu0 0
    %4681 = vmatmul.mubr.bf16.gmra.mrb[0].mxu0 %v3968
    %v4682 = vpop.f32.mrb[0].mxu0
    %v4683 = vadd.f32 %v3882, %v4682
    %v4684 = vpop.f32.mrb[0].mxu0
    %v4685 = vpop.f32.mrb[0].mxu0
    %v4686 = vadd.f32 %v3887, %v4685
    %v4687 = vpop.f32.mrb[0].mxu0
    %4688 = vmatprep.mubr.bf16.mxu0 0
    %4689 = vmatmul.mubr.bf16.gmra.mrb[0].mxu0 %v3971
    %v4690 = vpop.f32.mrb[0].mxu0
    %v4691 = vadd.f32 %v3892, %v4690
    %v4692 = vpop.f32.mrb[0].mxu0
    %v4693 = vpop.f32.mrb[0].mxu0
    %v4694 = vadd.f32 %v3897, %v4693
    %v4695 = vpop.f32.mrb[0].mxu0
    %4696 = vmatprep.mubr.bf16.mxu0 0
    %4697 = vmatmul.mubr.bf16.gmra.mrb[0].mxu0 %v3974
    %v4698 = vpop.f32.mrb[0].mxu0
    %v4699 = vadd.f32 %v3902, %v4698
    %v4700 = vpop.f32.mrb[0].mxu0
    %v4701 = vpop.f32.mrb[0].mxu0
    %v4702 = vadd.f32 %v3907, %v4701
    %v4703 = vpop.f32.mrb[0].mxu0
    %4704 = vmatprep.mubr.bf16.mxu0 0
    %4705 = vmatmul.mubr.bf16.gmra.mrb[0].mxu0 %v3977
    %v4706 = vpop.f32.mrb[0].mxu0
    %v4707 = vadd.f32 %v3912, %v4706
    %v4708 = vpop.f32.mrb[0].mxu0
    %v4709 = vpop.f32.mrb[0].mxu0
    %v4710 = vadd.f32 %v3917, %v4709
    %v4711 = vpop.f32.mrb[0].mxu0
    %4712 = vmatprep.mubr.bf16.mxu0 0
    %4713 = vmatmul.mubr.bf16.gmra.mrb[0].mxu0 %v3980
    %v4714 = vpop.f32.mrb[0].mxu0
    %v4715 = vadd.f32 %v3922, %v4714
    %v4716 = vpop.f32.mrb[0].mxu0
    %v4717 = vpop.f32.mrb[0].mxu0
    %v4718 = vadd.f32 %v3927, %v4717
    %v4719 = vpop.f32.mrb[0].mxu0
    %4720 = vmatprep.mubr.bf16.mxu0 0
    %4721 = vmatmul.mubr.bf16.gmra.mrb[0].mxu0 %v3983
    %v4722 = vpop.f32.mrb[0].mxu0
    %v4723 = vadd.f32 %v3932, %v4722
    %v4724 = vpop.f32.mrb[0].mxu0
    %v4725 = vpop.f32.mrb[0].mxu0
    %v4726 = vadd.f32 %v3937, %v4725
    %v4727 = vpop.f32.mrb[0].mxu0
    %4728 = vdwg.mxu0
    %v4729 = vpack.c.bf16 %v4683, %v4683
    %v4730 = vpack.c.bf16 %v4699, %v4699
    %4731 = vxpose.xlu0.c.b16.start [1/8] %v4729, 128
    %4732 = vxpose.xlu0.c.b16.cont [2/8] 0, 128
    %4733 = vxpose.xlu0.c.b16.cont [3/8] 0, 128
    %4734 = vxpose.xlu0.c.b16.cont [4/8] 0, 128
    %4735 = vxpose.xlu0.c.b16.cont [5/8] 0, 128
    %4736 = vxpose.xlu0.c.b16.cont [6/8] 0, 128
    %4737 = vxpose.xlu0.c.b16.cont [7/8] 0, 128
    %4738 = vxpose.xlu0.c.b16.end [8/8] 0, 128
    %v4739 = vpop.trf.xlu0
    %v4740 = vpop.trf.xlu0
    %v4741 = vpop.trf.xlu0
    %v4742 = vpop.trf.xlu0
    %v4743 = vpop.trf.xlu0
    %v4744 = vpop.trf.xlu0
    %v4745 = vpop.trf.xlu0
    %v4746 = vpop.trf.xlu0
    %v4748 = vsel %vm628, %v4739, 0
    %v4751 = vsel %vm632, %v4730, 0
    %4753 = vmatprep.subr.bf16.mxu0 0
    %4754 = vmatpush1.bf16.msra.mxu0 %v4751
    %4755 = vmatprep.subr.bf16.mxu0 0
    %4756 = vmatpush1.bf16.msra.mxu0 0
    %4757 = vmatprep.subr.bf16.mxu0 0
    %4758 = vmatpush1.bf16.msra.mxu0 0
    %4759 = vmatprep.subr.bf16.mxu0 0
    %4760 = vmatpush1.bf16.msra.mxu0 0
    %4761 = vmatprep.subr.bf16.mxu0 0
    %4762 = vmatpush1.bf16.msra.mxu0 0
    %4763 = vmatprep.subr.bf16.mxu0 0
    %4764 = vmatpush1.bf16.msra.mxu0 0
    %4765 = vmatprep.subr.bf16.mxu0 0
    %4766 = vmatpush1.bf16.msra.mxu0 0
    %4767 = vmatprep.subr.bf16.mxu0 0
    %4768 = vmatpush1.bf16.msra.mxu0 0
    %4769 = vmatprep.subr.bf16.mxu0 0
    %4770 = vmatpush1.bf16.msra.mxu0 0
    %4771 = vmatprep.subr.bf16.mxu0 0
    %4772 = vmatpush1.bf16.msra.mxu0 0
    %4773 = vmatprep.subr.bf16.mxu0 0
    %4774 = vmatpush1.bf16.msra.mxu0 0
    %4775 = vmatprep.subr.bf16.mxu0 0
    %4776 = vmatpush1.bf16.msra.mxu0 0
    %4777 = vmatprep.subr.bf16.mxu0 0
    %4778 = vmatpush1.bf16.msra.mxu0 0
    %4779 = vmatprep.subr.bf16.mxu0 0
    %4780 = vmatpush1.bf16.msra.mxu0 0
    %4781 = vmatprep.subr.bf16.mxu0 0
    %4782 = vmatpush1.bf16.msra.mxu0 0
    %4783 = vmatprep.subr.bf16.mxu0 0
    %4784 = vmatpush1.bf16.msra.mxu0 0
    %4785 = vmatprep.mubr.bf16.mxu0 0
    %4786 = vmatmul.mubr.bf16.gmra.mrb[0].mxu0 %v4748
    %v4787 = vpop.f32.mrb[0].mxu0
    %v4788 = vadd.f32 0.0, %v4787
    %v4789 = vpop.f32.mrb[0].mxu0
    %v4790 = vpop.f32.mrb[0].mxu0
    %v4791 = vpop.f32.mrb[0].mxu0
    %4792 = vdwg.mxu0
    %v4793 = vmul.f32 %v4788, 0.35355338
    %v4794 = vsel %vm628, %v4793, -inf
    %4795 = vmax.xlane.f32.xlu0 %v4794
    %v4796 = vpop.xlane.xlu0 %4795
    %v4797 = vsub.f32 %v4793, %v4796
    %v4798 = vmul.f32 %v4797, 1.442695
    %v4799 = vpow.pop %v4798
    %v4800 = vsel %vm628, %v4799, 0.0
    %4801 = vadd.xlane.f32.xlu0 %v4800
    %v4802 = vpop.xlane.xlu0 %4801
    %v4803 = vrcp.pop %v4802
    %v4804 = vmul.f32 %v4799, %v4803
    %v4805 = vpack.c.bf16 %v4715, %v4715
    %v4806 = vpack.c.bf16 %v4804, %v4804
    %v4808 = vsel %vm628, %v4805, 0
    %v4811 = vsel %vm628, %v4806, 0
    %4813 = vmatprep.subr.bf16.mxu0 0
    %4814 = vmatpush1.bf16.xpose.msra.mxu0 %v4811
    %4815 = vmatprep.subr.bf16.mxu0 0
    %4816 = vmatpush1.bf16.xpose.msra.mxu0 0
    %4817 = vmatprep.subr.bf16.mxu0 0
    %4818 = vmatpush1.bf16.xpose.msra.mxu0 0
    %4819 = vmatprep.subr.bf16.mxu0 0
    %4820 = vmatpush1.bf16.xpose.msra.mxu0 0
    %4821 = vmatprep.subr.bf16.mxu0 0
    %4822 = vmatpush1.bf16.xpose.msra.mxu0 0
    %4823 = vmatprep.subr.bf16.mxu0 0
    %4824 = vmatpush1.bf16.xpose.msra.mxu0 0
    %4825 = vmatprep.subr.bf16.mxu0 0
    %4826 = vmatpush1.bf16.xpose.msra.mxu0 0
    %4827 = vmatprep.subr.bf16.mxu0 0
    %4828 = vmatpush1.bf16.xpose.msra.mxu0 0
    %4829 = vmatprep.subr.bf16.mxu0 0
    %4830 = vmatpush1.bf16.xpose.msra.mxu0 0
    %4831 = vmatprep.subr.bf16.mxu0 0
    %4832 = vmatpush1.bf16.xpose.msra.mxu0 0
    %4833 = vmatprep.subr.bf16.mxu0 0
    %4834 = vmatpush1.bf16.xpose.msra.mxu0 0
    %4835 = vmatprep.subr.bf16.mxu0 0
    %4836 = vmatpush1.bf16.xpose.msra.mxu0 0
    %4837 = vmatprep.subr.bf16.mxu0 0
    %4838 = vmatpush1.bf16.xpose.msra.mxu0 0
    %4839 = vmatprep.subr.bf16.mxu0 0
    %4840 = vmatpush1.bf16.xpose.msra.mxu0 0
    %4841 = vmatprep.subr.bf16.mxu0 0
    %4842 = vmatpush1.bf16.xpose.msra.mxu0 0
    %4843 = vmatprep.subr.bf16.mxu0 0
    %4844 = vmatpush1.bf16.xpose.msra.mxu0 0
    %4845 = vmatprep.mubr.bf16.mxu0 0
    %4846 = vmatmul.mubr.bf16.gmra.mrb[0].mxu0 %v4808
    %v4847 = vpop.f32.mrb[0].mxu0
    %v4848 = vadd.f32 0.0, %v4847
    %v4849 = vpop.f32.mrb[0].mxu0
    %v4850 = vpop.f32.mrb[0].mxu0
    %v4851 = vpop.f32.mrb[0].mxu0
    %4852 = vdwg.mxu0
    %v4853 = vpack.c.bf16 %v4686, %v4686
    %v4854 = vpack.c.bf16 %v4702, %v4702
    %4855 = vxpose.xlu0.c.b16.start [1/8] %v4853, 128
    %4856 = vxpose.xlu0.c.b16.cont [2/8] 0, 128
    %4857 = vxpose.xlu0.c.b16.cont [3/8] 0, 128
    %4858 = vxpose.xlu0.c.b16.cont [4/8] 0, 128
    %4859 = vxpose.xlu0.c.b16.cont [5/8] 0, 128
    %4860 = vxpose.xlu0.c.b16.cont [6/8] 0, 128
    %4861 = vxpose.xlu0.c.b16.cont [7/8] 0, 128
    %4862 = vxpose.xlu0.c.b16.end [8/8] 0, 128
    %v4863 = vpop.trf.xlu0
    %v4864 = vpop.trf.xlu0
    %v4865 = vpop.trf.xlu0
    %v4866 = vpop.trf.xlu0
    %v4867 = vpop.trf.xlu0
    %v4868 = vpop.trf.xlu0
    %v4869 = vpop.trf.xlu0
    %v4870 = vpop.trf.xlu0
    %v4872 = vsel %vm628, %v4863, 0
    %v4875 = vsel %vm632, %v4854, 0
    %4877 = vmatprep.subr.bf16.mxu0 0
    %4878 = vmatpush1.bf16.msra.mxu0 %v4875
    %4879 = vmatprep.subr.bf16.mxu0 0
    %4880 = vmatpush1.bf16.msra.mxu0 0
    %4881 = vmatprep.subr.bf16.mxu0 0
    %4882 = vmatpush1.bf16.msra.mxu0 0
    %4883 = vmatprep.subr.bf16.mxu0 0
    %4884 = vmatpush1.bf16.msra.mxu0 0
    %4885 = vmatprep.subr.bf16.mxu0 0
    %4886 = vmatpush1.bf16.msra.mxu0 0
    %4887 = vmatprep.subr.bf16.mxu0 0
    %4888 = vmatpush1.bf16.msra.mxu0 0
    %4889 = vmatprep.subr.bf16.mxu0 0
    %4890 = vmatpush1.bf16.msra.mxu0 0
    %4891 = vmatprep.subr.bf16.mxu0 0
    %4892 = vmatpush1.bf16.msra.mxu0 0
    %4893 = vmatprep.subr.bf16.mxu0 0
    %4894 = vmatpush1.bf16.msra.mxu0 0
    %4895 = vmatprep.subr.bf16.mxu0 0
    %4896 = vmatpush1.bf16.msra.mxu0 0
    %4897 = vmatprep.subr.bf16.mxu0 0
    %4898 = vmatpush1.bf16.msra.mxu0 0
    %4899 = vmatprep.subr.bf16.mxu0 0
    %4900 = vmatpush1.bf16.msra.mxu0 0
    %4901 = vmatprep.subr.bf16.mxu0 0
    %4902 = vmatpush1.bf16.msra.mxu0 0
    %4903 = vmatprep.subr.bf16.mxu0 0
    %4904 = vmatpush1.bf16.msra.mxu0 0
    %4905 = vmatprep.subr.bf16.mxu0 0
    %4906 = vmatpush1.bf16.msra.mxu0 0
    %4907 = vmatprep.subr.bf16.mxu0 0
    %4908 = vmatpush1.bf16.msra.mxu0 0
    %4909 = vmatprep.mubr.bf16.mxu0 0
    %4910 = vmatmul.mubr.bf16.gmra.mrb[0].mxu0 %v4872
    %v4911 = vpop.f32.mrb[0].mxu0
    %v4912 = vadd.f32 0.0, %v4911
    %v4913 = vpop.f32.mrb[0].mxu0
    %v4914 = vpop.f32.mrb[0].mxu0
    %v4915 = vpop.f32.mrb[0].mxu0
    %4916 = vdwg.mxu0
    %v4917 = vmul.f32 %v4912, 0.35355338
    %v4918 = vsel %vm628, %v4917, -inf
    %4919 = vmax.xlane.f32.xlu0 %v4918
    %v4920 = vpop.xlane.xlu0 %4919
    %v4921 = vsub.f32 %v4917, %v4920
    %v4922 = vmul.f32 %v4921, 1.442695
    %v4923 = vpow.pop %v4922
    %v4924 = vsel %vm628, %v4923, 0.0
    %4925 = vadd.xlane.f32.xlu0 %v4924
    %v4926 = vpop.xlane.xlu0 %4925
    %v4927 = vrcp.pop %v4926
    %v4928 = vmul.f32 %v4923, %v4927
    %v4929 = vpack.c.bf16 %v4718, %v4718
    %v4930 = vpack.c.bf16 %v4928, %v4928
    %v4932 = vsel %vm628, %v4929, 0
    %v4935 = vsel %vm628, %v4930, 0
    %4937 = vmatprep.subr.bf16.mxu0 0
    %4938 = vmatpush1.bf16.xpose.msra.mxu0 %v4935
    %4939 = vmatprep.subr.bf16.mxu0 0
    %4940 = vmatpush1.bf16.xpose.msra.mxu0 0
    %4941 = vmatprep.subr.bf16.mxu0 0
    %4942 = vmatpush1.bf16.xpose.msra.mxu0 0
    %4943 = vmatprep.subr.bf16.mxu0 0
    %4944 = vmatpush1.bf16.xpose.msra.mxu0 0
    %4945 = vmatprep.subr.bf16.mxu0 0
    %4946 = vmatpush1.bf16.xpose.msra.mxu0 0
    %4947 = vmatprep.subr.bf16.mxu0 0
    %4948 = vmatpush1.bf16.xpose.msra.mxu0 0
    %4949 = vmatprep.subr.bf16.mxu0 0
    %4950 = vmatpush1.bf16.xpose.msra.mxu0 0
    %4951 = vmatprep.subr.bf16.mxu0 0
    %4952 = vmatpush1.bf16.xpose.msra.mxu0 0
    %4953 = vmatprep.subr.bf16.mxu0 0
    %4954 = vmatpush1.bf16.xpose.msra.mxu0 0
    %4955 = vmatprep.subr.bf16.mxu0 0
    %4956 = vmatpush1.bf16.xpose.msra.mxu0 0
    %4957 = vmatprep.subr.bf16.mxu0 0
    %4958 = vmatpush1.bf16.xpose.msra.mxu0 0
    %4959 = vmatprep.subr.bf16.mxu0 0
    %4960 = vmatpush1.bf16.xpose.msra.mxu0 0
    %4961 = vmatprep.subr.bf16.mxu0 0
    %4962 = vmatpush1.bf16.xpose.msra.mxu0 0
    %4963 = vmatprep.subr.bf16.mxu0 0
    %4964 = vmatpush1.bf16.xpose.msra.mxu0 0
    %4965 = vmatprep.subr.bf16.mxu0 0
    %4966 = vmatpush1.bf16.xpose.msra.mxu0 0
    %4967 = vmatprep.subr.bf16.mxu0 0
    %4968 = vmatpush1.bf16.xpose.msra.mxu0 0
    %4969 = vmatprep.mubr.bf16.mxu0 0
    %4970 = vmatmul.mubr.bf16.gmra.mrb[0].mxu0 %v4932
    %v4971 = vpop.f32.mrb[0].mxu0
    %v4972 = vadd.f32 0.0, %v4971
    %v4973 = vpop.f32.mrb[0].mxu0
    %v4974 = vpop.f32.mrb[0].mxu0
    %v4975 = vpop.f32.mrb[0].mxu0
    %4976 = vdwg.mxu0
    %v4977 = vpack.c.bf16 %v4691, %v4691
    %v4978 = vpack.c.bf16 %v4707, %v4707
    %4979 = vxpose.xlu0.c.b16.start [1/8] %v4977, 128
    %4980 = vxpose.xlu0.c.b16.cont [2/8] 0, 128
    %4981 = vxpose.xlu0.c.b16.cont [3/8] 0, 128
    %4982 = vxpose.xlu0.c.b16.cont [4/8] 0, 128
    %4983 = vxpose.xlu0.c.b16.cont [5/8] 0, 128
    %4984 = vxpose.xlu0.c.b16.cont [6/8] 0, 128
    %4985 = vxpose.xlu0.c.b16.cont [7/8] 0, 128
    %4986 = vxpose.xlu0.c.b16.end [8/8] 0, 128
    %v4987 = vpop.trf.xlu0
    %v4988 = vpop.trf.xlu0
    %v4989 = vpop.trf.xlu0
    %v4990 = vpop.trf.xlu0
    %v4991 = vpop.trf.xlu0
    %v4992 = vpop.trf.xlu0
    %v4993 = vpop.trf.xlu0
    %v4994 = vpop.trf.xlu0
    %v4996 = vsel %vm628, %v4987, 0
    %v4999 = vsel %vm632, %v4978, 0
    %5001 = vmatprep.subr.bf16.mxu0 0
    %5002 = vmatpush1.bf16.msra.mxu0 %v4999
    %5003 = vmatprep.subr.bf16.mxu0 0
    %5004 = vmatpush1.bf16.msra.mxu0 0
    %5005 = vmatprep.subr.bf16.mxu0 0
    %5006 = vmatpush1.bf16.msra.mxu0 0
    %5007 = vmatprep.subr.bf16.mxu0 0
    %5008 = vmatpush1.bf16.msra.mxu0 0
    %5009 = vmatprep.subr.bf16.mxu0 0
    %5010 = vmatpush1.bf16.msra.mxu0 0
    %5011 = vmatprep.subr.bf16.mxu0 0
    %5012 = vmatpush1.bf16.msra.mxu0 0
    %5013 = vmatprep.subr.bf16.mxu0 0
    %5014 = vmatpush1.bf16.msra.mxu0 0
    %5015 = vmatprep.subr.bf16.mxu0 0
    %5016 = vmatpush1.bf16.msra.mxu0 0
    %5017 = vmatprep.subr.bf16.mxu0 0
    %5018 = vmatpush1.bf16.msra.mxu0 0
    %5019 = vmatprep.subr.bf16.mxu0 0
    %5020 = vmatpush1.bf16.msra.mxu0 0
    %5021 = vmatprep.subr.bf16.mxu0 0
    %5022 = vmatpush1.bf16.msra.mxu0 0
    %5023 = vmatprep.subr.bf16.mxu0 0
    %5024 = vmatpush1.bf16.msra.mxu0 0
    %5025 = vmatprep.subr.bf16.mxu0 0
    %5026 = vmatpush1.bf16.msra.mxu0 0
    %5027 = vmatprep.subr.bf16.mxu0 0
    %5028 = vmatpush1.bf16.msra.mxu0 0
    %5029 = vmatprep.subr.bf16.mxu0 0
    %5030 = vmatpush1.bf16.msra.mxu0 0
    %5031 = vmatprep.subr.bf16.mxu0 0
    %5032 = vmatpush1.bf16.msra.mxu0 0
    %5033 = vmatprep.mubr.bf16.mxu0 0
    %5034 = vmatmul.mubr.bf16.gmra.mrb[0].mxu0 %v4996
    %v5035 = vpop.f32.mrb[0].mxu0
    %v5036 = vadd.f32 0.0, %v5035
    %v5037 = vpop.f32.mrb[0].mxu0
    %v5038 = vpop.f32.mrb[0].mxu0
    %v5039 = vpop.f32.mrb[0].mxu0
    %5040 = vdwg.mxu0
    %v5041 = vmul.f32 %v5036, 0.35355338
    %v5042 = vsel %vm628, %v5041, -inf
    %5043 = vmax.xlane.f32.xlu0 %v5042
    %v5044 = vpop.xlane.xlu0 %5043
    %v5045 = vsub.f32 %v5041, %v5044
    %v5046 = vmul.f32 %v5045, 1.442695
    %v5047 = vpow.pop %v5046
    %v5048 = vsel %vm628, %v5047, 0.0
    %5049 = vadd.xlane.f32.xlu0 %v5048
    %v5050 = vpop.xlane.xlu0 %5049
    %v5051 = vrcp.pop %v5050
    %v5052 = vmul.f32 %v5047, %v5051
    %v5053 = vpack.c.bf16 %v4723, %v4723
    %v5054 = vpack.c.bf16 %v5052, %v5052
    %v5056 = vsel %vm628, %v5053, 0
    %v5059 = vsel %vm628, %v5054, 0
    %5061 = vmatprep.subr.bf16.mxu0 0
    %5062 = vmatpush1.bf16.xpose.msra.mxu0 %v5059
    %5063 = vmatprep.subr.bf16.mxu0 0
    %5064 = vmatpush1.bf16.xpose.msra.mxu0 0
    %5065 = vmatprep.subr.bf16.mxu0 0
    %5066 = vmatpush1.bf16.xpose.msra.mxu0 0
    %5067 = vmatprep.subr.bf16.mxu0 0
    %5068 = vmatpush1.bf16.xpose.msra.mxu0 0
    %5069 = vmatprep.subr.bf16.mxu0 0
    %5070 = vmatpush1.bf16.xpose.msra.mxu0 0
    %5071 = vmatprep.subr.bf16.mxu0 0
    %5072 = vmatpush1.bf16.xpose.msra.mxu0 0
    %5073 = vmatprep.subr.bf16.mxu0 0
    %5074 = vmatpush1.bf16.xpose.msra.mxu0 0
    %5075 = vmatprep.subr.bf16.mxu0 0
    %5076 = vmatpush1.bf16.xpose.msra.mxu0 0
    %5077 = vmatprep.subr.bf16.mxu0 0
    %5078 = vmatpush1.bf16.xpose.msra.mxu0 0
    %5079 = vmatprep.subr.bf16.mxu0 0
    %5080 = vmatpush1.bf16.xpose.msra.mxu0 0
    %5081 = vmatprep.subr.bf16.mxu0 0
    %5082 = vmatpush1.bf16.xpose.msra.mxu0 0
    %5083 = vmatprep.subr.bf16.mxu0 0
    %5084 = vmatpush1.bf16.xpose.msra.mxu0 0
    %5085 = vmatprep.subr.bf16.mxu0 0
    %5086 = vmatpush1.bf16.xpose.msra.mxu0 0
    %5087 = vmatprep.subr.bf16.mxu0 0
    %5088 = vmatpush1.bf16.xpose.msra.mxu0 0
    %5089 = vmatprep.subr.bf16.mxu0 0
    %5090 = vmatpush1.bf16.xpose.msra.mxu0 0
    %5091 = vmatprep.subr.bf16.mxu0 0
    %5092 = vmatpush1.bf16.xpose.msra.mxu0 0
    %5093 = vmatprep.mubr.bf16.mxu0 0
    %5094 = vmatmul.mubr.bf16.gmra.mrb[0].mxu0 %v5056
    %v5095 = vpop.f32.mrb[0].mxu0
    %v5096 = vadd.f32 0.0, %v5095
    %v5097 = vpop.f32.mrb[0].mxu0
    %v5098 = vpop.f32.mrb[0].mxu0
    %v5099 = vpop.f32.mrb[0].mxu0
    %5100 = vdwg.mxu0
    %v5101 = vpack.c.bf16 %v4694, %v4694
    %v5102 = vpack.c.bf16 %v4710, %v4710
    %5103 = vxpose.xlu0.c.b16.start [1/8] %v5101, 128
    %5104 = vxpose.xlu0.c.b16.cont [2/8] 0, 128
    %5105 = vxpose.xlu0.c.b16.cont [3/8] 0, 128
    %5106 = vxpose.xlu0.c.b16.cont [4/8] 0, 128
    %5107 = vxpose.xlu0.c.b16.cont [5/8] 0, 128
    %5108 = vxpose.xlu0.c.b16.cont [6/8] 0, 128
    %5109 = vxpose.xlu0.c.b16.cont [7/8] 0, 128
    %5110 = vxpose.xlu0.c.b16.end [8/8] 0, 128
    %v5111 = vpop.trf.xlu0
    %v5112 = vpop.trf.xlu0
    %v5113 = vpop.trf.xlu0
    %v5114 = vpop.trf.xlu0
    %v5115 = vpop.trf.xlu0
    %v5116 = vpop.trf.xlu0
    %v5117 = vpop.trf.xlu0
    %v5118 = vpop.trf.xlu0
    %v5120 = vsel %vm628, %v5111, 0
    %v5123 = vsel %vm632, %v5102, 0
    %5125 = vmatprep.subr.bf16.mxu0 0
    %5126 = vmatpush1.bf16.msra.mxu0 %v5123
    %5127 = vmatprep.subr.bf16.mxu0 0
    %5128 = vmatpush1.bf16.msra.mxu0 0
    %5129 = vmatprep.subr.bf16.mxu0 0
    %5130 = vmatpush1.bf16.msra.mxu0 0
    %5131 = vmatprep.subr.bf16.mxu0 0
    %5132 = vmatpush1.bf16.msra.mxu0 0
    %5133 = vmatprep.subr.bf16.mxu0 0
    %5134 = vmatpush1.bf16.msra.mxu0 0
    %5135 = vmatprep.subr.bf16.mxu0 0
    %5136 = vmatpush1.bf16.msra.mxu0 0
    %5137 = vmatprep.subr.bf16.mxu0 0
    %5138 = vmatpush1.bf16.msra.mxu0 0
    %5139 = vmatprep.subr.bf16.mxu0 0
    %5140 = vmatpush1.bf16.msra.mxu0 0
    %5141 = vmatprep.subr.bf16.mxu0 0
    %5142 = vmatpush1.bf16.msra.mxu0 0
    %5143 = vmatprep.subr.bf16.mxu0 0
    %5144 = vmatpush1.bf16.msra.mxu0 0
    %5145 = vmatprep.subr.bf16.mxu0 0
    %5146 = vmatpush1.bf16.msra.mxu0 0
    %5147 = vmatprep.subr.bf16.mxu0 0
    %5148 = vmatpush1.bf16.msra.mxu0 0
    %5149 = vmatprep.subr.bf16.mxu0 0
    %5150 = vmatpush1.bf16.msra.mxu0 0
    %5151 = vmatprep.subr.bf16.mxu0 0
    %5152 = vmatpush1.bf16.msra.mxu0 0
    %5153 = vmatprep.subr.bf16.mxu0 0
    %5154 = vmatpush1.bf16.msra.mxu0 0
    %5155 = vmatprep.subr.bf16.mxu0 0
    %5156 = vmatpush1.bf16.msra.mxu0 0
    %5157 = vmatprep.mubr.bf16.mxu0 0
    %5158 = vmatmul.mubr.bf16.gmra.mrb[0].mxu0 %v5120
    %v5159 = vpop.f32.mrb[0].mxu0
    %v5160 = vadd.f32 0.0, %v5159
    %v5161 = vpop.f32.mrb[0].mxu0
    %v5162 = vpop.f32.mrb[0].mxu0
    %v5163 = vpop.f32.mrb[0].mxu0
    %5164 = vdwg.mxu0
    %v5165 = vmul.f32 %v5160, 0.35355338
    %v5166 = vsel %vm628, %v5165, -inf
    %5167 = vmax.xlane.f32.xlu0 %v5166
    %v5168 = vpop.xlane.xlu0 %5167
    %v5169 = vsub.f32 %v5165, %v5168
    %v5170 = vmul.f32 %v5169, 1.442695
    %v5171 = vpow.pop %v5170
    %v5172 = vsel %vm628, %v5171, 0.0
    %5173 = vadd.xlane.f32.xlu0 %v5172
    %v5174 = vpop.xlane.xlu0 %5173
    %v5175 = vrcp.pop %v5174
    %v5176 = vmul.f32 %v5171, %v5175
    %v5177 = vpack.c.bf16 %v4726, %v4726
    %v5178 = vpack.c.bf16 %v5176, %v5176
    %v5180 = vsel %vm628, %v5177, 0
    %v5183 = vsel %vm628, %v5178, 0
    %5185 = vmatprep.subr.bf16.mxu0 0
    %5186 = vmatpush1.bf16.xpose.msra.mxu0 %v5183
    %5187 = vmatprep.subr.bf16.mxu0 0
    %5188 = vmatpush1.bf16.xpose.msra.mxu0 0
    %5189 = vmatprep.subr.bf16.mxu0 0
    %5190 = vmatpush1.bf16.xpose.msra.mxu0 0
    %5191 = vmatprep.subr.bf16.mxu0 0
    %5192 = vmatpush1.bf16.xpose.msra.mxu0 0
    %5193 = vmatprep.subr.bf16.mxu0 0
    %5194 = vmatpush1.bf16.xpose.msra.mxu0 0
    %5195 = vmatprep.subr.bf16.mxu0 0
    %5196 = vmatpush1.bf16.xpose.msra.mxu0 0
    %5197 = vmatprep.subr.bf16.mxu0 0
    %5198 = vmatpush1.bf16.xpose.msra.mxu0 0
    %5199 = vmatprep.subr.bf16.mxu0 0
    %5200 = vmatpush1.bf16.xpose.msra.mxu0 0
    %5201 = vmatprep.subr.bf16.mxu0 0
    %5202 = vmatpush1.bf16.xpose.msra.mxu0 0
    %5203 = vmatprep.subr.bf16.mxu0 0
    %5204 = vmatpush1.bf16.xpose.msra.mxu0 0
    %5205 = vmatprep.subr.bf16.mxu0 0
    %5206 = vmatpush1.bf16.xpose.msra.mxu0 0
    %5207 = vmatprep.subr.bf16.mxu0 0
    %5208 = vmatpush1.bf16.xpose.msra.mxu0 0
    %5209 = vmatprep.subr.bf16.mxu0 0
    %5210 = vmatpush1.bf16.xpose.msra.mxu0 0
    %5211 = vmatprep.subr.bf16.mxu0 0
    %5212 = vmatpush1.bf16.xpose.msra.mxu0 0
    %5213 = vmatprep.subr.bf16.mxu0 0
    %5214 = vmatpush1.bf16.xpose.msra.mxu0 0
    %5215 = vmatprep.subr.bf16.mxu0 0
    %5216 = vmatpush1.bf16.xpose.msra.mxu0 0
    %5217 = vmatprep.mubr.bf16.mxu0 0
    %5218 = vmatmul.mubr.bf16.gmra.mrb[0].mxu0 %v5180
    %v5219 = vpop.f32.mrb[0].mxu0
    %v5220 = vadd.f32 0.0, %v5219
    %v5221 = vpop.f32.mrb[0].mxu0
    %v5222 = vpop.f32.mrb[0].mxu0
    %v5223 = vpop.f32.mrb[0].mxu0
    %5224 = vdwg.mxu0
    %v5225 = vpack.c.bf16 %v4972, %v4848
    %v5226 = vpack.c.bf16 %v5220, %v5096
    %5227 = vxpose.xlu0.c.b16.start [1/8] %v5225, 128
    %5228 = vxpose.xlu0.c.b16.cont [2/8] %v5226, 128
    %5229 = vxpose.xlu0.c.b16.cont [3/8] 0, 128
    %5230 = vxpose.xlu0.c.b16.cont [4/8] 0, 128
    %5231 = vxpose.xlu0.c.b16.cont [5/8] 0, 128
    %5232 = vxpose.xlu0.c.b16.cont [6/8] 0, 128
    %5233 = vxpose.xlu0.c.b16.cont [7/8] 0, 128
    %5234 = vxpose.xlu0.c.b16.end [8/8] 0, 128
    %v5235 = vpop.trf.xlu0
    %v5236 = vpop.trf.xlu0
    %v5237 = vpop.trf.xlu0
    %v5238 = vpop.trf.xlu0
    %v5239 = vpop.trf.xlu0
    %v5240 = vpop.trf.xlu0
    %v5241 = vpop.trf.xlu0
    %v5242 = vpop.trf.xlu0
    %v5244 = vsel %vm390, %v5235, 0
    %5246 = vmatprep.subr.bf16.mxu0 0
    %5247 = vmatpush1.bf16.msra.mxu0 %v4597
    %5248 = vmatprep.subr.bf16.mxu0 0
    %5249 = vmatpush1.bf16.msra.mxu0 %v4598
    %5250 = vmatprep.subr.bf16.mxu0 0
    %5251 = vmatpush1.bf16.msra.mxu0 0
    %5252 = vmatprep.subr.bf16.mxu0 0
    %5253 = vmatpush1.bf16.msra.mxu0 0
    %5254 = vmatprep.subr.bf16.mxu0 0
    %5255 = vmatpush1.bf16.msra.mxu0 0
    %5256 = vmatprep.subr.bf16.mxu0 0
    %5257 = vmatpush1.bf16.msra.mxu0 0
    %5258 = vmatprep.subr.bf16.mxu0 0
    %5259 = vmatpush1.bf16.msra.mxu0 0
    %5260 = vmatprep.subr.bf16.mxu0 0
    %5261 = vmatpush1.bf16.msra.mxu0 0
    %5262 = vmatprep.subr.bf16.mxu0 0
    %5263 = vmatpush1.bf16.msra.mxu0 0
    %5264 = vmatprep.subr.bf16.mxu0 0
    %5265 = vmatpush1.bf16.msra.mxu0 0
    %5266 = vmatprep.subr.bf16.mxu0 0
    %5267 = vmatpush1.bf16.msra.mxu0 0
    %5268 = vmatprep.subr.bf16.mxu0 0
    %5269 = vmatpush1.bf16.msra.mxu0 0
    %5270 = vmatprep.subr.bf16.mxu0 0
    %5271 = vmatpush1.bf16.msra.mxu0 0
    %5272 = vmatprep.subr.bf16.mxu0 0
    %5273 = vmatpush1.bf16.msra.mxu0 0
    %5274 = vmatprep.subr.bf16.mxu0 0
    %5275 = vmatpush1.bf16.msra.mxu0 0
    %5276 = vmatprep.subr.bf16.mxu0 0
    %5277 = vmatpush1.bf16.msra.mxu0 0
    %5278 = vmatprep.mubr.bf16.mxu0 0
    %5279 = vmatmul.mubr.bf16.gmra.mrb[0].mxu0 %v5244
    %v5280 = vpop.f32.mrb[0].mxu0
    %v5281 = vadd.f32 %v4571, %v5280
    %v5282 = vpop.f32.mrb[0].mxu0
    %v5283 = vpop.f32.mrb[0].mxu0
    %v5284 = vpop.f32.mrb[0].mxu0
    %5285 = vdwg.mxu0
    %s5286 = scalar_lea.vmem %s43, 1
    %v5287 = vld [vmem:[%s5286] sm:$0x1]
    %s5288 = scalar_lea.vmem %s45, 1
    %v5289 = vld [vmem:[%s5288] sm:$0x1]
    %s5290 = scalar_lea.vmem %s47, 16
    %v5291 = vld [vmem:[%s5290] sm:$0xf]
    %v5292 = vld [vmem:[%s5290 + $0x4] sm:$0xf]
    %v5293 = vld [vmem:[%s5290 + $0x8] sm:$0xf]
    %v5294 = vld [vmem:[%s5290 + $0xc] sm:$0xf]
    %s5295 = scalar_lea.vmem [#allocation22], 1
    %v5296 = vld [vmem:[%s5295] sm:$0x1]
    %s5297 = scalar_lea.vmem %s51, 16
    %v5298 = vld [vmem:[%s5297] sm:$0xf]
    %v5299 = vld [vmem:[%s5297 + $0x4] sm:$0xf]
    %v5300 = vld [vmem:[%s5297 + $0x8] sm:$0xf]
    %v5301 = vld [vmem:[%s5297 + $0xc] sm:$0xf]
    %s5302 = scalar_lea.vmem [#allocation23], 1
    %v5303 = vld [vmem:[%s5302] sm:$0x1]
    %s5304 = scalar_lea.vmem %s55, 1
    %v5305 = vld [vmem:[%s5304] sm:$0x1]
    %s5306 = scalar_lea.vmem %s57, 1
    %v5307 = vld [vmem:[%s5306] sm:$0x1]
    %v5308 = vsel %vm390, %v4639, 0.0
    %5309 = vadd.xlane.f32.xlu0 %v5308
    %v5310 = vpop.xlane.xlu0 %5309
    %v5311 = vsel %vm390, %v5281, 0.0
    %5312 = vadd.xlane.f32.xlu0 %v5311
    %v5313 = vpop.xlane.xlu0 %5312
    %v5314 = vmul.f32 %v5310, %v1951
    %v5315 = vmul.f32 %v5313, %v1951
    %v5316 = vsub.f32 %v4639, %v5314
    %v5317 = vsub.f32 %v5281, %v5315
    %v5318 = vmul.f32 %v5316, %v5316
    %v5319 = vmul.f32 %v5317, %v5317
    %v5320 = vsel %vm390, %v5318, 0.0
    %5321 = vadd.xlane.f32.xlu0 %v5320
    %v5322 = vpop.xlane.xlu0 %5321
    %v5323 = vsel %vm390, %v5319, 0.0
    %5324 = vadd.xlane.f32.xlu0 %v5323
    %v5325 = vpop.xlane.xlu0 %5324
    %v5326 = vmul.f32 %v5322, %v1951
    %v5327 = vmul.f32 %v5325, %v1951
    %v5328 = vadd.f32 %v5326, 1e-05
    %v5329 = vadd.f32 %v5327, 1e-05
    %v5330 = vrsqrt.pop %v5328
    %v5331 = vrsqrt.pop %v5329
    %v5332 = vmul.f32 %v5316, %v5330
    %v5333 = vmul.f32 %v5317, %v5331
    %v5335 = vlaneseq
    %v5336 = vshrl.u32 %v5335, 7
    %v5337 = vsub.s32 0, %v5336
    %v5338 = vrot.slane %v5287, %v5337
    %v5340 = vmul.f32 %v5332, %v5338
    %v5341 = vmul.f32 %v5333, %v5338
    %v5343 = vlaneseq
    %v5344 = vshrl.u32 %v5343, 7
    %v5345 = vsub.s32 0, %v5344
    %v5346 = vrot.slane %v5289, %v5345
    %v5348 = vadd.f32 %v5340, %v5346
    %v5349 = vadd.f32 %v5341, %v5346
    %v5350 = vadd.f32 %v5348, %v3851
    %v5351 = vadd.f32 %v5349, %v3852
    %v5352 = vpack.c.bf16 %v5351, %v5350
    %v5354 = vlaneseq
    %v5355 = vshrl.u32 %v5354, 7
    %v5356 = vsub.s32 0, %v5355
    %v5357 = vrot.slane %v5296, %v5356
    %v5363 = vunpack.c.l.b16 %v5291
    %v5364 = vunpack.c.l.b16 %v5292
    %v5365 = vunpack.c.l.b16 %v5293
    %v5366 = vunpack.c.l.b16 %v5294
    %v5367 = vpack.c.b16 %v5364, %v5363
    %v5368 = vpack.c.b16 %v5366, %v5365
    %v5372 = vsel %vm390, %v5352, 0
    %5374 = vmatprep.subr.bf16.mxu0 0
    %5375 = vmatpush1.bf16.msra.mxu0 %v5367
    %5376 = vmatprep.subr.bf16.mxu0 0
    %5377 = vmatpush1.bf16.msra.mxu0 %v5368
    %5378 = vmatprep.subr.bf16.mxu0 0
    %5379 = vmatpush1.bf16.msra.mxu0 0
    %5380 = vmatprep.subr.bf16.mxu0 0
    %5381 = vmatpush1.bf16.msra.mxu0 0
    %5382 = vmatprep.subr.bf16.mxu0 0
    %5383 = vmatpush1.bf16.msra.mxu0 0
    %5384 = vmatprep.subr.bf16.mxu0 0
    %5385 = vmatpush1.bf16.msra.mxu0 0
    %5386 = vmatprep.subr.bf16.mxu0 0
    %5387 = vmatpush1.bf16.msra.mxu0 0
    %5388 = vmatprep.subr.bf16.mxu0 0
    %5389 = vmatpush1.bf16.msra.mxu0 0
    %5390 = vmatprep.subr.bf16.mxu0 0
    %5391 = vmatpush1.bf16.msra.mxu0 0
    %5392 = vmatprep.subr.bf16.mxu0 0
    %5393 = vmatpush1.bf16.msra.mxu0 0
    %5394 = vmatprep.subr.bf16.mxu0 0
    %5395 = vmatpush1.bf16.msra.mxu0 0
    %5396 = vmatprep.subr.bf16.mxu0 0
    %5397 = vmatpush1.bf16.msra.mxu0 0
    %5398 = vmatprep.subr.bf16.mxu0 0
    %5399 = vmatpush1.bf16.msra.mxu0 0
    %5400 = vmatprep.subr.bf16.mxu0 0
    %5401 = vmatpush1.bf16.msra.mxu0 0
    %5402 = vmatprep.subr.bf16.mxu0 0
    %5403 = vmatpush1.bf16.msra.mxu0 0
    %5404 = vmatprep.subr.bf16.mxu0 0
    %5405 = vmatpush1.bf16.msra.mxu0 0
    %5406 = vmatprep.mubr.bf16.mxu0 0
    %5407 = vmatmul.mubr.bf16.gmra.mrb[0].mxu0 %v5372
    %v5408 = vpop.f32.mrb[0].mxu0
    %v5409 = vadd.f32 %v5357, %v5408
    %v5410 = vpop.f32.mrb[0].mxu0
    %v5411 = vpop.f32.mrb[0].mxu0
    %v5412 = vadd.f32 %v5357, %v5411
    %v5413 = vpop.f32.mrb[0].mxu0
    %5414 = vdwg.mxu0
    %v5415 = vmul.f32 %v5409, 0.5
    %v5416 = vmul.f32 %v5412, 0.5
    %v5417 = vmul.f32 %v5409, 0.044715
    %v5418 = vmul.f32 %v5412, 0.044715
    %v5419 = vmul.f32 %v5417, %v5409
    %v5420 = vmul.f32 %v5418, %v5412
    %v5421 = vmul.f32 %v5419, %v5409
    %v5422 = vmul.f32 %v5420, %v5412
    %v5423 = vadd.f32 %v5409, %v5421
    %v5424 = vadd.f32 %v5412, %v5422
    %v5425 = vmul.f32 %v5423, 0.7978846
    %v5426 = vmul.f32 %v5424, 0.7978846
    %v5427 = vtanh.pop %v5425
    %v5428 = vtanh.pop %v5426
    %v5429 = vadd.f32 %v5427, 1.0
    %v5430 = vadd.f32 %v5428, 1.0
    %v5431 = vmul.f32 %v5415, %v5429
    %v5432 = vmul.f32 %v5416, %v5430
    %v5433 = vpack.c.bf16 %v5432, %v5431
    %v5435 = vlaneseq
    %v5436 = vshrl.u32 %v5435, 7
    %v5437 = vsub.s32 0, %v5436
    %v5438 = vrot.slane %v5303, %v5437
    %v5444 = vunpack.c.l.b16 %v5298
    %v5445 = vunpack.c.l.b16 %v5299
    %v5446 = vunpack.c.l.b16 %v5300
    %v5447 = vunpack.c.l.b16 %v5301
    %v5448 = vpack.c.b16 %v5445, %v5444
    %v5449 = vpack.c.b16 %v5447, %v5446
    %v5453 = vsel %vm390, %v5433, 0
    %5455 = vmatprep.subr.bf16.mxu0 0
    %5456 = vmatpush1.bf16.msra.mxu0 %v5448
    %5457 = vmatprep.subr.bf16.mxu0 0
    %5458 = vmatpush1.bf16.msra.mxu0 %v5449
    %5459 = vmatprep.subr.bf16.mxu0 0
    %5460 = vmatpush1.bf16.msra.mxu0 0
    %5461 = vmatprep.subr.bf16.mxu0 0
    %5462 = vmatpush1.bf16.msra.mxu0 0
    %5463 = vmatprep.subr.bf16.mxu0 0
    %5464 = vmatpush1.bf16.msra.mxu0 0
    %5465 = vmatprep.subr.bf16.mxu0 0
    %5466 = vmatpush1.bf16.msra.mxu0 0
    %5467 = vmatprep.subr.bf16.mxu0 0
    %5468 = vmatpush1.bf16.msra.mxu0 0
    %5469 = vmatprep.subr.bf16.mxu0 0
    %5470 = vmatpush1.bf16.msra.mxu0 0
    %5471 = vmatprep.subr.bf16.mxu0 0
    %5472 = vmatpush1.bf16.msra.mxu0 0
    %5473 = vmatprep.subr.bf16.mxu0 0
    %5474 = vmatpush1.bf16.msra.mxu0 0
    %5475 = vmatprep.subr.bf16.mxu0 0
    %5476 = vmatpush1.bf16.msra.mxu0 0
    %5477 = vmatprep.subr.bf16.mxu0 0
    %5478 = vmatpush1.bf16.msra.mxu0 0
    %5479 = vmatprep.subr.bf16.mxu0 0
    %5480 = vmatpush1.bf16.msra.mxu0 0
    %5481 = vmatprep.subr.bf16.mxu0 0
    %5482 = vmatpush1.bf16.msra.mxu0 0
    %5483 = vmatprep.subr.bf16.mxu0 0
    %5484 = vmatpush1.bf16.msra.mxu0 0
    %5485 = vmatprep.subr.bf16.mxu0 0
    %5486 = vmatpush1.bf16.msra.mxu0 0
    %5487 = vmatprep.mubr.bf16.mxu0 0
    %5488 = vmatmul.mubr.bf16.gmra.mrb[0].mxu0 %v5453
    %v5489 = vpop.f32.mrb[0].mxu0
    %v5490 = vadd.f32 %v5438, %v5489
    %v5491 = vpop.f32.mrb[0].mxu0
    %v5492 = vpop.f32.mrb[0].mxu0
    %v5493 = vadd.f32 %v5438, %v5492
    %v5494 = vpop.f32.mrb[0].mxu0
    %5495 = vdwg.mxu0
    %v5496 = vsel %vm390, %v5490, 0.0
    %5497 = vadd.xlane.f32.xlu0 %v5496
    %v5498 = vpop.xlane.xlu0 %5497
    %v5499 = vsel %vm390, %v5493, 0.0
    %5500 = vadd.xlane.f32.xlu0 %v5499
    %v5501 = vpop.xlane.xlu0 %5500
    %v5502 = vmul.f32 %v5498, %v1951
    %v5503 = vmul.f32 %v5501, %v1951
    %v5504 = vsub.f32 %v5490, %v5502
    %v5505 = vsub.f32 %v5493, %v5503
    %v5506 = vmul.f32 %v5504, %v5504
    %v5507 = vmul.f32 %v5505, %v5505
    %v5508 = vsel %vm390, %v5506, 0.0
    %5509 = vadd.xlane.f32.xlu0 %v5508
    %v5510 = vpop.xlane.xlu0 %5509
    %v5511 = vsel %vm390, %v5507, 0.0
    %5512 = vadd.xlane.f32.xlu0 %v5511
    %v5513 = vpop.xlane.xlu0 %5512
    %v5514 = vmul.f32 %v5510, %v1951
    %v5515 = vmul.f32 %v5513, %v1951
    %v5516 = vadd.f32 %v5514, 1e-05
    %v5517 = vadd.f32 %v5515, 1e-05
    %v5518 = vrsqrt.pop %v5516
    %v5519 = vrsqrt.pop %v5517
    %v5520 = vmul.f32 %v5504, %v5518
    %v5521 = vmul.f32 %v5505, %v5519
    %v5523 = vlaneseq
    %v5524 = vshrl.u32 %v5523, 7
    %v5525 = vsub.s32 0, %v5524
    %v5526 = vrot.slane %v5305, %v5525
    %v5528 = vmul.f32 %v5520, %v5526
    %v5529 = vmul.f32 %v5521, %v5526
    %v5531 = vlaneseq
    %v5532 = vshrl.u32 %v5531, 7
    %v5533 = vsub.s32 0, %v5532
    %v5534 = vrot.slane %v5307, %v5533
    %v5536 = vadd.f32 %v5528, %v5534
    %v5537 = vadd.f32 %v5529, %v5534
    %v5538 = vadd.f32 %v5536, %v5350
    %v5539 = vadd.f32 %v5537, %v5351
    %5540 = vst.msk [vmem:[#allocation25] sm:$0xff] %vm390, %v5538
    %s5541 = scalar_lea.vmem [#allocation25], 8
    %5542 = vst.msk [vmem:[%s5541] sm:$0xff] %vm390, %v5539
    // Predicated region
    $region174: #{_lambda_.1} parent=1 // pred_check
      _
    $region175: #{_lambda_.1} parent=1 // pred_check_branch
      %5544 = sbr.rel (0) target = $region177
    $region176: #{_lambda_.1} parent=1 // pred_region
      %s5546 = ssub.s32 256, 256
      %5547 = vsyncadd [#allocation4], %s5546
      %s5548 = sshll.u32 [#allocation25], 4
      %s5549 = int_to_ptr.vmem [resolvable:$true] %s5548
      %5554 = dma.vmem_to_hbm [thread:$0]  %s5549, 256, %s59, [#allocation4], 128, 128, 8
    $region177: #{_lambda_.1} parent=1 // pred_fallthru
      _
    // Predicated region
    $region178: #{_lambda_.1} parent=1 // pred_check
      _
    $region179: #{_lambda_.1} parent=1 // pred_check_branch
      %5556 = sbr.rel (0) target = $region181
    $region180: #{_lambda_.1} parent=1 // pred_region
      %5557 = dma.done [#allocation4], 256
    $region181: #{_lambda_.1} parent=1 // pred_fallthru
      _
    %5558 = vsyncpa [#allocation3], 1
    %5559 = vsyncpa [#allocation6], 1
    %5560 = vsyncpa [#allocation9], 1
    %5561 = vsyncpa [#allocation12], 1
    %5562 = vsyncpa [#allocation15], 1
    %5563 = vsyncpa [#allocation18], 1
    %5564 = vsyncpa [#allocation21], 1
    %5565 = vsyncpa [#allocation24], 1
    %5566 = vsyncpa [#allocation4], 1

</llo_original>
